<compile_context>
chip_gen: v7x
topology: tpu7x:2x2x1
jax: 0.10.0
libtpu: 0.0.40
codegen_flags: <defaults>
</compile_context>

<pallas_src>
import functools

import jax
import jax.numpy as jnp
from jax.experimental import pallas as pl
from jax.experimental.pallas import tpu as pltpu

EPS = 1e-5
DEFAULT_TILE_ROWS = 512      # 1x1 / epilogue kernels: rows per grid step (mem-bound).
DEFAULT_TILE_OUT_ROWS = 8    # conv2: output image rows per grid step.


def _default_vmem_limit():
    # Default scoped VMEM is only 16/32 MiB; raise it but stay under v7x's 64 MiB.
    try:
        cap = int(pltpu.get_tpu_info().vmem_capacity_bytes)
        return max(32 * 1024 * 1024, min(100 * 1024 * 1024, (3 * cap) // 4))
    except Exception:
        return 48 * 1024 * 1024


_VMEM_LIMIT = _default_vmem_limit()


def _cparams(*sem):
    return pltpu.CompilerParams(dimension_semantics=tuple(sem),
                                vmem_limit_bytes=_VMEM_LIMIT)


# --------------------------------------------------------------------------- #
# Kernel bodies
# --------------------------------------------------------------------------- #

def _emit_out_and_stats(y_f32, y_ref, sum_ref, sq_ref):
    """Store the raw conv output + per-tile per-channel sum / sum-of-squares (f32)."""
    y_ref[...] = y_f32.astype(y_ref.dtype)
    c = y_f32.shape[-1]
    sum_ref[...] = jnp.sum(y_f32, axis=0).reshape(1, c)
    sq_ref[...] = jnp.sum(y_f32 * y_f32, axis=0).reshape(1, c)


def conv1x1_stats_kernel(x_ref, w_ref, y_ref, sum_ref, sq_ref):
    # x: (TM, Cin) bf16   w: (Cin, Cout) bf16   y: raw conv output (no BN/ReLU yet)
    y = jnp.dot(x_ref[...], w_ref[...], preferred_element_type=jnp.float32)
    _emit_out_and_stats(y, y_ref, sum_ref, sq_ref)


def dual_conv1x1_stats_kernel(x_ref, w1_ref, wd_ref,
                              y1_ref, yd_ref, s1_ref, q1_ref, sd_ref, qd_ref):
    # conv1 and the stride-1 downsample conv share the same input -> one HBM read of x.
    x = x_ref[...]
    _emit_out_and_stats(jnp.dot(x, w1_ref[...], preferred_element_type=jnp.float32),
                        y1_ref, s1_ref, q1_ref)
    _emit_out_and_stats(jnp.dot(x, wd_ref[...], preferred_element_type=jnp.float32),
                        yd_ref, sd_ref, qd_ref)


def bn_relu_conv1x1_stats_kernel(x_ref, s_ref, b_ref, w_ref, y_ref, sum_ref, sq_ref):
    # Fused: y = relu(x * scale + shift) @ w   (scale/shift fold the producer's BN).
    x = x_ref[...].astype(jnp.float32)
    x = jnp.maximum(x * s_ref[...] + b_ref[...], 0.0)
    y = jnp.dot(x.astype(w_ref.dtype), w_ref[...], preferred_element_type=jnp.float32)
    _emit_out_and_stats(y, y_ref, sum_ref, sq_ref)


def conv3x3_stats_kernel(x_ref, s_ref, b_ref, w_ref, y_ref, sum_ref, sq_ref,
                         pad_ref, *phase_refs, stride):
    # x_ref : (H, W, C)  whole conv1-output image, resident in VMEM across h-tiles.
    # w_ref : (9*C, D)   3x3 weight pre-flattened in (kh, kw, C) order.
    # y_ref : (TH, WO, D) one output row tile.  bn1+relu is applied on the fly while
    # building the padded tile; only the 1-pixel border of the halo is zero-filled.
    t = pl.program_id(1)
    h, w, c = x_ref.shape
    tho, wo, d = y_ref.shape
    thin = pad_ref.shape[0]                       # (tho - 1) * stride + 3

    scale = s_ref[...].reshape(1, 1, c)
    shift = b_ref[...].reshape(1, 1, c)

    def act(rows):                                # bn1 + relu (f32 math, bf16 out)
        v = rows.astype(jnp.float32) * scale + shift
        return jnp.maximum(v, 0.0).astype(pad_ref.dtype)

    # ---- build the (thin, W+2) halo tile; only the border is written with zeros ----
    zero_col = jnp.zeros((thin, 1, c), pad_ref.dtype)
    pad_ref[:, 0:1, :] = zero_col
    pad_ref[:, w + 1:w + 2, :] = zero_col

    base = t * tho * stride - 1                   # input row mapped to pad row 0
    # Middle rows are always in range.
    pad_ref[1:thin - 1, 1:w + 1, :] = act(x_ref[pl.ds(base + 1, thin - 2), :, :])

    zero_row = jnp.zeros((1, w + 2, c), pad_ref.dtype)

    @pl.when(t == 0)
    def _():
        pad_ref[0:1, :, :] = zero_row

    @pl.when(t > 0)
    def _():
        pad_ref[0:1, 1:w + 1, :] = act(x_ref[pl.ds(base, 1), :, :])

    bot = base + thin - 1

    @pl.when(bot < h)
    def _():
        pad_ref[thin - 1:thin, 1:w + 1, :] = act(x_ref[pl.ds(bot, 1), :, :])

    @pl.when(bot >= h)
    def _():
        pad_ref[thin - 1:thin, :, :] = zero_row

    # ---- im2col patch -> single deep-K matmul (K = 9*C fills the MXU) ----
    if stride == 1:
        taps = [pad_ref[kh:kh + tho, kw:kw + wo, :]
                for kh in range(3) for kw in range(3)]
    elif stride == 2:
        # Split the padded tile into even/odd column phases once (2 sublane-strided
        # reads); every tap below is then dense along W (H stride is the cheap outer
        # dim).  This replaces 9 W-strided gathers with 2.
        pe_ref, po_ref = phase_refs
        pe_ref[...] = pad_ref[:, pl.ds(0, wo + 1, stride=2), :]
        po_ref[...] = pad_ref[:, pl.ds(1, wo, stride=2), :]
        sel = ((pe_ref, 0), (po_ref, 0), (pe_ref, 1))
        taps = []
        for kh in range(3):
            for kw in range(3):
                src, off = sel[kw]
                taps.append(src[pl.ds(kh, tho, stride=2), off:off + wo, :])
    else:
        # Generic fallback (ResNet only uses stride 1/2).
        taps = [pad_ref[pl.ds(kh, tho, stride=stride),
                        pl.ds(kw, wo, stride=stride), :]
                for kh in range(3) for kw in range(3)]

    patch = jnp.concatenate(taps, axis=-1).reshape(tho * wo, 9 * c)
    acc = jnp.dot(patch, w_ref[...], preferred_element_type=jnp.float32)

    y_ref[...] = acc.reshape(tho, wo, d).astype(y_ref.dtype)
    sum_ref[...] = jnp.sum(acc, axis=0).reshape(1, d)
    sq_ref[...] = jnp.sum(acc * acc, axis=0).reshape(1, d)


def bn_add_relu_kernel(y_ref, i_ref, s3_ref, b3_ref, si_ref, bi_ref, o_ref):
    # out = relu(bn3(conv3) + bn_d(identity)); epilogue math in f32, bf16 output.
    y = y_ref[...].astype(jnp.float32) * s3_ref[...] + b3_ref[...]
    idn = i_ref[...].astype(jnp.float32) * si_ref[...] + bi_ref[...]
    o_ref[...] = jnp.maximum(y + idn, 0.0).astype(o_ref.dtype)


# --------------------------------------------------------------------------- #
# pallas_call builders
# --------------------------------------------------------------------------- #

def _pick_tile_rows(m, target=DEFAULT_TILE_ROWS):
    # Largest multiple of 8 that divides m and is <= target.
    t = min(target, m)
    t -= t % 8
    while t >= 8:
        if m % t == 0:
            return t
        t -= 8
    return m    # TODO(synk): masked remainder tile when m is not a multiple of 8.


def _pick_h_tile(ho, target=DEFAULT_TILE_OUT_ROWS):
    t = min(target, ho)
    while t > 1:
        if ho % t == 0:
            return t
        t -= 1
    return 1


def _row_spec(tm, c):
    return pl.BlockSpec((tm, c), lambda i: (i, 0))


def _const_spec(shape):
    # TODO(synk): pipeline_mode=pl.Buffered(1) would single-buffer these constant
    #             blocks and free VMEM on v7x; left at the default to keep lowering
    #             risk low.
    return pl.BlockSpec(shape, lambda i: (0, 0))


def _stats_spec(c):
    return pl.BlockSpec((None, 1, c), lambda i: (i, 0, 0))


def _stats_shape(t, c):
    return jax.ShapeDtypeStruct((t, 1, c), jnp.float32)


def _conv1x1_stats(x2d, w, tm):
    m, cin = x2d.shape
    cout = w.shape[1]
    t = m // tm
    return pl.pallas_call(
        conv1x1_stats_kernel,
        grid=(t,),
        in_specs=[_row_spec(tm, cin), _const_spec((cin, cout))],
        out_specs=(_row_spec(tm, cout), _stats_spec(cout), _stats_spec(cout)),
        out_shape=(jax.ShapeDtypeStruct((m, cout), jnp.bfloat16),
                   _stats_shape(t, cout), _stats_shape(t, cout)),
        compiler_params=_cparams("parallel"),
    )(x2d, w)


def _dual_conv1x1_stats(x2d, w1, wd, tm):
    m, cin = x2d.shape
    c1 = w1.shape[1]
    cd = wd.shape[1]
    t = m // tm
    return pl.pallas_call(
        dual_conv1x1_stats_kernel,
        grid=(t,),
        in_specs=[_row_spec(tm, cin), _const_spec((cin, c1)), _const_spec((cin, cd))],
        out_specs=(_row_spec(tm, c1), _row_spec(tm, cd),
                   _stats_spec(c1), _stats_spec(c1), _stats_spec(cd), _stats_spec(cd)),
        out_shape=(jax.ShapeDtypeStruct((m, c1), jnp.bfloat16),
                   jax.ShapeDtypeStruct((m, cd), jnp.bfloat16),
                   _stats_shape(t, c1), _stats_shape(t, c1),
                   _stats_shape(t, cd), _stats_shape(t, cd)),
        compiler_params=_cparams("parallel"),
    )(x2d, w1, wd)


def _bn_relu_conv1x1_stats(x2d, scale, shift, w, tm):
    m, cin = x2d.shape
    cout = w.shape[1]
    t = m // tm
    return pl.pallas_call(
        bn_relu_conv1x1_stats_kernel,
        grid=(t,),
        in_specs=[_row_spec(tm, cin), _const_spec((1, cin)), _const_spec((1, cin)),
                  _const_spec((cin, cout))],
        out_specs=(_row_spec(tm, cout), _stats_spec(cout), _stats_spec(cout)),
        out_shape=(jax.ShapeDtypeStruct((m, cout), jnp.bfloat16),
                   _stats_shape(t, cout), _stats_shape(t, cout)),
        compiler_params=_cparams("parallel"),
    )(x2d, scale, shift, w)


def _conv3x3_stats(x_nhwc, scale, shift, w_flat, stride, tile_ho=None):
    n, h, w, c = x_nhwc.shape
    d = w_flat.shape[-1]
    ho = (h - 1) // stride + 1
    wo = (w - 1) // stride + 1
    if tile_ho is None:
        tile_ho = _pick_h_tile(ho)
    assert ho % tile_ho == 0, (ho, tile_ho)
    n_t = ho // tile_ho
    thin = (tile_ho - 1) * stride + 3

    scratch = [pltpu.VMEM((thin, w + 2, c), jnp.bfloat16)]
    if stride == 2:
        scratch += [pltpu.VMEM((thin, wo + 1, c), jnp.bfloat16),
                    pltpu.VMEM((thin, wo, c), jnp.bfloat16)]

    return pl.pallas_call(
        functools.partial(conv3x3_stats_kernel, stride=stride),
        grid=(n, n_t),
        in_specs=[pl.BlockSpec((None, h, w, c), lambda b, t: (b, 0, 0, 0)),
                  pl.BlockSpec((1, c), lambda b, t: (0, 0)),
                  pl.BlockSpec((1, c), lambda b, t: (0, 0)),
                  pl.BlockSpec((9 * c, d), lambda b, t: (0, 0))],
        out_specs=(pl.BlockSpec((None, tile_ho, wo, d), lambda b, t: (b, t, 0, 0)),
                   pl.BlockSpec((None, None, 1, d), lambda b, t: (b, t, 0, 0)),
                   pl.BlockSpec((None, None, 1, d), lambda b, t: (b, t, 0, 0))),
        out_shape=(jax.ShapeDtypeStruct((n, ho, wo, d), jnp.bfloat16),
                   jax.ShapeDtypeStruct((n, n_t, 1, d), jnp.float32),
                   jax.ShapeDtypeStruct((n, n_t, 1, d), jnp.float32)),
        scratch_shapes=scratch,
        compiler_params=_cparams("parallel", "parallel"),
    )(x_nhwc, scale, shift, w_flat)


def _bn_add_relu(y2d, id2d, s3, b3, si, bi, tm):
    m, cout = y2d.shape
    t = m // tm
    return pl.pallas_call(
        bn_add_relu_kernel,
        grid=(t,),
        in_specs=[_row_spec(tm, cout), _row_spec(tm, cout),
                  _const_spec((1, cout)), _const_spec((1, cout)),
                  _const_spec((1, cout)), _const_spec((1, cout))],
        out_specs=_row_spec(tm, cout),
        out_shape=jax.ShapeDtypeStruct((m, cout), jnp.bfloat16),
        input_output_aliases={0: 0},     # write over the conv3 buffer
        compiler_params=_cparams("parallel"),
    )(y2d, id2d, s3, b3, si, bi)


# --------------------------------------------------------------------------- #
# Bottleneck forward
# --------------------------------------------------------------------------- #

def _bn_scale_shift(psum, psq, count, gamma, beta):
    """Fold batch statistics + (gamma, beta) into a (1, C) scale/shift pair."""
    c = psum.shape[-1]
    s = jnp.sum(psum.reshape(-1, c), axis=0)
    q = jnp.sum(psq.reshape(-1, c), axis=0)
    mean = s / count
    # TODO(synk): E[x^2]-E[x]^2 in f32 can cancel for large-mean activations; switch
    #             to a shifted two-pass formulation if tolerances ever tighten.
    var = jnp.maximum(q / count - mean * mean, 0.0)   # biased var (training mode)
    inv = jax.lax.rsqrt(var + EPS)
    scale = gamma.reshape(-1) * inv
    shift = beta.reshape(-1) - mean * scale
    return scale.reshape(1, -1), shift.reshape(1, -1)


def bottleneck_forward(x_nchw, params, stride=1, tile_rows=DEFAULT_TILE_ROWS,
                       tile_ho=None):
    x = jnp.transpose(x_nchw, (0, 2, 3, 1)).astype(jnp.bfloat16)   # NHWC, bf16
    n, h, w, cin = x.shape
    cmid = params["w1"].shape[1]
    cout = params["w3"].shape[1]
    ho = (h - 1) // stride + 1
    wo = (w - 1) // stride + 1
    m1 = n * h * w
    m2 = n * ho * wo

    w1 = params["w1"].astype(jnp.bfloat16)
    w2f = params["w2"].reshape(9 * cmid, cmid).astype(jnp.bfloat16)  # (kh,kw,C) -> 9C
    w3 = params["w3"].astype(jnp.bfloat16)

    has_ds = (stride != 1) or (cin != cout)
    x2d = x.reshape(m1, cin)
    tm1 = _pick_tile_rows(m1, tile_rows)
    tm2 = _pick_tile_rows(m2, tile_rows)

    # -- conv1 (and the stride-1 downsample, fused: one HBM read of x) ---------------
    if has_ds and stride == 1:
        wd = params["wd"].astype(jnp.bfloat16)
        y1_2d, yd_2d, s1, q1, sd, qd = _dual_conv1x1_stats(x2d, w1, wd, tm1)
    else:
        y1_2d, s1, q1 = _conv1x1_stats(x2d, w1, tm1)
        if has_ds:
            wd = params["wd"].astype(jnp.bfloat16)
            # TODO(synk): fuse this strided gather into the conv2 launch to drop one
            #             HBM round trip of x on stride-2 blocks.
            xd2d = x[:, ::stride, ::stride, :].reshape(m2, cin)
            yd_2d, sd, qd = _conv1x1_stats(xd2d, wd, tm2)

    scale1, shift1 = _bn_scale_shift(s1, q1, m1, params["g1"], params["b1"])

    # -- conv2: bn1+relu fused on its input, row-tiled grid, halo in VMEM, one 9C dot --
    y1 = y1_2d.reshape(n, h, w, cmid)
    z2, s2, q2 = _conv3x3_stats(y1, scale1, shift1, w2f, stride, tile_ho)
    scale2, shift2 = _bn_scale_shift(s2, q2, m2, params["g2"], params["b2"])

    # -- conv3: bn2 + relu fused on its input ------------------------------------------
    y3_2d, s3, q3 = _bn_relu_conv1x1_stats(z2.reshape(m2, cmid), scale2, shift2, w3, tm2)
    scale3, shift3 = _bn_scale_shift(s3, q3, m2, params["g3"], params["b3"])

    # -- bn3 + bn_d(identity) + add + relu ----------------------------------------------
    if has_ds:
        scaled, shiftd = _bn_scale_shift(sd, qd, m2, params["gd"], params["bd"])
        id2d = yd_2d
    else:
        scaled = jnp.ones((1, cout), jnp.float32)
        shiftd = jnp.zeros((1, cout), jnp.float32)
        id2d = x2d                         # cin == cout and stride == 1 here

    out2d = _bn_add_relu(y3_2d, id2d, scale3, shift3, scaled, shiftd, tm2)
    out = out2d.reshape(n, ho, wo, cout)
    # TODO(synk): when chaining NHWC bottleneck blocks, keep bf16 NHWC and drop this
    #             transpose + f32 upcast (a full extra HBM pass done by XLA).
    return jnp.transpose(out, (0, 3, 1, 2)).astype(jnp.float32)


# --------------------------------------------------------------------------- #
# Pure-JAX reference (f32, PyTorch training-mode BN semantics)
# --------------------------------------------------------------------------- #

def reference_forward(x_nchw, params, stride=1):
    x = jnp.transpose(x_nchw, (0, 2, 3, 1)).astype(jnp.float32)

    def bn(y, g, b, relu):
        m = y.mean(axis=(0, 1, 2), keepdims=True)
        v = ((y - m) ** 2).mean(axis=(0, 1, 2), keepdims=True)
        y = (y - m) / jnp.sqrt(v + EPS) * g.reshape(1, 1, 1, -1) + b.reshape(1, 1, 1, -1)
        return jnp.maximum(y, 0.0) if relu else y

    def conv1x1(t, w):
        return jnp.einsum("nhwc,cd->nhwd", t, w)

    def conv3x3(t, w, s):
        hh, ww = t.shape[1], t.shape[2]
        tp = jnp.pad(t, ((0, 0), (1, 1), (1, 1), (0, 0)))
        acc = 0.0
        for kh in range(3):
            for kw in range(3):
                acc = acc + jnp.einsum("nhwc,cd->nhwd",
                                       tp[:, kh:kh + hh, kw:kw + ww, :], w[kh, kw])
        return acc[:, ::s, ::s, :]

    cin = x.shape[-1]
    cout = params["w3"].shape[1]
    if stride != 1 or cin != cout:
        idn = bn(conv1x1(x[:, ::stride, ::stride, :], params["wd"]),
                 params["gd"], params["bd"], False)
    else:
        idn = x
    out = bn(conv1x1(x, params["w1"]), params["g1"], params["b1"], True)
    out = bn(conv3x3(out, params["w2"], stride), params["g2"], params["b2"], True)
    out = bn(conv1x1(out, params["w3"]), params["g3"], params["b3"], False)
    out = jnp.maximum(out + idn, 0.0)
    return jnp.transpose(out, (0, 3, 1, 2))


# --------------------------------------------------------------------------- #
# Parameters + main
# --------------------------------------------------------------------------- #

def make_params(key, in_channel, out_channel):
    expansion = 4
    cout = out_channel * expansion
    ks = jax.random.split(key, 12)
    scale = 0.1
    return {
        # conv weights stored channels-last: (Cin, Cout) / (kh, kw, Cin, Cout)
        "w1": scale * jax.random.normal(ks[0], (in_channel, out_channel), jnp.float32),
        "w2": scale * jax.random.normal(ks[1], (3, 3, out_channel, out_channel), jnp.float32),
        "w3": scale * jax.random.normal(ks[2], (out_channel, cout), jnp.float32),
        "wd": scale * jax.random.normal(ks[3], (in_channel, cout), jnp.float32),
        # BN affine params (gamma, beta), shape (1, C)
        "g1": 1.0 + 0.1 * jax.random.normal(ks[4], (1, out_channel), jnp.float32),
        "b1": 0.1 * jax.random.normal(ks[5], (1, out_channel), jnp.float32),
        "g2": 1.0 + 0.1 * jax.random.normal(ks[6], (1, out_channel), jnp.float32),
        "b2": 0.1 * jax.random.normal(ks[7], (1, out_channel), jnp.float32),
        "g3": 1.0 + 0.1 * jax.random.normal(ks[8], (1, cout), jnp.float32),
        "b3": 0.1 * jax.random.normal(ks[9], (1, cout), jnp.float32),
        "gd": 1.0 + 0.1 * jax.random.normal(ks[10], (1, cout), jnp.float32),
        "bd": 0.1 * jax.random.normal(ks[11], (1, cout), jnp.float32),
    }


if __name__ == "__main__":
    # NOTE: shapes are intentionally tiny; real ResNet channel counts (multiples of
    # 64/128) are what the tiling above is sized for.
    key = jax.random.PRNGKey(0)
    k_x1, k_p1, k_x2, k_p2, k_x3, k_p3 = jax.random.split(key, 6)
    H = W = 16

    # ---- Config 1: projection shortcut (cin != cout*4), stride 1 ---------------------
    x1 = jax.random.normal(k_x1, (2, 4, H, W), jnp.float32)
    p1 = make_params(k_p1, 4, 4)
    out1 = jax.block_until_ready(
        jax.jit(functools.partial(bottleneck_forward, stride=1))(x1, p1))
    ref1 = reference_forward(x1, p1, stride=1)
    assert out1.shape == (2, 16, H, W), out1.shape
    assert jnp.allclose(out1, ref1, atol=5e-2, rtol=5e-2), \
        float(jnp.max(jnp.abs(out1 - ref1)))

    # ---- Config 2: identity shortcut (cin == cout*4), stride 1 -----------------------
    x2 = jax.random.normal(k_x2, (2, 16, H, W), jnp.float32)
    p2 = make_params(k_p2, 16, 4)
    out2 = jax.block_until_ready(
        jax.jit(functools.partial(bottleneck_forward, stride=1))(x2, p2))
    ref2 = reference_forward(x2, p2, stride=1)
    assert out2.shape == (2, 16, H, W), out2.shape
    assert jnp.allclose(out2, ref2, atol=5e-2, rtol=5e-2), \
        float(jnp.max(jnp.abs(out2 - ref2)))

    # ---- Config 3: stride-2 block with projection shortcut (layer transition) --------
    x3 = jax.random.normal(k_x3, (2, 8, H, W), jnp.float32)
    p3 = make_params(k_p3, 8, 4)
    out3 = jax.block_until_ready(
        jax.jit(functools.partial(bottleneck_forward, stride=2, tile_ho=4))(x3, p3))
    ref3 = reference_forward(x3, p3, stride=2)
    assert out3.shape == (2, 16, H // 2, W // 2), out3.shape
    assert jnp.allclose(out3, ref3, atol=5e-2, rtol=5e-2), \
        float(jnp.max(jnp.abs(out3 - ref3)))

    print("KERNEL_OK")
</pallas_src>

<mosaic_0001>
module attributes {stable_mosaic.version = 11 : i64} {
  func.func @dual_conv1x1_stats_kernel(%arg0: i32, %arg1: memref<512x4xbf16, #tpu.memory_space<vmem>>, %arg2: memref<4x4xbf16, #tpu.memory_space<vmem>>, %arg3: memref<4x16xbf16, #tpu.memory_space<vmem>>, %arg4: memref<512x4xbf16, #tpu.memory_space<vmem>>, %arg5: memref<512x16xbf16, #tpu.memory_space<vmem>>, %arg6: memref<1x1x4xf32, #tpu.memory_space<vmem>>, %arg7: memref<1x1x4xf32, #tpu.memory_space<vmem>>, %arg8: memref<1x1x16xf32, #tpu.memory_space<vmem>>, %arg9: memref<1x1x16xf32, #tpu.memory_space<vmem>>) attributes {dimension_semantics = [#tpu.dimension_semantics<parallel>], iteration_bounds = array<i64: 1>, scalar_prefetch = 0 : i64, scratch_operands = 0 : i64, tpu.core_type = #tpu.core_type<tc>, window_params = [{transform_indices = @transform_0, window_bounds = array<i64: 512, 4>}, {pipeline_mode = #tpu.pipeline_mode<synchronous>, transform_indices = @transform_1, window_bounds = array<i64: 4, 4>}, {pipeline_mode = #tpu.pipeline_mode<synchronous>, transform_indices = @transform_2, window_bounds = array<i64: 4, 16>}, {transform_indices = @transform_3, window_bounds = array<i64: 512, 4>}, {transform_indices = @transform_4, window_bounds = array<i64: 512, 16>}, {transform_indices = @transform_5, window_bounds = array<i64: 1, 1, 4>}, {transform_indices = @transform_6, window_bounds = array<i64: 1, 1, 4>}, {transform_indices = @transform_7, window_bounds = array<i64: 1, 1, 16>}, {transform_indices = @transform_8, window_bounds = array<i64: 1, 1, 16>}]} {
    %c0 = arith.constant 0 : index
    %c0_0 = arith.constant 0 : index
    %0 = vector.load %arg1[%c0, %c0_0] : memref<512x4xbf16, #tpu.memory_space<vmem>>, vector<512x4xbf16>
    %c0_1 = arith.constant 0 : index
    %c0_2 = arith.constant 0 : index
    %1 = vector.load %arg2[%c0_1, %c0_2] : memref<4x4xbf16, #tpu.memory_space<vmem>>, vector<4x4xbf16>
    %cst = arith.constant dense<0.000000e+00> : vector<512x4xf32>
    %2 = tpu.matmul %0, %1, %cst {dimension_numbers = #tpu.dot_dimension_numbers<[1], [0], [0], [1], [0, 0, 1, 1], [], []>} : vector<512x4xbf16>, vector<4x4xbf16>, vector<512x4xf32> -> vector<512x4xf32>
    %3 = arith.truncf %2 : vector<512x4xf32> to vector<512x4xbf16>
    %c0_3 = arith.constant 0 : index
    %c0_4 = arith.constant 0 : index
    %4 = vector.load %arg4[%c0_3, %c0_4] : memref<512x4xbf16, #tpu.memory_space<vmem>>, vector<512x4xbf16>
    tpu.vector_store %arg4[%c0_3, %c0_4], %3 {strides = array<i32>} : memref<512x4xbf16, #tpu.memory_space<vmem>>, vector<512x4xbf16>,
    %cst_5 = arith.constant dense<0.000000e+00> : vector<4xf32>
    %5 = vector.multi_reduction <add>, %2, %cst_5 [0] : vector<512x4xf32> to vector<4xf32>
    %6 = vector.shape_cast %5 : vector<4xf32> to vector<1x4xf32>
    %c0_6 = arith.constant 0 : index
    %c0_7 = arith.constant 0 : index
    %c0_8 = arith.constant 0 : index
    %7 = vector.load %arg6[%c0_6, %c0_7, %c0_8] : memref<1x1x4xf32, #tpu.memory_space<vmem>>, vector<1x1x4xf32>
    %8 = vector.shape_cast %7 : vector<1x1x4xf32> to vector<1x4xf32>
    %9 = vector.shape_cast %6 : vector<1x4xf32> to vector<1x1x4xf32>
    tpu.vector_store %arg6[%c0_6, %c0_7, %c0_8], %9 {strides = array<i32>} : memref<1x1x4xf32, #tpu.memory_space<vmem>>, vector<1x1x4xf32>,
    %10 = arith.mulf %2, %2 : vector<512x4xf32>
    %cst_9 = arith.constant dense<0.000000e+00> : vector<4xf32>
    %11 = vector.multi_reduction <add>, %10, %cst_9 [0] : vector<512x4xf32> to vector<4xf32>
    %12 = vector.shape_cast %11 : vector<4xf32> to vector<1x4xf32>
    %c0_10 = arith.constant 0 : index
    %c0_11 = arith.constant 0 : index
    %c0_12 = arith.constant 0 : index
    %13 = vector.load %arg7[%c0_10, %c0_11, %c0_12] : memref<1x1x4xf32, #tpu.memory_space<vmem>>, vector<1x1x4xf32>
    %14 = vector.shape_cast %13 : vector<1x1x4xf32> to vector<1x4xf32>
    %15 = vector.shape_cast %12 : vector<1x4xf32> to vector<1x1x4xf32>
    tpu.vector_store %arg7[%c0_10, %c0_11, %c0_12], %15 {strides = array<i32>} : memref<1x1x4xf32, #tpu.memory_space<vmem>>, vector<1x1x4xf32>,
    %c0_13 = arith.constant 0 : index
    %c0_14 = arith.constant 0 : index
    %16 = vector.load %arg3[%c0_13, %c0_14] : memref<4x16xbf16, #tpu.memory_space<vmem>>, vector<4x16xbf16>
    %cst_15 = arith.constant dense<0.000000e+00> : vector<512x16xf32>
    %17 = tpu.matmul %0, %16, %cst_15 {dimension_numbers = #tpu.dot_dimension_numbers<[1], [0], [0], [1], [0, 0, 1, 1], [], []>} : vector<512x4xbf16>, vector<4x16xbf16>, vector<512x16xf32> -> vector<512x16xf32>
    %18 = arith.truncf %17 : vector<512x16xf32> to vector<512x16xbf16>
    %c0_16 = arith.constant 0 : index
    %c0_17 = arith.constant 0 : index
    %19 = vector.load %arg5[%c0_16, %c0_17] : memref<512x16xbf16, #tpu.memory_space<vmem>>, vector<512x16xbf16>
    tpu.vector_store %arg5[%c0_16, %c0_17], %18 {strides = array<i32>} : memref<512x16xbf16, #tpu.memory_space<vmem>>, vector<512x16xbf16>,
    %cst_18 = arith.constant dense<0.000000e+00> : vector<16xf32>
    %20 = vector.multi_reduction <add>, %17, %cst_18 [0] : vector<512x16xf32> to vector<16xf32>
    %21 = vector.shape_cast %20 : vector<16xf32> to vector<1x16xf32>
    %c0_19 = arith.constant 0 : index
    %c0_20 = arith.constant 0 : index
    %c0_21 = arith.constant 0 : index
    %22 = vector.load %arg8[%c0_19, %c0_20, %c0_21] : memref<1x1x16xf32, #tpu.memory_space<vmem>>, vector<1x1x16xf32>
    %23 = vector.shape_cast %22 : vector<1x1x16xf32> to vector<1x16xf32>
    %24 = vector.shape_cast %21 : vector<1x16xf32> to vector<1x1x16xf32>
    tpu.vector_store %arg8[%c0_19, %c0_20, %c0_21], %24 {strides = array<i32>} : memref<1x1x16xf32, #tpu.memory_space<vmem>>, vector<1x1x16xf32>,
    %25 = arith.mulf %17, %17 : vector<512x16xf32>
    %cst_22 = arith.constant dense<0.000000e+00> : vector<16xf32>
    %26 = vector.multi_reduction <add>, %25, %cst_22 [0] : vector<512x16xf32> to vector<16xf32>
    %27 = vector.shape_cast %26 : vector<16xf32> to vector<1x16xf32>
    %c0_23 = arith.constant 0 : index
    %c0_24 = arith.constant 0 : index
    %c0_25 = arith.constant 0 : index
    %28 = vector.load %arg9[%c0_23, %c0_24, %c0_25] : memref<1x1x16xf32, #tpu.memory_space<vmem>>, vector<1x1x16xf32>
    %29 = vector.shape_cast %28 : vector<1x1x16xf32> to vector<1x16xf32>
    %30 = vector.shape_cast %27 : vector<1x16xf32> to vector<1x1x16xf32>
    tpu.vector_store %arg9[%c0_23, %c0_24, %c0_25], %30 {strides = array<i32>} : memref<1x1x16xf32, #tpu.memory_space<vmem>>, vector<1x1x16xf32>,
    return
  }
  func.func @transform_0(%arg0: i32) -> (i32, i32) {
    %c0_i32 = arith.constant 0 : i32
    %c0_i32_0 = arith.constant 0 : i32
    return %arg0, %c0_i32 : i32, i32
  }
  func.func @transform_1(%arg0: i32) -> (i32, i32) {
    %c0_i32 = arith.constant 0 : i32
    %c0_i32_0 = arith.constant 0 : i32
    %c0_i32_1 = arith.constant 0 : i32
    return %c0_i32, %c0_i32_0 : i32, i32
  }
  func.func @transform_2(%arg0: i32) -> (i32, i32) {
    %c0_i32 = arith.constant 0 : i32
    %c0_i32_0 = arith.constant 0 : i32
    %c0_i32_1 = arith.constant 0 : i32
    return %c0_i32, %c0_i32_0 : i32, i32
  }
  func.func @transform_3(%arg0: i32) -> (i32, i32) {
    %c0_i32 = arith.constant 0 : i32
    %c0_i32_0 = arith.constant 0 : i32
    return %arg0, %c0_i32 : i32, i32
  }
  func.func @transform_4(%arg0: i32) -> (i32, i32) {
    %c0_i32 = arith.constant 0 : i32
    %c0_i32_0 = arith.constant 0 : i32
    return %arg0, %c0_i32 : i32, i32
  }
  func.func @transform_5(%arg0: i32) -> (i32, i32, i32) {
    %c0_i32 = arith.constant 0 : i32
    %c0_i32_0 = arith.constant 0 : i32
    %c0_i32_1 = arith.constant 0 : i32
    return %arg0, %c0_i32, %c0_i32_0 : i32, i32, i32
  }
  func.func @transform_6(%arg0: i32) -> (i32, i32, i32) {
    %c0_i32 = arith.constant 0 : i32
    %c0_i32_0 = arith.constant 0 : i32
    %c0_i32_1 = arith.constant 0 : i32
    return %arg0, %c0_i32, %c0_i32_0 : i32, i32, i32
  }
  func.func @transform_7(%arg0: i32) -> (i32, i32, i32) {
    %c0_i32 = arith.constant 0 : i32
    %c0_i32_0 = arith.constant 0 : i32
    %c0_i32_1 = arith.constant 0 : i32
    return %arg0, %c0_i32, %c0_i32_0 : i32, i32, i32
  }
  func.func @transform_8(%arg0: i32) -> (i32, i32, i32) {
    %c0_i32 = arith.constant 0 : i32
    %c0_i32_0 = arith.constant 0 : i32
    %c0_i32_1 = arith.constant 0 : i32
    return %arg0, %c0_i32, %c0_i32_0 : i32, i32, i32
  }
}

module attributes {stable_mosaic.version = 11 : i64} {
  func.func @conv3x3_stats_kernel(%arg0: i32, %arg1: i32, %arg2: memref<1x16x16x4xbf16, #tpu.memory_space<vmem>>, %arg3: memref<1x4xf32, #tpu.memory_space<vmem>>, %arg4: memref<1x4xf32, #tpu.memory_space<vmem>>, %arg5: memref<36x4xbf16, #tpu.memory_space<vmem>>, %arg6: memref<1x8x16x4xbf16, #tpu.memory_space<vmem>>, %arg7: memref<1x1x1x4xf32, #tpu.memory_space<vmem>>, %arg8: memref<1x1x1x4xf32, #tpu.memory_space<vmem>>, %arg9: memref<10x18x4xbf16, #tpu.memory_space<vmem>>) attributes {dimension_semantics = [#tpu.dimension_semantics<parallel>, #tpu.dimension_semantics<parallel>], iteration_bounds = array<i64: 2, 2>, scalar_prefetch = 0 : i64, scratch_operands = 1 : i64, tpu.core_type = #tpu.core_type<tc>, window_params = [{transform_indices = @transform_0, window_bounds = array<i64: 1, 16, 16, 4>}, {pipeline_mode = #tpu.pipeline_mode<synchronous>, transform_indices = @transform_1, window_bounds = array<i64: 1, 4>}, {pipeline_mode = #tpu.pipeline_mode<synchronous>, transform_indices = @transform_2, window_bounds = array<i64: 1, 4>}, {pipeline_mode = #tpu.pipeline_mode<synchronous>, transform_indices = @transform_3, window_bounds = array<i64: 36, 4>}, {transform_indices = @transform_4, window_bounds = array<i64: 1, 8, 16, 4>}, {transform_indices = @transform_5, window_bounds = array<i64: 1, 1, 1, 4>}, {transform_indices = @transform_6, window_bounds = array<i64: 1, 1, 1, 4>}]} {
    %c0 = arith.constant 0 : index
    %c0_0 = arith.constant 0 : index
    %0 = vector.load %arg3[%c0, %c0_0] : memref<1x4xf32, #tpu.memory_space<vmem>>, vector<1x4xf32>
    %1 = vector.shape_cast %0 : vector<1x4xf32> to vector<1x1x4xf32>
    %c0_1 = arith.constant 0 : index
    %c0_2 = arith.constant 0 : index
    %2 = vector.load %arg4[%c0_1, %c0_2] : memref<1x4xf32, #tpu.memory_space<vmem>>, vector<1x4xf32>
    %3 = vector.shape_cast %2 : vector<1x4xf32> to vector<1x1x4xf32>
    %cst = arith.constant 0.000000e+00 : bf16
    %4 = vector.broadcast %cst : bf16 to vector<10x1x4xbf16>
    %c0_3 = arith.constant 0 : index
    %c0_4 = arith.constant 0 : index
    %c0_5 = arith.constant 0 : index
    %5 = vector.load %arg9[%c0_3, %c0_4, %c0_5] : memref<10x18x4xbf16, #tpu.memory_space<vmem>>, vector<10x1x4xbf16>
    tpu.vector_store %arg9[%c0_3, %c0_4, %c0_5], %4 {strides = array<i32>} : memref<10x18x4xbf16, #tpu.memory_space<vmem>>, vector<10x1x4xbf16>,
    %c0_6 = arith.constant 0 : index
    %c17 = arith.constant 17 : index
    %c0_7 = arith.constant 0 : index
    %6 = vector.load %arg9[%c0_6, %c17, %c0_7] : memref<10x18x4xbf16, #tpu.memory_space<vmem>>, vector<10x1x4xbf16>
    tpu.vector_store %arg9[%c0_6, %c17, %c0_7], %4 {strides = array<i32>} : memref<10x18x4xbf16, #tpu.memory_space<vmem>>, vector<10x1x4xbf16>,
    %c8_i32 = arith.constant 8 : i32
    %7 = arith.muli %arg1, %c8_i32 : i32
    %c1_i32 = arith.constant 1 : i32
    %8 = arith.muli %7, %c1_i32 : i32
    %c1_i32_8 = arith.constant 1 : i32
    %9 = arith.subi %8, %c1_i32_8 : i32
    %c1_i32_9 = arith.constant 1 : i32
    %10 = arith.addi %9, %c1_i32_9 : i32
    %c0_10 = arith.constant 0 : index
    %11 = arith.index_cast %10 : i32 to index
    %c0_11 = arith.constant 0 : index
    %c0_12 = arith.constant 0 : index
    %12 = vector.load %arg2[%c0_10, %11, %c0_11, %c0_12] : memref<1x16x16x4xbf16, #tpu.memory_space<vmem>>, vector<1x8x16x4xbf16>
    %13 = vector.shape_cast %12 : vector<1x8x16x4xbf16> to vector<8x16x4xbf16>
    %14 = arith.extf %13 : vector<8x16x4xbf16> to vector<8x16x4xf32>
    %15 = vector.broadcast %1 : vector<1x1x4xf32> to vector<8x16x4xf32>
    %16 = arith.mulf %14, %15 : vector<8x16x4xf32>
    %17 = vector.broadcast %3 : vector<1x1x4xf32> to vector<8x16x4xf32>
    %18 = arith.addf %16, %17 : vector<8x16x4xf32>
    %cst_13 = arith.constant 0.000000e+00 : f32
    %19 = vector.broadcast %cst_13 : f32 to vector<8x16x4xf32>
    %20 = arith.maximumf %18, %19 : vector<8x16x4xf32>
    %21 = arith.truncf %20 : vector<8x16x4xf32> to vector<8x16x4xbf16>
    %c1 = arith.constant 1 : index
    %c1_14 = arith.constant 1 : index
    %c0_15 = arith.constant 0 : index
    %22 = vector.load %arg9[%c1, %c1_14, %c0_15] : memref<10x18x4xbf16, #tpu.memory_space<vmem>>, vector<8x16x4xbf16>
    tpu.vector_store %arg9[%c1, %c1_14, %c0_15], %21 {strides = array<i32>} : memref<10x18x4xbf16, #tpu.memory_space<vmem>>, vector<8x16x4xbf16>,
    %cst_16 = arith.constant 0.000000e+00 : bf16
    %23 = vector.broadcast %cst_16 : bf16 to vector<1x18x4xbf16>
    %c0_i32 = arith.constant 0 : i32
    %24 = arith.cmpi eq, %arg1, %c0_i32 : i32
    %25 = arith.extui %24 : i1 to i32
    %c0_i32_17 = arith.constant 0 : i32
    %26 = arith.cmpi ne, %25, %c0_i32_17 : i32
    scf.if %26 {
      %c0_67 = arith.constant 0 : index
      %c0_68 = arith.constant 0 : index
      %c0_69 = arith.constant 0 : index
      %67 = vector.load %arg9[%c0_67, %c0_68, %c0_69] : memref<10x18x4xbf16, #tpu.memory_space<vmem>>, vector<1x18x4xbf16>
      tpu.vector_store %arg9[%c0_67, %c0_68, %c0_69], %23 {strides = array<i32>} : memref<10x18x4xbf16, #tpu.memory_space<vmem>>, vector<1x18x4xbf16>,
    } else {
    }
    %c0_i32_18 = arith.constant 0 : i32
    %27 = arith.cmpi sgt, %arg1, %c0_i32_18 : i32
    %28 = arith.extui %27 : i1 to i32
    %c0_i32_19 = arith.constant 0 : i32
    %29 = arith.cmpi ne, %28, %c0_i32_19 : i32
    scf.if %29 {
      %c0_67 = arith.constant 0 : index
      %67 = arith.index_cast %9 : i32 to index
      %c0_68 = arith.constant 0 : index
      %c0_69 = arith.constant 0 : index
      %68 = vector.load %arg2[%c0_67, %67, %c0_68, %c0_69] : memref<1x16x16x4xbf16, #tpu.memory_space<vmem>>, vector<1x1x16x4xbf16>
      %69 = vector.shape_cast %68 : vector<1x1x16x4xbf16> to vector<1x16x4xbf16>
      %70 = arith.extf %69 : vector<1x16x4xbf16> to vector<1x16x4xf32>
      %71 = vector.broadcast %1 : vector<1x1x4xf32> to vector<1x16x4xf32>
      %72 = arith.mulf %70, %71 : vector<1x16x4xf32>
      %73 = vector.broadcast %3 : vector<1x1x4xf32> to vector<1x16x4xf32>
      %74 = arith.addf %72, %73 : vector<1x16x4xf32>
      %cst_70 = arith.constant 0.000000e+00 : f32
      %75 = vector.broadcast %cst_70 : f32 to vector<1x16x4xf32>
      %76 = arith.maximumf %74, %75 : vector<1x16x4xf32>
      %77 = arith.truncf %76 : vector<1x16x4xf32> to vector<1x16x4xbf16>
      %c0_71 = arith.constant 0 : index
      %c1_72 = arith.constant 1 : index
      %c0_73 = arith.constant 0 : index
      %78 = vector.load %arg9[%c0_71, %c1_72, %c0_73] : memref<10x18x4xbf16, #tpu.memory_space<vmem>>, vector<1x16x4xbf16>
      tpu.vector_store %arg9[%c0_71, %c1_72, %c0_73], %77 {strides = array<i32>} : memref<10x18x4xbf16, #tpu.memory_space<vmem>>, vector<1x16x4xbf16>,
    } else {
    }
    %c10_i32 = arith.constant 10 : i32
    %30 = arith.addi %9, %c10_i32 : i32
    %c1_i32_20 = arith.constant 1 : i32
    %31 = arith.subi %30, %c1_i32_20 : i32
    %c16_i32 = arith.constant 16 : i32
    %32 = arith.cmpi slt, %31, %c16_i32 : i32
    %33 = arith.extui %32 : i1 to i32
    %c0_i32_21 = arith.constant 0 : i32
    %34 = arith.cmpi ne, %33, %c0_i32_21 : i32
    scf.if %34 {
      %c0_67 = arith.constant 0 : index
      %67 = arith.index_cast %31 : i32 to index
      %c0_68 = arith.constant 0 : index
      %c0_69 = arith.constant 0 : index
      %68 = vector.load %arg2[%c0_67, %67, %c0_68, %c0_69] : memref<1x16x16x4xbf16, #tpu.memory_space<vmem>>, vector<1x1x16x4xbf16>
      %69 = vector.shape_cast %68 : vector<1x1x16x4xbf16> to vector<1x16x4xbf16>
      %70 = arith.extf %69 : vector<1x16x4xbf16> to vector<1x16x4xf32>
      %71 = vector.broadcast %1 : vector<1x1x4xf32> to vector<1x16x4xf32>
      %72 = arith.mulf %70, %71 : vector<1x16x4xf32>
      %73 = vector.broadcast %3 : vector<1x1x4xf32> to vector<1x16x4xf32>
      %74 = arith.addf %72, %73 : vector<1x16x4xf32>
      %cst_70 = arith.constant 0.000000e+00 : f32
      %75 = vector.broadcast %cst_70 : f32 to vector<1x16x4xf32>
      %76 = arith.maximumf %74, %75 : vector<1x16x4xf32>
      %77 = arith.truncf %76 : vector<1x16x4xf32> to vector<1x16x4xbf16>
      %c9 = arith.constant 9 : index
      %c1_71 = arith.constant 1 : index
      %c0_72 = arith.constant 0 : index
      %78 = vector.load %arg9[%c9, %c1_71, %c0_72] : memref<10x18x4xbf16, #tpu.memory_space<vmem>>, vector<1x16x4xbf16>
      tpu.vector_store %arg9[%c9, %c1_71, %c0_72], %77 {strides = array<i32>} : memref<10x18x4xbf16, #tpu.memory_space<vmem>>, vector<1x16x4xbf16>,
    } else {
    }
    %c16_i32_22 = arith.constant 16 : i32
    %35 = arith.cmpi sge, %31, %c16_i32_22 : i32
    %36 = arith.extui %35 : i1 to i32
    %c0_i32_23 = arith.constant 0 : i32
    %37 = arith.cmpi ne, %36, %c0_i32_23 : i32
    scf.if %37 {
      %c9 = arith.constant 9 : index
      %c0_67 = arith.constant 0 : index
      %c0_68 = arith.constant 0 : index
      %67 = vector.load %arg9[%c9, %c0_67, %c0_68] : memref<10x18x4xbf16, #tpu.memory_space<vmem>>, vector<1x18x4xbf16>
      tpu.vector_store %arg9[%c9, %c0_67, %c0_68], %23 {strides = array<i32>} : memref<10x18x4xbf16, #tpu.memory_space<vmem>>, vector<1x18x4xbf16>,
    } else {
    }
    %c0_24 = arith.constant 0 : index
    %c0_25 = arith.constant 0 : index
    %c0_26 = arith.constant 0 : index
    %38 = vector.load %arg9[%c0_24, %c0_25, %c0_26] : memref<10x18x4xbf16, #tpu.memory_space<vmem>>, vector<8x16x4xbf16>
    %c0_27 = arith.constant 0 : index
    %c1_28 = arith.constant 1 : index
    %c0_29 = arith.constant 0 : index
    %39 = vector.load %arg9[%c0_27, %c1_28, %c0_29] : memref<10x18x4xbf16, #tpu.memory_space<vmem>>, vector<8x16x4xbf16>
    %c0_30 = arith.constant 0 : index
    %c2 = arith.constant 2 : index
    %c0_31 = arith.constant 0 : index
    %40 = vector.load %arg9[%c0_30, %c2, %c0_31] : memref<10x18x4xbf16, #tpu.memory_space<vmem>>, vector<8x16x4xbf16>
    %c1_32 = arith.constant 1 : index
    %c0_33 = arith.constant 0 : index
    %c0_34 = arith.constant 0 : index
    %41 = vector.load %arg9[%c1_32, %c0_33, %c0_34] : memref<10x18x4xbf16, #tpu.memory_space<vmem>>, vector<8x16x4xbf16>
    %c1_35 = arith.constant 1 : index
    %c1_36 = arith.constant 1 : index
    %c0_37 = arith.constant 0 : index
    %42 = vector.load %arg9[%c1_35, %c1_36, %c0_37] : memref<10x18x4xbf16, #tpu.memory_space<vmem>>, vector<8x16x4xbf16>
    %c1_38 = arith.constant 1 : index
    %c2_39 = arith.constant 2 : index
    %c0_40 = arith.constant 0 : index
    %43 = vector.load %arg9[%c1_38, %c2_39, %c0_40] : memref<10x18x4xbf16, #tpu.memory_space<vmem>>, vector<8x16x4xbf16>
    %c2_41 = arith.constant 2 : index
    %c0_42 = arith.constant 0 : index
    %c0_43 = arith.constant 0 : index
    %44 = vector.load %arg9[%c2_41, %c0_42, %c0_43] : memref<10x18x4xbf16, #tpu.memory_space<vmem>>, vector<8x16x4xbf16>
    %c2_44 = arith.constant 2 : index
    %c1_45 = arith.constant 1 : index
    %c0_46 = arith.constant 0 : index
    %45 = vector.load %arg9[%c2_44, %c1_45, %c0_46] : memref<10x18x4xbf16, #tpu.memory_space<vmem>>, vector<8x16x4xbf16>
    %c2_47 = arith.constant 2 : index
    %c2_48 = arith.constant 2 : index
    %c0_49 = arith.constant 0 : index
    %46 = vector.load %arg9[%c2_47, %c2_48, %c0_49] : memref<10x18x4xbf16, #tpu.memory_space<vmem>>, vector<8x16x4xbf16>
    %47 = tpu.concatenate %38, %39, %40, %41, %42, %43, %44, %45, %46 in 2 : vector<8x16x4xbf16>, vector<8x16x4xbf16>, vector<8x16x4xbf16>, vector<8x16x4xbf16>, vector<8x16x4xbf16>, vector<8x16x4xbf16>, vector<8x16x4xbf16>, vector<8x16x4xbf16>, vector<8x16x4xbf16> -> vector<8x16x36xbf16>
    %48 = vector.shape_cast %47 : vector<8x16x36xbf16> to vector<128x36xbf16>
    %c0_50 = arith.constant 0 : index
    %c0_51 = arith.constant 0 : index
    %49 = vector.load %arg5[%c0_50, %c0_51] : memref<36x4xbf16, #tpu.memory_space<vmem>>, vector<36x4xbf16>
    %cst_52 = arith.constant dense<0.000000e+00> : vector<128x4xf32>
    %50 = tpu.matmul %48, %49, %cst_52 {dimension_numbers = #tpu.dot_dimension_numbers<[1], [0], [0], [1], [0, 0, 1, 1], [], []>} : vector<128x36xbf16>, vector<36x4xbf16>, vector<128x4xf32> -> vector<128x4xf32>
    %51 = vector.shape_cast %50 : vector<128x4xf32> to vector<8x16x4xf32>
    %52 = arith.truncf %51 : vector<8x16x4xf32> to vector<8x16x4xbf16>
    %c0_53 = arith.constant 0 : index
    %c0_54 = arith.constant 0 : index
    %c0_55 = arith.constant 0 : index
    %c0_56 = arith.constant 0 : index
    %53 = vector.load %arg6[%c0_53, %c0_54, %c0_55, %c0_56] : memref<1x8x16x4xbf16, #tpu.memory_space<vmem>>, vector<1x8x16x4xbf16>
    %54 = vector.shape_cast %53 : vector<1x8x16x4xbf16> to vector<8x16x4xbf16>
    %55 = vector.shape_cast %52 : vector<8x16x4xbf16> to vector<1x8x16x4xbf16>
    tpu.vector_store %arg6[%c0_53, %c0_54, %c0_55, %c0_56], %55 {strides = array<i32>} : memref<1x8x16x4xbf16, #tpu.memory_space<vmem>>, vector<1x8x16x4xbf16>,
    %cst_57 = arith.constant dense<0.000000e+00> : vector<4xf32>
    %56 = vector.multi_reduction <add>, %50, %cst_57 [0] : vector<128x4xf32> to vector<4xf32>
    %57 = vector.shape_cast %56 : vector<4xf32> to vector<1x4xf32>
    %c0_58 = arith.constant 0 : index
    %c0_59 = arith.constant 0 : index
    %c0_60 = arith.constant 0 : index
    %c0_61 = arith.constant 0 : index
    %58 = vector.load %arg7[%c0_58, %c0_59, %c0_60, %c0_61] : memref<1x1x1x4xf32, #tpu.memory_space<vmem>>, vector<1x1x1x4xf32>
    %59 = vector.shape_cast %58 : vector<1x1x1x4xf32> to vector<1x4xf32>
    %60 = vector.shape_cast %57 : vector<1x4xf32> to vector<1x1x1x4xf32>
    tpu.vector_store %arg7[%c0_58, %c0_59, %c0_60, %c0_61], %60 {strides = array<i32>} : memref<1x1x1x4xf32, #tpu.memory_space<vmem>>, vector<1x1x1x4xf32>,
    %61 = arith.mulf %50, %50 : vector<128x4xf32>
    %cst_62 = arith.constant dense<0.000000e+00> : vector<4xf32>
    %62 = vector.multi_reduction <add>, %61, %cst_62 [0] : vector<128x4xf32> to vector<4xf32>
    %63 = vector.shape_cast %62 : vector<4xf32> to vector<1x4xf32>
    %c0_63 = arith.constant 0 : index
    %c0_64 = arith.constant 0 : index
    %c0_65 = arith.constant 0 : index
    %c0_66 = arith.constant 0 : index
    %64 = vector.load %arg8[%c0_63, %c0_64, %c0_65, %c0_66] : memref<1x1x1x4xf32, #tpu.memory_space<vmem>>, vector<1x1x1x4xf32>
    %65 = vector.shape_cast %64 : vector<1x1x1x4xf32> to vector<1x4xf32>
    %66 = vector.shape_cast %63 : vector<1x4xf32> to vector<1x1x1x4xf32>
    tpu.vector_store %arg8[%c0_63, %c0_64, %c0_65, %c0_66], %66 {strides = array<i32>} : memref<1x1x1x4xf32, #tpu.memory_space<vmem>>, vector<1x1x1x4xf32>,
    return
  }
  func.func @transform_0(%arg0: i32, %arg1: i32) -> (i32, i32, i32, i32) {
    %c0_i32 = arith.constant 0 : i32
    %c0_i32_0 = arith.constant 0 : i32
    %c0_i32_1 = arith.constant 0 : i32
    %c0_i32_2 = arith.constant 0 : i32
    return %arg0, %c0_i32, %c0_i32_0, %c0_i32_1 : i32, i32, i32, i32
  }
  func.func @transform_1(%arg0: i32, %arg1: i32) -> (i32, i32) {
    %c0_i32 = arith.constant 0 : i32
    %c0_i32_0 = arith.constant 0 : i32
    %c0_i32_1 = arith.constant 0 : i32
    return %c0_i32, %c0_i32_0 : i32, i32
  }
  func.func @transform_2(%arg0: i32, %arg1: i32) -> (i32, i32) {
    %c0_i32 = arith.constant 0 : i32
    %c0_i32_0 = arith.constant 0 : i32
    %c0_i32_1 = arith.constant 0 : i32
    return %c0_i32, %c0_i32_0 : i32, i32
  }
  func.func @transform_3(%arg0: i32, %arg1: i32) -> (i32, i32) {
    %c0_i32 = arith.constant 0 : i32
    %c0_i32_0 = arith.constant 0 : i32
    %c0_i32_1 = arith.constant 0 : i32
    return %c0_i32, %c0_i32_0 : i32, i32
  }
  func.func @transform_4(%arg0: i32, %arg1: i32) -> (i32, i32, i32, i32) {
    %c0_i32 = arith.constant 0 : i32
    %c0_i32_0 = arith.constant 0 : i32
    %c0_i32_1 = arith.constant 0 : i32
    return %arg0, %arg1, %c0_i32, %c0_i32_0 : i32, i32, i32, i32
  }
  func.func @transform_5(%arg0: i32, %arg1: i32) -> (i32, i32, i32, i32) {
    %c0_i32 = arith.constant 0 : i32
    %c0_i32_0 = arith.constant 0 : i32
    %c0_i32_1 = arith.constant 0 : i32
    return %arg0, %arg1, %c0_i32, %c0_i32_0 : i32, i32, i32, i32
  }
  func.func @transform_6(%arg0: i32, %arg1: i32) -> (i32, i32, i32, i32) {
    %c0_i32 = arith.constant 0 : i32
    %c0_i32_0 = arith.constant 0 : i32
    %c0_i32_1 = arith.constant 0 : i32
    return %arg0, %arg1, %c0_i32, %c0_i32_0 : i32, i32, i32, i32
  }
}

module attributes {stable_mosaic.version = 11 : i64} {
  func.func @bn_relu_conv1x1_stats_kernel(%arg0: i32, %arg1: memref<512x4xbf16, #tpu.memory_space<vmem>>, %arg2: memref<1x4xf32, #tpu.memory_space<vmem>>, %arg3: memref<1x4xf32, #tpu.memory_space<vmem>>, %arg4: memref<4x16xbf16, #tpu.memory_space<vmem>>, %arg5: memref<512x16xbf16, #tpu.memory_space<vmem>>, %arg6: memref<1x1x16xf32, #tpu.memory_space<vmem>>, %arg7: memref<1x1x16xf32, #tpu.memory_space<vmem>>) attributes {dimension_semantics = [#tpu.dimension_semantics<parallel>], iteration_bounds = array<i64: 1>, scalar_prefetch = 0 : i64, scratch_operands = 0 : i64, tpu.core_type = #tpu.core_type<tc>, window_params = [{transform_indices = @transform_0, window_bounds = array<i64: 512, 4>}, {pipeline_mode = #tpu.pipeline_mode<synchronous>, transform_indices = @transform_1, window_bounds = array<i64: 1, 4>}, {pipeline_mode = #tpu.pipeline_mode<synchronous>, transform_indices = @transform_2, window_bounds = array<i64: 1, 4>}, {pipeline_mode = #tpu.pipeline_mode<synchronous>, transform_indices = @transform_3, window_bounds = array<i64: 4, 16>}, {transform_indices = @transform_4, window_bounds = array<i64: 512, 16>}, {transform_indices = @transform_5, window_bounds = array<i64: 1, 1, 16>}, {transform_indices = @transform_6, window_bounds = array<i64: 1, 1, 16>}]} {
    %c0 = arith.constant 0 : index
    %c0_0 = arith.constant 0 : index
    %0 = vector.load %arg1[%c0, %c0_0] : memref<512x4xbf16, #tpu.memory_space<vmem>>, vector<512x4xbf16>
    %1 = arith.extf %0 : vector<512x4xbf16> to vector<512x4xf32>
    %c0_1 = arith.constant 0 : index
    %c0_2 = arith.constant 0 : index
    %2 = vector.load %arg2[%c0_1, %c0_2] : memref<1x4xf32, #tpu.memory_space<vmem>>, vector<1x4xf32>
    %3 = vector.broadcast %2 : vector<1x4xf32> to vector<512x4xf32>
    %4 = arith.mulf %1, %3 : vector<512x4xf32>
    %c0_3 = arith.constant 0 : index
    %c0_4 = arith.constant 0 : index
    %5 = vector.load %arg3[%c0_3, %c0_4] : memref<1x4xf32, #tpu.memory_space<vmem>>, vector<1x4xf32>
    %6 = vector.broadcast %5 : vector<1x4xf32> to vector<512x4xf32>
    %7 = arith.addf %4, %6 : vector<512x4xf32>
    %cst = arith.constant 0.000000e+00 : f32
    %8 = vector.broadcast %cst : f32 to vector<512x4xf32>
    %9 = arith.maximumf %7, %8 : vector<512x4xf32>
    %10 = arith.truncf %9 : vector<512x4xf32> to vector<512x4xbf16>
    %c0_5 = arith.constant 0 : index
    %c0_6 = arith.constant 0 : index
    %11 = vector.load %arg4[%c0_5, %c0_6] : memref<4x16xbf16, #tpu.memory_space<vmem>>, vector<4x16xbf16>
    %cst_7 = arith.constant dense<0.000000e+00> : vector<512x16xf32>
    %12 = tpu.matmul %10, %11, %cst_7 {dimension_numbers = #tpu.dot_dimension_numbers<[1], [0], [0], [1], [0, 0, 1, 1], [], []>} : vector<512x4xbf16>, vector<4x16xbf16>, vector<512x16xf32> -> vector<512x16xf32>
    %13 = arith.truncf %12 : vector<512x16xf32> to vector<512x16xbf16>
    %c0_8 = arith.constant 0 : index
    %c0_9 = arith.constant 0 : index
    %14 = vector.load %arg5[%c0_8, %c0_9] : memref<512x16xbf16, #tpu.memory_space<vmem>>, vector<512x16xbf16>
    tpu.vector_store %arg5[%c0_8, %c0_9], %13 {strides = array<i32>} : memref<512x16xbf16, #tpu.memory_space<vmem>>, vector<512x16xbf16>,
    %cst_10 = arith.constant dense<0.000000e+00> : vector<16xf32>
    %15 = vector.multi_reduction <add>, %12, %cst_10 [0] : vector<512x16xf32> to vector<16xf32>
    %16 = vector.shape_cast %15 : vector<16xf32> to vector<1x16xf32>
    %c0_11 = arith.constant 0 : index
    %c0_12 = arith.constant 0 : index
    %c0_13 = arith.constant 0 : index
    %17 = vector.load %arg6[%c0_11, %c0_12, %c0_13] : memref<1x1x16xf32, #tpu.memory_space<vmem>>, vector<1x1x16xf32>
    %18 = vector.shape_cast %17 : vector<1x1x16xf32> to vector<1x16xf32>
    %19 = vector.shape_cast %16 : vector<1x16xf32> to vector<1x1x16xf32>
    tpu.vector_store %arg6[%c0_11, %c0_12, %c0_13], %19 {strides = array<i32>} : memref<1x1x16xf32, #tpu.memory_space<vmem>>, vector<1x1x16xf32>,
    %20 = arith.mulf %12, %12 : vector<512x16xf32>
    %cst_14 = arith.constant dense<0.000000e+00> : vector<16xf32>
    %21 = vector.multi_reduction <add>, %20, %cst_14 [0] : vector<512x16xf32> to vector<16xf32>
    %22 = vector.shape_cast %21 : vector<16xf32> to vector<1x16xf32>
    %c0_15 = arith.constant 0 : index
    %c0_16 = arith.constant 0 : index
    %c0_17 = arith.constant 0 : index
    %23 = vector.load %arg7[%c0_15, %c0_16, %c0_17] : memref<1x1x16xf32, #tpu.memory_space<vmem>>, vector<1x1x16xf32>
    %24 = vector.shape_cast %23 : vector<1x1x16xf32> to vector<1x16xf32>
    %25 = vector.shape_cast %22 : vector<1x16xf32> to vector<1x1x16xf32>
    tpu.vector_store %arg7[%c0_15, %c0_16, %c0_17], %25 {strides = array<i32>} : memref<1x1x16xf32, #tpu.memory_space<vmem>>, vector<1x1x16xf32>,
    return
  }
  func.func @transform_0(%arg0: i32) -> (i32, i32) {
    %c0_i32 = arith.constant 0 : i32
    %c0_i32_0 = arith.constant 0 : i32
    return %arg0, %c0_i32 : i32, i32
  }
  func.func @transform_1(%arg0: i32) -> (i32, i32) {
    %c0_i32 = arith.constant 0 : i32
    %c0_i32_0 = arith.constant 0 : i32
    %c0_i32_1 = arith.constant 0 : i32
    return %c0_i32, %c0_i32_0 : i32, i32
  }
  func.func @transform_2(%arg0: i32) -> (i32, i32) {
    %c0_i32 = arith.constant 0 : i32
    %c0_i32_0 = arith.constant 0 : i32
    %c0_i32_1 = arith.constant 0 : i32
    return %c0_i32, %c0_i32_0 : i32, i32
  }
  func.func @transform_3(%arg0: i32) -> (i32, i32) {
    %c0_i32 = arith.constant 0 : i32
    %c0_i32_0 = arith.constant 0 : i32
    %c0_i32_1 = arith.constant 0 : i32
    return %c0_i32, %c0_i32_0 : i32, i32
  }
  func.func @transform_4(%arg0: i32) -> (i32, i32) {
    %c0_i32 = arith.constant 0 : i32
    %c0_i32_0 = arith.constant 0 : i32
    return %arg0, %c0_i32 : i32, i32
  }
  func.func @transform_5(%arg0: i32) -> (i32, i32, i32) {
    %c0_i32 = arith.constant 0 : i32
    %c0_i32_0 = arith.constant 0 : i32
    %c0_i32_1 = arith.constant 0 : i32
    return %arg0, %c0_i32, %c0_i32_0 : i32, i32, i32
  }
  func.func @transform_6(%arg0: i32) -> (i32, i32, i32) {
    %c0_i32 = arith.constant 0 : i32
    %c0_i32_0 = arith.constant 0 : i32
    %c0_i32_1 = arith.constant 0 : i32
    return %arg0, %c0_i32, %c0_i32_0 : i32, i32, i32
  }
}

module attributes {stable_mosaic.version = 11 : i64} {
  func.func @bn_add_relu_kernel(%arg0: i32, %arg1: memref<512x16xbf16, #tpu.memory_space<vmem>>, %arg2: memref<512x16xbf16, #tpu.memory_space<vmem>>, %arg3: memref<1x16xf32, #tpu.memory_space<vmem>>, %arg4: memref<1x16xf32, #tpu.memory_space<vmem>>, %arg5: memref<1x16xf32, #tpu.memory_space<vmem>>, %arg6: memref<1x16xf32, #tpu.memory_space<vmem>>, %arg7: memref<512x16xbf16, #tpu.memory_space<vmem>>) attributes {dimension_semantics = [#tpu.dimension_semantics<parallel>], iteration_bounds = array<i64: 1>, scalar_prefetch = 0 : i64, scratch_operands = 0 : i64, tpu.core_type = #tpu.core_type<tc>, window_params = [{transform_indices = @transform_0, window_bounds = array<i64: 512, 16>}, {transform_indices = @transform_1, window_bounds = array<i64: 512, 16>}, {pipeline_mode = #tpu.pipeline_mode<synchronous>, transform_indices = @transform_2, window_bounds = array<i64: 1, 16>}, {pipeline_mode = #tpu.pipeline_mode<synchronous>, transform_indices = @transform_3, window_bounds = array<i64: 1, 16>}, {pipeline_mode = #tpu.pipeline_mode<synchronous>, transform_indices = @transform_4, window_bounds = array<i64: 1, 16>}, {pipeline_mode = #tpu.pipeline_mode<synchronous>, transform_indices = @transform_5, window_bounds = array<i64: 1, 16>}, {transform_indices = @transform_6, window_bounds = array<i64: 512, 16>}]} {
    %c0 = arith.constant 0 : index
    %c0_0 = arith.constant 0 : index
    %0 = vector.load %arg1[%c0, %c0_0] : memref<512x16xbf16, #tpu.memory_space<vmem>>, vector<512x16xbf16>
    %1 = arith.extf %0 : vector<512x16xbf16> to vector<512x16xf32>
    %c0_1 = arith.constant 0 : index
    %c0_2 = arith.constant 0 : index
    %2 = vector.load %arg3[%c0_1, %c0_2] : memref<1x16xf32, #tpu.memory_space<vmem>>, vector<1x16xf32>
    %3 = vector.broadcast %2 : vector<1x16xf32> to vector<512x16xf32>
    %4 = arith.mulf %1, %3 : vector<512x16xf32>
    %c0_3 = arith.constant 0 : index
    %c0_4 = arith.constant 0 : index
    %5 = vector.load %arg4[%c0_3, %c0_4] : memref<1x16xf32, #tpu.memory_space<vmem>>, vector<1x16xf32>
    %6 = vector.broadcast %5 : vector<1x16xf32> to vector<512x16xf32>
    %7 = arith.addf %4, %6 : vector<512x16xf32>
    %c0_5 = arith.constant 0 : index
    %c0_6 = arith.constant 0 : index
    %8 = vector.load %arg2[%c0_5, %c0_6] : memref<512x16xbf16, #tpu.memory_space<vmem>>, vector<512x16xbf16>
    %9 = arith.extf %8 : vector<512x16xbf16> to vector<512x16xf32>
    %c0_7 = arith.constant 0 : index
    %c0_8 = arith.constant 0 : index
    %10 = vector.load %arg5[%c0_7, %c0_8] : memref<1x16xf32, #tpu.memory_space<vmem>>, vector<1x16xf32>
    %11 = vector.broadcast %10 : vector<1x16xf32> to vector<512x16xf32>
    %12 = arith.mulf %9, %11 : vector<512x16xf32>
    %c0_9 = arith.constant 0 : index
    %c0_10 = arith.constant 0 : index
    %13 = vector.load %arg6[%c0_9, %c0_10] : memref<1x16xf32, #tpu.memory_space<vmem>>, vector<1x16xf32>
    %14 = vector.broadcast %13 : vector<1x16xf32> to vector<512x16xf32>
    %15 = arith.addf %12, %14 : vector<512x16xf32>
    %16 = arith.addf %7, %15 : vector<512x16xf32>
    %cst = arith.constant 0.000000e+00 : f32
    %17 = vector.broadcast %cst : f32 to vector<512x16xf32>
    %18 = arith.maximumf %16, %17 : vector<512x16xf32>
    %19 = arith.truncf %18 : vector<512x16xf32> to vector<512x16xbf16>
    %c0_11 = arith.constant 0 : index
    %c0_12 = arith.constant 0 : index
    %20 = vector.load %arg7[%c0_11, %c0_12] : memref<512x16xbf16, #tpu.memory_space<vmem>>, vector<512x16xbf16>
    tpu.vector_store %arg7[%c0_11, %c0_12], %19 {strides = array<i32>} : memref<512x16xbf16, #tpu.memory_space<vmem>>, vector<512x16xbf16>,
    return
  }
  func.func @transform_0(%arg0: i32) -> (i32, i32) {
    %c0_i32 = arith.constant 0 : i32
    %c0_i32_0 = arith.constant 0 : i32
    return %arg0, %c0_i32 : i32, i32
  }
  func.func @transform_1(%arg0: i32) -> (i32, i32) {
    %c0_i32 = arith.constant 0 : i32
    %c0_i32_0 = arith.constant 0 : i32
    return %arg0, %c0_i32 : i32, i32
  }
  func.func @transform_2(%arg0: i32) -> (i32, i32) {
    %c0_i32 = arith.constant 0 : i32
    %c0_i32_0 = arith.constant 0 : i32
    %c0_i32_1 = arith.constant 0 : i32
    return %c0_i32, %c0_i32_0 : i32, i32
  }
  func.func @transform_3(%arg0: i32) -> (i32, i32) {
    %c0_i32 = arith.constant 0 : i32
    %c0_i32_0 = arith.constant 0 : i32
    %c0_i32_1 = arith.constant 0 : i32
    return %c0_i32, %c0_i32_0 : i32, i32
  }
  func.func @transform_4(%arg0: i32) -> (i32, i32) {
    %c0_i32 = arith.constant 0 : i32
    %c0_i32_0 = arith.constant 0 : i32
    %c0_i32_1 = arith.constant 0 : i32
    return %c0_i32, %c0_i32_0 : i32, i32
  }
  func.func @transform_5(%arg0: i32) -> (i32, i32) {
    %c0_i32 = arith.constant 0 : i32
    %c0_i32_0 = arith.constant 0 : i32
    %c0_i32_1 = arith.constant 0 : i32
    return %c0_i32, %c0_i32_0 : i32, i32
  }
  func.func @transform_6(%arg0: i32) -> (i32, i32) {
    %c0_i32 = arith.constant 0 : i32
    %c0_i32_0 = arith.constant 0 : i32
    return %arg0, %c0_i32 : i32, i32
  }
}

</mosaic_0001>

<llo_original>
// kernel: bottleneck_forward.6
$region0: #{bottleneck_forward.6}
  #allocation0 [shape = 'u32[]', space=smem, size = 0x4, offset = 0x4, fixed_abs, tag = 'smem constant byte address 0x4 - core index']
  #allocation1 [shape = 'u32[144,128]{1,0:T(1,128)}', space=vmem, size = 0x12000, scoped, tag = 'internal scratch']
  %s0 = inlined_call_operand.vmem [shape: bf16[512,4], index: 0, kind: input, shape index: {}]
  %s1 = inlined_call_operand.vmem [shape: f32[1,4], index: 1, kind: input, shape index: {}]
  %s2 = inlined_call_operand.vmem [shape: f32[1,4], index: 2, kind: input, shape index: {}]
  %s3 = inlined_call_operand.vmem [shape: bf16[4,16], index: 3, kind: input, shape index: {}]
  %s4 = inlined_call_operand.vmem [shape: bf16[512,16], index: 4, kind: output, shape index: {0}]
  %s5 = inlined_call_operand.vmem [shape: f32[1,1,16], index: 5, kind: output, shape index: {1}]
  %s6 = inlined_call_operand.vmem [shape: f32[1,1,16], index: 6, kind: output, shape index: {2}]
  %7 = xla_tuple %s4, %s5, %s6
  %s8 = sld [smem:[#allocation0]]
  $region42: #{bottleneck_forward.6} parent=0
    _
  %s10 = ssub.s32 1, %s8
  %s11 = scalar_select 0, %s10, %s8
  // Predicated region
  $region2: #{bottleneck_forward.6} parent=0 // pred_check
    _
  $region3: #{bottleneck_forward.6} parent=0 // pred_check_branch
    %13 = sbr.rel (0) target = $region5
  $region4: #{bottleneck_forward.6} parent=0 // pred_region
    _
  $region5: #{bottleneck_forward.6} parent=0 // pred_fallthru
    _
  // Predicated region
  $region6: #{bottleneck_forward.6} parent=0 // pred_check
    _
  $region7: #{bottleneck_forward.6} parent=0 // pred_check_branch
    %15 = sbr.rel (0) target = $region9
  $region8: #{bottleneck_forward.6} parent=0 // pred_region
    _
  $region9: #{bottleneck_forward.6} parent=0 // pred_fallthru
    _
  // Predicated region
  $region10: #{bottleneck_forward.6} parent=0 // pred_check
    _
  $region11: #{bottleneck_forward.6} parent=0 // pred_check_branch
    %17 = sbr.rel (0) target = $region13
  $region12: #{bottleneck_forward.6} parent=0 // pred_region
    _
  $region13: #{bottleneck_forward.6} parent=0 // pred_fallthru
    _
  // Predicated region
  $region14: #{bottleneck_forward.6} parent=0 // pred_check
    _
  $region15: #{bottleneck_forward.6} parent=0 // pred_check_branch
    %19 = sbr.rel (0) target = $region17
  $region16: #{bottleneck_forward.6} parent=0 // pred_region
    _
  $region17: #{bottleneck_forward.6} parent=0 // pred_fallthru
    _
  %v21 = vld [vmem:[%s0] sm:$0xf]
  %v22 = vld [vmem:[%s0 + $0x4] sm:$0xf]
  %v23 = vld [vmem:[%s0 + $0x8] sm:$0xf]
  %v24 = vld [vmem:[%s0 + $0xc] sm:$0xf]
  %v25 = vld [vmem:[%s0 + $0x10] sm:$0xf]
  %v26 = vld [vmem:[%s0 + $0x14] sm:$0xf]
  %v27 = vld [vmem:[%s0 + $0x18] sm:$0xf]
  %v28 = vld [vmem:[%s0 + $0x1c] sm:$0xf]
  %v29 = vld [vmem:[%s0 + $0x20] sm:$0xf]
  %v30 = vld [vmem:[%s0 + $0x24] sm:$0xf]
  %v31 = vld [vmem:[%s0 + $0x28] sm:$0xf]
  %v32 = vld [vmem:[%s0 + $0x2c] sm:$0xf]
  %v33 = vld [vmem:[%s0 + $0x30] sm:$0xf]
  %v34 = vld [vmem:[%s0 + $0x34] sm:$0xf]
  %v35 = vld [vmem:[%s0 + $0x38] sm:$0xf]
  %v36 = vld [vmem:[%s0 + $0x3c] sm:$0xf]
  %v37 = vld [vmem:[%s0 + $0x40] sm:$0xf]
  %v38 = vld [vmem:[%s0 + $0x44] sm:$0xf]
  %v39 = vld [vmem:[%s0 + $0x48] sm:$0xf]
  %v40 = vld [vmem:[%s0 + $0x4c] sm:$0xf]
  %v41 = vld [vmem:[%s0 + $0x50] sm:$0xf]
  %v42 = vld [vmem:[%s0 + $0x54] sm:$0xf]
  %v43 = vld [vmem:[%s0 + $0x58] sm:$0xf]
  %v44 = vld [vmem:[%s0 + $0x5c] sm:$0xf]
  %v45 = vld [vmem:[%s0 + $0x60] sm:$0xf]
  %v46 = vld [vmem:[%s0 + $0x64] sm:$0xf]
  %v47 = vld [vmem:[%s0 + $0x68] sm:$0xf]
  %v48 = vld [vmem:[%s0 + $0x6c] sm:$0xf]
  %v49 = vld [vmem:[%s0 + $0x70] sm:$0xf]
  %v50 = vld [vmem:[%s0 + $0x74] sm:$0xf]
  %v51 = vld [vmem:[%s0 + $0x78] sm:$0xf]
  %v52 = vld [vmem:[%s0 + $0x7c] sm:$0xf]
  %v53 = vld [vmem:[%s0 + $0x80] sm:$0xf]
  %v54 = vld [vmem:[%s0 + $0x84] sm:$0xf]
  %v55 = vld [vmem:[%s0 + $0x88] sm:$0xf]
  %v56 = vld [vmem:[%s0 + $0x8c] sm:$0xf]
  %v57 = vld [vmem:[%s0 + $0x90] sm:$0xf]
  %v58 = vld [vmem:[%s0 + $0x94] sm:$0xf]
  %v59 = vld [vmem:[%s0 + $0x98] sm:$0xf]
  %v60 = vld [vmem:[%s0 + $0x9c] sm:$0xf]
  %v61 = vld [vmem:[%s0 + $0xa0] sm:$0xf]
  %v62 = vld [vmem:[%s0 + $0xa4] sm:$0xf]
  %v63 = vld [vmem:[%s0 + $0xa8] sm:$0xf]
  %v64 = vld [vmem:[%s0 + $0xac] sm:$0xf]
  %v65 = vld [vmem:[%s0 + $0xb0] sm:$0xf]
  %v66 = vld [vmem:[%s0 + $0xb4] sm:$0xf]
  %v67 = vld [vmem:[%s0 + $0xb8] sm:$0xf]
  %v68 = vld [vmem:[%s0 + $0xbc] sm:$0xf]
  %v69 = vld [vmem:[%s0 + $0xc0] sm:$0xf]
  %v70 = vld [vmem:[%s0 + $0xc4] sm:$0xf]
  %v71 = vld [vmem:[%s0 + $0xc8] sm:$0xf]
  %v72 = vld [vmem:[%s0 + $0xcc] sm:$0xf]
  %v73 = vld [vmem:[%s0 + $0xd0] sm:$0xf]
  %v74 = vld [vmem:[%s0 + $0xd4] sm:$0xf]
  %v75 = vld [vmem:[%s0 + $0xd8] sm:$0xf]
  %v76 = vld [vmem:[%s0 + $0xdc] sm:$0xf]
  %v77 = vld [vmem:[%s0 + $0xe0] sm:$0xf]
  %v78 = vld [vmem:[%s0 + $0xe4] sm:$0xf]
  %v79 = vld [vmem:[%s0 + $0xe8] sm:$0xf]
  %v80 = vld [vmem:[%s0 + $0xec] sm:$0xf]
  %v81 = vld [vmem:[%s0 + $0xf0] sm:$0xf]
  %v82 = vld [vmem:[%s0 + $0xf4] sm:$0xf]
  %v83 = vld [vmem:[%s0 + $0xf8] sm:$0xf]
  %v84 = vld [vmem:[%s0 + $0xfc] sm:$0xf]
  %v85 = vunpack.c.l.bf16 %v21
  %v86 = vunpack.c.l.bf16 %v22
  %v87 = vunpack.c.l.bf16 %v23
  %v88 = vunpack.c.l.bf16 %v24
  %v89 = vunpack.c.l.bf16 %v25
  %v90 = vunpack.c.l.bf16 %v26
  %v91 = vunpack.c.l.bf16 %v27
  %v92 = vunpack.c.l.bf16 %v28
  %v93 = vunpack.c.l.bf16 %v29
  %v94 = vunpack.c.l.bf16 %v30
  %v95 = vunpack.c.l.bf16 %v31
  %v96 = vunpack.c.l.bf16 %v32
  %v97 = vunpack.c.l.bf16 %v33
  %v98 = vunpack.c.l.bf16 %v34
  %v99 = vunpack.c.l.bf16 %v35
  %v100 = vunpack.c.l.bf16 %v36
  %v101 = vunpack.c.l.bf16 %v37
  %v102 = vunpack.c.l.bf16 %v38
  %v103 = vunpack.c.l.bf16 %v39
  %v104 = vunpack.c.l.bf16 %v40
  %v105 = vunpack.c.l.bf16 %v41
  %v106 = vunpack.c.l.bf16 %v42
  %v107 = vunpack.c.l.bf16 %v43
  %v108 = vunpack.c.l.bf16 %v44
  %v109 = vunpack.c.l.bf16 %v45
  %v110 = vunpack.c.l.bf16 %v46
  %v111 = vunpack.c.l.bf16 %v47
  %v112 = vunpack.c.l.bf16 %v48
  %v113 = vunpack.c.l.bf16 %v49
  %v114 = vunpack.c.l.bf16 %v50
  %v115 = vunpack.c.l.bf16 %v51
  %v116 = vunpack.c.l.bf16 %v52
  %v117 = vunpack.c.l.bf16 %v53
  %v118 = vunpack.c.l.bf16 %v54
  %v119 = vunpack.c.l.bf16 %v55
  %v120 = vunpack.c.l.bf16 %v56
  %v121 = vunpack.c.l.bf16 %v57
  %v122 = vunpack.c.l.bf16 %v58
  %v123 = vunpack.c.l.bf16 %v59
  %v124 = vunpack.c.l.bf16 %v60
  %v125 = vunpack.c.l.bf16 %v61
  %v126 = vunpack.c.l.bf16 %v62
  %v127 = vunpack.c.l.bf16 %v63
  %v128 = vunpack.c.l.bf16 %v64
  %v129 = vunpack.c.l.bf16 %v65
  %v130 = vunpack.c.l.bf16 %v66
  %v131 = vunpack.c.l.bf16 %v67
  %v132 = vunpack.c.l.bf16 %v68
  %v133 = vunpack.c.l.bf16 %v69
  %v134 = vunpack.c.l.bf16 %v70
  %v135 = vunpack.c.l.bf16 %v71
  %v136 = vunpack.c.l.bf16 %v72
  %v137 = vunpack.c.l.bf16 %v73
  %v138 = vunpack.c.l.bf16 %v74
  %v139 = vunpack.c.l.bf16 %v75
  %v140 = vunpack.c.l.bf16 %v76
  %v141 = vunpack.c.l.bf16 %v77
  %v142 = vunpack.c.l.bf16 %v78
  %v143 = vunpack.c.l.bf16 %v79
  %v144 = vunpack.c.l.bf16 %v80
  %v145 = vunpack.c.l.bf16 %v81
  %v146 = vunpack.c.l.bf16 %v82
  %v147 = vunpack.c.l.bf16 %v83
  %v148 = vunpack.c.l.bf16 %v84
  %v149 = vld [vmem:[%s1] sm:$0x1]
  %v151 = vlaneseq
  %v152 = vshrl.u32 %v151, 7
  %v153 = vsub.s32 0, %v152
  %v154 = vrot.slane %v149, %v153
  %v156 = vmul.f32 %v85, %v154
  %v157 = vmul.f32 %v86, %v154
  %v158 = vmul.f32 %v87, %v154
  %v159 = vmul.f32 %v88, %v154
  %v160 = vmul.f32 %v89, %v154
  %v161 = vmul.f32 %v90, %v154
  %v162 = vmul.f32 %v91, %v154
  %v163 = vmul.f32 %v92, %v154
  %v164 = vmul.f32 %v93, %v154
  %v165 = vmul.f32 %v94, %v154
  %v166 = vmul.f32 %v95, %v154
  %v167 = vmul.f32 %v96, %v154
  %v168 = vmul.f32 %v97, %v154
  %v169 = vmul.f32 %v98, %v154
  %v170 = vmul.f32 %v99, %v154
  %v171 = vmul.f32 %v100, %v154
  %v172 = vmul.f32 %v101, %v154
  %v173 = vmul.f32 %v102, %v154
  %v174 = vmul.f32 %v103, %v154
  %v175 = vmul.f32 %v104, %v154
  %v176 = vmul.f32 %v105, %v154
  %v177 = vmul.f32 %v106, %v154
  %v178 = vmul.f32 %v107, %v154
  %v179 = vmul.f32 %v108, %v154
  %v180 = vmul.f32 %v109, %v154
  %v181 = vmul.f32 %v110, %v154
  %v182 = vmul.f32 %v111, %v154
  %v183 = vmul.f32 %v112, %v154
  %v184 = vmul.f32 %v113, %v154
  %v185 = vmul.f32 %v114, %v154
  %v186 = vmul.f32 %v115, %v154
  %v187 = vmul.f32 %v116, %v154
  %v188 = vmul.f32 %v117, %v154
  %v189 = vmul.f32 %v118, %v154
  %v190 = vmul.f32 %v119, %v154
  %v191 = vmul.f32 %v120, %v154
  %v192 = vmul.f32 %v121, %v154
  %v193 = vmul.f32 %v122, %v154
  %v194 = vmul.f32 %v123, %v154
  %v195 = vmul.f32 %v124, %v154
  %v196 = vmul.f32 %v125, %v154
  %v197 = vmul.f32 %v126, %v154
  %v198 = vmul.f32 %v127, %v154
  %v199 = vmul.f32 %v128, %v154
  %v200 = vmul.f32 %v129, %v154
  %v201 = vmul.f32 %v130, %v154
  %v202 = vmul.f32 %v131, %v154
  %v203 = vmul.f32 %v132, %v154
  %v204 = vmul.f32 %v133, %v154
  %v205 = vmul.f32 %v134, %v154
  %v206 = vmul.f32 %v135, %v154
  %v207 = vmul.f32 %v136, %v154
  %v208 = vmul.f32 %v137, %v154
  %v209 = vmul.f32 %v138, %v154
  %v210 = vmul.f32 %v139, %v154
  %v211 = vmul.f32 %v140, %v154
  %v212 = vmul.f32 %v141, %v154
  %v213 = vmul.f32 %v142, %v154
  %v214 = vmul.f32 %v143, %v154
  %v215 = vmul.f32 %v144, %v154
  %v216 = vmul.f32 %v145, %v154
  %v217 = vmul.f32 %v146, %v154
  %v218 = vmul.f32 %v147, %v154
  %v219 = vmul.f32 %v148, %v154
  %v220 = vld [vmem:[%s2] sm:$0x1]
  %v222 = vlaneseq
  %v223 = vshrl.u32 %v222, 7
  %v224 = vsub.s32 0, %v223
  %v225 = vrot.slane %v220, %v224
  %v227 = vadd.f32 %v156, %v225
  %v228 = vadd.f32 %v157, %v225
  %v229 = vadd.f32 %v158, %v225
  %v230 = vadd.f32 %v159, %v225
  %v231 = vadd.f32 %v160, %v225
  %v232 = vadd.f32 %v161, %v225
  %v233 = vadd.f32 %v162, %v225
  %v234 = vadd.f32 %v163, %v225
  %v235 = vadd.f32 %v164, %v225
  %v236 = vadd.f32 %v165, %v225
  %v237 = vadd.f32 %v166, %v225
  %v238 = vadd.f32 %v167, %v225
  %v239 = vadd.f32 %v168, %v225
  %v240 = vadd.f32 %v169, %v225
  %v241 = vadd.f32 %v170, %v225
  %v242 = vadd.f32 %v171, %v225
  %v243 = vadd.f32 %v172, %v225
  %v244 = vadd.f32 %v173, %v225
  %v245 = vadd.f32 %v174, %v225
  %v246 = vadd.f32 %v175, %v225
  %v247 = vadd.f32 %v176, %v225
  %v248 = vadd.f32 %v177, %v225
  %v249 = vadd.f32 %v178, %v225
  %v250 = vadd.f32 %v179, %v225
  %v251 = vadd.f32 %v180, %v225
  %v252 = vadd.f32 %v181, %v225
  %v253 = vadd.f32 %v182, %v225
  %v254 = vadd.f32 %v183, %v225
  %v255 = vadd.f32 %v184, %v225
  %v256 = vadd.f32 %v185, %v225
  %v257 = vadd.f32 %v186, %v225
  %v258 = vadd.f32 %v187, %v225
  %v259 = vadd.f32 %v188, %v225
  %v260 = vadd.f32 %v189, %v225
  %v261 = vadd.f32 %v190, %v225
  %v262 = vadd.f32 %v191, %v225
  %v263 = vadd.f32 %v192, %v225
  %v264 = vadd.f32 %v193, %v225
  %v265 = vadd.f32 %v194, %v225
  %v266 = vadd.f32 %v195, %v225
  %v267 = vadd.f32 %v196, %v225
  %v268 = vadd.f32 %v197, %v225
  %v269 = vadd.f32 %v198, %v225
  %v270 = vadd.f32 %v199, %v225
  %v271 = vadd.f32 %v200, %v225
  %v272 = vadd.f32 %v201, %v225
  %v273 = vadd.f32 %v202, %v225
  %v274 = vadd.f32 %v203, %v225
  %v275 = vadd.f32 %v204, %v225
  %v276 = vadd.f32 %v205, %v225
  %v277 = vadd.f32 %v206, %v225
  %v278 = vadd.f32 %v207, %v225
  %v279 = vadd.f32 %v208, %v225
  %v280 = vadd.f32 %v209, %v225
  %v281 = vadd.f32 %v210, %v225
  %v282 = vadd.f32 %v211, %v225
  %v283 = vadd.f32 %v212, %v225
  %v284 = vadd.f32 %v213, %v225
  %v285 = vadd.f32 %v214, %v225
  %v286 = vadd.f32 %v215, %v225
  %v287 = vadd.f32 %v216, %v225
  %v288 = vadd.f32 %v217, %v225
  %v289 = vadd.f32 %v218, %v225
  %v290 = vadd.f32 %v219, %v225
  %v291 = vmax.f32 %v227, 0.0
  %v292 = vmax.f32 %v228, 0.0
  %v293 = vmax.f32 %v229, 0.0
  %v294 = vmax.f32 %v230, 0.0
  %v295 = vmax.f32 %v231, 0.0
  %v296 = vmax.f32 %v232, 0.0
  %v297 = vmax.f32 %v233, 0.0
  %v298 = vmax.f32 %v234, 0.0
  %v299 = vmax.f32 %v235, 0.0
  %v300 = vmax.f32 %v236, 0.0
  %v301 = vmax.f32 %v237, 0.0
  %v302 = vmax.f32 %v238, 0.0
  %v303 = vmax.f32 %v239, 0.0
  %v304 = vmax.f32 %v240, 0.0
  %v305 = vmax.f32 %v241, 0.0
  %v306 = vmax.f32 %v242, 0.0
  %v307 = vmax.f32 %v243, 0.0
  %v308 = vmax.f32 %v244, 0.0
  %v309 = vmax.f32 %v245, 0.0
  %v310 = vmax.f32 %v246, 0.0
  %v311 = vmax.f32 %v247, 0.0
  %v312 = vmax.f32 %v248, 0.0
  %v313 = vmax.f32 %v249, 0.0
  %v314 = vmax.f32 %v250, 0.0
  %v315 = vmax.f32 %v251, 0.0
  %v316 = vmax.f32 %v252, 0.0
  %v317 = vmax.f32 %v253, 0.0
  %v318 = vmax.f32 %v254, 0.0
  %v319 = vmax.f32 %v255, 0.0
  %v320 = vmax.f32 %v256, 0.0
  %v321 = vmax.f32 %v257, 0.0
  %v322 = vmax.f32 %v258, 0.0
  %v323 = vmax.f32 %v259, 0.0
  %v324 = vmax.f32 %v260, 0.0
  %v325 = vmax.f32 %v261, 0.0
  %v326 = vmax.f32 %v262, 0.0
  %v327 = vmax.f32 %v263, 0.0
  %v328 = vmax.f32 %v264, 0.0
  %v329 = vmax.f32 %v265, 0.0
  %v330 = vmax.f32 %v266, 0.0
  %v331 = vmax.f32 %v267, 0.0
  %v332 = vmax.f32 %v268, 0.0
  %v333 = vmax.f32 %v269, 0.0
  %v334 = vmax.f32 %v270, 0.0
  %v335 = vmax.f32 %v271, 0.0
  %v336 = vmax.f32 %v272, 0.0
  %v337 = vmax.f32 %v273, 0.0
  %v338 = vmax.f32 %v274, 0.0
  %v339 = vmax.f32 %v275, 0.0
  %v340 = vmax.f32 %v276, 0.0
  %v341 = vmax.f32 %v277, 0.0
  %v342 = vmax.f32 %v278, 0.0
  %v343 = vmax.f32 %v279, 0.0
  %v344 = vmax.f32 %v280, 0.0
  %v345 = vmax.f32 %v281, 0.0
  %v346 = vmax.f32 %v282, 0.0
  %v347 = vmax.f32 %v283, 0.0
  %v348 = vmax.f32 %v284, 0.0
  %v349 = vmax.f32 %v285, 0.0
  %v350 = vmax.f32 %v286, 0.0
  %v351 = vmax.f32 %v287, 0.0
  %v352 = vmax.f32 %v288, 0.0
  %v353 = vmax.f32 %v289, 0.0
  %v354 = vmax.f32 %v290, 0.0
  %v355 = vpack.c.bf16 %v292, %v291
  %v356 = vpack.c.bf16 %v294, %v293
  %v357 = vpack.c.bf16 %v296, %v295
  %v358 = vpack.c.bf16 %v298, %v297
  %v359 = vpack.c.bf16 %v300, %v299
  %v360 = vpack.c.bf16 %v302, %v301
  %v361 = vpack.c.bf16 %v304, %v303
  %v362 = vpack.c.bf16 %v306, %v305
  %v363 = vpack.c.bf16 %v308, %v307
  %v364 = vpack.c.bf16 %v310, %v309
  %v365 = vpack.c.bf16 %v312, %v311
  %v366 = vpack.c.bf16 %v314, %v313
  %v367 = vpack.c.bf16 %v316, %v315
  %v368 = vpack.c.bf16 %v318, %v317
  %v369 = vpack.c.bf16 %v320, %v319
  %v370 = vpack.c.bf16 %v322, %v321
  %v371 = vpack.c.bf16 %v324, %v323
  %v372 = vpack.c.bf16 %v326, %v325
  %v373 = vpack.c.bf16 %v328, %v327
  %v374 = vpack.c.bf16 %v330, %v329
  %v375 = vpack.c.bf16 %v332, %v331
  %v376 = vpack.c.bf16 %v334, %v333
  %v377 = vpack.c.bf16 %v336, %v335
  %v378 = vpack.c.bf16 %v338, %v337
  %v379 = vpack.c.bf16 %v340, %v339
  %v380 = vpack.c.bf16 %v342, %v341
  %v381 = vpack.c.bf16 %v344, %v343
  %v382 = vpack.c.bf16 %v346, %v345
  %v383 = vpack.c.bf16 %v348, %v347
  %v384 = vpack.c.bf16 %v350, %v349
  %v385 = vpack.c.bf16 %v352, %v351
  %v386 = vpack.c.bf16 %v354, %v353
  %v387 = vld [vmem:[%s3] sm:$0x3]
  %vm388 = vcmask 31744
  %v390 = vsel %vm388, %v355, 0
  %v393 = vsel %vm388, %v356, 0
  %v396 = vsel %vm388, %v357, 0
  %v399 = vsel %vm388, %v358, 0
  %v402 = vsel %vm388, %v359, 0
  %v405 = vsel %vm388, %v360, 0
  %v408 = vsel %vm388, %v361, 0
  %v411 = vsel %vm388, %v362, 0
  %v414 = vsel %vm388, %v363, 0
  %v417 = vsel %vm388, %v364, 0
  %v420 = vsel %vm388, %v365, 0
  %v423 = vsel %vm388, %v366, 0
  %v426 = vsel %vm388, %v367, 0
  %v429 = vsel %vm388, %v368, 0
  %v432 = vsel %vm388, %v369, 0
  %v435 = vsel %vm388, %v370, 0
  %v438 = vsel %vm388, %v371, 0
  %v441 = vsel %vm388, %v372, 0
  %v444 = vsel %vm388, %v373, 0
  %v447 = vsel %vm388, %v374, 0
  %v450 = vsel %vm388, %v375, 0
  %v453 = vsel %vm388, %v376, 0
  %v456 = vsel %vm388, %v377, 0
  %v459 = vsel %vm388, %v378, 0
  %v462 = vsel %vm388, %v379, 0
  %v465 = vsel %vm388, %v380, 0
  %v468 = vsel %vm388, %v381, 0
  %v471 = vsel %vm388, %v382, 0
  %v474 = vsel %vm388, %v383, 0
  %v477 = vsel %vm388, %v384, 0
  %v480 = vsel %vm388, %v385, 0
  %v483 = vsel %vm388, %v386, 0
  %vm485 = vcmask 1041408
  %v487 = vsel %vm485, %v387, 0
  %489 = vmatprep.subr.bf16.mxu0 0
  %490 = vmatpush1.bf16.msra.mxu0 %v487
  %491 = vmatprep.subr.bf16.mxu0 0
  %492 = vmatpush1.bf16.msra.mxu0 0
  %493 = vmatprep.subr.bf16.mxu0 0
  %494 = vmatpush1.bf16.msra.mxu0 0
  %495 = vmatprep.subr.bf16.mxu0 0
  %496 = vmatpush1.bf16.msra.mxu0 0
  %497 = vmatprep.subr.bf16.mxu0 0
  %498 = vmatpush1.bf16.msra.mxu0 0
  %499 = vmatprep.subr.bf16.mxu0 0
  %500 = vmatpush1.bf16.msra.mxu0 0
  %501 = vmatprep.subr.bf16.mxu0 0
  %502 = vmatpush1.bf16.msra.mxu0 0
  %503 = vmatprep.subr.bf16.mxu0 0
  %504 = vmatpush1.bf16.msra.mxu0 0
  %505 = vmatprep.subr.bf16.mxu0 0
  %506 = vmatpush1.bf16.msra.mxu0 0
  %507 = vmatprep.subr.bf16.mxu0 0
  %508 = vmatpush1.bf16.msra.mxu0 0
  %509 = vmatprep.subr.bf16.mxu0 0
  %510 = vmatpush1.bf16.msra.mxu0 0
  %511 = vmatprep.subr.bf16.mxu0 0
  %512 = vmatpush1.bf16.msra.mxu0 0
  %513 = vmatprep.subr.bf16.mxu0 0
  %514 = vmatpush1.bf16.msra.mxu0 0
  %515 = vmatprep.subr.bf16.mxu0 0
  %516 = vmatpush1.bf16.msra.mxu0 0
  %517 = vmatprep.subr.bf16.mxu0 0
  %518 = vmatpush1.bf16.msra.mxu0 0
  %519 = vmatprep.subr.bf16.mxu0 0
  %520 = vmatpush1.bf16.msra.mxu0 0
  %521 = vmatprep.mubr.bf16.mxu0 0
  %522 = vmatmul.mubr.bf16.gmra.mrb[0].mxu0 %v390
  %v523 = vpop.f32.mrb[0].mxu0
  %v524 = vadd.f32 0.0, %v523
  %v525 = vpop.f32.mrb[0].mxu0
  %v526 = vpop.f32.mrb[0].mxu0
  %v527 = vadd.f32 0.0, %v526
  %v528 = vpop.f32.mrb[0].mxu0
  %529 = vmatprep.mubr.bf16.mxu0 0
  %530 = vmatmul.mubr.bf16.gmra.mrb[0].mxu0 %v393
  %v531 = vpop.f32.mrb[0].mxu0
  %v532 = vadd.f32 0.0, %v531
  %v533 = vpop.f32.mrb[0].mxu0
  %v534 = vpop.f32.mrb[0].mxu0
  %v535 = vadd.f32 0.0, %v534
  %v536 = vpop.f32.mrb[0].mxu0
  %537 = vmatprep.mubr.bf16.mxu0 0
  %538 = vmatmul.mubr.bf16.gmra.mrb[0].mxu0 %v396
  %v539 = vpop.f32.mrb[0].mxu0
  %v540 = vadd.f32 0.0, %v539
  %v541 = vpop.f32.mrb[0].mxu0
  %v542 = vpop.f32.mrb[0].mxu0
  %v543 = vadd.f32 0.0, %v542
  %v544 = vpop.f32.mrb[0].mxu0
  %545 = vmatprep.mubr.bf16.mxu0 0
  %546 = vmatmul.mubr.bf16.gmra.mrb[0].mxu0 %v399
  %v547 = vpop.f32.mrb[0].mxu0
  %v548 = vadd.f32 0.0, %v547
  %v549 = vpop.f32.mrb[0].mxu0
  %v550 = vpop.f32.mrb[0].mxu0
  %v551 = vadd.f32 0.0, %v550
  %v552 = vpop.f32.mrb[0].mxu0
  %553 = vmatprep.mubr.bf16.mxu0 0
  %554 = vmatmul.mubr.bf16.gmra.mrb[0].mxu0 %v402
  %v555 = vpop.f32.mrb[0].mxu0
  %v556 = vadd.f32 0.0, %v555
  %v557 = vpop.f32.mrb[0].mxu0
  %v558 = vpop.f32.mrb[0].mxu0
  %v559 = vadd.f32 0.0, %v558
  %v560 = vpop.f32.mrb[0].mxu0
  %561 = vmatprep.mubr.bf16.mxu0 0
  %562 = vmatmul.mubr.bf16.gmra.mrb[0].mxu0 %v405
  %v563 = vpop.f32.mrb[0].mxu0
  %v564 = vadd.f32 0.0, %v563
  %v565 = vpop.f32.mrb[0].mxu0
  %v566 = vpop.f32.mrb[0].mxu0
  %v567 = vadd.f32 0.0, %v566
  %v568 = vpop.f32.mrb[0].mxu0
  %569 = vmatprep.mubr.bf16.mxu0 0
  %570 = vmatmul.mubr.bf16.gmra.mrb[0].mxu0 %v408
  %v571 = vpop.f32.mrb[0].mxu0
  %v572 = vadd.f32 0.0, %v571
  %v573 = vpop.f32.mrb[0].mxu0
  %v574 = vpop.f32.mrb[0].mxu0
  %v575 = vadd.f32 0.0, %v574
  %v576 = vpop.f32.mrb[0].mxu0
  %577 = vmatprep.mubr.bf16.mxu0 0
  %578 = vmatmul.mubr.bf16.gmra.mrb[0].mxu0 %v411
  %v579 = vpop.f32.mrb[0].mxu0
  %v580 = vadd.f32 0.0, %v579
  %v581 = vpop.f32.mrb[0].mxu0
  %v582 = vpop.f32.mrb[0].mxu0
  %v583 = vadd.f32 0.0, %v582
  %v584 = vpop.f32.mrb[0].mxu0
  %585 = vmatprep.mubr.bf16.mxu0 0
  %586 = vmatmul.mubr.bf16.gmra.mrb[0].mxu0 %v414
  %v587 = vpop.f32.mrb[0].mxu0
  %v588 = vadd.f32 0.0, %v587
  %v589 = vpop.f32.mrb[0].mxu0
  %v590 = vpop.f32.mrb[0].mxu0
  %v591 = vadd.f32 0.0, %v590
  %v592 = vpop.f32.mrb[0].mxu0
  %593 = vmatprep.mubr.bf16.mxu0 0
  %594 = vmatmul.mubr.bf16.gmra.mrb[0].mxu0 %v417
  %v595 = vpop.f32.mrb[0].mxu0
  %v596 = vadd.f32 0.0, %v595
  %v597 = vpop.f32.mrb[0].mxu0
  %v598 = vpop.f32.mrb[0].mxu0
  %v599 = vadd.f32 0.0, %v598
  %v600 = vpop.f32.mrb[0].mxu0
  %601 = vmatprep.mubr.bf16.mxu0 0
  %602 = vmatmul.mubr.bf16.gmra.mrb[0].mxu0 %v420
  %v603 = vpop.f32.mrb[0].mxu0
  %v604 = vadd.f32 0.0, %v603
  %v605 = vpop.f32.mrb[0].mxu0
  %v606 = vpop.f32.mrb[0].mxu0
  %v607 = vadd.f32 0.0, %v606
  %v608 = vpop.f32.mrb[0].mxu0
  %609 = vmatprep.mubr.bf16.mxu0 0
  %610 = vmatmul.mubr.bf16.gmra.mrb[0].mxu0 %v423
  %v611 = vpop.f32.mrb[0].mxu0
  %v612 = vadd.f32 0.0, %v611
  %v613 = vpop.f32.mrb[0].mxu0
  %v614 = vpop.f32.mrb[0].mxu0
  %v615 = vadd.f32 0.0, %v614
  %v616 = vpop.f32.mrb[0].mxu0
  %617 = vmatprep.mubr.bf16.mxu0 0
  %618 = vmatmul.mubr.bf16.gmra.mrb[0].mxu0 %v426
  %v619 = vpop.f32.mrb[0].mxu0
  %v620 = vadd.f32 0.0, %v619
  %v621 = vpop.f32.mrb[0].mxu0
  %v622 = vpop.f32.mrb[0].mxu0
  %v623 = vadd.f32 0.0, %v622
  %v624 = vpop.f32.mrb[0].mxu0
  %625 = vmatprep.mubr.bf16.mxu0 0
  %626 = vmatmul.mubr.bf16.gmra.mrb[0].mxu0 %v429
  %v627 = vpop.f32.mrb[0].mxu0
  %v628 = vadd.f32 0.0, %v627
  %v629 = vpop.f32.mrb[0].mxu0
  %v630 = vpop.f32.mrb[0].mxu0
  %v631 = vadd.f32 0.0, %v630
  %v632 = vpop.f32.mrb[0].mxu0
  %633 = vmatprep.mubr.bf16.mxu0 0
  %634 = vmatmul.mubr.bf16.gmra.mrb[0].mxu0 %v432
  %v635 = vpop.f32.mrb[0].mxu0
  %v636 = vadd.f32 0.0, %v635
  %v637 = vpop.f32.mrb[0].mxu0
  %v638 = vpop.f32.mrb[0].mxu0
  %v639 = vadd.f32 0.0, %v638
  %v640 = vpop.f32.mrb[0].mxu0
  %641 = vmatprep.mubr.bf16.mxu0 0
  %642 = vmatmul.mubr.bf16.gmra.mrb[0].mxu0 %v435
  %v643 = vpop.f32.mrb[0].mxu0
  %v644 = vadd.f32 0.0, %v643
  %v645 = vpop.f32.mrb[0].mxu0
  %v646 = vpop.f32.mrb[0].mxu0
  %v647 = vadd.f32 0.0, %v646
  %v648 = vpop.f32.mrb[0].mxu0
  %649 = vmatprep.mubr.bf16.mxu0 0
  %650 = vmatmul.mubr.bf16.gmra.mrb[0].mxu0 %v438
  %v651 = vpop.f32.mrb[0].mxu0
  %v652 = vadd.f32 0.0, %v651
  %v653 = vpop.f32.mrb[0].mxu0
  %v654 = vpop.f32.mrb[0].mxu0
  %v655 = vadd.f32 0.0, %v654
  %v656 = vpop.f32.mrb[0].mxu0
  %657 = vmatprep.mubr.bf16.mxu0 0
  %658 = vmatmul.mubr.bf16.gmra.mrb[0].mxu0 %v441
  %v659 = vpop.f32.mrb[0].mxu0
  %v660 = vadd.f32 0.0, %v659
  %v661 = vpop.f32.mrb[0].mxu0
  %v662 = vpop.f32.mrb[0].mxu0
  %v663 = vadd.f32 0.0, %v662
  %v664 = vpop.f32.mrb[0].mxu0
  %665 = vmatprep.mubr.bf16.mxu0 0
  %666 = vmatmul.mubr.bf16.gmra.mrb[0].mxu0 %v444
  %v667 = vpop.f32.mrb[0].mxu0
  %v668 = vadd.f32 0.0, %v667
  %v669 = vpop.f32.mrb[0].mxu0
  %v670 = vpop.f32.mrb[0].mxu0
  %v671 = vadd.f32 0.0, %v670
  %v672 = vpop.f32.mrb[0].mxu0
  %673 = vmatprep.mubr.bf16.mxu0 0
  %674 = vmatmul.mubr.bf16.gmra.mrb[0].mxu0 %v447
  %v675 = vpop.f32.mrb[0].mxu0
  %v676 = vadd.f32 0.0, %v675
  %v677 = vpop.f32.mrb[0].mxu0
  %v678 = vpop.f32.mrb[0].mxu0
  %v679 = vadd.f32 0.0, %v678
  %v680 = vpop.f32.mrb[0].mxu0
  %681 = vmatprep.mubr.bf16.mxu0 0
  %682 = vmatmul.mubr.bf16.gmra.mrb[0].mxu0 %v450
  %v683 = vpop.f32.mrb[0].mxu0
  %v684 = vadd.f32 0.0, %v683
  %v685 = vpop.f32.mrb[0].mxu0
  %v686 = vpop.f32.mrb[0].mxu0
  %v687 = vadd.f32 0.0, %v686
  %v688 = vpop.f32.mrb[0].mxu0
  %689 = vmatprep.mubr.bf16.mxu0 0
  %690 = vmatmul.mubr.bf16.gmra.mrb[0].mxu0 %v453
  %v691 = vpop.f32.mrb[0].mxu0
  %v692 = vadd.f32 0.0, %v691
  %v693 = vpop.f32.mrb[0].mxu0
  %v694 = vpop.f32.mrb[0].mxu0
  %v695 = vadd.f32 0.0, %v694
  %v696 = vpop.f32.mrb[0].mxu0
  %697 = vmatprep.mubr.bf16.mxu0 0
  %698 = vmatmul.mubr.bf16.gmra.mrb[0].mxu0 %v456
  %v699 = vpop.f32.mrb[0].mxu0
  %v700 = vadd.f32 0.0, %v699
  %v701 = vpop.f32.mrb[0].mxu0
  %v702 = vpop.f32.mrb[0].mxu0
  %v703 = vadd.f32 0.0, %v702
  %v704 = vpop.f32.mrb[0].mxu0
  %705 = vmatprep.mubr.bf16.mxu0 0
  %706 = vmatmul.mubr.bf16.gmra.mrb[0].mxu0 %v459
  %v707 = vpop.f32.mrb[0].mxu0
  %v708 = vadd.f32 0.0, %v707
  %v709 = vpop.f32.mrb[0].mxu0
  %v710 = vpop.f32.mrb[0].mxu0
  %v711 = vadd.f32 0.0, %v710
  %v712 = vpop.f32.mrb[0].mxu0
  %713 = vmatprep.mubr.bf16.mxu0 0
  %714 = vmatmul.mubr.bf16.gmra.mrb[0].mxu0 %v462
  %v715 = vpop.f32.mrb[0].mxu0
  %v716 = vadd.f32 0.0, %v715
  %v717 = vpop.f32.mrb[0].mxu0
  %v718 = vpop.f32.mrb[0].mxu0
  %v719 = vadd.f32 0.0, %v718
  %v720 = vpop.f32.mrb[0].mxu0
  %721 = vmatprep.mubr.bf16.mxu0 0
  %722 = vmatmul.mubr.bf16.gmra.mrb[0].mxu0 %v465
  %v723 = vpop.f32.mrb[0].mxu0
  %v724 = vadd.f32 0.0, %v723
  %v725 = vpop.f32.mrb[0].mxu0
  %v726 = vpop.f32.mrb[0].mxu0
  %v727 = vadd.f32 0.0, %v726
  %v728 = vpop.f32.mrb[0].mxu0
  %729 = vmatprep.mubr.bf16.mxu0 0
  %730 = vmatmul.mubr.bf16.gmra.mrb[0].mxu0 %v468
  %v731 = vpop.f32.mrb[0].mxu0
  %v732 = vadd.f32 0.0, %v731
  %v733 = vpop.f32.mrb[0].mxu0
  %v734 = vpop.f32.mrb[0].mxu0
  %v735 = vadd.f32 0.0, %v734
  %v736 = vpop.f32.mrb[0].mxu0
  %737 = vmatprep.mubr.bf16.mxu0 0
  %738 = vmatmul.mubr.bf16.gmra.mrb[0].mxu0 %v471
  %v739 = vpop.f32.mrb[0].mxu0
  %v740 = vadd.f32 0.0, %v739
  %v741 = vpop.f32.mrb[0].mxu0
  %v742 = vpop.f32.mrb[0].mxu0
  %v743 = vadd.f32 0.0, %v742
  %v744 = vpop.f32.mrb[0].mxu0
  %745 = vmatprep.mubr.bf16.mxu0 0
  %746 = vmatmul.mubr.bf16.gmra.mrb[0].mxu0 %v474
  %v747 = vpop.f32.mrb[0].mxu0
  %v748 = vadd.f32 0.0, %v747
  %v749 = vpop.f32.mrb[0].mxu0
  %v750 = vpop.f32.mrb[0].mxu0
  %v751 = vadd.f32 0.0, %v750
  %v752 = vpop.f32.mrb[0].mxu0
  %753 = vmatprep.mubr.bf16.mxu0 0
  %754 = vmatmul.mubr.bf16.gmra.mrb[0].mxu0 %v477
  %v755 = vpop.f32.mrb[0].mxu0
  %v756 = vadd.f32 0.0, %v755
  %v757 = vpop.f32.mrb[0].mxu0
  %v758 = vpop.f32.mrb[0].mxu0
  %v759 = vadd.f32 0.0, %v758
  %v760 = vpop.f32.mrb[0].mxu0
  %761 = vmatprep.mubr.bf16.mxu0 0
  %762 = vmatmul.mubr.bf16.gmra.mrb[0].mxu0 %v480
  %v763 = vpop.f32.mrb[0].mxu0
  %v764 = vadd.f32 0.0, %v763
  %v765 = vpop.f32.mrb[0].mxu0
  %v766 = vpop.f32.mrb[0].mxu0
  %v767 = vadd.f32 0.0, %v766
  %v768 = vpop.f32.mrb[0].mxu0
  %769 = vmatprep.mubr.bf16.mxu0 0
  %770 = vmatmul.mubr.bf16.gmra.mrb[0].mxu0 %v483
  %v771 = vpop.f32.mrb[0].mxu0
  %v772 = vadd.f32 0.0, %v771
  %v773 = vpop.f32.mrb[0].mxu0
  %v774 = vpop.f32.mrb[0].mxu0
  %v775 = vadd.f32 0.0, %v774
  %v776 = vpop.f32.mrb[0].mxu0
  %777 = vdwg.mxu0
  %v778 = vpack.c.bf16 %v527, %v524
  %v779 = vpack.c.bf16 %v535, %v532
  %v780 = vpack.c.bf16 %v543, %v540
  %v781 = vpack.c.bf16 %v551, %v548
  %v782 = vpack.c.bf16 %v559, %v556
  %v783 = vpack.c.bf16 %v567, %v564
  %v784 = vpack.c.bf16 %v575, %v572
  %v785 = vpack.c.bf16 %v583, %v580
  %v786 = vpack.c.bf16 %v591, %v588
  %v787 = vpack.c.bf16 %v599, %v596
  %v788 = vpack.c.bf16 %v607, %v604
  %v789 = vpack.c.bf16 %v615, %v612
  %v790 = vpack.c.bf16 %v623, %v620
  %v791 = vpack.c.bf16 %v631, %v628
  %v792 = vpack.c.bf16 %v639, %v636
  %v793 = vpack.c.bf16 %v647, %v644
  %v794 = vpack.c.bf16 %v655, %v652
  %v795 = vpack.c.bf16 %v663, %v660
  %v796 = vpack.c.bf16 %v671, %v668
  %v797 = vpack.c.bf16 %v679, %v676
  %v798 = vpack.c.bf16 %v687, %v684
  %v799 = vpack.c.bf16 %v695, %v692
  %v800 = vpack.c.bf16 %v703, %v700
  %v801 = vpack.c.bf16 %v711, %v708
  %v802 = vpack.c.bf16 %v719, %v716
  %v803 = vpack.c.bf16 %v727, %v724
  %v804 = vpack.c.bf16 %v735, %v732
  %v805 = vpack.c.bf16 %v743, %v740
  %v806 = vpack.c.bf16 %v751, %v748
  %v807 = vpack.c.bf16 %v759, %v756
  %v808 = vpack.c.bf16 %v767, %v764
  %v809 = vpack.c.bf16 %v775, %v772
  %v842 = vunpack.c.l.b16 %v778
  %v843 = vunpack.c.h.b16 %v778
  %v844 = vunpack.c.l.b16 %v779
  %v845 = vunpack.c.h.b16 %v779
  %v846 = vunpack.c.l.b16 %v780
  %v847 = vunpack.c.h.b16 %v780
  %v848 = vunpack.c.l.b16 %v781
  %v849 = vunpack.c.h.b16 %v781
  %v850 = vunpack.c.l.b16 %v782
  %v851 = vunpack.c.h.b16 %v782
  %v852 = vunpack.c.l.b16 %v783
  %v853 = vunpack.c.h.b16 %v783
  %v854 = vunpack.c.l.b16 %v784
  %v855 = vunpack.c.h.b16 %v784
  %v856 = vunpack.c.l.b16 %v785
  %v857 = vunpack.c.h.b16 %v785
  %v858 = vunpack.c.l.b16 %v786
  %v859 = vunpack.c.h.b16 %v786
  %v860 = vunpack.c.l.b16 %v787
  %v861 = vunpack.c.h.b16 %v787
  %v862 = vunpack.c.l.b16 %v788
  %v863 = vunpack.c.h.b16 %v788
  %v864 = vunpack.c.l.b16 %v789
  %v865 = vunpack.c.h.b16 %v789
  %v866 = vunpack.c.l.b16 %v790
  %v867 = vunpack.c.h.b16 %v790
  %v868 = vunpack.c.l.b16 %v791
  %v869 = vunpack.c.h.b16 %v791
  %v870 = vunpack.c.l.b16 %v792
  %v871 = vunpack.c.h.b16 %v792
  %v872 = vunpack.c.l.b16 %v793
  %v873 = vunpack.c.h.b16 %v793
  %v874 = vunpack.c.l.b16 %v794
  %v875 = vunpack.c.h.b16 %v794
  %v876 = vunpack.c.l.b16 %v795
  %v877 = vunpack.c.h.b16 %v795
  %v878 = vunpack.c.l.b16 %v796
  %v879 = vunpack.c.h.b16 %v796
  %v880 = vunpack.c.l.b16 %v797
  %v881 = vunpack.c.h.b16 %v797
  %v882 = vunpack.c.l.b16 %v798
  %v883 = vunpack.c.h.b16 %v798
  %v884 = vunpack.c.l.b16 %v799
  %v885 = vunpack.c.h.b16 %v799
  %v886 = vunpack.c.l.b16 %v800
  %v887 = vunpack.c.h.b16 %v800
  %v888 = vunpack.c.l.b16 %v801
  %v889 = vunpack.c.h.b16 %v801
  %v890 = vunpack.c.l.b16 %v802
  %v891 = vunpack.c.h.b16 %v802
  %v892 = vunpack.c.l.b16 %v803
  %v893 = vunpack.c.h.b16 %v803
  %v894 = vunpack.c.l.b16 %v804
  %v895 = vunpack.c.h.b16 %v804
  %v896 = vunpack.c.l.b16 %v805
  %v897 = vunpack.c.h.b16 %v805
  %v898 = vunpack.c.l.b16 %v806
  %v899 = vunpack.c.h.b16 %v806
  %v900 = vunpack.c.l.b16 %v807
  %v901 = vunpack.c.h.b16 %v807
  %v902 = vunpack.c.l.b16 %v808
  %v903 = vunpack.c.h.b16 %v808
  %v904 = vunpack.c.l.b16 %v809
  %v905 = vunpack.c.h.b16 %v809
  %v906 = vpack.c.b16 %v842, %v842
  %v907 = vpack.c.b16 %v843, %v843
  %v908 = vpack.c.b16 %v844, %v844
  %v909 = vpack.c.b16 %v845, %v845
  %v910 = vpack.c.b16 %v846, %v846
  %v911 = vpack.c.b16 %v847, %v847
  %v912 = vpack.c.b16 %v848, %v848
  %v913 = vpack.c.b16 %v849, %v849
  %v914 = vpack.c.b16 %v850, %v850
  %v915 = vpack.c.b16 %v851, %v851
  %v916 = vpack.c.b16 %v852, %v852
  %v917 = vpack.c.b16 %v853, %v853
  %v918 = vpack.c.b16 %v854, %v854
  %v919 = vpack.c.b16 %v855, %v855
  %v920 = vpack.c.b16 %v856, %v856
  %v921 = vpack.c.b16 %v857, %v857
  %v922 = vpack.c.b16 %v858, %v858
  %v923 = vpack.c.b16 %v859, %v859
  %v924 = vpack.c.b16 %v860, %v860
  %v925 = vpack.c.b16 %v861, %v861
  %v926 = vpack.c.b16 %v862, %v862
  %v927 = vpack.c.b16 %v863, %v863
  %v928 = vpack.c.b16 %v864, %v864
  %v929 = vpack.c.b16 %v865, %v865
  %v930 = vpack.c.b16 %v866, %v866
  %v931 = vpack.c.b16 %v867, %v867
  %v932 = vpack.c.b16 %v868, %v868
  %v933 = vpack.c.b16 %v869, %v869
  %v934 = vpack.c.b16 %v870, %v870
  %v935 = vpack.c.b16 %v871, %v871
  %v936 = vpack.c.b16 %v872, %v872
  %v937 = vpack.c.b16 %v873, %v873
  %v938 = vpack.c.b16 %v874, %v874
  %v939 = vpack.c.b16 %v875, %v875
  %v940 = vpack.c.b16 %v876, %v876
  %v941 = vpack.c.b16 %v877, %v877
  %v942 = vpack.c.b16 %v878, %v878
  %v943 = vpack.c.b16 %v879, %v879
  %v944 = vpack.c.b16 %v880, %v880
  %v945 = vpack.c.b16 %v881, %v881
  %v946 = vpack.c.b16 %v882, %v882
  %v947 = vpack.c.b16 %v883, %v883
  %v948 = vpack.c.b16 %v884, %v884
  %v949 = vpack.c.b16 %v885, %v885
  %v950 = vpack.c.b16 %v886, %v886
  %v951 = vpack.c.b16 %v887, %v887
  %v952 = vpack.c.b16 %v888, %v888
  %v953 = vpack.c.b16 %v889, %v889
  %v954 = vpack.c.b16 %v890, %v890
  %v955 = vpack.c.b16 %v891, %v891
  %v956 = vpack.c.b16 %v892, %v892
  %v957 = vpack.c.b16 %v893, %v893
  %v958 = vpack.c.b16 %v894, %v894
  %v959 = vpack.c.b16 %v895, %v895
  %v960 = vpack.c.b16 %v896, %v896
  %v961 = vpack.c.b16 %v897, %v897
  %v962 = vpack.c.b16 %v898, %v898
  %v963 = vpack.c.b16 %v899, %v899
  %v964 = vpack.c.b16 %v900, %v900
  %v965 = vpack.c.b16 %v901, %v901
  %v966 = vpack.c.b16 %v902, %v902
  %v967 = vpack.c.b16 %v903, %v903
  %v968 = vpack.c.b16 %v904, %v904
  %v969 = vpack.c.b16 %v905, %v905
  %vm1034 = vcmask 125952
  %1035 = vst.msk [vmem:[%s4] sm:$0xf] %vm1034, %v906
  %1036 = vst.msk [vmem:[%s4 + $0x4] sm:$0xf] %vm1034, %v907
  %1037 = vst.msk [vmem:[%s4 + $0x8] sm:$0xf] %vm1034, %v908
  %1038 = vst.msk [vmem:[%s4 + $0xc] sm:$0xf] %vm1034, %v909
  %1039 = vst.msk [vmem:[%s4 + $0x10] sm:$0xf] %vm1034, %v910
  %1040 = vst.msk [vmem:[%s4 + $0x14] sm:$0xf] %vm1034, %v911
  %1041 = vst.msk [vmem:[%s4 + $0x18] sm:$0xf] %vm1034, %v912
  %1042 = vst.msk [vmem:[%s4 + $0x1c] sm:$0xf] %vm1034, %v913
  %1043 = vst.msk [vmem:[%s4 + $0x20] sm:$0xf] %vm1034, %v914
  %1044 = vst.msk [vmem:[%s4 + $0x24] sm:$0xf] %vm1034, %v915
  %1045 = vst.msk [vmem:[%s4 + $0x28] sm:$0xf] %vm1034, %v916
  %1046 = vst.msk [vmem:[%s4 + $0x2c] sm:$0xf] %vm1034, %v917
  %1047 = vst.msk [vmem:[%s4 + $0x30] sm:$0xf] %vm1034, %v918
  %1048 = vst.msk [vmem:[%s4 + $0x34] sm:$0xf] %vm1034, %v919
  %1049 = vst.msk [vmem:[%s4 + $0x38] sm:$0xf] %vm1034, %v920
  %1050 = vst.msk [vmem:[%s4 + $0x3c] sm:$0xf] %vm1034, %v921
  %1051 = vst.msk [vmem:[%s4 + $0x40] sm:$0xf] %vm1034, %v922
  %1052 = vst.msk [vmem:[%s4 + $0x44] sm:$0xf] %vm1034, %v923
  %1053 = vst.msk [vmem:[%s4 + $0x48] sm:$0xf] %vm1034, %v924
  %1054 = vst.msk [vmem:[%s4 + $0x4c] sm:$0xf] %vm1034, %v925
  %1055 = vst.msk [vmem:[%s4 + $0x50] sm:$0xf] %vm1034, %v926
  %1056 = vst.msk [vmem:[%s4 + $0x54] sm:$0xf] %vm1034, %v927
  %1057 = vst.msk [vmem:[%s4 + $0x58] sm:$0xf] %vm1034, %v928
  %1058 = vst.msk [vmem:[%s4 + $0x5c] sm:$0xf] %vm1034, %v929
  %1059 = vst.msk [vmem:[%s4 + $0x60] sm:$0xf] %vm1034, %v930
  %1060 = vst.msk [vmem:[%s4 + $0x64] sm:$0xf] %vm1034, %v931
  %1061 = vst.msk [vmem:[%s4 + $0x68] sm:$0xf] %vm1034, %v932
  %1062 = vst.msk [vmem:[%s4 + $0x6c] sm:$0xf] %vm1034, %v933
  %1063 = vst.msk [vmem:[%s4 + $0x70] sm:$0xf] %vm1034, %v934
  %1064 = vst.msk [vmem:[%s4 + $0x74] sm:$0xf] %vm1034, %v935
  %1065 = vst.msk [vmem:[%s4 + $0x78] sm:$0xf] %vm1034, %v936
  %1066 = vst.msk [vmem:[%s4 + $0x7c] sm:$0xf] %vm1034, %v937
  %1067 = vst.msk [vmem:[%s4 + $0x80] sm:$0xf] %vm1034, %v938
  %1068 = vst.msk [vmem:[%s4 + $0x84] sm:$0xf] %vm1034, %v939
  %1069 = vst.msk [vmem:[%s4 + $0x88] sm:$0xf] %vm1034, %v940
  %1070 = vst.msk [vmem:[%s4 + $0x8c] sm:$0xf] %vm1034, %v941
  %1071 = vst.msk [vmem:[%s4 + $0x90] sm:$0xf] %vm1034, %v942
  %1072 = vst.msk [vmem:[%s4 + $0x94] sm:$0xf] %vm1034, %v943
  %1073 = vst.msk [vmem:[%s4 + $0x98] sm:$0xf] %vm1034, %v944
  %1074 = vst.msk [vmem:[%s4 + $0x9c] sm:$0xf] %vm1034, %v945
  %1075 = vst.msk [vmem:[%s4 + $0xa0] sm:$0xf] %vm1034, %v946
  %1076 = vst.msk [vmem:[%s4 + $0xa4] sm:$0xf] %vm1034, %v947
  %1077 = vst.msk [vmem:[%s4 + $0xa8] sm:$0xf] %vm1034, %v948
  %1078 = vst.msk [vmem:[%s4 + $0xac] sm:$0xf] %vm1034, %v949
  %1079 = vst.msk [vmem:[%s4 + $0xb0] sm:$0xf] %vm1034, %v950
  %1080 = vst.msk [vmem:[%s4 + $0xb4] sm:$0xf] %vm1034, %v951
  %1081 = vst.msk [vmem:[%s4 + $0xb8] sm:$0xf] %vm1034, %v952
  %1082 = vst.msk [vmem:[%s4 + $0xbc] sm:$0xf] %vm1034, %v953
  %1083 = vst.msk [vmem:[%s4 + $0xc0] sm:$0xf] %vm1034, %v954
  %1084 = vst.msk [vmem:[%s4 + $0xc4] sm:$0xf] %vm1034, %v955
  %1085 = vst.msk [vmem:[%s4 + $0xc8] sm:$0xf] %vm1034, %v956
  %1086 = vst.msk [vmem:[%s4 + $0xcc] sm:$0xf] %vm1034, %v957
  %1087 = vst.msk [vmem:[%s4 + $0xd0] sm:$0xf] %vm1034, %v958
  %1088 = vst.msk [vmem:[%s4 + $0xd4] sm:$0xf] %vm1034, %v959
  %1089 = vst.msk [vmem:[%s4 + $0xd8] sm:$0xf] %vm1034, %v960
  %1090 = vst.msk [vmem:[%s4 + $0xdc] sm:$0xf] %vm1034, %v961
  %1091 = vst.msk [vmem:[%s4 + $0xe0] sm:$0xf] %vm1034, %v962
  %1092 = vst.msk [vmem:[%s4 + $0xe4] sm:$0xf] %vm1034, %v963
  %1093 = vst.msk [vmem:[%s4 + $0xe8] sm:$0xf] %vm1034, %v964
  %1094 = vst.msk [vmem:[%s4 + $0xec] sm:$0xf] %vm1034, %v965
  %1095 = vst.msk [vmem:[%s4 + $0xf0] sm:$0xf] %vm1034, %v966
  %1096 = vst.msk [vmem:[%s4 + $0xf4] sm:$0xf] %vm1034, %v967
  %1097 = vst.msk [vmem:[%s4 + $0xf8] sm:$0xf] %vm1034, %v968
  %1098 = vst.msk [vmem:[%s4 + $0xfc] sm:$0xf] %vm1034, %v969
  %vm1099 = vcmask 130048
  %v1100 = vsel %vm1099, %v524, 0.0
  %v1101 = vsel %vm1099, %v527, 0.0
  %v1102 = vadd.f32 %v1100, %v1101
  %v1103 = vsel %vm1099, %v532, 0.0
  %v1104 = vadd.f32 %v1102, %v1103
  %v1105 = vsel %vm1099, %v535, 0.0
  %v1106 = vadd.f32 %v1104, %v1105
  %v1107 = vsel %vm1099, %v540, 0.0
  %v1108 = vadd.f32 %v1106, %v1107
  %v1109 = vsel %vm1099, %v543, 0.0
  %v1110 = vadd.f32 %v1108, %v1109
  %v1111 = vsel %vm1099, %v548, 0.0
  %v1112 = vadd.f32 %v1110, %v1111
  %v1113 = vsel %vm1099, %v551, 0.0
  %v1114 = vadd.f32 %v1112, %v1113
  %v1115 = vsel %vm1099, %v556, 0.0
  %v1116 = vadd.f32 %v1114, %v1115
  %v1117 = vsel %vm1099, %v559, 0.0
  %v1118 = vadd.f32 %v1116, %v1117
  %v1119 = vsel %vm1099, %v564, 0.0
  %v1120 = vadd.f32 %v1118, %v1119
  %v1121 = vsel %vm1099, %v567, 0.0
  %v1122 = vadd.f32 %v1120, %v1121
  %v1123 = vsel %vm1099, %v572, 0.0
  %v1124 = vadd.f32 %v1122, %v1123
  %v1125 = vsel %vm1099, %v575, 0.0
  %v1126 = vadd.f32 %v1124, %v1125
  %v1127 = vsel %vm1099, %v580, 0.0
  %v1128 = vadd.f32 %v1126, %v1127
  %v1129 = vsel %vm1099, %v583, 0.0
  %v1130 = vadd.f32 %v1128, %v1129
  %v1131 = vsel %vm1099, %v588, 0.0
  %v1132 = vadd.f32 %v1130, %v1131
  %v1133 = vsel %vm1099, %v591, 0.0
  %v1134 = vadd.f32 %v1132, %v1133
  %v1135 = vsel %vm1099, %v596, 0.0
  %v1136 = vadd.f32 %v1134, %v1135
  %v1137 = vsel %vm1099, %v599, 0.0
  %v1138 = vadd.f32 %v1136, %v1137
  %v1139 = vsel %vm1099, %v604, 0.0
  %v1140 = vadd.f32 %v1138, %v1139
  %v1141 = vsel %vm1099, %v607, 0.0
  %v1142 = vadd.f32 %v1140, %v1141
  %v1143 = vsel %vm1099, %v612, 0.0
  %v1144 = vadd.f32 %v1142, %v1143
  %v1145 = vsel %vm1099, %v615, 0.0
  %v1146 = vadd.f32 %v1144, %v1145
  %v1147 = vsel %vm1099, %v620, 0.0
  %v1148 = vadd.f32 %v1146, %v1147
  %v1149 = vsel %vm1099, %v623, 0.0
  %v1150 = vadd.f32 %v1148, %v1149
  %v1151 = vsel %vm1099, %v628, 0.0
  %v1152 = vadd.f32 %v1150, %v1151
  %v1153 = vsel %vm1099, %v631, 0.0
  %v1154 = vadd.f32 %v1152, %v1153
  %v1155 = vsel %vm1099, %v636, 0.0
  %v1156 = vadd.f32 %v1154, %v1155
  %v1157 = vsel %vm1099, %v639, 0.0
  %v1158 = vadd.f32 %v1156, %v1157
  %v1159 = vsel %vm1099, %v644, 0.0
  %v1160 = vadd.f32 %v1158, %v1159
  %v1161 = vsel %vm1099, %v647, 0.0
  %v1162 = vadd.f32 %v1160, %v1161
  %v1163 = vsel %vm1099, %v652, 0.0
  %v1164 = vadd.f32 %v1162, %v1163
  %v1165 = vsel %vm1099, %v655, 0.0
  %v1166 = vadd.f32 %v1164, %v1165
  %v1167 = vsel %vm1099, %v660, 0.0
  %v1168 = vadd.f32 %v1166, %v1167
  %v1169 = vsel %vm1099, %v663, 0.0
  %v1170 = vadd.f32 %v1168, %v1169
  %v1171 = vsel %vm1099, %v668, 0.0
  %v1172 = vadd.f32 %v1170, %v1171
  %v1173 = vsel %vm1099, %v671, 0.0
  %v1174 = vadd.f32 %v1172, %v1173
  %v1175 = vsel %vm1099, %v676, 0.0
  %v1176 = vadd.f32 %v1174, %v1175
  %v1177 = vsel %vm1099, %v679, 0.0
  %v1178 = vadd.f32 %v1176, %v1177
  %v1179 = vsel %vm1099, %v684, 0.0
  %v1180 = vadd.f32 %v1178, %v1179
  %v1181 = vsel %vm1099, %v687, 0.0
  %v1182 = vadd.f32 %v1180, %v1181
  %v1183 = vsel %vm1099, %v692, 0.0
  %v1184 = vadd.f32 %v1182, %v1183
  %v1185 = vsel %vm1099, %v695, 0.0
  %v1186 = vadd.f32 %v1184, %v1185
  %v1187 = vsel %vm1099, %v700, 0.0
  %v1188 = vadd.f32 %v1186, %v1187
  %v1189 = vsel %vm1099, %v703, 0.0
  %v1190 = vadd.f32 %v1188, %v1189
  %v1191 = vsel %vm1099, %v708, 0.0
  %v1192 = vadd.f32 %v1190, %v1191
  %v1193 = vsel %vm1099, %v711, 0.0
  %v1194 = vadd.f32 %v1192, %v1193
  %v1195 = vsel %vm1099, %v716, 0.0
  %v1196 = vadd.f32 %v1194, %v1195
  %v1197 = vsel %vm1099, %v719, 0.0
  %v1198 = vadd.f32 %v1196, %v1197
  %v1199 = vsel %vm1099, %v724, 0.0
  %v1200 = vadd.f32 %v1198, %v1199
  %v1201 = vsel %vm1099, %v727, 0.0
  %v1202 = vadd.f32 %v1200, %v1201
  %v1203 = vsel %vm1099, %v732, 0.0
  %v1204 = vadd.f32 %v1202, %v1203
  %v1205 = vsel %vm1099, %v735, 0.0
  %v1206 = vadd.f32 %v1204, %v1205
  %v1207 = vsel %vm1099, %v740, 0.0
  %v1208 = vadd.f32 %v1206, %v1207
  %v1209 = vsel %vm1099, %v743, 0.0
  %v1210 = vadd.f32 %v1208, %v1209
  %v1211 = vsel %vm1099, %v748, 0.0
  %v1212 = vadd.f32 %v1210, %v1211
  %v1213 = vsel %vm1099, %v751, 0.0
  %v1214 = vadd.f32 %v1212, %v1213
  %v1215 = vsel %vm1099, %v756, 0.0
  %v1216 = vadd.f32 %v1214, %v1215
  %v1217 = vsel %vm1099, %v759, 0.0
  %v1218 = vadd.f32 %v1216, %v1217
  %v1219 = vsel %vm1099, %v764, 0.0
  %v1220 = vadd.f32 %v1218, %v1219
  %v1221 = vsel %vm1099, %v767, 0.0
  %v1222 = vadd.f32 %v1220, %v1221
  %v1223 = vsel %vm1099, %v772, 0.0
  %v1224 = vadd.f32 %v1222, %v1223
  %v1225 = vsel %vm1099, %v775, 0.0
  %v1226 = vadd.f32 %v1224, %v1225
  %v1227 = vrot.slane %v1226, 4
  %v1228 = vadd.f32 %v1226, %v1227
  %v1229 = vrot.slane %v1228, 2
  %v1230 = vadd.f32 %v1228, %v1229
  %v1231 = vrot.slane %v1230, 1
  %v1232 = vadd.f32 %v1230, %v1231
  %vm1233 = vcmask 122880
  %1234 = vst.msk [vmem:[%s5] sm:$0x1] %vm1233, %v1232
  %v1235 = vmul.f32 %v524, %v524
  %v1236 = vmul.f32 %v527, %v527
  %v1237 = vmul.f32 %v532, %v532
  %v1238 = vmul.f32 %v535, %v535
  %v1239 = vmul.f32 %v540, %v540
  %v1240 = vmul.f32 %v543, %v543
  %v1241 = vmul.f32 %v548, %v548
  %v1242 = vmul.f32 %v551, %v551
  %v1243 = vmul.f32 %v556, %v556
  %v1244 = vmul.f32 %v559, %v559
  %v1245 = vmul.f32 %v564, %v564
  %v1246 = vmul.f32 %v567, %v567
  %v1247 = vmul.f32 %v572, %v572
  %v1248 = vmul.f32 %v575, %v575
  %v1249 = vmul.f32 %v580, %v580
  %v1250 = vmul.f32 %v583, %v583
  %v1251 = vmul.f32 %v588, %v588
  %v1252 = vmul.f32 %v591, %v591
  %v1253 = vmul.f32 %v596, %v596
  %v1254 = vmul.f32 %v599, %v599
  %v1255 = vmul.f32 %v604, %v604
  %v1256 = vmul.f32 %v607, %v607
  %v1257 = vmul.f32 %v612, %v612
  %v1258 = vmul.f32 %v615, %v615
  %v1259 = vmul.f32 %v620, %v620
  %v1260 = vmul.f32 %v623, %v623
  %v1261 = vmul.f32 %v628, %v628
  %v1262 = vmul.f32 %v631, %v631
  %v1263 = vmul.f32 %v636, %v636
  %v1264 = vmul.f32 %v639, %v639
  %v1265 = vmul.f32 %v644, %v644
  %v1266 = vmul.f32 %v647, %v647
  %v1267 = vmul.f32 %v652, %v652
  %v1268 = vmul.f32 %v655, %v655
  %v1269 = vmul.f32 %v660, %v660
  %v1270 = vmul.f32 %v663, %v663
  %v1271 = vmul.f32 %v668, %v668
  %v1272 = vmul.f32 %v671, %v671
  %v1273 = vmul.f32 %v676, %v676
  %v1274 = vmul.f32 %v679, %v679
  %v1275 = vmul.f32 %v684, %v684
  %v1276 = vmul.f32 %v687, %v687
  %v1277 = vmul.f32 %v692, %v692
  %v1278 = vmul.f32 %v695, %v695
  %v1279 = vmul.f32 %v700, %v700
  %v1280 = vmul.f32 %v703, %v703
  %v1281 = vmul.f32 %v708, %v708
  %v1282 = vmul.f32 %v711, %v711
  %v1283 = vmul.f32 %v716, %v716
  %v1284 = vmul.f32 %v719, %v719
  %v1285 = vmul.f32 %v724, %v724
  %v1286 = vmul.f32 %v727, %v727
  %v1287 = vmul.f32 %v732, %v732
  %v1288 = vmul.f32 %v735, %v735
  %v1289 = vmul.f32 %v740, %v740
  %v1290 = vmul.f32 %v743, %v743
  %v1291 = vmul.f32 %v748, %v748
  %v1292 = vmul.f32 %v751, %v751
  %v1293 = vmul.f32 %v756, %v756
  %v1294 = vmul.f32 %v759, %v759
  %v1295 = vmul.f32 %v764, %v764
  %v1296 = vmul.f32 %v767, %v767
  %v1297 = vmul.f32 %v772, %v772
  %v1298 = vmul.f32 %v775, %v775
  %v1299 = vsel %vm1099, %v1235, 0.0
  %v1300 = vsel %vm1099, %v1236, 0.0
  %v1301 = vadd.f32 %v1299, %v1300
  %v1302 = vsel %vm1099, %v1237, 0.0
  %v1303 = vadd.f32 %v1301, %v1302
  %v1304 = vsel %vm1099, %v1238, 0.0
  %v1305 = vadd.f32 %v1303, %v1304
  %v1306 = vsel %vm1099, %v1239, 0.0
  %v1307 = vadd.f32 %v1305, %v1306
  %v1308 = vsel %vm1099, %v1240, 0.0
  %v1309 = vadd.f32 %v1307, %v1308
  %v1310 = vsel %vm1099, %v1241, 0.0
  %v1311 = vadd.f32 %v1309, %v1310
  %v1312 = vsel %vm1099, %v1242, 0.0
  %v1313 = vadd.f32 %v1311, %v1312
  %v1314 = vsel %vm1099, %v1243, 0.0
  %v1315 = vadd.f32 %v1313, %v1314
  %v1316 = vsel %vm1099, %v1244, 0.0
  %v1317 = vadd.f32 %v1315, %v1316
  %v1318 = vsel %vm1099, %v1245, 0.0
  %v1319 = vadd.f32 %v1317, %v1318
  %v1320 = vsel %vm1099, %v1246, 0.0
  %v1321 = vadd.f32 %v1319, %v1320
  %v1322 = vsel %vm1099, %v1247, 0.0
  %v1323 = vadd.f32 %v1321, %v1322
  %v1324 = vsel %vm1099, %v1248, 0.0
  %v1325 = vadd.f32 %v1323, %v1324
  %v1326 = vsel %vm1099, %v1249, 0.0
  %v1327 = vadd.f32 %v1325, %v1326
  %v1328 = vsel %vm1099, %v1250, 0.0
  %v1329 = vadd.f32 %v1327, %v1328
  %v1330 = vsel %vm1099, %v1251, 0.0
  %v1331 = vadd.f32 %v1329, %v1330
  %v1332 = vsel %vm1099, %v1252, 0.0
  %v1333 = vadd.f32 %v1331, %v1332
  %v1334 = vsel %vm1099, %v1253, 0.0
  %v1335 = vadd.f32 %v1333, %v1334
  %v1336 = vsel %vm1099, %v1254, 0.0
  %v1337 = vadd.f32 %v1335, %v1336
  %v1338 = vsel %vm1099, %v1255, 0.0
  %v1339 = vadd.f32 %v1337, %v1338
  %v1340 = vsel %vm1099, %v1256, 0.0
  %v1341 = vadd.f32 %v1339, %v1340
  %v1342 = vsel %vm1099, %v1257, 0.0
  %v1343 = vadd.f32 %v1341, %v1342
  %v1344 = vsel %vm1099, %v1258, 0.0
  %v1345 = vadd.f32 %v1343, %v1344
  %v1346 = vsel %vm1099, %v1259, 0.0
  %v1347 = vadd.f32 %v1345, %v1346
  %v1348 = vsel %vm1099, %v1260, 0.0
  %v1349 = vadd.f32 %v1347, %v1348
  %v1350 = vsel %vm1099, %v1261, 0.0
  %v1351 = vadd.f32 %v1349, %v1350
  %v1352 = vsel %vm1099, %v1262, 0.0
  %v1353 = vadd.f32 %v1351, %v1352
  %v1354 = vsel %vm1099, %v1263, 0.0
  %v1355 = vadd.f32 %v1353, %v1354
  %v1356 = vsel %vm1099, %v1264, 0.0
  %v1357 = vadd.f32 %v1355, %v1356
  %v1358 = vsel %vm1099, %v1265, 0.0
  %v1359 = vadd.f32 %v1357, %v1358
  %v1360 = vsel %vm1099, %v1266, 0.0
  %v1361 = vadd.f32 %v1359, %v1360
  %v1362 = vsel %vm1099, %v1267, 0.0
  %v1363 = vadd.f32 %v1361, %v1362
  %v1364 = vsel %vm1099, %v1268, 0.0
  %v1365 = vadd.f32 %v1363, %v1364
  %v1366 = vsel %vm1099, %v1269, 0.0
  %v1367 = vadd.f32 %v1365, %v1366
  %v1368 = vsel %vm1099, %v1270, 0.0
  %v1369 = vadd.f32 %v1367, %v1368
  %v1370 = vsel %vm1099, %v1271, 0.0
  %v1371 = vadd.f32 %v1369, %v1370
  %v1372 = vsel %vm1099, %v1272, 0.0
  %v1373 = vadd.f32 %v1371, %v1372
  %v1374 = vsel %vm1099, %v1273, 0.0
  %v1375 = vadd.f32 %v1373, %v1374
  %v1376 = vsel %vm1099, %v1274, 0.0
  %v1377 = vadd.f32 %v1375, %v1376
  %v1378 = vsel %vm1099, %v1275, 0.0
  %v1379 = vadd.f32 %v1377, %v1378
  %v1380 = vsel %vm1099, %v1276, 0.0
  %v1381 = vadd.f32 %v1379, %v1380
  %v1382 = vsel %vm1099, %v1277, 0.0
  %v1383 = vadd.f32 %v1381, %v1382
  %v1384 = vsel %vm1099, %v1278, 0.0
  %v1385 = vadd.f32 %v1383, %v1384
  %v1386 = vsel %vm1099, %v1279, 0.0
  %v1387 = vadd.f32 %v1385, %v1386
  %v1388 = vsel %vm1099, %v1280, 0.0
  %v1389 = vadd.f32 %v1387, %v1388
  %v1390 = vsel %vm1099, %v1281, 0.0
  %v1391 = vadd.f32 %v1389, %v1390
  %v1392 = vsel %vm1099, %v1282, 0.0
  %v1393 = vadd.f32 %v1391, %v1392
  %v1394 = vsel %vm1099, %v1283, 0.0
  %v1395 = vadd.f32 %v1393, %v1394
  %v1396 = vsel %vm1099, %v1284, 0.0
  %v1397 = vadd.f32 %v1395, %v1396
  %v1398 = vsel %vm1099, %v1285, 0.0
  %v1399 = vadd.f32 %v1397, %v1398
  %v1400 = vsel %vm1099, %v1286, 0.0
  %v1401 = vadd.f32 %v1399, %v1400
  %v1402 = vsel %vm1099, %v1287, 0.0
  %v1403 = vadd.f32 %v1401, %v1402
  %v1404 = vsel %vm1099, %v1288, 0.0
  %v1405 = vadd.f32 %v1403, %v1404
  %v1406 = vsel %vm1099, %v1289, 0.0
  %v1407 = vadd.f32 %v1405, %v1406
  %v1408 = vsel %vm1099, %v1290, 0.0
  %v1409 = vadd.f32 %v1407, %v1408
  %v1410 = vsel %vm1099, %v1291, 0.0
  %v1411 = vadd.f32 %v1409, %v1410
  %v1412 = vsel %vm1099, %v1292, 0.0
  %v1413 = vadd.f32 %v1411, %v1412
  %v1414 = vsel %vm1099, %v1293, 0.0
  %v1415 = vadd.f32 %v1413, %v1414
  %v1416 = vsel %vm1099, %v1294, 0.0
  %v1417 = vadd.f32 %v1415, %v1416
  %v1418 = vsel %vm1099, %v1295, 0.0
  %v1419 = vadd.f32 %v1417, %v1418
  %v1420 = vsel %vm1099, %v1296, 0.0
  %v1421 = vadd.f32 %v1419, %v1420
  %v1422 = vsel %vm1099, %v1297, 0.0
  %v1423 = vadd.f32 %v1421, %v1422
  %v1424 = vsel %vm1099, %v1298, 0.0
  %v1425 = vadd.f32 %v1423, %v1424
  %v1426 = vrot.slane %v1425, 4
  %v1427 = vadd.f32 %v1425, %v1426
  %v1428 = vrot.slane %v1427, 2
  %v1429 = vadd.f32 %v1427, %v1428
  %v1430 = vrot.slane %v1429, 1
  %v1431 = vadd.f32 %v1429, %v1430
  %1432 = vst.msk [vmem:[%s6] sm:$0x1] %vm1233, %v1431
  // Predicated region
  $region18: #{bottleneck_forward.6} parent=0 // pred_check
    _
  $region19: #{bottleneck_forward.6} parent=0 // pred_check_branch
    %1434 = sbr.rel (0) target = $region21
  $region20: #{bottleneck_forward.6} parent=0 // pred_region
    _
  $region21: #{bottleneck_forward.6} parent=0 // pred_fallthru
    _
  // Predicated region
  $region22: #{bottleneck_forward.6} parent=0 // pred_check
    _
  $region23: #{bottleneck_forward.6} parent=0 // pred_check_branch
    %1436 = sbr.rel (0) target = $region25
  $region24: #{bottleneck_forward.6} parent=0 // pred_region
    _
  $region25: #{bottleneck_forward.6} parent=0 // pred_fallthru
    _
  // Predicated region
  $region26: #{bottleneck_forward.6} parent=0 // pred_check
    _
  $region27: #{bottleneck_forward.6} parent=0 // pred_check_branch
    %1438 = sbr.rel (0) target = $region29
  $region28: #{bottleneck_forward.6} parent=0 // pred_region
    _
  $region29: #{bottleneck_forward.6} parent=0 // pred_fallthru
    _
  // Predicated region
  $region30: #{bottleneck_forward.6} parent=0 // pred_check
    _
  $region31: #{bottleneck_forward.6} parent=0 // pred_check_branch
    %1440 = sbr.rel (0) target = $region33
  $region32: #{bottleneck_forward.6} parent=0 // pred_region
    _
  $region33: #{bottleneck_forward.6} parent=0 // pred_fallthru
    _
  // Predicated region
  $region34: #{bottleneck_forward.6} parent=0 // pred_check
    _
  $region35: #{bottleneck_forward.6} parent=0 // pred_check_branch
    %1442 = sbr.rel (0) target = $region37
  $region36: #{bottleneck_forward.6} parent=0 // pred_region
    _
  $region37: #{bottleneck_forward.6} parent=0 // pred_fallthru
    _
  // Predicated region
  $region38: #{bottleneck_forward.6} parent=0 // pred_check
    _
  $region39: #{bottleneck_forward.6} parent=0 // pred_check_branch
    %1444 = sbr.rel (0) target = $region41
  $region40: #{bottleneck_forward.6} parent=0 // pred_region
    _
  $region41: #{bottleneck_forward.6} parent=0 // pred_fallthru
    _

// kernel: bottleneck_forward.7
$region0: #{bottleneck_forward.7}
  #allocation0 [shape = 'u32[]', space=smem, size = 0x4, offset = 0x4, fixed_abs, tag = 'smem constant byte address 0x4 - core index']
  #allocation1 [shape = 'u32[144,128]{1,0:T(1,128)}', space=vmem, size = 0x12000, scoped, tag = 'internal scratch']
  %s0 = inlined_call_operand.vmem [shape: bf16[512,16], index: 0, kind: input, shape index: {}, may-alias: {0,6}]
  %s1 = inlined_call_operand.vmem [shape: bf16[512,16], index: 1, kind: input, shape index: {}]
  %s2 = inlined_call_operand.vmem [shape: f32[1,16], index: 2, kind: input, shape index: {}]
  %s3 = inlined_call_operand.vmem [shape: f32[1,16], index: 3, kind: input, shape index: {}]
  %s4 = inlined_call_operand.vmem [shape: f32[1,16], index: 4, kind: input, shape index: {}]
  %s5 = inlined_call_operand.vmem [shape: f32[1,16], index: 5, kind: input, shape index: {}]
  %s6 = inlined_call_operand.vmem [shape: bf16[512,16], index: 6, kind: output, shape index: {}, may-alias: {0,6}]
  %s7 = sld [smem:[#allocation0]]
  $region34: #{bottleneck_forward.7} parent=0
    _
  %s9 = ssub.s32 1, %s7
  %s10 = scalar_select 0, %s9, %s7
  // Predicated region
  $region2: #{bottleneck_forward.7} parent=0 // pred_check
    _
  $region3: #{bottleneck_forward.7} parent=0 // pred_check_branch
    %12 = sbr.rel (0) target = $region5
  $region4: #{bottleneck_forward.7} parent=0 // pred_region
    _
  $region5: #{bottleneck_forward.7} parent=0 // pred_fallthru
    _
  // Predicated region
  $region6: #{bottleneck_forward.7} parent=0 // pred_check
    _
  $region7: #{bottleneck_forward.7} parent=0 // pred_check_branch
    %14 = sbr.rel (0) target = $region9
  $region8: #{bottleneck_forward.7} parent=0 // pred_region
    _
  $region9: #{bottleneck_forward.7} parent=0 // pred_fallthru
    _
  // Predicated region
  $region10: #{bottleneck_forward.7} parent=0 // pred_check
    _
  $region11: #{bottleneck_forward.7} parent=0 // pred_check_branch
    %16 = sbr.rel (0) target = $region13
  $region12: #{bottleneck_forward.7} parent=0 // pred_region
    _
  $region13: #{bottleneck_forward.7} parent=0 // pred_fallthru
    _
  // Predicated region
  $region14: #{bottleneck_forward.7} parent=0 // pred_check
    _
  $region15: #{bottleneck_forward.7} parent=0 // pred_check_branch
    %18 = sbr.rel (0) target = $region17
  $region16: #{bottleneck_forward.7} parent=0 // pred_region
    _
  $region17: #{bottleneck_forward.7} parent=0 // pred_fallthru
    _
  // Predicated region
  $region18: #{bottleneck_forward.7} parent=0 // pred_check
    _
  $region19: #{bottleneck_forward.7} parent=0 // pred_check_branch
    %20 = sbr.rel (0) target = $region21
  $region20: #{bottleneck_forward.7} parent=0 // pred_region
    _
  $region21: #{bottleneck_forward.7} parent=0 // pred_fallthru
    _
  // Predicated region
  $region22: #{bottleneck_forward.7} parent=0 // pred_check
    _
  $region23: #{bottleneck_forward.7} parent=0 // pred_check_branch
    %22 = sbr.rel (0) target = $region25
  $region24: #{bottleneck_forward.7} parent=0 // pred_region
    _
  $region25: #{bottleneck_forward.7} parent=0 // pred_fallthru
    _
  %v23 = vld [vmem:[%s0] sm:$0xf]
  %v24 = vld [vmem:[%s0 + $0x4] sm:$0xf]
  %v25 = vld [vmem:[%s0 + $0x8] sm:$0xf]
  %v26 = vld [vmem:[%s0 + $0xc] sm:$0xf]
  %v27 = vld [vmem:[%s0 + $0x10] sm:$0xf]
  %v28 = vld [vmem:[%s0 + $0x14] sm:$0xf]
  %v29 = vld [vmem:[%s0 + $0x18] sm:$0xf]
  %v30 = vld [vmem:[%s0 + $0x1c] sm:$0xf]
  %v31 = vld [vmem:[%s0 + $0x20] sm:$0xf]
  %v32 = vld [vmem:[%s0 + $0x24] sm:$0xf]
  %v33 = vld [vmem:[%s0 + $0x28] sm:$0xf]
  %v34 = vld [vmem:[%s0 + $0x2c] sm:$0xf]
  %v35 = vld [vmem:[%s0 + $0x30] sm:$0xf]
  %v36 = vld [vmem:[%s0 + $0x34] sm:$0xf]
  %v37 = vld [vmem:[%s0 + $0x38] sm:$0xf]
  %v38 = vld [vmem:[%s0 + $0x3c] sm:$0xf]
  %v39 = vld [vmem:[%s0 + $0x40] sm:$0xf]
  %v40 = vld [vmem:[%s0 + $0x44] sm:$0xf]
  %v41 = vld [vmem:[%s0 + $0x48] sm:$0xf]
  %v42 = vld [vmem:[%s0 + $0x4c] sm:$0xf]
  %v43 = vld [vmem:[%s0 + $0x50] sm:$0xf]
  %v44 = vld [vmem:[%s0 + $0x54] sm:$0xf]
  %v45 = vld [vmem:[%s0 + $0x58] sm:$0xf]
  %v46 = vld [vmem:[%s0 + $0x5c] sm:$0xf]
  %v47 = vld [vmem:[%s0 + $0x60] sm:$0xf]
  %v48 = vld [vmem:[%s0 + $0x64] sm:$0xf]
  %v49 = vld [vmem:[%s0 + $0x68] sm:$0xf]
  %v50 = vld [vmem:[%s0 + $0x6c] sm:$0xf]
  %v51 = vld [vmem:[%s0 + $0x70] sm:$0xf]
  %v52 = vld [vmem:[%s0 + $0x74] sm:$0xf]
  %v53 = vld [vmem:[%s0 + $0x78] sm:$0xf]
  %v54 = vld [vmem:[%s0 + $0x7c] sm:$0xf]
  %v55 = vld [vmem:[%s0 + $0x80] sm:$0xf]
  %v56 = vld [vmem:[%s0 + $0x84] sm:$0xf]
  %v57 = vld [vmem:[%s0 + $0x88] sm:$0xf]
  %v58 = vld [vmem:[%s0 + $0x8c] sm:$0xf]
  %v59 = vld [vmem:[%s0 + $0x90] sm:$0xf]
  %v60 = vld [vmem:[%s0 + $0x94] sm:$0xf]
  %v61 = vld [vmem:[%s0 + $0x98] sm:$0xf]
  %v62 = vld [vmem:[%s0 + $0x9c] sm:$0xf]
  %v63 = vld [vmem:[%s0 + $0xa0] sm:$0xf]
  %v64 = vld [vmem:[%s0 + $0xa4] sm:$0xf]
  %v65 = vld [vmem:[%s0 + $0xa8] sm:$0xf]
  %v66 = vld [vmem:[%s0 + $0xac] sm:$0xf]
  %v67 = vld [vmem:[%s0 + $0xb0] sm:$0xf]
  %v68 = vld [vmem:[%s0 + $0xb4] sm:$0xf]
  %v69 = vld [vmem:[%s0 + $0xb8] sm:$0xf]
  %v70 = vld [vmem:[%s0 + $0xbc] sm:$0xf]
  %v71 = vld [vmem:[%s0 + $0xc0] sm:$0xf]
  %v72 = vld [vmem:[%s0 + $0xc4] sm:$0xf]
  %v73 = vld [vmem:[%s0 + $0xc8] sm:$0xf]
  %v74 = vld [vmem:[%s0 + $0xcc] sm:$0xf]
  %v75 = vld [vmem:[%s0 + $0xd0] sm:$0xf]
  %v76 = vld [vmem:[%s0 + $0xd4] sm:$0xf]
  %v77 = vld [vmem:[%s0 + $0xd8] sm:$0xf]
  %v78 = vld [vmem:[%s0 + $0xdc] sm:$0xf]
  %v79 = vld [vmem:[%s0 + $0xe0] sm:$0xf]
  %v80 = vld [vmem:[%s0 + $0xe4] sm:$0xf]
  %v81 = vld [vmem:[%s0 + $0xe8] sm:$0xf]
  %v82 = vld [vmem:[%s0 + $0xec] sm:$0xf]
  %v83 = vld [vmem:[%s0 + $0xf0] sm:$0xf]
  %v84 = vld [vmem:[%s0 + $0xf4] sm:$0xf]
  %v85 = vld [vmem:[%s0 + $0xf8] sm:$0xf]
  %v86 = vld [vmem:[%s0 + $0xfc] sm:$0xf]
  %v87 = vunpack.c.l.bf16 %v23
  %v88 = vunpack.c.l.bf16 %v24
  %v89 = vunpack.c.l.bf16 %v25
  %v90 = vunpack.c.l.bf16 %v26
  %v91 = vunpack.c.l.bf16 %v27
  %v92 = vunpack.c.l.bf16 %v28
  %v93 = vunpack.c.l.bf16 %v29
  %v94 = vunpack.c.l.bf16 %v30
  %v95 = vunpack.c.l.bf16 %v31
  %v96 = vunpack.c.l.bf16 %v32
  %v97 = vunpack.c.l.bf16 %v33
  %v98 = vunpack.c.l.bf16 %v34
  %v99 = vunpack.c.l.bf16 %v35
  %v100 = vunpack.c.l.bf16 %v36
  %v101 = vunpack.c.l.bf16 %v37
  %v102 = vunpack.c.l.bf16 %v38
  %v103 = vunpack.c.l.bf16 %v39
  %v104 = vunpack.c.l.bf16 %v40
  %v105 = vunpack.c.l.bf16 %v41
  %v106 = vunpack.c.l.bf16 %v42
  %v107 = vunpack.c.l.bf16 %v43
  %v108 = vunpack.c.l.bf16 %v44
  %v109 = vunpack.c.l.bf16 %v45
  %v110 = vunpack.c.l.bf16 %v46
  %v111 = vunpack.c.l.bf16 %v47
  %v112 = vunpack.c.l.bf16 %v48
  %v113 = vunpack.c.l.bf16 %v49
  %v114 = vunpack.c.l.bf16 %v50
  %v115 = vunpack.c.l.bf16 %v51
  %v116 = vunpack.c.l.bf16 %v52
  %v117 = vunpack.c.l.bf16 %v53
  %v118 = vunpack.c.l.bf16 %v54
  %v119 = vunpack.c.l.bf16 %v55
  %v120 = vunpack.c.l.bf16 %v56
  %v121 = vunpack.c.l.bf16 %v57
  %v122 = vunpack.c.l.bf16 %v58
  %v123 = vunpack.c.l.bf16 %v59
  %v124 = vunpack.c.l.bf16 %v60
  %v125 = vunpack.c.l.bf16 %v61
  %v126 = vunpack.c.l.bf16 %v62
  %v127 = vunpack.c.l.bf16 %v63
  %v128 = vunpack.c.l.bf16 %v64
  %v129 = vunpack.c.l.bf16 %v65
  %v130 = vunpack.c.l.bf16 %v66
  %v131 = vunpack.c.l.bf16 %v67
  %v132 = vunpack.c.l.bf16 %v68
  %v133 = vunpack.c.l.bf16 %v69
  %v134 = vunpack.c.l.bf16 %v70
  %v135 = vunpack.c.l.bf16 %v71
  %v136 = vunpack.c.l.bf16 %v72
  %v137 = vunpack.c.l.bf16 %v73
  %v138 = vunpack.c.l.bf16 %v74
  %v139 = vunpack.c.l.bf16 %v75
  %v140 = vunpack.c.l.bf16 %v76
  %v141 = vunpack.c.l.bf16 %v77
  %v142 = vunpack.c.l.bf16 %v78
  %v143 = vunpack.c.l.bf16 %v79
  %v144 = vunpack.c.l.bf16 %v80
  %v145 = vunpack.c.l.bf16 %v81
  %v146 = vunpack.c.l.bf16 %v82
  %v147 = vunpack.c.l.bf16 %v83
  %v148 = vunpack.c.l.bf16 %v84
  %v149 = vunpack.c.l.bf16 %v85
  %v150 = vunpack.c.l.bf16 %v86
  %v151 = vld [vmem:[%s2] sm:$0x1]
  %v153 = vlaneseq
  %v154 = vshrl.u32 %v153, 7
  %v155 = vsub.s32 0, %v154
  %v156 = vrot.slane %v151, %v155
  %v158 = vmul.f32 %v87, %v156
  %v159 = vmul.f32 %v88, %v156
  %v160 = vmul.f32 %v89, %v156
  %v161 = vmul.f32 %v90, %v156
  %v162 = vmul.f32 %v91, %v156
  %v163 = vmul.f32 %v92, %v156
  %v164 = vmul.f32 %v93, %v156
  %v165 = vmul.f32 %v94, %v156
  %v166 = vmul.f32 %v95, %v156
  %v167 = vmul.f32 %v96, %v156
  %v168 = vmul.f32 %v97, %v156
  %v169 = vmul.f32 %v98, %v156
  %v170 = vmul.f32 %v99, %v156
  %v171 = vmul.f32 %v100, %v156
  %v172 = vmul.f32 %v101, %v156
  %v173 = vmul.f32 %v102, %v156
  %v174 = vmul.f32 %v103, %v156
  %v175 = vmul.f32 %v104, %v156
  %v176 = vmul.f32 %v105, %v156
  %v177 = vmul.f32 %v106, %v156
  %v178 = vmul.f32 %v107, %v156
  %v179 = vmul.f32 %v108, %v156
  %v180 = vmul.f32 %v109, %v156
  %v181 = vmul.f32 %v110, %v156
  %v182 = vmul.f32 %v111, %v156
  %v183 = vmul.f32 %v112, %v156
  %v184 = vmul.f32 %v113, %v156
  %v185 = vmul.f32 %v114, %v156
  %v186 = vmul.f32 %v115, %v156
  %v187 = vmul.f32 %v116, %v156
  %v188 = vmul.f32 %v117, %v156
  %v189 = vmul.f32 %v118, %v156
  %v190 = vmul.f32 %v119, %v156
  %v191 = vmul.f32 %v120, %v156
  %v192 = vmul.f32 %v121, %v156
  %v193 = vmul.f32 %v122, %v156
  %v194 = vmul.f32 %v123, %v156
  %v195 = vmul.f32 %v124, %v156
  %v196 = vmul.f32 %v125, %v156
  %v197 = vmul.f32 %v126, %v156
  %v198 = vmul.f32 %v127, %v156
  %v199 = vmul.f32 %v128, %v156
  %v200 = vmul.f32 %v129, %v156
  %v201 = vmul.f32 %v130, %v156
  %v202 = vmul.f32 %v131, %v156
  %v203 = vmul.f32 %v132, %v156
  %v204 = vmul.f32 %v133, %v156
  %v205 = vmul.f32 %v134, %v156
  %v206 = vmul.f32 %v135, %v156
  %v207 = vmul.f32 %v136, %v156
  %v208 = vmul.f32 %v137, %v156
  %v209 = vmul.f32 %v138, %v156
  %v210 = vmul.f32 %v139, %v156
  %v211 = vmul.f32 %v140, %v156
  %v212 = vmul.f32 %v141, %v156
  %v213 = vmul.f32 %v142, %v156
  %v214 = vmul.f32 %v143, %v156
  %v215 = vmul.f32 %v144, %v156
  %v216 = vmul.f32 %v145, %v156
  %v217 = vmul.f32 %v146, %v156
  %v218 = vmul.f32 %v147, %v156
  %v219 = vmul.f32 %v148, %v156
  %v220 = vmul.f32 %v149, %v156
  %v221 = vmul.f32 %v150, %v156
  %v222 = vld [vmem:[%s3] sm:$0x1]
  %v224 = vlaneseq
  %v225 = vshrl.u32 %v224, 7
  %v226 = vsub.s32 0, %v225
  %v227 = vrot.slane %v222, %v226
  %v229 = vadd.f32 %v158, %v227
  %v230 = vadd.f32 %v159, %v227
  %v231 = vadd.f32 %v160, %v227
  %v232 = vadd.f32 %v161, %v227
  %v233 = vadd.f32 %v162, %v227
  %v234 = vadd.f32 %v163, %v227
  %v235 = vadd.f32 %v164, %v227
  %v236 = vadd.f32 %v165, %v227
  %v237 = vadd.f32 %v166, %v227
  %v238 = vadd.f32 %v167, %v227
  %v239 = vadd.f32 %v168, %v227
  %v240 = vadd.f32 %v169, %v227
  %v241 = vadd.f32 %v170, %v227
  %v242 = vadd.f32 %v171, %v227
  %v243 = vadd.f32 %v172, %v227
  %v244 = vadd.f32 %v173, %v227
  %v245 = vadd.f32 %v174, %v227
  %v246 = vadd.f32 %v175, %v227
  %v247 = vadd.f32 %v176, %v227
  %v248 = vadd.f32 %v177, %v227
  %v249 = vadd.f32 %v178, %v227
  %v250 = vadd.f32 %v179, %v227
  %v251 = vadd.f32 %v180, %v227
  %v252 = vadd.f32 %v181, %v227
  %v253 = vadd.f32 %v182, %v227
  %v254 = vadd.f32 %v183, %v227
  %v255 = vadd.f32 %v184, %v227
  %v256 = vadd.f32 %v185, %v227
  %v257 = vadd.f32 %v186, %v227
  %v258 = vadd.f32 %v187, %v227
  %v259 = vadd.f32 %v188, %v227
  %v260 = vadd.f32 %v189, %v227
  %v261 = vadd.f32 %v190, %v227
  %v262 = vadd.f32 %v191, %v227
  %v263 = vadd.f32 %v192, %v227
  %v264 = vadd.f32 %v193, %v227
  %v265 = vadd.f32 %v194, %v227
  %v266 = vadd.f32 %v195, %v227
  %v267 = vadd.f32 %v196, %v227
  %v268 = vadd.f32 %v197, %v227
  %v269 = vadd.f32 %v198, %v227
  %v270 = vadd.f32 %v199, %v227
  %v271 = vadd.f32 %v200, %v227
  %v272 = vadd.f32 %v201, %v227
  %v273 = vadd.f32 %v202, %v227
  %v274 = vadd.f32 %v203, %v227
  %v275 = vadd.f32 %v204, %v227
  %v276 = vadd.f32 %v205, %v227
  %v277 = vadd.f32 %v206, %v227
  %v278 = vadd.f32 %v207, %v227
  %v279 = vadd.f32 %v208, %v227
  %v280 = vadd.f32 %v209, %v227
  %v281 = vadd.f32 %v210, %v227
  %v282 = vadd.f32 %v211, %v227
  %v283 = vadd.f32 %v212, %v227
  %v284 = vadd.f32 %v213, %v227
  %v285 = vadd.f32 %v214, %v227
  %v286 = vadd.f32 %v215, %v227
  %v287 = vadd.f32 %v216, %v227
  %v288 = vadd.f32 %v217, %v227
  %v289 = vadd.f32 %v218, %v227
  %v290 = vadd.f32 %v219, %v227
  %v291 = vadd.f32 %v220, %v227
  %v292 = vadd.f32 %v221, %v227
  %v293 = vld [vmem:[%s1] sm:$0xf]
  %v294 = vld [vmem:[%s1 + $0x4] sm:$0xf]
  %v295 = vld [vmem:[%s1 + $0x8] sm:$0xf]
  %v296 = vld [vmem:[%s1 + $0xc] sm:$0xf]
  %v297 = vld [vmem:[%s1 + $0x10] sm:$0xf]
  %v298 = vld [vmem:[%s1 + $0x14] sm:$0xf]
  %v299 = vld [vmem:[%s1 + $0x18] sm:$0xf]
  %v300 = vld [vmem:[%s1 + $0x1c] sm:$0xf]
  %v301 = vld [vmem:[%s1 + $0x20] sm:$0xf]
  %v302 = vld [vmem:[%s1 + $0x24] sm:$0xf]
  %v303 = vld [vmem:[%s1 + $0x28] sm:$0xf]
  %v304 = vld [vmem:[%s1 + $0x2c] sm:$0xf]
  %v305 = vld [vmem:[%s1 + $0x30] sm:$0xf]
  %v306 = vld [vmem:[%s1 + $0x34] sm:$0xf]
  %v307 = vld [vmem:[%s1 + $0x38] sm:$0xf]
  %v308 = vld [vmem:[%s1 + $0x3c] sm:$0xf]
  %v309 = vld [vmem:[%s1 + $0x40] sm:$0xf]
  %v310 = vld [vmem:[%s1 + $0x44] sm:$0xf]
  %v311 = vld [vmem:[%s1 + $0x48] sm:$0xf]
  %v312 = vld [vmem:[%s1 + $0x4c] sm:$0xf]
  %v313 = vld [vmem:[%s1 + $0x50] sm:$0xf]
  %v314 = vld [vmem:[%s1 + $0x54] sm:$0xf]
  %v315 = vld [vmem:[%s1 + $0x58] sm:$0xf]
  %v316 = vld [vmem:[%s1 + $0x5c] sm:$0xf]
  %v317 = vld [vmem:[%s1 + $0x60] sm:$0xf]
  %v318 = vld [vmem:[%s1 + $0x64] sm:$0xf]
  %v319 = vld [vmem:[%s1 + $0x68] sm:$0xf]
  %v320 = vld [vmem:[%s1 + $0x6c] sm:$0xf]
  %v321 = vld [vmem:[%s1 + $0x70] sm:$0xf]
  %v322 = vld [vmem:[%s1 + $0x74] sm:$0xf]
  %v323 = vld [vmem:[%s1 + $0x78] sm:$0xf]
  %v324 = vld [vmem:[%s1 + $0x7c] sm:$0xf]
  %v325 = vld [vmem:[%s1 + $0x80] sm:$0xf]
  %v326 = vld [vmem:[%s1 + $0x84] sm:$0xf]
  %v327 = vld [vmem:[%s1 + $0x88] sm:$0xf]
  %v328 = vld [vmem:[%s1 + $0x8c] sm:$0xf]
  %v329 = vld [vmem:[%s1 + $0x90] sm:$0xf]
  %v330 = vld [vmem:[%s1 + $0x94] sm:$0xf]
  %v331 = vld [vmem:[%s1 + $0x98] sm:$0xf]
  %v332 = vld [vmem:[%s1 + $0x9c] sm:$0xf]
  %v333 = vld [vmem:[%s1 + $0xa0] sm:$0xf]
  %v334 = vld [vmem:[%s1 + $0xa4] sm:$0xf]
  %v335 = vld [vmem:[%s1 + $0xa8] sm:$0xf]
  %v336 = vld [vmem:[%s1 + $0xac] sm:$0xf]
  %v337 = vld [vmem:[%s1 + $0xb0] sm:$0xf]
  %v338 = vld [vmem:[%s1 + $0xb4] sm:$0xf]
  %v339 = vld [vmem:[%s1 + $0xb8] sm:$0xf]
  %v340 = vld [vmem:[%s1 + $0xbc] sm:$0xf]
  %v341 = vld [vmem:[%s1 + $0xc0] sm:$0xf]
  %v342 = vld [vmem:[%s1 + $0xc4] sm:$0xf]
  %v343 = vld [vmem:[%s1 + $0xc8] sm:$0xf]
  %v344 = vld [vmem:[%s1 + $0xcc] sm:$0xf]
  %v345 = vld [vmem:[%s1 + $0xd0] sm:$0xf]
  %v346 = vld [vmem:[%s1 + $0xd4] sm:$0xf]
  %v347 = vld [vmem:[%s1 + $0xd8] sm:$0xf]
  %v348 = vld [vmem:[%s1 + $0xdc] sm:$0xf]
  %v349 = vld [vmem:[%s1 + $0xe0] sm:$0xf]
  %v350 = vld [vmem:[%s1 + $0xe4] sm:$0xf]
  %v351 = vld [vmem:[%s1 + $0xe8] sm:$0xf]
  %v352 = vld [vmem:[%s1 + $0xec] sm:$0xf]
  %v353 = vld [vmem:[%s1 + $0xf0] sm:$0xf]
  %v354 = vld [vmem:[%s1 + $0xf4] sm:$0xf]
  %v355 = vld [vmem:[%s1 + $0xf8] sm:$0xf]
  %v356 = vld [vmem:[%s1 + $0xfc] sm:$0xf]
  %v357 = vunpack.c.l.bf16 %v293
  %v358 = vunpack.c.l.bf16 %v294
  %v359 = vunpack.c.l.bf16 %v295
  %v360 = vunpack.c.l.bf16 %v296
  %v361 = vunpack.c.l.bf16 %v297
  %v362 = vunpack.c.l.bf16 %v298
  %v363 = vunpack.c.l.bf16 %v299
  %v364 = vunpack.c.l.bf16 %v300
  %v365 = vunpack.c.l.bf16 %v301
  %v366 = vunpack.c.l.bf16 %v302
  %v367 = vunpack.c.l.bf16 %v303
  %v368 = vunpack.c.l.bf16 %v304
  %v369 = vunpack.c.l.bf16 %v305
  %v370 = vunpack.c.l.bf16 %v306
  %v371 = vunpack.c.l.bf16 %v307
  %v372 = vunpack.c.l.bf16 %v308
  %v373 = vunpack.c.l.bf16 %v309
  %v374 = vunpack.c.l.bf16 %v310
  %v375 = vunpack.c.l.bf16 %v311
  %v376 = vunpack.c.l.bf16 %v312
  %v377 = vunpack.c.l.bf16 %v313
  %v378 = vunpack.c.l.bf16 %v314
  %v379 = vunpack.c.l.bf16 %v315
  %v380 = vunpack.c.l.bf16 %v316
  %v381 = vunpack.c.l.bf16 %v317
  %v382 = vunpack.c.l.bf16 %v318
  %v383 = vunpack.c.l.bf16 %v319
  %v384 = vunpack.c.l.bf16 %v320
  %v385 = vunpack.c.l.bf16 %v321
  %v386 = vunpack.c.l.bf16 %v322
  %v387 = vunpack.c.l.bf16 %v323
  %v388 = vunpack.c.l.bf16 %v324
  %v389 = vunpack.c.l.bf16 %v325
  %v390 = vunpack.c.l.bf16 %v326
  %v391 = vunpack.c.l.bf16 %v327
  %v392 = vunpack.c.l.bf16 %v328
  %v393 = vunpack.c.l.bf16 %v329
  %v394 = vunpack.c.l.bf16 %v330
  %v395 = vunpack.c.l.bf16 %v331
  %v396 = vunpack.c.l.bf16 %v332
  %v397 = vunpack.c.l.bf16 %v333
  %v398 = vunpack.c.l.bf16 %v334
  %v399 = vunpack.c.l.bf16 %v335
  %v400 = vunpack.c.l.bf16 %v336
  %v401 = vunpack.c.l.bf16 %v337
  %v402 = vunpack.c.l.bf16 %v338
  %v403 = vunpack.c.l.bf16 %v339
  %v404 = vunpack.c.l.bf16 %v340
  %v405 = vunpack.c.l.bf16 %v341
  %v406 = vunpack.c.l.bf16 %v342
  %v407 = vunpack.c.l.bf16 %v343
  %v408 = vunpack.c.l.bf16 %v344
  %v409 = vunpack.c.l.bf16 %v345
  %v410 = vunpack.c.l.bf16 %v346
  %v411 = vunpack.c.l.bf16 %v347
  %v412 = vunpack.c.l.bf16 %v348
  %v413 = vunpack.c.l.bf16 %v349
  %v414 = vunpack.c.l.bf16 %v350
  %v415 = vunpack.c.l.bf16 %v351
  %v416 = vunpack.c.l.bf16 %v352
  %v417 = vunpack.c.l.bf16 %v353
  %v418 = vunpack.c.l.bf16 %v354
  %v419 = vunpack.c.l.bf16 %v355
  %v420 = vunpack.c.l.bf16 %v356
  %v421 = vld [vmem:[%s4] sm:$0x1]
  %v423 = vlaneseq
  %v424 = vshrl.u32 %v423, 7
  %v425 = vsub.s32 0, %v424
  %v426 = vrot.slane %v421, %v425
  %v428 = vmul.f32 %v357, %v426
  %v429 = vmul.f32 %v358, %v426
  %v430 = vmul.f32 %v359, %v426
  %v431 = vmul.f32 %v360, %v426
  %v432 = vmul.f32 %v361, %v426
  %v433 = vmul.f32 %v362, %v426
  %v434 = vmul.f32 %v363, %v426
  %v435 = vmul.f32 %v364, %v426
  %v436 = vmul.f32 %v365, %v426
  %v437 = vmul.f32 %v366, %v426
  %v438 = vmul.f32 %v367, %v426
  %v439 = vmul.f32 %v368, %v426
  %v440 = vmul.f32 %v369, %v426
  %v441 = vmul.f32 %v370, %v426
  %v442 = vmul.f32 %v371, %v426
  %v443 = vmul.f32 %v372, %v426
  %v444 = vmul.f32 %v373, %v426
  %v445 = vmul.f32 %v374, %v426
  %v446 = vmul.f32 %v375, %v426
  %v447 = vmul.f32 %v376, %v426
  %v448 = vmul.f32 %v377, %v426
  %v449 = vmul.f32 %v378, %v426
  %v450 = vmul.f32 %v379, %v426
  %v451 = vmul.f32 %v380, %v426
  %v452 = vmul.f32 %v381, %v426
  %v453 = vmul.f32 %v382, %v426
  %v454 = vmul.f32 %v383, %v426
  %v455 = vmul.f32 %v384, %v426
  %v456 = vmul.f32 %v385, %v426
  %v457 = vmul.f32 %v386, %v426
  %v458 = vmul.f32 %v387, %v426
  %v459 = vmul.f32 %v388, %v426
  %v460 = vmul.f32 %v389, %v426
  %v461 = vmul.f32 %v390, %v426
  %v462 = vmul.f32 %v391, %v426
  %v463 = vmul.f32 %v392, %v426
  %v464 = vmul.f32 %v393, %v426
  %v465 = vmul.f32 %v394, %v426
  %v466 = vmul.f32 %v395, %v426
  %v467 = vmul.f32 %v396, %v426
  %v468 = vmul.f32 %v397, %v426
  %v469 = vmul.f32 %v398, %v426
  %v470 = vmul.f32 %v399, %v426
  %v471 = vmul.f32 %v400, %v426
  %v472 = vmul.f32 %v401, %v426
  %v473 = vmul.f32 %v402, %v426
  %v474 = vmul.f32 %v403, %v426
  %v475 = vmul.f32 %v404, %v426
  %v476 = vmul.f32 %v405, %v426
  %v477 = vmul.f32 %v406, %v426
  %v478 = vmul.f32 %v407, %v426
  %v479 = vmul.f32 %v408, %v426
  %v480 = vmul.f32 %v409, %v426
  %v481 = vmul.f32 %v410, %v426
  %v482 = vmul.f32 %v411, %v426
  %v483 = vmul.f32 %v412, %v426
  %v484 = vmul.f32 %v413, %v426
  %v485 = vmul.f32 %v414, %v426
  %v486 = vmul.f32 %v415, %v426
  %v487 = vmul.f32 %v416, %v426
  %v488 = vmul.f32 %v417, %v426
  %v489 = vmul.f32 %v418, %v426
  %v490 = vmul.f32 %v419, %v426
  %v491 = vmul.f32 %v420, %v426
  %v492 = vld [vmem:[%s5] sm:$0x1]
  %v494 = vlaneseq
  %v495 = vshrl.u32 %v494, 7
  %v496 = vsub.s32 0, %v495
  %v497 = vrot.slane %v492, %v496
  %v499 = vadd.f32 %v428, %v497
  %v500 = vadd.f32 %v429, %v497
  %v501 = vadd.f32 %v430, %v497
  %v502 = vadd.f32 %v431, %v497
  %v503 = vadd.f32 %v432, %v497
  %v504 = vadd.f32 %v433, %v497
  %v505 = vadd.f32 %v434, %v497
  %v506 = vadd.f32 %v435, %v497
  %v507 = vadd.f32 %v436, %v497
  %v508 = vadd.f32 %v437, %v497
  %v509 = vadd.f32 %v438, %v497
  %v510 = vadd.f32 %v439, %v497
  %v511 = vadd.f32 %v440, %v497
  %v512 = vadd.f32 %v441, %v497
  %v513 = vadd.f32 %v442, %v497
  %v514 = vadd.f32 %v443, %v497
  %v515 = vadd.f32 %v444, %v497
  %v516 = vadd.f32 %v445, %v497
  %v517 = vadd.f32 %v446, %v497
  %v518 = vadd.f32 %v447, %v497
  %v519 = vadd.f32 %v448, %v497
  %v520 = vadd.f32 %v449, %v497
  %v521 = vadd.f32 %v450, %v497
  %v522 = vadd.f32 %v451, %v497
  %v523 = vadd.f32 %v452, %v497
  %v524 = vadd.f32 %v453, %v497
  %v525 = vadd.f32 %v454, %v497
  %v526 = vadd.f32 %v455, %v497
  %v527 = vadd.f32 %v456, %v497
  %v528 = vadd.f32 %v457, %v497
  %v529 = vadd.f32 %v458, %v497
  %v530 = vadd.f32 %v459, %v497
  %v531 = vadd.f32 %v460, %v497
  %v532 = vadd.f32 %v461, %v497
  %v533 = vadd.f32 %v462, %v497
  %v534 = vadd.f32 %v463, %v497
  %v535 = vadd.f32 %v464, %v497
  %v536 = vadd.f32 %v465, %v497
  %v537 = vadd.f32 %v466, %v497
  %v538 = vadd.f32 %v467, %v497
  %v539 = vadd.f32 %v468, %v497
  %v540 = vadd.f32 %v469, %v497
  %v541 = vadd.f32 %v470, %v497
  %v542 = vadd.f32 %v471, %v497
  %v543 = vadd.f32 %v472, %v497
  %v544 = vadd.f32 %v473, %v497
  %v545 = vadd.f32 %v474, %v497
  %v546 = vadd.f32 %v475, %v497
  %v547 = vadd.f32 %v476, %v497
  %v548 = vadd.f32 %v477, %v497
  %v549 = vadd.f32 %v478, %v497
  %v550 = vadd.f32 %v479, %v497
  %v551 = vadd.f32 %v480, %v497
  %v552 = vadd.f32 %v481, %v497
  %v553 = vadd.f32 %v482, %v497
  %v554 = vadd.f32 %v483, %v497
  %v555 = vadd.f32 %v484, %v497
  %v556 = vadd.f32 %v485, %v497
  %v557 = vadd.f32 %v486, %v497
  %v558 = vadd.f32 %v487, %v497
  %v559 = vadd.f32 %v488, %v497
  %v560 = vadd.f32 %v489, %v497
  %v561 = vadd.f32 %v490, %v497
  %v562 = vadd.f32 %v491, %v497
  %v563 = vadd.f32 %v229, %v499
  %v564 = vadd.f32 %v230, %v500
  %v565 = vadd.f32 %v231, %v501
  %v566 = vadd.f32 %v232, %v502
  %v567 = vadd.f32 %v233, %v503
  %v568 = vadd.f32 %v234, %v504
  %v569 = vadd.f32 %v235, %v505
  %v570 = vadd.f32 %v236, %v506
  %v571 = vadd.f32 %v237, %v507
  %v572 = vadd.f32 %v238, %v508
  %v573 = vadd.f32 %v239, %v509
  %v574 = vadd.f32 %v240, %v510
  %v575 = vadd.f32 %v241, %v511
  %v576 = vadd.f32 %v242, %v512
  %v577 = vadd.f32 %v243, %v513
  %v578 = vadd.f32 %v244, %v514
  %v579 = vadd.f32 %v245, %v515
  %v580 = vadd.f32 %v246, %v516
  %v581 = vadd.f32 %v247, %v517
  %v582 = vadd.f32 %v248, %v518
  %v583 = vadd.f32 %v249, %v519
  %v584 = vadd.f32 %v250, %v520
  %v585 = vadd.f32 %v251, %v521
  %v586 = vadd.f32 %v252, %v522
  %v587 = vadd.f32 %v253, %v523
  %v588 = vadd.f32 %v254, %v524
  %v589 = vadd.f32 %v255, %v525
  %v590 = vadd.f32 %v256, %v526
  %v591 = vadd.f32 %v257, %v527
  %v592 = vadd.f32 %v258, %v528
  %v593 = vadd.f32 %v259, %v529
  %v594 = vadd.f32 %v260, %v530
  %v595 = vadd.f32 %v261, %v531
  %v596 = vadd.f32 %v262, %v532
  %v597 = vadd.f32 %v263, %v533
  %v598 = vadd.f32 %v264, %v534
  %v599 = vadd.f32 %v265, %v535
  %v600 = vadd.f32 %v266, %v536
  %v601 = vadd.f32 %v267, %v537
  %v602 = vadd.f32 %v268, %v538
  %v603 = vadd.f32 %v269, %v539
  %v604 = vadd.f32 %v270, %v540
  %v605 = vadd.f32 %v271, %v541
  %v606 = vadd.f32 %v272, %v542
  %v607 = vadd.f32 %v273, %v543
  %v608 = vadd.f32 %v274, %v544
  %v609 = vadd.f32 %v275, %v545
  %v610 = vadd.f32 %v276, %v546
  %v611 = vadd.f32 %v277, %v547
  %v612 = vadd.f32 %v278, %v548
  %v613 = vadd.f32 %v279, %v549
  %v614 = vadd.f32 %v280, %v550
  %v615 = vadd.f32 %v281, %v551
  %v616 = vadd.f32 %v282, %v552
  %v617 = vadd.f32 %v283, %v553
  %v618 = vadd.f32 %v284, %v554
  %v619 = vadd.f32 %v285, %v555
  %v620 = vadd.f32 %v286, %v556
  %v621 = vadd.f32 %v287, %v557
  %v622 = vadd.f32 %v288, %v558
  %v623 = vadd.f32 %v289, %v559
  %v624 = vadd.f32 %v290, %v560
  %v625 = vadd.f32 %v291, %v561
  %v626 = vadd.f32 %v292, %v562
  %v627 = vmax.f32 %v563, 0.0
  %v628 = vmax.f32 %v564, 0.0
  %v629 = vmax.f32 %v565, 0.0
  %v630 = vmax.f32 %v566, 0.0
  %v631 = vmax.f32 %v567, 0.0
  %v632 = vmax.f32 %v568, 0.0
  %v633 = vmax.f32 %v569, 0.0
  %v634 = vmax.f32 %v570, 0.0
  %v635 = vmax.f32 %v571, 0.0
  %v636 = vmax.f32 %v572, 0.0
  %v637 = vmax.f32 %v573, 0.0
  %v638 = vmax.f32 %v574, 0.0
  %v639 = vmax.f32 %v575, 0.0
  %v640 = vmax.f32 %v576, 0.0
  %v641 = vmax.f32 %v577, 0.0
  %v642 = vmax.f32 %v578, 0.0
  %v643 = vmax.f32 %v579, 0.0
  %v644 = vmax.f32 %v580, 0.0
  %v645 = vmax.f32 %v581, 0.0
  %v646 = vmax.f32 %v582, 0.0
  %v647 = vmax.f32 %v583, 0.0
  %v648 = vmax.f32 %v584, 0.0
  %v649 = vmax.f32 %v585, 0.0
  %v650 = vmax.f32 %v586, 0.0
  %v651 = vmax.f32 %v587, 0.0
  %v652 = vmax.f32 %v588, 0.0
  %v653 = vmax.f32 %v589, 0.0
  %v654 = vmax.f32 %v590, 0.0
  %v655 = vmax.f32 %v591, 0.0
  %v656 = vmax.f32 %v592, 0.0
  %v657 = vmax.f32 %v593, 0.0
  %v658 = vmax.f32 %v594, 0.0
  %v659 = vmax.f32 %v595, 0.0
  %v660 = vmax.f32 %v596, 0.0
  %v661 = vmax.f32 %v597, 0.0
  %v662 = vmax.f32 %v598, 0.0
  %v663 = vmax.f32 %v599, 0.0
  %v664 = vmax.f32 %v600, 0.0
  %v665 = vmax.f32 %v601, 0.0
  %v666 = vmax.f32 %v602, 0.0
  %v667 = vmax.f32 %v603, 0.0
  %v668 = vmax.f32 %v604, 0.0
  %v669 = vmax.f32 %v605, 0.0
  %v670 = vmax.f32 %v606, 0.0
  %v671 = vmax.f32 %v607, 0.0
  %v672 = vmax.f32 %v608, 0.0
  %v673 = vmax.f32 %v609, 0.0
  %v674 = vmax.f32 %v610, 0.0
  %v675 = vmax.f32 %v611, 0.0
  %v676 = vmax.f32 %v612, 0.0
  %v677 = vmax.f32 %v613, 0.0
  %v678 = vmax.f32 %v614, 0.0
  %v679 = vmax.f32 %v615, 0.0
  %v680 = vmax.f32 %v616, 0.0
  %v681 = vmax.f32 %v617, 0.0
  %v682 = vmax.f32 %v618, 0.0
  %v683 = vmax.f32 %v619, 0.0
  %v684 = vmax.f32 %v620, 0.0
  %v685 = vmax.f32 %v621, 0.0
  %v686 = vmax.f32 %v622, 0.0
  %v687 = vmax.f32 %v623, 0.0
  %v688 = vmax.f32 %v624, 0.0
  %v689 = vmax.f32 %v625, 0.0
  %v690 = vmax.f32 %v626, 0.0
  %v691 = vpack.c.bf16 %v628, %v627
  %v692 = vpack.c.bf16 %v630, %v629
  %v693 = vpack.c.bf16 %v632, %v631
  %v694 = vpack.c.bf16 %v634, %v633
  %v695 = vpack.c.bf16 %v636, %v635
  %v696 = vpack.c.bf16 %v638, %v637
  %v697 = vpack.c.bf16 %v640, %v639
  %v698 = vpack.c.bf16 %v642, %v641
  %v699 = vpack.c.bf16 %v644, %v643
  %v700 = vpack.c.bf16 %v646, %v645
  %v701 = vpack.c.bf16 %v648, %v647
  %v702 = vpack.c.bf16 %v650, %v649
  %v703 = vpack.c.bf16 %v652, %v651
  %v704 = vpack.c.bf16 %v654, %v653
  %v705 = vpack.c.bf16 %v656, %v655
  %v706 = vpack.c.bf16 %v658, %v657
  %v707 = vpack.c.bf16 %v660, %v659
  %v708 = vpack.c.bf16 %v662, %v661
  %v709 = vpack.c.bf16 %v664, %v663
  %v710 = vpack.c.bf16 %v666, %v665
  %v711 = vpack.c.bf16 %v668, %v667
  %v712 = vpack.c.bf16 %v670, %v669
  %v713 = vpack.c.bf16 %v672, %v671
  %v714 = vpack.c.bf16 %v674, %v673
  %v715 = vpack.c.bf16 %v676, %v675
  %v716 = vpack.c.bf16 %v678, %v677
  %v717 = vpack.c.bf16 %v680, %v679
  %v718 = vpack.c.bf16 %v682, %v681
  %v719 = vpack.c.bf16 %v684, %v683
  %v720 = vpack.c.bf16 %v686, %v685
  %v721 = vpack.c.bf16 %v688, %v687
  %v722 = vpack.c.bf16 %v690, %v689
  %v755 = vunpack.c.l.b16 %v691
  %v756 = vunpack.c.h.b16 %v691
  %v757 = vunpack.c.l.b16 %v692
  %v758 = vunpack.c.h.b16 %v692
  %v759 = vunpack.c.l.b16 %v693
  %v760 = vunpack.c.h.b16 %v693
  %v761 = vunpack.c.l.b16 %v694
  %v762 = vunpack.c.h.b16 %v694
  %v763 = vunpack.c.l.b16 %v695
  %v764 = vunpack.c.h.b16 %v695
  %v765 = vunpack.c.l.b16 %v696
  %v766 = vunpack.c.h.b16 %v696
  %v767 = vunpack.c.l.b16 %v697
  %v768 = vunpack.c.h.b16 %v697
  %v769 = vunpack.c.l.b16 %v698
  %v770 = vunpack.c.h.b16 %v698
  %v771 = vunpack.c.l.b16 %v699
  %v772 = vunpack.c.h.b16 %v699
  %v773 = vunpack.c.l.b16 %v700
  %v774 = vunpack.c.h.b16 %v700
  %v775 = vunpack.c.l.b16 %v701
  %v776 = vunpack.c.h.b16 %v701
  %v777 = vunpack.c.l.b16 %v702
  %v778 = vunpack.c.h.b16 %v702
  %v779 = vunpack.c.l.b16 %v703
  %v780 = vunpack.c.h.b16 %v703
  %v781 = vunpack.c.l.b16 %v704
  %v782 = vunpack.c.h.b16 %v704
  %v783 = vunpack.c.l.b16 %v705
  %v784 = vunpack.c.h.b16 %v705
  %v785 = vunpack.c.l.b16 %v706
  %v786 = vunpack.c.h.b16 %v706
  %v787 = vunpack.c.l.b16 %v707
  %v788 = vunpack.c.h.b16 %v707
  %v789 = vunpack.c.l.b16 %v708
  %v790 = vunpack.c.h.b16 %v708
  %v791 = vunpack.c.l.b16 %v709
  %v792 = vunpack.c.h.b16 %v709
  %v793 = vunpack.c.l.b16 %v710
  %v794 = vunpack.c.h.b16 %v710
  %v795 = vunpack.c.l.b16 %v711
  %v796 = vunpack.c.h.b16 %v711
  %v797 = vunpack.c.l.b16 %v712
  %v798 = vunpack.c.h.b16 %v712
  %v799 = vunpack.c.l.b16 %v713
  %v800 = vunpack.c.h.b16 %v713
  %v801 = vunpack.c.l.b16 %v714
  %v802 = vunpack.c.h.b16 %v714
  %v803 = vunpack.c.l.b16 %v715
  %v804 = vunpack.c.h.b16 %v715
  %v805 = vunpack.c.l.b16 %v716
  %v806 = vunpack.c.h.b16 %v716
  %v807 = vunpack.c.l.b16 %v717
  %v808 = vunpack.c.h.b16 %v717
  %v809 = vunpack.c.l.b16 %v718
  %v810 = vunpack.c.h.b16 %v718
  %v811 = vunpack.c.l.b16 %v719
  %v812 = vunpack.c.h.b16 %v719
  %v813 = vunpack.c.l.b16 %v720
  %v814 = vunpack.c.h.b16 %v720
  %v815 = vunpack.c.l.b16 %v721
  %v816 = vunpack.c.h.b16 %v721
  %v817 = vunpack.c.l.b16 %v722
  %v818 = vunpack.c.h.b16 %v722
  %v819 = vpack.c.b16 %v755, %v755
  %v820 = vpack.c.b16 %v756, %v756
  %v821 = vpack.c.b16 %v757, %v757
  %v822 = vpack.c.b16 %v758, %v758
  %v823 = vpack.c.b16 %v759, %v759
  %v824 = vpack.c.b16 %v760, %v760
  %v825 = vpack.c.b16 %v761, %v761
  %v826 = vpack.c.b16 %v762, %v762
  %v827 = vpack.c.b16 %v763, %v763
  %v828 = vpack.c.b16 %v764, %v764
  %v829 = vpack.c.b16 %v765, %v765
  %v830 = vpack.c.b16 %v766, %v766
  %v831 = vpack.c.b16 %v767, %v767
  %v832 = vpack.c.b16 %v768, %v768
  %v833 = vpack.c.b16 %v769, %v769
  %v834 = vpack.c.b16 %v770, %v770
  %v835 = vpack.c.b16 %v771, %v771
  %v836 = vpack.c.b16 %v772, %v772
  %v837 = vpack.c.b16 %v773, %v773
  %v838 = vpack.c.b16 %v774, %v774
  %v839 = vpack.c.b16 %v775, %v775
  %v840 = vpack.c.b16 %v776, %v776
  %v841 = vpack.c.b16 %v777, %v777
  %v842 = vpack.c.b16 %v778, %v778
  %v843 = vpack.c.b16 %v779, %v779
  %v844 = vpack.c.b16 %v780, %v780
  %v845 = vpack.c.b16 %v781, %v781
  %v846 = vpack.c.b16 %v782, %v782
  %v847 = vpack.c.b16 %v783, %v783
  %v848 = vpack.c.b16 %v784, %v784
  %v849 = vpack.c.b16 %v785, %v785
  %v850 = vpack.c.b16 %v786, %v786
  %v851 = vpack.c.b16 %v787, %v787
  %v852 = vpack.c.b16 %v788, %v788
  %v853 = vpack.c.b16 %v789, %v789
  %v854 = vpack.c.b16 %v790, %v790
  %v855 = vpack.c.b16 %v791, %v791
  %v856 = vpack.c.b16 %v792, %v792
  %v857 = vpack.c.b16 %v793, %v793
  %v858 = vpack.c.b16 %v794, %v794
  %v859 = vpack.c.b16 %v795, %v795
  %v860 = vpack.c.b16 %v796, %v796
  %v861 = vpack.c.b16 %v797, %v797
  %v862 = vpack.c.b16 %v798, %v798
  %v863 = vpack.c.b16 %v799, %v799
  %v864 = vpack.c.b16 %v800, %v800
  %v865 = vpack.c.b16 %v801, %v801
  %v866 = vpack.c.b16 %v802, %v802
  %v867 = vpack.c.b16 %v803, %v803
  %v868 = vpack.c.b16 %v804, %v804
  %v869 = vpack.c.b16 %v805, %v805
  %v870 = vpack.c.b16 %v806, %v806
  %v871 = vpack.c.b16 %v807, %v807
  %v872 = vpack.c.b16 %v808, %v808
  %v873 = vpack.c.b16 %v809, %v809
  %v874 = vpack.c.b16 %v810, %v810
  %v875 = vpack.c.b16 %v811, %v811
  %v876 = vpack.c.b16 %v812, %v812
  %v877 = vpack.c.b16 %v813, %v813
  %v878 = vpack.c.b16 %v814, %v814
  %v879 = vpack.c.b16 %v815, %v815
  %v880 = vpack.c.b16 %v816, %v816
  %v881 = vpack.c.b16 %v817, %v817
  %v882 = vpack.c.b16 %v818, %v818
  %vm947 = vcmask 125952
  %948 = vst.msk [vmem:[%s6] sm:$0xf] %vm947, %v819
  %949 = vst.msk [vmem:[%s6 + $0x4] sm:$0xf] %vm947, %v820
  %950 = vst.msk [vmem:[%s6 + $0x8] sm:$0xf] %vm947, %v821
  %951 = vst.msk [vmem:[%s6 + $0xc] sm:$0xf] %vm947, %v822
  %952 = vst.msk [vmem:[%s6 + $0x10] sm:$0xf] %vm947, %v823
  %953 = vst.msk [vmem:[%s6 + $0x14] sm:$0xf] %vm947, %v824
  %954 = vst.msk [vmem:[%s6 + $0x18] sm:$0xf] %vm947, %v825
  %955 = vst.msk [vmem:[%s6 + $0x1c] sm:$0xf] %vm947, %v826
  %956 = vst.msk [vmem:[%s6 + $0x20] sm:$0xf] %vm947, %v827
  %957 = vst.msk [vmem:[%s6 + $0x24] sm:$0xf] %vm947, %v828
  %958 = vst.msk [vmem:[%s6 + $0x28] sm:$0xf] %vm947, %v829
  %959 = vst.msk [vmem:[%s6 + $0x2c] sm:$0xf] %vm947, %v830
  %960 = vst.msk [vmem:[%s6 + $0x30] sm:$0xf] %vm947, %v831
  %961 = vst.msk [vmem:[%s6 + $0x34] sm:$0xf] %vm947, %v832
  %962 = vst.msk [vmem:[%s6 + $0x38] sm:$0xf] %vm947, %v833
  %963 = vst.msk [vmem:[%s6 + $0x3c] sm:$0xf] %vm947, %v834
  %964 = vst.msk [vmem:[%s6 + $0x40] sm:$0xf] %vm947, %v835
  %965 = vst.msk [vmem:[%s6 + $0x44] sm:$0xf] %vm947, %v836
  %966 = vst.msk [vmem:[%s6 + $0x48] sm:$0xf] %vm947, %v837
  %967 = vst.msk [vmem:[%s6 + $0x4c] sm:$0xf] %vm947, %v838
  %968 = vst.msk [vmem:[%s6 + $0x50] sm:$0xf] %vm947, %v839
  %969 = vst.msk [vmem:[%s6 + $0x54] sm:$0xf] %vm947, %v840
  %970 = vst.msk [vmem:[%s6 + $0x58] sm:$0xf] %vm947, %v841
  %971 = vst.msk [vmem:[%s6 + $0x5c] sm:$0xf] %vm947, %v842
  %972 = vst.msk [vmem:[%s6 + $0x60] sm:$0xf] %vm947, %v843
  %973 = vst.msk [vmem:[%s6 + $0x64] sm:$0xf] %vm947, %v844
  %974 = vst.msk [vmem:[%s6 + $0x68] sm:$0xf] %vm947, %v845
  %975 = vst.msk [vmem:[%s6 + $0x6c] sm:$0xf] %vm947, %v846
  %976 = vst.msk [vmem:[%s6 + $0x70] sm:$0xf] %vm947, %v847
  %977 = vst.msk [vmem:[%s6 + $0x74] sm:$0xf] %vm947, %v848
  %978 = vst.msk [vmem:[%s6 + $0x78] sm:$0xf] %vm947, %v849
  %979 = vst.msk [vmem:[%s6 + $0x7c] sm:$0xf] %vm947, %v850
  %980 = vst.msk [vmem:[%s6 + $0x80] sm:$0xf] %vm947, %v851
  %981 = vst.msk [vmem:[%s6 + $0x84] sm:$0xf] %vm947, %v852
  %982 = vst.msk [vmem:[%s6 + $0x88] sm:$0xf] %vm947, %v853
  %983 = vst.msk [vmem:[%s6 + $0x8c] sm:$0xf] %vm947, %v854
  %984 = vst.msk [vmem:[%s6 + $0x90] sm:$0xf] %vm947, %v855
  %985 = vst.msk [vmem:[%s6 + $0x94] sm:$0xf] %vm947, %v856
  %986 = vst.msk [vmem:[%s6 + $0x98] sm:$0xf] %vm947, %v857
  %987 = vst.msk [vmem:[%s6 + $0x9c] sm:$0xf] %vm947, %v858
  %988 = vst.msk [vmem:[%s6 + $0xa0] sm:$0xf] %vm947, %v859
  %989 = vst.msk [vmem:[%s6 + $0xa4] sm:$0xf] %vm947, %v860
  %990 = vst.msk [vmem:[%s6 + $0xa8] sm:$0xf] %vm947, %v861
  %991 = vst.msk [vmem:[%s6 + $0xac] sm:$0xf] %vm947, %v862
  %992 = vst.msk [vmem:[%s6 + $0xb0] sm:$0xf] %vm947, %v863
  %993 = vst.msk [vmem:[%s6 + $0xb4] sm:$0xf] %vm947, %v864
  %994 = vst.msk [vmem:[%s6 + $0xb8] sm:$0xf] %vm947, %v865
  %995 = vst.msk [vmem:[%s6 + $0xbc] sm:$0xf] %vm947, %v866
  %996 = vst.msk [vmem:[%s6 + $0xc0] sm:$0xf] %vm947, %v867
  %997 = vst.msk [vmem:[%s6 + $0xc4] sm:$0xf] %vm947, %v868
  %998 = vst.msk [vmem:[%s6 + $0xc8] sm:$0xf] %vm947, %v869
  %999 = vst.msk [vmem:[%s6 + $0xcc] sm:$0xf] %vm947, %v870
  %1000 = vst.msk [vmem:[%s6 + $0xd0] sm:$0xf] %vm947, %v871
  %1001 = vst.msk [vmem:[%s6 + $0xd4] sm:$0xf] %vm947, %v872
  %1002 = vst.msk [vmem:[%s6 + $0xd8] sm:$0xf] %vm947, %v873
  %1003 = vst.msk [vmem:[%s6 + $0xdc] sm:$0xf] %vm947, %v874
  %1004 = vst.msk [vmem:[%s6 + $0xe0] sm:$0xf] %vm947, %v875
  %1005 = vst.msk [vmem:[%s6 + $0xe4] sm:$0xf] %vm947, %v876
  %1006 = vst.msk [vmem:[%s6 + $0xe8] sm:$0xf] %vm947, %v877
  %1007 = vst.msk [vmem:[%s6 + $0xec] sm:$0xf] %vm947, %v878
  %1008 = vst.msk [vmem:[%s6 + $0xf0] sm:$0xf] %vm947, %v879
  %1009 = vst.msk [vmem:[%s6 + $0xf4] sm:$0xf] %vm947, %v880
  %1010 = vst.msk [vmem:[%s6 + $0xf8] sm:$0xf] %vm947, %v881
  %1011 = vst.msk [vmem:[%s6 + $0xfc] sm:$0xf] %vm947, %v882
  // Predicated region
  $region26: #{bottleneck_forward.7} parent=0 // pred_check
    _
  $region27: #{bottleneck_forward.7} parent=0 // pred_check_branch
    %1013 = sbr.rel (0) target = $region29
  $region28: #{bottleneck_forward.7} parent=0 // pred_region
    _
  $region29: #{bottleneck_forward.7} parent=0 // pred_fallthru
    _
  // Predicated region
  $region30: #{bottleneck_forward.7} parent=0 // pred_check
    _
  $region31: #{bottleneck_forward.7} parent=0 // pred_check_branch
    %1015 = sbr.rel (0) target = $region33
  $region32: #{bottleneck_forward.7} parent=0 // pred_region
    _
  $region33: #{bottleneck_forward.7} parent=0 // pred_fallthru
    _

// kernel: bottleneck_forward.4
$region0: #{bottleneck_forward.4}
  #allocation0 [shape = 'u32[]', space=smem, size = 0x4, offset = 0x4, fixed_abs, tag = 'smem constant byte address 0x4 - core index']
  #allocation1 [shape = 'u32[144,128]{1,0:T(1,128)}', space=vmem, size = 0x12000, scoped, tag = 'internal scratch']
  %s0 = inlined_call_operand.vmem [shape: bf16[512,4], index: 0, kind: input, shape index: {}]
  %s1 = inlined_call_operand.vmem [shape: bf16[4,4], index: 1, kind: input, shape index: {}]
  %s2 = inlined_call_operand.vmem [shape: bf16[4,16], index: 2, kind: input, shape index: {}]
  %s3 = inlined_call_operand.vmem [shape: bf16[512,4], index: 3, kind: output, shape index: {0}]
  %s4 = inlined_call_operand.vmem [shape: bf16[512,16], index: 4, kind: output, shape index: {1}]
  %s5 = inlined_call_operand.vmem [shape: f32[1,1,4], index: 5, kind: output, shape index: {2}]
  %s6 = inlined_call_operand.vmem [shape: f32[1,1,4], index: 6, kind: output, shape index: {3}]
  %s7 = inlined_call_operand.vmem [shape: f32[1,1,16], index: 7, kind: output, shape index: {4}]
  %s8 = inlined_call_operand.vmem [shape: f32[1,1,16], index: 8, kind: output, shape index: {5}]
  %9 = xla_tuple %s3, %s4, %s5, %s6, %s7, %s8
  %s10 = sld [smem:[#allocation0]]
  $region62: #{bottleneck_forward.4} parent=0
    _
  %s12 = ssub.s32 1, %s10
  %s13 = scalar_select 0, %s12, %s10
  // Predicated region
  $region2: #{bottleneck_forward.4} parent=0 // pred_check
    _
  $region3: #{bottleneck_forward.4} parent=0 // pred_check_branch
    %15 = sbr.rel (0) target = $region5
  $region4: #{bottleneck_forward.4} parent=0 // pred_region
    _
  $region5: #{bottleneck_forward.4} parent=0 // pred_fallthru
    _
  // Predicated region
  $region6: #{bottleneck_forward.4} parent=0 // pred_check
    _
  $region7: #{bottleneck_forward.4} parent=0 // pred_check_branch
    %17 = sbr.rel (0) target = $region9
  $region8: #{bottleneck_forward.4} parent=0 // pred_region
    _
  $region9: #{bottleneck_forward.4} parent=0 // pred_fallthru
    _
  // Predicated region
  $region10: #{bottleneck_forward.4} parent=0 // pred_check
    _
  $region11: #{bottleneck_forward.4} parent=0 // pred_check_branch
    %19 = sbr.rel (0) target = $region13
  $region12: #{bottleneck_forward.4} parent=0 // pred_region
    _
  $region13: #{bottleneck_forward.4} parent=0 // pred_fallthru
    _
  %v21 = vld [vmem:[%s0] sm:$0xf]
  %v22 = vld [vmem:[%s0 + $0x4] sm:$0xf]
  %v23 = vld [vmem:[%s0 + $0x8] sm:$0xf]
  %v24 = vld [vmem:[%s0 + $0xc] sm:$0xf]
  %v25 = vld [vmem:[%s0 + $0x10] sm:$0xf]
  %v26 = vld [vmem:[%s0 + $0x14] sm:$0xf]
  %v27 = vld [vmem:[%s0 + $0x18] sm:$0xf]
  %v28 = vld [vmem:[%s0 + $0x1c] sm:$0xf]
  %v29 = vld [vmem:[%s0 + $0x20] sm:$0xf]
  %v30 = vld [vmem:[%s0 + $0x24] sm:$0xf]
  %v31 = vld [vmem:[%s0 + $0x28] sm:$0xf]
  %v32 = vld [vmem:[%s0 + $0x2c] sm:$0xf]
  %v33 = vld [vmem:[%s0 + $0x30] sm:$0xf]
  %v34 = vld [vmem:[%s0 + $0x34] sm:$0xf]
  %v35 = vld [vmem:[%s0 + $0x38] sm:$0xf]
  %v36 = vld [vmem:[%s0 + $0x3c] sm:$0xf]
  %v37 = vld [vmem:[%s0 + $0x40] sm:$0xf]
  %v38 = vld [vmem:[%s0 + $0x44] sm:$0xf]
  %v39 = vld [vmem:[%s0 + $0x48] sm:$0xf]
  %v40 = vld [vmem:[%s0 + $0x4c] sm:$0xf]
  %v41 = vld [vmem:[%s0 + $0x50] sm:$0xf]
  %v42 = vld [vmem:[%s0 + $0x54] sm:$0xf]
  %v43 = vld [vmem:[%s0 + $0x58] sm:$0xf]
  %v44 = vld [vmem:[%s0 + $0x5c] sm:$0xf]
  %v45 = vld [vmem:[%s0 + $0x60] sm:$0xf]
  %v46 = vld [vmem:[%s0 + $0x64] sm:$0xf]
  %v47 = vld [vmem:[%s0 + $0x68] sm:$0xf]
  %v48 = vld [vmem:[%s0 + $0x6c] sm:$0xf]
  %v49 = vld [vmem:[%s0 + $0x70] sm:$0xf]
  %v50 = vld [vmem:[%s0 + $0x74] sm:$0xf]
  %v51 = vld [vmem:[%s0 + $0x78] sm:$0xf]
  %v52 = vld [vmem:[%s0 + $0x7c] sm:$0xf]
  %v53 = vld [vmem:[%s0 + $0x80] sm:$0xf]
  %v54 = vld [vmem:[%s0 + $0x84] sm:$0xf]
  %v55 = vld [vmem:[%s0 + $0x88] sm:$0xf]
  %v56 = vld [vmem:[%s0 + $0x8c] sm:$0xf]
  %v57 = vld [vmem:[%s0 + $0x90] sm:$0xf]
  %v58 = vld [vmem:[%s0 + $0x94] sm:$0xf]
  %v59 = vld [vmem:[%s0 + $0x98] sm:$0xf]
  %v60 = vld [vmem:[%s0 + $0x9c] sm:$0xf]
  %v61 = vld [vmem:[%s0 + $0xa0] sm:$0xf]
  %v62 = vld [vmem:[%s0 + $0xa4] sm:$0xf]
  %v63 = vld [vmem:[%s0 + $0xa8] sm:$0xf]
  %v64 = vld [vmem:[%s0 + $0xac] sm:$0xf]
  %v65 = vld [vmem:[%s0 + $0xb0] sm:$0xf]
  %v66 = vld [vmem:[%s0 + $0xb4] sm:$0xf]
  %v67 = vld [vmem:[%s0 + $0xb8] sm:$0xf]
  %v68 = vld [vmem:[%s0 + $0xbc] sm:$0xf]
  %v69 = vld [vmem:[%s0 + $0xc0] sm:$0xf]
  %v70 = vld [vmem:[%s0 + $0xc4] sm:$0xf]
  %v71 = vld [vmem:[%s0 + $0xc8] sm:$0xf]
  %v72 = vld [vmem:[%s0 + $0xcc] sm:$0xf]
  %v73 = vld [vmem:[%s0 + $0xd0] sm:$0xf]
  %v74 = vld [vmem:[%s0 + $0xd4] sm:$0xf]
  %v75 = vld [vmem:[%s0 + $0xd8] sm:$0xf]
  %v76 = vld [vmem:[%s0 + $0xdc] sm:$0xf]
  %v77 = vld [vmem:[%s0 + $0xe0] sm:$0xf]
  %v78 = vld [vmem:[%s0 + $0xe4] sm:$0xf]
  %v79 = vld [vmem:[%s0 + $0xe8] sm:$0xf]
  %v80 = vld [vmem:[%s0 + $0xec] sm:$0xf]
  %v81 = vld [vmem:[%s0 + $0xf0] sm:$0xf]
  %v82 = vld [vmem:[%s0 + $0xf4] sm:$0xf]
  %v83 = vld [vmem:[%s0 + $0xf8] sm:$0xf]
  %v84 = vld [vmem:[%s0 + $0xfc] sm:$0xf]
  %v85 = vld [vmem:[%s1] sm:$0x3]
  %v150 = vunpack.c.l.b16 %v21
  %v151 = vunpack.c.l.b16 %v22
  %v152 = vunpack.c.l.b16 %v23
  %v153 = vunpack.c.l.b16 %v24
  %v154 = vunpack.c.l.b16 %v25
  %v155 = vunpack.c.l.b16 %v26
  %v156 = vunpack.c.l.b16 %v27
  %v157 = vunpack.c.l.b16 %v28
  %v158 = vunpack.c.l.b16 %v29
  %v159 = vunpack.c.l.b16 %v30
  %v160 = vunpack.c.l.b16 %v31
  %v161 = vunpack.c.l.b16 %v32
  %v162 = vunpack.c.l.b16 %v33
  %v163 = vunpack.c.l.b16 %v34
  %v164 = vunpack.c.l.b16 %v35
  %v165 = vunpack.c.l.b16 %v36
  %v166 = vunpack.c.l.b16 %v37
  %v167 = vunpack.c.l.b16 %v38
  %v168 = vunpack.c.l.b16 %v39
  %v169 = vunpack.c.l.b16 %v40
  %v170 = vunpack.c.l.b16 %v41
  %v171 = vunpack.c.l.b16 %v42
  %v172 = vunpack.c.l.b16 %v43
  %v173 = vunpack.c.l.b16 %v44
  %v174 = vunpack.c.l.b16 %v45
  %v175 = vunpack.c.l.b16 %v46
  %v176 = vunpack.c.l.b16 %v47
  %v177 = vunpack.c.l.b16 %v48
  %v178 = vunpack.c.l.b16 %v49
  %v179 = vunpack.c.l.b16 %v50
  %v180 = vunpack.c.l.b16 %v51
  %v181 = vunpack.c.l.b16 %v52
  %v182 = vunpack.c.l.b16 %v53
  %v183 = vunpack.c.l.b16 %v54
  %v184 = vunpack.c.l.b16 %v55
  %v185 = vunpack.c.l.b16 %v56
  %v186 = vunpack.c.l.b16 %v57
  %v187 = vunpack.c.l.b16 %v58
  %v188 = vunpack.c.l.b16 %v59
  %v189 = vunpack.c.l.b16 %v60
  %v190 = vunpack.c.l.b16 %v61
  %v191 = vunpack.c.l.b16 %v62
  %v192 = vunpack.c.l.b16 %v63
  %v193 = vunpack.c.l.b16 %v64
  %v194 = vunpack.c.l.b16 %v65
  %v195 = vunpack.c.l.b16 %v66
  %v196 = vunpack.c.l.b16 %v67
  %v197 = vunpack.c.l.b16 %v68
  %v198 = vunpack.c.l.b16 %v69
  %v199 = vunpack.c.l.b16 %v70
  %v200 = vunpack.c.l.b16 %v71
  %v201 = vunpack.c.l.b16 %v72
  %v202 = vunpack.c.l.b16 %v73
  %v203 = vunpack.c.l.b16 %v74
  %v204 = vunpack.c.l.b16 %v75
  %v205 = vunpack.c.l.b16 %v76
  %v206 = vunpack.c.l.b16 %v77
  %v207 = vunpack.c.l.b16 %v78
  %v208 = vunpack.c.l.b16 %v79
  %v209 = vunpack.c.l.b16 %v80
  %v210 = vunpack.c.l.b16 %v81
  %v211 = vunpack.c.l.b16 %v82
  %v212 = vunpack.c.l.b16 %v83
  %v213 = vunpack.c.l.b16 %v84
  %v214 = vpack.c.b16 %v151, %v150
  %v215 = vpack.c.b16 %v153, %v152
  %v216 = vpack.c.b16 %v155, %v154
  %v217 = vpack.c.b16 %v157, %v156
  %v218 = vpack.c.b16 %v159, %v158
  %v219 = vpack.c.b16 %v161, %v160
  %v220 = vpack.c.b16 %v163, %v162
  %v221 = vpack.c.b16 %v165, %v164
  %v222 = vpack.c.b16 %v167, %v166
  %v223 = vpack.c.b16 %v169, %v168
  %v224 = vpack.c.b16 %v171, %v170
  %v225 = vpack.c.b16 %v173, %v172
  %v226 = vpack.c.b16 %v175, %v174
  %v227 = vpack.c.b16 %v177, %v176
  %v228 = vpack.c.b16 %v179, %v178
  %v229 = vpack.c.b16 %v181, %v180
  %v230 = vpack.c.b16 %v183, %v182
  %v231 = vpack.c.b16 %v185, %v184
  %v232 = vpack.c.b16 %v187, %v186
  %v233 = vpack.c.b16 %v189, %v188
  %v234 = vpack.c.b16 %v191, %v190
  %v235 = vpack.c.b16 %v193, %v192
  %v236 = vpack.c.b16 %v195, %v194
  %v237 = vpack.c.b16 %v197, %v196
  %v238 = vpack.c.b16 %v199, %v198
  %v239 = vpack.c.b16 %v201, %v200
  %v240 = vpack.c.b16 %v203, %v202
  %v241 = vpack.c.b16 %v205, %v204
  %v242 = vpack.c.b16 %v207, %v206
  %v243 = vpack.c.b16 %v209, %v208
  %v244 = vpack.c.b16 %v211, %v210
  %v245 = vpack.c.b16 %v213, %v212
  %vm246 = vcmask 31744
  %v248 = vsel %vm246, %v214, 0
  %v251 = vsel %vm246, %v215, 0
  %v254 = vsel %vm246, %v216, 0
  %v257 = vsel %vm246, %v217, 0
  %v260 = vsel %vm246, %v218, 0
  %v263 = vsel %vm246, %v219, 0
  %v266 = vsel %vm246, %v220, 0
  %v269 = vsel %vm246, %v221, 0
  %v272 = vsel %vm246, %v222, 0
  %v275 = vsel %vm246, %v223, 0
  %v278 = vsel %vm246, %v224, 0
  %v281 = vsel %vm246, %v225, 0
  %v284 = vsel %vm246, %v226, 0
  %v287 = vsel %vm246, %v227, 0
  %v290 = vsel %vm246, %v228, 0
  %v293 = vsel %vm246, %v229, 0
  %v296 = vsel %vm246, %v230, 0
  %v299 = vsel %vm246, %v231, 0
  %v302 = vsel %vm246, %v232, 0
  %v305 = vsel %vm246, %v233, 0
  %v308 = vsel %vm246, %v234, 0
  %v311 = vsel %vm246, %v235, 0
  %v314 = vsel %vm246, %v236, 0
  %v317 = vsel %vm246, %v237, 0
  %v320 = vsel %vm246, %v238, 0
  %v323 = vsel %vm246, %v239, 0
  %v326 = vsel %vm246, %v240, 0
  %v329 = vsel %vm246, %v241, 0
  %v332 = vsel %vm246, %v242, 0
  %v335 = vsel %vm246, %v243, 0
  %v338 = vsel %vm246, %v244, 0
  %v341 = vsel %vm246, %v245, 0
  %vm343 = vcmask 1041408
  %v345 = vsel %vm343, %v85, 0
  %347 = vmatprep.subr.bf16.mxu0 0
  %348 = vmatpush1.bf16.msra.mxu0 %v345
  %349 = vmatprep.subr.bf16.mxu0 0
  %350 = vmatpush1.bf16.msra.mxu0 0
  %351 = vmatprep.subr.bf16.mxu0 0
  %352 = vmatpush1.bf16.msra.mxu0 0
  %353 = vmatprep.subr.bf16.mxu0 0
  %354 = vmatpush1.bf16.msra.mxu0 0
  %355 = vmatprep.subr.bf16.mxu0 0
  %356 = vmatpush1.bf16.msra.mxu0 0
  %357 = vmatprep.subr.bf16.mxu0 0
  %358 = vmatpush1.bf16.msra.mxu0 0
  %359 = vmatprep.subr.bf16.mxu0 0
  %360 = vmatpush1.bf16.msra.mxu0 0
  %361 = vmatprep.subr.bf16.mxu0 0
  %362 = vmatpush1.bf16.msra.mxu0 0
  %363 = vmatprep.subr.bf16.mxu0 0
  %364 = vmatpush1.bf16.msra.mxu0 0
  %365 = vmatprep.subr.bf16.mxu0 0
  %366 = vmatpush1.bf16.msra.mxu0 0
  %367 = vmatprep.subr.bf16.mxu0 0
  %368 = vmatpush1.bf16.msra.mxu0 0
  %369 = vmatprep.subr.bf16.mxu0 0
  %370 = vmatpush1.bf16.msra.mxu0 0
  %371 = vmatprep.subr.bf16.mxu0 0
  %372 = vmatpush1.bf16.msra.mxu0 0
  %373 = vmatprep.subr.bf16.mxu0 0
  %374 = vmatpush1.bf16.msra.mxu0 0
  %375 = vmatprep.subr.bf16.mxu0 0
  %376 = vmatpush1.bf16.msra.mxu0 0
  %377 = vmatprep.subr.bf16.mxu0 0
  %378 = vmatpush1.bf16.msra.mxu0 0
  %379 = vmatprep.mubr.bf16.mxu0 0
  %380 = vmatmul.mubr.bf16.gmra.mrb[0].mxu0 %v248
  %v381 = vpop.f32.mrb[0].mxu0
  %v382 = vadd.f32 0.0, %v381
  %v383 = vpop.f32.mrb[0].mxu0
  %v384 = vpop.f32.mrb[0].mxu0
  %v385 = vadd.f32 0.0, %v384
  %v386 = vpop.f32.mrb[0].mxu0
  %387 = vmatprep.mubr.bf16.mxu0 0
  %388 = vmatmul.mubr.bf16.gmra.mrb[0].mxu0 %v251
  %v389 = vpop.f32.mrb[0].mxu0
  %v390 = vadd.f32 0.0, %v389
  %v391 = vpop.f32.mrb[0].mxu0
  %v392 = vpop.f32.mrb[0].mxu0
  %v393 = vadd.f32 0.0, %v392
  %v394 = vpop.f32.mrb[0].mxu0
  %395 = vmatprep.mubr.bf16.mxu0 0
  %396 = vmatmul.mubr.bf16.gmra.mrb[0].mxu0 %v254
  %v397 = vpop.f32.mrb[0].mxu0
  %v398 = vadd.f32 0.0, %v397
  %v399 = vpop.f32.mrb[0].mxu0
  %v400 = vpop.f32.mrb[0].mxu0
  %v401 = vadd.f32 0.0, %v400
  %v402 = vpop.f32.mrb[0].mxu0
  %403 = vmatprep.mubr.bf16.mxu0 0
  %404 = vmatmul.mubr.bf16.gmra.mrb[0].mxu0 %v257
  %v405 = vpop.f32.mrb[0].mxu0
  %v406 = vadd.f32 0.0, %v405
  %v407 = vpop.f32.mrb[0].mxu0
  %v408 = vpop.f32.mrb[0].mxu0
  %v409 = vadd.f32 0.0, %v408
  %v410 = vpop.f32.mrb[0].mxu0
  %411 = vmatprep.mubr.bf16.mxu0 0
  %412 = vmatmul.mubr.bf16.gmra.mrb[0].mxu0 %v260
  %v413 = vpop.f32.mrb[0].mxu0
  %v414 = vadd.f32 0.0, %v413
  %v415 = vpop.f32.mrb[0].mxu0
  %v416 = vpop.f32.mrb[0].mxu0
  %v417 = vadd.f32 0.0, %v416
  %v418 = vpop.f32.mrb[0].mxu0
  %419 = vmatprep.mubr.bf16.mxu0 0
  %420 = vmatmul.mubr.bf16.gmra.mrb[0].mxu0 %v263
  %v421 = vpop.f32.mrb[0].mxu0
  %v422 = vadd.f32 0.0, %v421
  %v423 = vpop.f32.mrb[0].mxu0
  %v424 = vpop.f32.mrb[0].mxu0
  %v425 = vadd.f32 0.0, %v424
  %v426 = vpop.f32.mrb[0].mxu0
  %427 = vmatprep.mubr.bf16.mxu0 0
  %428 = vmatmul.mubr.bf16.gmra.mrb[0].mxu0 %v266
  %v429 = vpop.f32.mrb[0].mxu0
  %v430 = vadd.f32 0.0, %v429
  %v431 = vpop.f32.mrb[0].mxu0
  %v432 = vpop.f32.mrb[0].mxu0
  %v433 = vadd.f32 0.0, %v432
  %v434 = vpop.f32.mrb[0].mxu0
  %435 = vmatprep.mubr.bf16.mxu0 0
  %436 = vmatmul.mubr.bf16.gmra.mrb[0].mxu0 %v269
  %v437 = vpop.f32.mrb[0].mxu0
  %v438 = vadd.f32 0.0, %v437
  %v439 = vpop.f32.mrb[0].mxu0
  %v440 = vpop.f32.mrb[0].mxu0
  %v441 = vadd.f32 0.0, %v440
  %v442 = vpop.f32.mrb[0].mxu0
  %443 = vmatprep.mubr.bf16.mxu0 0
  %444 = vmatmul.mubr.bf16.gmra.mrb[0].mxu0 %v272
  %v445 = vpop.f32.mrb[0].mxu0
  %v446 = vadd.f32 0.0, %v445
  %v447 = vpop.f32.mrb[0].mxu0
  %v448 = vpop.f32.mrb[0].mxu0
  %v449 = vadd.f32 0.0, %v448
  %v450 = vpop.f32.mrb[0].mxu0
  %451 = vmatprep.mubr.bf16.mxu0 0
  %452 = vmatmul.mubr.bf16.gmra.mrb[0].mxu0 %v275
  %v453 = vpop.f32.mrb[0].mxu0
  %v454 = vadd.f32 0.0, %v453
  %v455 = vpop.f32.mrb[0].mxu0
  %v456 = vpop.f32.mrb[0].mxu0
  %v457 = vadd.f32 0.0, %v456
  %v458 = vpop.f32.mrb[0].mxu0
  %459 = vmatprep.mubr.bf16.mxu0 0
  %460 = vmatmul.mubr.bf16.gmra.mrb[0].mxu0 %v278
  %v461 = vpop.f32.mrb[0].mxu0
  %v462 = vadd.f32 0.0, %v461
  %v463 = vpop.f32.mrb[0].mxu0
  %v464 = vpop.f32.mrb[0].mxu0
  %v465 = vadd.f32 0.0, %v464
  %v466 = vpop.f32.mrb[0].mxu0
  %467 = vmatprep.mubr.bf16.mxu0 0
  %468 = vmatmul.mubr.bf16.gmra.mrb[0].mxu0 %v281
  %v469 = vpop.f32.mrb[0].mxu0
  %v470 = vadd.f32 0.0, %v469
  %v471 = vpop.f32.mrb[0].mxu0
  %v472 = vpop.f32.mrb[0].mxu0
  %v473 = vadd.f32 0.0, %v472
  %v474 = vpop.f32.mrb[0].mxu0
  %475 = vmatprep.mubr.bf16.mxu0 0
  %476 = vmatmul.mubr.bf16.gmra.mrb[0].mxu0 %v284
  %v477 = vpop.f32.mrb[0].mxu0
  %v478 = vadd.f32 0.0, %v477
  %v479 = vpop.f32.mrb[0].mxu0
  %v480 = vpop.f32.mrb[0].mxu0
  %v481 = vadd.f32 0.0, %v480
  %v482 = vpop.f32.mrb[0].mxu0
  %483 = vmatprep.mubr.bf16.mxu0 0
  %484 = vmatmul.mubr.bf16.gmra.mrb[0].mxu0 %v287
  %v485 = vpop.f32.mrb[0].mxu0
  %v486 = vadd.f32 0.0, %v485
  %v487 = vpop.f32.mrb[0].mxu0
  %v488 = vpop.f32.mrb[0].mxu0
  %v489 = vadd.f32 0.0, %v488
  %v490 = vpop.f32.mrb[0].mxu0
  %491 = vmatprep.mubr.bf16.mxu0 0
  %492 = vmatmul.mubr.bf16.gmra.mrb[0].mxu0 %v290
  %v493 = vpop.f32.mrb[0].mxu0
  %v494 = vadd.f32 0.0, %v493
  %v495 = vpop.f32.mrb[0].mxu0
  %v496 = vpop.f32.mrb[0].mxu0
  %v497 = vadd.f32 0.0, %v496
  %v498 = vpop.f32.mrb[0].mxu0
  %499 = vmatprep.mubr.bf16.mxu0 0
  %500 = vmatmul.mubr.bf16.gmra.mrb[0].mxu0 %v293
  %v501 = vpop.f32.mrb[0].mxu0
  %v502 = vadd.f32 0.0, %v501
  %v503 = vpop.f32.mrb[0].mxu0
  %v504 = vpop.f32.mrb[0].mxu0
  %v505 = vadd.f32 0.0, %v504
  %v506 = vpop.f32.mrb[0].mxu0
  %507 = vmatprep.mubr.bf16.mxu0 0
  %508 = vmatmul.mubr.bf16.gmra.mrb[0].mxu0 %v296
  %v509 = vpop.f32.mrb[0].mxu0
  %v510 = vadd.f32 0.0, %v509
  %v511 = vpop.f32.mrb[0].mxu0
  %v512 = vpop.f32.mrb[0].mxu0
  %v513 = vadd.f32 0.0, %v512
  %v514 = vpop.f32.mrb[0].mxu0
  %515 = vmatprep.mubr.bf16.mxu0 0
  %516 = vmatmul.mubr.bf16.gmra.mrb[0].mxu0 %v299
  %v517 = vpop.f32.mrb[0].mxu0
  %v518 = vadd.f32 0.0, %v517
  %v519 = vpop.f32.mrb[0].mxu0
  %v520 = vpop.f32.mrb[0].mxu0
  %v521 = vadd.f32 0.0, %v520
  %v522 = vpop.f32.mrb[0].mxu0
  %523 = vmatprep.mubr.bf16.mxu0 0
  %524 = vmatmul.mubr.bf16.gmra.mrb[0].mxu0 %v302
  %v525 = vpop.f32.mrb[0].mxu0
  %v526 = vadd.f32 0.0, %v525
  %v527 = vpop.f32.mrb[0].mxu0
  %v528 = vpop.f32.mrb[0].mxu0
  %v529 = vadd.f32 0.0, %v528
  %v530 = vpop.f32.mrb[0].mxu0
  %531 = vmatprep.mubr.bf16.mxu0 0
  %532 = vmatmul.mubr.bf16.gmra.mrb[0].mxu0 %v305
  %v533 = vpop.f32.mrb[0].mxu0
  %v534 = vadd.f32 0.0, %v533
  %v535 = vpop.f32.mrb[0].mxu0
  %v536 = vpop.f32.mrb[0].mxu0
  %v537 = vadd.f32 0.0, %v536
  %v538 = vpop.f32.mrb[0].mxu0
  %539 = vmatprep.mubr.bf16.mxu0 0
  %540 = vmatmul.mubr.bf16.gmra.mrb[0].mxu0 %v308
  %v541 = vpop.f32.mrb[0].mxu0
  %v542 = vadd.f32 0.0, %v541
  %v543 = vpop.f32.mrb[0].mxu0
  %v544 = vpop.f32.mrb[0].mxu0
  %v545 = vadd.f32 0.0, %v544
  %v546 = vpop.f32.mrb[0].mxu0
  %547 = vmatprep.mubr.bf16.mxu0 0
  %548 = vmatmul.mubr.bf16.gmra.mrb[0].mxu0 %v311
  %v549 = vpop.f32.mrb[0].mxu0
  %v550 = vadd.f32 0.0, %v549
  %v551 = vpop.f32.mrb[0].mxu0
  %v552 = vpop.f32.mrb[0].mxu0
  %v553 = vadd.f32 0.0, %v552
  %v554 = vpop.f32.mrb[0].mxu0
  %555 = vmatprep.mubr.bf16.mxu0 0
  %556 = vmatmul.mubr.bf16.gmra.mrb[0].mxu0 %v314
  %v557 = vpop.f32.mrb[0].mxu0
  %v558 = vadd.f32 0.0, %v557
  %v559 = vpop.f32.mrb[0].mxu0
  %v560 = vpop.f32.mrb[0].mxu0
  %v561 = vadd.f32 0.0, %v560
  %v562 = vpop.f32.mrb[0].mxu0
  %563 = vmatprep.mubr.bf16.mxu0 0
  %564 = vmatmul.mubr.bf16.gmra.mrb[0].mxu0 %v317
  %v565 = vpop.f32.mrb[0].mxu0
  %v566 = vadd.f32 0.0, %v565
  %v567 = vpop.f32.mrb[0].mxu0
  %v568 = vpop.f32.mrb[0].mxu0
  %v569 = vadd.f32 0.0, %v568
  %v570 = vpop.f32.mrb[0].mxu0
  %571 = vmatprep.mubr.bf16.mxu0 0
  %572 = vmatmul.mubr.bf16.gmra.mrb[0].mxu0 %v320
  %v573 = vpop.f32.mrb[0].mxu0
  %v574 = vadd.f32 0.0, %v573
  %v575 = vpop.f32.mrb[0].mxu0
  %v576 = vpop.f32.mrb[0].mxu0
  %v577 = vadd.f32 0.0, %v576
  %v578 = vpop.f32.mrb[0].mxu0
  %579 = vmatprep.mubr.bf16.mxu0 0
  %580 = vmatmul.mubr.bf16.gmra.mrb[0].mxu0 %v323
  %v581 = vpop.f32.mrb[0].mxu0
  %v582 = vadd.f32 0.0, %v581
  %v583 = vpop.f32.mrb[0].mxu0
  %v584 = vpop.f32.mrb[0].mxu0
  %v585 = vadd.f32 0.0, %v584
  %v586 = vpop.f32.mrb[0].mxu0
  %587 = vmatprep.mubr.bf16.mxu0 0
  %588 = vmatmul.mubr.bf16.gmra.mrb[0].mxu0 %v326
  %v589 = vpop.f32.mrb[0].mxu0
  %v590 = vadd.f32 0.0, %v589
  %v591 = vpop.f32.mrb[0].mxu0
  %v592 = vpop.f32.mrb[0].mxu0
  %v593 = vadd.f32 0.0, %v592
  %v594 = vpop.f32.mrb[0].mxu0
  %595 = vmatprep.mubr.bf16.mxu0 0
  %596 = vmatmul.mubr.bf16.gmra.mrb[0].mxu0 %v329
  %v597 = vpop.f32.mrb[0].mxu0
  %v598 = vadd.f32 0.0, %v597
  %v599 = vpop.f32.mrb[0].mxu0
  %v600 = vpop.f32.mrb[0].mxu0
  %v601 = vadd.f32 0.0, %v600
  %v602 = vpop.f32.mrb[0].mxu0
  %603 = vmatprep.mubr.bf16.mxu0 0
  %604 = vmatmul.mubr.bf16.gmra.mrb[0].mxu0 %v332
  %v605 = vpop.f32.mrb[0].mxu0
  %v606 = vadd.f32 0.0, %v605
  %v607 = vpop.f32.mrb[0].mxu0
  %v608 = vpop.f32.mrb[0].mxu0
  %v609 = vadd.f32 0.0, %v608
  %v610 = vpop.f32.mrb[0].mxu0
  %611 = vmatprep.mubr.bf16.mxu0 0
  %612 = vmatmul.mubr.bf16.gmra.mrb[0].mxu0 %v335
  %v613 = vpop.f32.mrb[0].mxu0
  %v614 = vadd.f32 0.0, %v613
  %v615 = vpop.f32.mrb[0].mxu0
  %v616 = vpop.f32.mrb[0].mxu0
  %v617 = vadd.f32 0.0, %v616
  %v618 = vpop.f32.mrb[0].mxu0
  %619 = vmatprep.mubr.bf16.mxu0 0
  %620 = vmatmul.mubr.bf16.gmra.mrb[0].mxu0 %v338
  %v621 = vpop.f32.mrb[0].mxu0
  %v622 = vadd.f32 0.0, %v621
  %v623 = vpop.f32.mrb[0].mxu0
  %v624 = vpop.f32.mrb[0].mxu0
  %v625 = vadd.f32 0.0, %v624
  %v626 = vpop.f32.mrb[0].mxu0
  %627 = vmatprep.mubr.bf16.mxu0 0
  %628 = vmatmul.mubr.bf16.gmra.mrb[0].mxu0 %v341
  %v629 = vpop.f32.mrb[0].mxu0
  %v630 = vadd.f32 0.0, %v629
  %v631 = vpop.f32.mrb[0].mxu0
  %v632 = vpop.f32.mrb[0].mxu0
  %v633 = vadd.f32 0.0, %v632
  %v634 = vpop.f32.mrb[0].mxu0
  %635 = vdwg.mxu0
  %v636 = vpack.c.bf16 %v385, %v382
  %v637 = vpack.c.bf16 %v393, %v390
  %v638 = vpack.c.bf16 %v401, %v398
  %v639 = vpack.c.bf16 %v409, %v406
  %v640 = vpack.c.bf16 %v417, %v414
  %v641 = vpack.c.bf16 %v425, %v422
  %v642 = vpack.c.bf16 %v433, %v430
  %v643 = vpack.c.bf16 %v441, %v438
  %v644 = vpack.c.bf16 %v449, %v446
  %v645 = vpack.c.bf16 %v457, %v454
  %v646 = vpack.c.bf16 %v465, %v462
  %v647 = vpack.c.bf16 %v473, %v470
  %v648 = vpack.c.bf16 %v481, %v478
  %v649 = vpack.c.bf16 %v489, %v486
  %v650 = vpack.c.bf16 %v497, %v494
  %v651 = vpack.c.bf16 %v505, %v502
  %v652 = vpack.c.bf16 %v513, %v510
  %v653 = vpack.c.bf16 %v521, %v518
  %v654 = vpack.c.bf16 %v529, %v526
  %v655 = vpack.c.bf16 %v537, %v534
  %v656 = vpack.c.bf16 %v545, %v542
  %v657 = vpack.c.bf16 %v553, %v550
  %v658 = vpack.c.bf16 %v561, %v558
  %v659 = vpack.c.bf16 %v569, %v566
  %v660 = vpack.c.bf16 %v577, %v574
  %v661 = vpack.c.bf16 %v585, %v582
  %v662 = vpack.c.bf16 %v593, %v590
  %v663 = vpack.c.bf16 %v601, %v598
  %v664 = vpack.c.bf16 %v609, %v606
  %v665 = vpack.c.bf16 %v617, %v614
  %v666 = vpack.c.bf16 %v625, %v622
  %v667 = vpack.c.bf16 %v633, %v630
  %v700 = vunpack.c.l.b16 %v636
  %v701 = vunpack.c.h.b16 %v636
  %v702 = vunpack.c.l.b16 %v637
  %v703 = vunpack.c.h.b16 %v637
  %v704 = vunpack.c.l.b16 %v638
  %v705 = vunpack.c.h.b16 %v638
  %v706 = vunpack.c.l.b16 %v639
  %v707 = vunpack.c.h.b16 %v639
  %v708 = vunpack.c.l.b16 %v640
  %v709 = vunpack.c.h.b16 %v640
  %v710 = vunpack.c.l.b16 %v641
  %v711 = vunpack.c.h.b16 %v641
  %v712 = vunpack.c.l.b16 %v642
  %v713 = vunpack.c.h.b16 %v642
  %v714 = vunpack.c.l.b16 %v643
  %v715 = vunpack.c.h.b16 %v643
  %v716 = vunpack.c.l.b16 %v644
  %v717 = vunpack.c.h.b16 %v644
  %v718 = vunpack.c.l.b16 %v645
  %v719 = vunpack.c.h.b16 %v645
  %v720 = vunpack.c.l.b16 %v646
  %v721 = vunpack.c.h.b16 %v646
  %v722 = vunpack.c.l.b16 %v647
  %v723 = vunpack.c.h.b16 %v647
  %v724 = vunpack.c.l.b16 %v648
  %v725 = vunpack.c.h.b16 %v648
  %v726 = vunpack.c.l.b16 %v649
  %v727 = vunpack.c.h.b16 %v649
  %v728 = vunpack.c.l.b16 %v650
  %v729 = vunpack.c.h.b16 %v650
  %v730 = vunpack.c.l.b16 %v651
  %v731 = vunpack.c.h.b16 %v651
  %v732 = vunpack.c.l.b16 %v652
  %v733 = vunpack.c.h.b16 %v652
  %v734 = vunpack.c.l.b16 %v653
  %v735 = vunpack.c.h.b16 %v653
  %v736 = vunpack.c.l.b16 %v654
  %v737 = vunpack.c.h.b16 %v654
  %v738 = vunpack.c.l.b16 %v655
  %v739 = vunpack.c.h.b16 %v655
  %v740 = vunpack.c.l.b16 %v656
  %v741 = vunpack.c.h.b16 %v656
  %v742 = vunpack.c.l.b16 %v657
  %v743 = vunpack.c.h.b16 %v657
  %v744 = vunpack.c.l.b16 %v658
  %v745 = vunpack.c.h.b16 %v658
  %v746 = vunpack.c.l.b16 %v659
  %v747 = vunpack.c.h.b16 %v659
  %v748 = vunpack.c.l.b16 %v660
  %v749 = vunpack.c.h.b16 %v660
  %v750 = vunpack.c.l.b16 %v661
  %v751 = vunpack.c.h.b16 %v661
  %v752 = vunpack.c.l.b16 %v662
  %v753 = vunpack.c.h.b16 %v662
  %v754 = vunpack.c.l.b16 %v663
  %v755 = vunpack.c.h.b16 %v663
  %v756 = vunpack.c.l.b16 %v664
  %v757 = vunpack.c.h.b16 %v664
  %v758 = vunpack.c.l.b16 %v665
  %v759 = vunpack.c.h.b16 %v665
  %v760 = vunpack.c.l.b16 %v666
  %v761 = vunpack.c.h.b16 %v666
  %v762 = vunpack.c.l.b16 %v667
  %v763 = vunpack.c.h.b16 %v667
  %v764 = vpack.c.b16 %v700, %v700
  %v765 = vpack.c.b16 %v701, %v701
  %v766 = vpack.c.b16 %v702, %v702
  %v767 = vpack.c.b16 %v703, %v703
  %v768 = vpack.c.b16 %v704, %v704
  %v769 = vpack.c.b16 %v705, %v705
  %v770 = vpack.c.b16 %v706, %v706
  %v771 = vpack.c.b16 %v707, %v707
  %v772 = vpack.c.b16 %v708, %v708
  %v773 = vpack.c.b16 %v709, %v709
  %v774 = vpack.c.b16 %v710, %v710
  %v775 = vpack.c.b16 %v711, %v711
  %v776 = vpack.c.b16 %v712, %v712
  %v777 = vpack.c.b16 %v713, %v713
  %v778 = vpack.c.b16 %v714, %v714
  %v779 = vpack.c.b16 %v715, %v715
  %v780 = vpack.c.b16 %v716, %v716
  %v781 = vpack.c.b16 %v717, %v717
  %v782 = vpack.c.b16 %v718, %v718
  %v783 = vpack.c.b16 %v719, %v719
  %v784 = vpack.c.b16 %v720, %v720
  %v785 = vpack.c.b16 %v721, %v721
  %v786 = vpack.c.b16 %v722, %v722
  %v787 = vpack.c.b16 %v723, %v723
  %v788 = vpack.c.b16 %v724, %v724
  %v789 = vpack.c.b16 %v725, %v725
  %v790 = vpack.c.b16 %v726, %v726
  %v791 = vpack.c.b16 %v727, %v727
  %v792 = vpack.c.b16 %v728, %v728
  %v793 = vpack.c.b16 %v729, %v729
  %v794 = vpack.c.b16 %v730, %v730
  %v795 = vpack.c.b16 %v731, %v731
  %v796 = vpack.c.b16 %v732, %v732
  %v797 = vpack.c.b16 %v733, %v733
  %v798 = vpack.c.b16 %v734, %v734
  %v799 = vpack.c.b16 %v735, %v735
  %v800 = vpack.c.b16 %v736, %v736
  %v801 = vpack.c.b16 %v737, %v737
  %v802 = vpack.c.b16 %v738, %v738
  %v803 = vpack.c.b16 %v739, %v739
  %v804 = vpack.c.b16 %v740, %v740
  %v805 = vpack.c.b16 %v741, %v741
  %v806 = vpack.c.b16 %v742, %v742
  %v807 = vpack.c.b16 %v743, %v743
  %v808 = vpack.c.b16 %v744, %v744
  %v809 = vpack.c.b16 %v745, %v745
  %v810 = vpack.c.b16 %v746, %v746
  %v811 = vpack.c.b16 %v747, %v747
  %v812 = vpack.c.b16 %v748, %v748
  %v813 = vpack.c.b16 %v749, %v749
  %v814 = vpack.c.b16 %v750, %v750
  %v815 = vpack.c.b16 %v751, %v751
  %v816 = vpack.c.b16 %v752, %v752
  %v817 = vpack.c.b16 %v753, %v753
  %v818 = vpack.c.b16 %v754, %v754
  %v819 = vpack.c.b16 %v755, %v755
  %v820 = vpack.c.b16 %v756, %v756
  %v821 = vpack.c.b16 %v757, %v757
  %v822 = vpack.c.b16 %v758, %v758
  %v823 = vpack.c.b16 %v759, %v759
  %v824 = vpack.c.b16 %v760, %v760
  %v825 = vpack.c.b16 %v761, %v761
  %v826 = vpack.c.b16 %v762, %v762
  %v827 = vpack.c.b16 %v763, %v763
  %vm892 = vcmask 27648
  %893 = vst.msk [vmem:[%s3] sm:$0xf] %vm892, %v764
  %894 = vst.msk [vmem:[%s3 + $0x4] sm:$0xf] %vm892, %v765
  %895 = vst.msk [vmem:[%s3 + $0x8] sm:$0xf] %vm892, %v766
  %896 = vst.msk [vmem:[%s3 + $0xc] sm:$0xf] %vm892, %v767
  %897 = vst.msk [vmem:[%s3 + $0x10] sm:$0xf] %vm892, %v768
  %898 = vst.msk [vmem:[%s3 + $0x14] sm:$0xf] %vm892, %v769
  %899 = vst.msk [vmem:[%s3 + $0x18] sm:$0xf] %vm892, %v770
  %900 = vst.msk [vmem:[%s3 + $0x1c] sm:$0xf] %vm892, %v771
  %901 = vst.msk [vmem:[%s3 + $0x20] sm:$0xf] %vm892, %v772
  %902 = vst.msk [vmem:[%s3 + $0x24] sm:$0xf] %vm892, %v773
  %903 = vst.msk [vmem:[%s3 + $0x28] sm:$0xf] %vm892, %v774
  %904 = vst.msk [vmem:[%s3 + $0x2c] sm:$0xf] %vm892, %v775
  %905 = vst.msk [vmem:[%s3 + $0x30] sm:$0xf] %vm892, %v776
  %906 = vst.msk [vmem:[%s3 + $0x34] sm:$0xf] %vm892, %v777
  %907 = vst.msk [vmem:[%s3 + $0x38] sm:$0xf] %vm892, %v778
  %908 = vst.msk [vmem:[%s3 + $0x3c] sm:$0xf] %vm892, %v779
  %909 = vst.msk [vmem:[%s3 + $0x40] sm:$0xf] %vm892, %v780
  %910 = vst.msk [vmem:[%s3 + $0x44] sm:$0xf] %vm892, %v781
  %911 = vst.msk [vmem:[%s3 + $0x48] sm:$0xf] %vm892, %v782
  %912 = vst.msk [vmem:[%s3 + $0x4c] sm:$0xf] %vm892, %v783
  %913 = vst.msk [vmem:[%s3 + $0x50] sm:$0xf] %vm892, %v784
  %914 = vst.msk [vmem:[%s3 + $0x54] sm:$0xf] %vm892, %v785
  %915 = vst.msk [vmem:[%s3 + $0x58] sm:$0xf] %vm892, %v786
  %916 = vst.msk [vmem:[%s3 + $0x5c] sm:$0xf] %vm892, %v787
  %917 = vst.msk [vmem:[%s3 + $0x60] sm:$0xf] %vm892, %v788
  %918 = vst.msk [vmem:[%s3 + $0x64] sm:$0xf] %vm892, %v789
  %919 = vst.msk [vmem:[%s3 + $0x68] sm:$0xf] %vm892, %v790
  %920 = vst.msk [vmem:[%s3 + $0x6c] sm:$0xf] %vm892, %v791
  %921 = vst.msk [vmem:[%s3 + $0x70] sm:$0xf] %vm892, %v792
  %922 = vst.msk [vmem:[%s3 + $0x74] sm:$0xf] %vm892, %v793
  %923 = vst.msk [vmem:[%s3 + $0x78] sm:$0xf] %vm892, %v794
  %924 = vst.msk [vmem:[%s3 + $0x7c] sm:$0xf] %vm892, %v795
  %925 = vst.msk [vmem:[%s3 + $0x80] sm:$0xf] %vm892, %v796
  %926 = vst.msk [vmem:[%s3 + $0x84] sm:$0xf] %vm892, %v797
  %927 = vst.msk [vmem:[%s3 + $0x88] sm:$0xf] %vm892, %v798
  %928 = vst.msk [vmem:[%s3 + $0x8c] sm:$0xf] %vm892, %v799
  %929 = vst.msk [vmem:[%s3 + $0x90] sm:$0xf] %vm892, %v800
  %930 = vst.msk [vmem:[%s3 + $0x94] sm:$0xf] %vm892, %v801
  %931 = vst.msk [vmem:[%s3 + $0x98] sm:$0xf] %vm892, %v802
  %932 = vst.msk [vmem:[%s3 + $0x9c] sm:$0xf] %vm892, %v803
  %933 = vst.msk [vmem:[%s3 + $0xa0] sm:$0xf] %vm892, %v804
  %934 = vst.msk [vmem:[%s3 + $0xa4] sm:$0xf] %vm892, %v805
  %935 = vst.msk [vmem:[%s3 + $0xa8] sm:$0xf] %vm892, %v806
  %936 = vst.msk [vmem:[%s3 + $0xac] sm:$0xf] %vm892, %v807
  %937 = vst.msk [vmem:[%s3 + $0xb0] sm:$0xf] %vm892, %v808
  %938 = vst.msk [vmem:[%s3 + $0xb4] sm:$0xf] %vm892, %v809
  %939 = vst.msk [vmem:[%s3 + $0xb8] sm:$0xf] %vm892, %v810
  %940 = vst.msk [vmem:[%s3 + $0xbc] sm:$0xf] %vm892, %v811
  %941 = vst.msk [vmem:[%s3 + $0xc0] sm:$0xf] %vm892, %v812
  %942 = vst.msk [vmem:[%s3 + $0xc4] sm:$0xf] %vm892, %v813
  %943 = vst.msk [vmem:[%s3 + $0xc8] sm:$0xf] %vm892, %v814
  %944 = vst.msk [vmem:[%s3 + $0xcc] sm:$0xf] %vm892, %v815
  %945 = vst.msk [vmem:[%s3 + $0xd0] sm:$0xf] %vm892, %v816
  %946 = vst.msk [vmem:[%s3 + $0xd4] sm:$0xf] %vm892, %v817
  %947 = vst.msk [vmem:[%s3 + $0xd8] sm:$0xf] %vm892, %v818
  %948 = vst.msk [vmem:[%s3 + $0xdc] sm:$0xf] %vm892, %v819
  %949 = vst.msk [vmem:[%s3 + $0xe0] sm:$0xf] %vm892, %v820
  %950 = vst.msk [vmem:[%s3 + $0xe4] sm:$0xf] %vm892, %v821
  %951 = vst.msk [vmem:[%s3 + $0xe8] sm:$0xf] %vm892, %v822
  %952 = vst.msk [vmem:[%s3 + $0xec] sm:$0xf] %vm892, %v823
  %953 = vst.msk [vmem:[%s3 + $0xf0] sm:$0xf] %vm892, %v824
  %954 = vst.msk [vmem:[%s3 + $0xf4] sm:$0xf] %vm892, %v825
  %955 = vst.msk [vmem:[%s3 + $0xf8] sm:$0xf] %vm892, %v826
  %956 = vst.msk [vmem:[%s3 + $0xfc] sm:$0xf] %vm892, %v827
  %v957 = vsel %vm246, %v382, 0.0
  %v958 = vsel %vm246, %v385, 0.0
  %v959 = vadd.f32 %v957, %v958
  %v960 = vsel %vm246, %v390, 0.0
  %v961 = vadd.f32 %v959, %v960
  %v962 = vsel %vm246, %v393, 0.0
  %v963 = vadd.f32 %v961, %v962
  %v964 = vsel %vm246, %v398, 0.0
  %v965 = vadd.f32 %v963, %v964
  %v966 = vsel %vm246, %v401, 0.0
  %v967 = vadd.f32 %v965, %v966
  %v968 = vsel %vm246, %v406, 0.0
  %v969 = vadd.f32 %v967, %v968
  %v970 = vsel %vm246, %v409, 0.0
  %v971 = vadd.f32 %v969, %v970
  %v972 = vsel %vm246, %v414, 0.0
  %v973 = vadd.f32 %v971, %v972
  %v974 = vsel %vm246, %v417, 0.0
  %v975 = vadd.f32 %v973, %v974
  %v976 = vsel %vm246, %v422, 0.0
  %v977 = vadd.f32 %v975, %v976
  %v978 = vsel %vm246, %v425, 0.0
  %v979 = vadd.f32 %v977, %v978
  %v980 = vsel %vm246, %v430, 0.0
  %v981 = vadd.f32 %v979, %v980
  %v982 = vsel %vm246, %v433, 0.0
  %v983 = vadd.f32 %v981, %v982
  %v984 = vsel %vm246, %v438, 0.0
  %v985 = vadd.f32 %v983, %v984
  %v986 = vsel %vm246, %v441, 0.0
  %v987 = vadd.f32 %v985, %v986
  %v988 = vsel %vm246, %v446, 0.0
  %v989 = vadd.f32 %v987, %v988
  %v990 = vsel %vm246, %v449, 0.0
  %v991 = vadd.f32 %v989, %v990
  %v992 = vsel %vm246, %v454, 0.0
  %v993 = vadd.f32 %v991, %v992
  %v994 = vsel %vm246, %v457, 0.0
  %v995 = vadd.f32 %v993, %v994
  %v996 = vsel %vm246, %v462, 0.0
  %v997 = vadd.f32 %v995, %v996
  %v998 = vsel %vm246, %v465, 0.0
  %v999 = vadd.f32 %v997, %v998
  %v1000 = vsel %vm246, %v470, 0.0
  %v1001 = vadd.f32 %v999, %v1000
  %v1002 = vsel %vm246, %v473, 0.0
  %v1003 = vadd.f32 %v1001, %v1002
  %v1004 = vsel %vm246, %v478, 0.0
  %v1005 = vadd.f32 %v1003, %v1004
  %v1006 = vsel %vm246, %v481, 0.0
  %v1007 = vadd.f32 %v1005, %v1006
  %v1008 = vsel %vm246, %v486, 0.0
  %v1009 = vadd.f32 %v1007, %v1008
  %v1010 = vsel %vm246, %v489, 0.0
  %v1011 = vadd.f32 %v1009, %v1010
  %v1012 = vsel %vm246, %v494, 0.0
  %v1013 = vadd.f32 %v1011, %v1012
  %v1014 = vsel %vm246, %v497, 0.0
  %v1015 = vadd.f32 %v1013, %v1014
  %v1016 = vsel %vm246, %v502, 0.0
  %v1017 = vadd.f32 %v1015, %v1016
  %v1018 = vsel %vm246, %v505, 0.0
  %v1019 = vadd.f32 %v1017, %v1018
  %v1020 = vsel %vm246, %v510, 0.0
  %v1021 = vadd.f32 %v1019, %v1020
  %v1022 = vsel %vm246, %v513, 0.0
  %v1023 = vadd.f32 %v1021, %v1022
  %v1024 = vsel %vm246, %v518, 0.0
  %v1025 = vadd.f32 %v1023, %v1024
  %v1026 = vsel %vm246, %v521, 0.0
  %v1027 = vadd.f32 %v1025, %v1026
  %v1028 = vsel %vm246, %v526, 0.0
  %v1029 = vadd.f32 %v1027, %v1028
  %v1030 = vsel %vm246, %v529, 0.0
  %v1031 = vadd.f32 %v1029, %v1030
  %v1032 = vsel %vm246, %v534, 0.0
  %v1033 = vadd.f32 %v1031, %v1032
  %v1034 = vsel %vm246, %v537, 0.0
  %v1035 = vadd.f32 %v1033, %v1034
  %v1036 = vsel %vm246, %v542, 0.0
  %v1037 = vadd.f32 %v1035, %v1036
  %v1038 = vsel %vm246, %v545, 0.0
  %v1039 = vadd.f32 %v1037, %v1038
  %v1040 = vsel %vm246, %v550, 0.0
  %v1041 = vadd.f32 %v1039, %v1040
  %v1042 = vsel %vm246, %v553, 0.0
  %v1043 = vadd.f32 %v1041, %v1042
  %v1044 = vsel %vm246, %v558, 0.0
  %v1045 = vadd.f32 %v1043, %v1044
  %v1046 = vsel %vm246, %v561, 0.0
  %v1047 = vadd.f32 %v1045, %v1046
  %v1048 = vsel %vm246, %v566, 0.0
  %v1049 = vadd.f32 %v1047, %v1048
  %v1050 = vsel %vm246, %v569, 0.0
  %v1051 = vadd.f32 %v1049, %v1050
  %v1052 = vsel %vm246, %v574, 0.0
  %v1053 = vadd.f32 %v1051, %v1052
  %v1054 = vsel %vm246, %v577, 0.0
  %v1055 = vadd.f32 %v1053, %v1054
  %v1056 = vsel %vm246, %v582, 0.0
  %v1057 = vadd.f32 %v1055, %v1056
  %v1058 = vsel %vm246, %v585, 0.0
  %v1059 = vadd.f32 %v1057, %v1058
  %v1060 = vsel %vm246, %v590, 0.0
  %v1061 = vadd.f32 %v1059, %v1060
  %v1062 = vsel %vm246, %v593, 0.0
  %v1063 = vadd.f32 %v1061, %v1062
  %v1064 = vsel %vm246, %v598, 0.0
  %v1065 = vadd.f32 %v1063, %v1064
  %v1066 = vsel %vm246, %v601, 0.0
  %v1067 = vadd.f32 %v1065, %v1066
  %v1068 = vsel %vm246, %v606, 0.0
  %v1069 = vadd.f32 %v1067, %v1068
  %v1070 = vsel %vm246, %v609, 0.0
  %v1071 = vadd.f32 %v1069, %v1070
  %v1072 = vsel %vm246, %v614, 0.0
  %v1073 = vadd.f32 %v1071, %v1072
  %v1074 = vsel %vm246, %v617, 0.0
  %v1075 = vadd.f32 %v1073, %v1074
  %v1076 = vsel %vm246, %v622, 0.0
  %v1077 = vadd.f32 %v1075, %v1076
  %v1078 = vsel %vm246, %v625, 0.0
  %v1079 = vadd.f32 %v1077, %v1078
  %v1080 = vsel %vm246, %v630, 0.0
  %v1081 = vadd.f32 %v1079, %v1080
  %v1082 = vsel %vm246, %v633, 0.0
  %v1083 = vadd.f32 %v1081, %v1082
  %v1084 = vrot.slane %v1083, 4
  %v1085 = vadd.f32 %v1083, %v1084
  %v1086 = vrot.slane %v1085, 2
  %v1087 = vadd.f32 %v1085, %v1086
  %v1088 = vrot.slane %v1087, 1
  %v1089 = vadd.f32 %v1087, %v1088
  %vm1090 = vcmask 24576
  %1091 = vst.msk [vmem:[%s5] sm:$0x1] %vm1090, %v1089
  %v1092 = vmul.f32 %v382, %v382
  %v1093 = vmul.f32 %v385, %v385
  %v1094 = vmul.f32 %v390, %v390
  %v1095 = vmul.f32 %v393, %v393
  %v1096 = vmul.f32 %v398, %v398
  %v1097 = vmul.f32 %v401, %v401
  %v1098 = vmul.f32 %v406, %v406
  %v1099 = vmul.f32 %v409, %v409
  %v1100 = vmul.f32 %v414, %v414
  %v1101 = vmul.f32 %v417, %v417
  %v1102 = vmul.f32 %v422, %v422
  %v1103 = vmul.f32 %v425, %v425
  %v1104 = vmul.f32 %v430, %v430
  %v1105 = vmul.f32 %v433, %v433
  %v1106 = vmul.f32 %v438, %v438
  %v1107 = vmul.f32 %v441, %v441
  %v1108 = vmul.f32 %v446, %v446
  %v1109 = vmul.f32 %v449, %v449
  %v1110 = vmul.f32 %v454, %v454
  %v1111 = vmul.f32 %v457, %v457
  %v1112 = vmul.f32 %v462, %v462
  %v1113 = vmul.f32 %v465, %v465
  %v1114 = vmul.f32 %v470, %v470
  %v1115 = vmul.f32 %v473, %v473
  %v1116 = vmul.f32 %v478, %v478
  %v1117 = vmul.f32 %v481, %v481
  %v1118 = vmul.f32 %v486, %v486
  %v1119 = vmul.f32 %v489, %v489
  %v1120 = vmul.f32 %v494, %v494
  %v1121 = vmul.f32 %v497, %v497
  %v1122 = vmul.f32 %v502, %v502
  %v1123 = vmul.f32 %v505, %v505
  %v1124 = vmul.f32 %v510, %v510
  %v1125 = vmul.f32 %v513, %v513
  %v1126 = vmul.f32 %v518, %v518
  %v1127 = vmul.f32 %v521, %v521
  %v1128 = vmul.f32 %v526, %v526
  %v1129 = vmul.f32 %v529, %v529
  %v1130 = vmul.f32 %v534, %v534
  %v1131 = vmul.f32 %v537, %v537
  %v1132 = vmul.f32 %v542, %v542
  %v1133 = vmul.f32 %v545, %v545
  %v1134 = vmul.f32 %v550, %v550
  %v1135 = vmul.f32 %v553, %v553
  %v1136 = vmul.f32 %v558, %v558
  %v1137 = vmul.f32 %v561, %v561
  %v1138 = vmul.f32 %v566, %v566
  %v1139 = vmul.f32 %v569, %v569
  %v1140 = vmul.f32 %v574, %v574
  %v1141 = vmul.f32 %v577, %v577
  %v1142 = vmul.f32 %v582, %v582
  %v1143 = vmul.f32 %v585, %v585
  %v1144 = vmul.f32 %v590, %v590
  %v1145 = vmul.f32 %v593, %v593
  %v1146 = vmul.f32 %v598, %v598
  %v1147 = vmul.f32 %v601, %v601
  %v1148 = vmul.f32 %v606, %v606
  %v1149 = vmul.f32 %v609, %v609
  %v1150 = vmul.f32 %v614, %v614
  %v1151 = vmul.f32 %v617, %v617
  %v1152 = vmul.f32 %v622, %v622
  %v1153 = vmul.f32 %v625, %v625
  %v1154 = vmul.f32 %v630, %v630
  %v1155 = vmul.f32 %v633, %v633
  %v1156 = vsel %vm246, %v1092, 0.0
  %v1157 = vsel %vm246, %v1093, 0.0
  %v1158 = vadd.f32 %v1156, %v1157
  %v1159 = vsel %vm246, %v1094, 0.0
  %v1160 = vadd.f32 %v1158, %v1159
  %v1161 = vsel %vm246, %v1095, 0.0
  %v1162 = vadd.f32 %v1160, %v1161
  %v1163 = vsel %vm246, %v1096, 0.0
  %v1164 = vadd.f32 %v1162, %v1163
  %v1165 = vsel %vm246, %v1097, 0.0
  %v1166 = vadd.f32 %v1164, %v1165
  %v1167 = vsel %vm246, %v1098, 0.0
  %v1168 = vadd.f32 %v1166, %v1167
  %v1169 = vsel %vm246, %v1099, 0.0
  %v1170 = vadd.f32 %v1168, %v1169
  %v1171 = vsel %vm246, %v1100, 0.0
  %v1172 = vadd.f32 %v1170, %v1171
  %v1173 = vsel %vm246, %v1101, 0.0
  %v1174 = vadd.f32 %v1172, %v1173
  %v1175 = vsel %vm246, %v1102, 0.0
  %v1176 = vadd.f32 %v1174, %v1175
  %v1177 = vsel %vm246, %v1103, 0.0
  %v1178 = vadd.f32 %v1176, %v1177
  %v1179 = vsel %vm246, %v1104, 0.0
  %v1180 = vadd.f32 %v1178, %v1179
  %v1181 = vsel %vm246, %v1105, 0.0
  %v1182 = vadd.f32 %v1180, %v1181
  %v1183 = vsel %vm246, %v1106, 0.0
  %v1184 = vadd.f32 %v1182, %v1183
  %v1185 = vsel %vm246, %v1107, 0.0
  %v1186 = vadd.f32 %v1184, %v1185
  %v1187 = vsel %vm246, %v1108, 0.0
  %v1188 = vadd.f32 %v1186, %v1187
  %v1189 = vsel %vm246, %v1109, 0.0
  %v1190 = vadd.f32 %v1188, %v1189
  %v1191 = vsel %vm246, %v1110, 0.0
  %v1192 = vadd.f32 %v1190, %v1191
  %v1193 = vsel %vm246, %v1111, 0.0
  %v1194 = vadd.f32 %v1192, %v1193
  %v1195 = vsel %vm246, %v1112, 0.0
  %v1196 = vadd.f32 %v1194, %v1195
  %v1197 = vsel %vm246, %v1113, 0.0
  %v1198 = vadd.f32 %v1196, %v1197
  %v1199 = vsel %vm246, %v1114, 0.0
  %v1200 = vadd.f32 %v1198, %v1199
  %v1201 = vsel %vm246, %v1115, 0.0
  %v1202 = vadd.f32 %v1200, %v1201
  %v1203 = vsel %vm246, %v1116, 0.0
  %v1204 = vadd.f32 %v1202, %v1203
  %v1205 = vsel %vm246, %v1117, 0.0
  %v1206 = vadd.f32 %v1204, %v1205
  %v1207 = vsel %vm246, %v1118, 0.0
  %v1208 = vadd.f32 %v1206, %v1207
  %v1209 = vsel %vm246, %v1119, 0.0
  %v1210 = vadd.f32 %v1208, %v1209
  %v1211 = vsel %vm246, %v1120, 0.0
  %v1212 = vadd.f32 %v1210, %v1211
  %v1213 = vsel %vm246, %v1121, 0.0
  %v1214 = vadd.f32 %v1212, %v1213
  %v1215 = vsel %vm246, %v1122, 0.0
  %v1216 = vadd.f32 %v1214, %v1215
  %v1217 = vsel %vm246, %v1123, 0.0
  %v1218 = vadd.f32 %v1216, %v1217
  %v1219 = vsel %vm246, %v1124, 0.0
  %v1220 = vadd.f32 %v1218, %v1219
  %v1221 = vsel %vm246, %v1125, 0.0
  %v1222 = vadd.f32 %v1220, %v1221
  %v1223 = vsel %vm246, %v1126, 0.0
  %v1224 = vadd.f32 %v1222, %v1223
  %v1225 = vsel %vm246, %v1127, 0.0
  %v1226 = vadd.f32 %v1224, %v1225
  %v1227 = vsel %vm246, %v1128, 0.0
  %v1228 = vadd.f32 %v1226, %v1227
  %v1229 = vsel %vm246, %v1129, 0.0
  %v1230 = vadd.f32 %v1228, %v1229
  %v1231 = vsel %vm246, %v1130, 0.0
  %v1232 = vadd.f32 %v1230, %v1231
  %v1233 = vsel %vm246, %v1131, 0.0
  %v1234 = vadd.f32 %v1232, %v1233
  %v1235 = vsel %vm246, %v1132, 0.0
  %v1236 = vadd.f32 %v1234, %v1235
  %v1237 = vsel %vm246, %v1133, 0.0
  %v1238 = vadd.f32 %v1236, %v1237
  %v1239 = vsel %vm246, %v1134, 0.0
  %v1240 = vadd.f32 %v1238, %v1239
  %v1241 = vsel %vm246, %v1135, 0.0
  %v1242 = vadd.f32 %v1240, %v1241
  %v1243 = vsel %vm246, %v1136, 0.0
  %v1244 = vadd.f32 %v1242, %v1243
  %v1245 = vsel %vm246, %v1137, 0.0
  %v1246 = vadd.f32 %v1244, %v1245
  %v1247 = vsel %vm246, %v1138, 0.0
  %v1248 = vadd.f32 %v1246, %v1247
  %v1249 = vsel %vm246, %v1139, 0.0
  %v1250 = vadd.f32 %v1248, %v1249
  %v1251 = vsel %vm246, %v1140, 0.0
  %v1252 = vadd.f32 %v1250, %v1251
  %v1253 = vsel %vm246, %v1141, 0.0
  %v1254 = vadd.f32 %v1252, %v1253
  %v1255 = vsel %vm246, %v1142, 0.0
  %v1256 = vadd.f32 %v1254, %v1255
  %v1257 = vsel %vm246, %v1143, 0.0
  %v1258 = vadd.f32 %v1256, %v1257
  %v1259 = vsel %vm246, %v1144, 0.0
  %v1260 = vadd.f32 %v1258, %v1259
  %v1261 = vsel %vm246, %v1145, 0.0
  %v1262 = vadd.f32 %v1260, %v1261
  %v1263 = vsel %vm246, %v1146, 0.0
  %v1264 = vadd.f32 %v1262, %v1263
  %v1265 = vsel %vm246, %v1147, 0.0
  %v1266 = vadd.f32 %v1264, %v1265
  %v1267 = vsel %vm246, %v1148, 0.0
  %v1268 = vadd.f32 %v1266, %v1267
  %v1269 = vsel %vm246, %v1149, 0.0
  %v1270 = vadd.f32 %v1268, %v1269
  %v1271 = vsel %vm246, %v1150, 0.0
  %v1272 = vadd.f32 %v1270, %v1271
  %v1273 = vsel %vm246, %v1151, 0.0
  %v1274 = vadd.f32 %v1272, %v1273
  %v1275 = vsel %vm246, %v1152, 0.0
  %v1276 = vadd.f32 %v1274, %v1275
  %v1277 = vsel %vm246, %v1153, 0.0
  %v1278 = vadd.f32 %v1276, %v1277
  %v1279 = vsel %vm246, %v1154, 0.0
  %v1280 = vadd.f32 %v1278, %v1279
  %v1281 = vsel %vm246, %v1155, 0.0
  %v1282 = vadd.f32 %v1280, %v1281
  %v1283 = vrot.slane %v1282, 4
  %v1284 = vadd.f32 %v1282, %v1283
  %v1285 = vrot.slane %v1284, 2
  %v1286 = vadd.f32 %v1284, %v1285
  %v1287 = vrot.slane %v1286, 1
  %v1288 = vadd.f32 %v1286, %v1287
  %1289 = vst.msk [vmem:[%s6] sm:$0x1] %vm1090, %v1288
  %v1290 = vld [vmem:[%s2] sm:$0x3]
  %v1292 = vsel %vm343, %v1290, 0
  %1294 = vmatprep.subr.bf16.mxu0 0
  %1295 = vmatpush1.bf16.msra.mxu0 %v1292
  %1296 = vmatprep.subr.bf16.mxu0 0
  %1297 = vmatpush1.bf16.msra.mxu0 0
  %1298 = vmatprep.subr.bf16.mxu0 0
  %1299 = vmatpush1.bf16.msra.mxu0 0
  %1300 = vmatprep.subr.bf16.mxu0 0
  %1301 = vmatpush1.bf16.msra.mxu0 0
  %1302 = vmatprep.subr.bf16.mxu0 0
  %1303 = vmatpush1.bf16.msra.mxu0 0
  %1304 = vmatprep.subr.bf16.mxu0 0
  %1305 = vmatpush1.bf16.msra.mxu0 0
  %1306 = vmatprep.subr.bf16.mxu0 0
  %1307 = vmatpush1.bf16.msra.mxu0 0
  %1308 = vmatprep.subr.bf16.mxu0 0
  %1309 = vmatpush1.bf16.msra.mxu0 0
  %1310 = vmatprep.subr.bf16.mxu0 0
  %1311 = vmatpush1.bf16.msra.mxu0 0
  %1312 = vmatprep.subr.bf16.mxu0 0
  %1313 = vmatpush1.bf16.msra.mxu0 0
  %1314 = vmatprep.subr.bf16.mxu0 0
  %1315 = vmatpush1.bf16.msra.mxu0 0
  %1316 = vmatprep.subr.bf16.mxu0 0
  %1317 = vmatpush1.bf16.msra.mxu0 0
  %1318 = vmatprep.subr.bf16.mxu0 0
  %1319 = vmatpush1.bf16.msra.mxu0 0
  %1320 = vmatprep.subr.bf16.mxu0 0
  %1321 = vmatpush1.bf16.msra.mxu0 0
  %1322 = vmatprep.subr.bf16.mxu0 0
  %1323 = vmatpush1.bf16.msra.mxu0 0
  %1324 = vmatprep.subr.bf16.mxu0 0
  %1325 = vmatpush1.bf16.msra.mxu0 0
  %1326 = vmatprep.mubr.bf16.mxu0 0
  %1327 = vmatmul.mubr.bf16.gmra.mrb[0].mxu0 %v248
  %v1328 = vpop.f32.mrb[0].mxu0
  %v1329 = vadd.f32 0.0, %v1328
  %v1330 = vpop.f32.mrb[0].mxu0
  %v1331 = vpop.f32.mrb[0].mxu0
  %v1332 = vadd.f32 0.0, %v1331
  %v1333 = vpop.f32.mrb[0].mxu0
  %1334 = vmatprep.mubr.bf16.mxu0 0
  %1335 = vmatmul.mubr.bf16.gmra.mrb[0].mxu0 %v251
  %v1336 = vpop.f32.mrb[0].mxu0
  %v1337 = vadd.f32 0.0, %v1336
  %v1338 = vpop.f32.mrb[0].mxu0
  %v1339 = vpop.f32.mrb[0].mxu0
  %v1340 = vadd.f32 0.0, %v1339
  %v1341 = vpop.f32.mrb[0].mxu0
  %1342 = vmatprep.mubr.bf16.mxu0 0
  %1343 = vmatmul.mubr.bf16.gmra.mrb[0].mxu0 %v254
  %v1344 = vpop.f32.mrb[0].mxu0
  %v1345 = vadd.f32 0.0, %v1344
  %v1346 = vpop.f32.mrb[0].mxu0
  %v1347 = vpop.f32.mrb[0].mxu0
  %v1348 = vadd.f32 0.0, %v1347
  %v1349 = vpop.f32.mrb[0].mxu0
  %1350 = vmatprep.mubr.bf16.mxu0 0
  %1351 = vmatmul.mubr.bf16.gmra.mrb[0].mxu0 %v257
  %v1352 = vpop.f32.mrb[0].mxu0
  %v1353 = vadd.f32 0.0, %v1352
  %v1354 = vpop.f32.mrb[0].mxu0
  %v1355 = vpop.f32.mrb[0].mxu0
  %v1356 = vadd.f32 0.0, %v1355
  %v1357 = vpop.f32.mrb[0].mxu0
  %1358 = vmatprep.mubr.bf16.mxu0 0
  %1359 = vmatmul.mubr.bf16.gmra.mrb[0].mxu0 %v260
  %v1360 = vpop.f32.mrb[0].mxu0
  %v1361 = vadd.f32 0.0, %v1360
  %v1362 = vpop.f32.mrb[0].mxu0
  %v1363 = vpop.f32.mrb[0].mxu0
  %v1364 = vadd.f32 0.0, %v1363
  %v1365 = vpop.f32.mrb[0].mxu0
  %1366 = vmatprep.mubr.bf16.mxu0 0
  %1367 = vmatmul.mubr.bf16.gmra.mrb[0].mxu0 %v263
  %v1368 = vpop.f32.mrb[0].mxu0
  %v1369 = vadd.f32 0.0, %v1368
  %v1370 = vpop.f32.mrb[0].mxu0
  %v1371 = vpop.f32.mrb[0].mxu0
  %v1372 = vadd.f32 0.0, %v1371
  %v1373 = vpop.f32.mrb[0].mxu0
  %1374 = vmatprep.mubr.bf16.mxu0 0
  %1375 = vmatmul.mubr.bf16.gmra.mrb[0].mxu0 %v266
  %v1376 = vpop.f32.mrb[0].mxu0
  %v1377 = vadd.f32 0.0, %v1376
  %v1378 = vpop.f32.mrb[0].mxu0
  %v1379 = vpop.f32.mrb[0].mxu0
  %v1380 = vadd.f32 0.0, %v1379
  %v1381 = vpop.f32.mrb[0].mxu0
  %1382 = vmatprep.mubr.bf16.mxu0 0
  %1383 = vmatmul.mubr.bf16.gmra.mrb[0].mxu0 %v269
  %v1384 = vpop.f32.mrb[0].mxu0
  %v1385 = vadd.f32 0.0, %v1384
  %v1386 = vpop.f32.mrb[0].mxu0
  %v1387 = vpop.f32.mrb[0].mxu0
  %v1388 = vadd.f32 0.0, %v1387
  %v1389 = vpop.f32.mrb[0].mxu0
  %1390 = vmatprep.mubr.bf16.mxu0 0
  %1391 = vmatmul.mubr.bf16.gmra.mrb[0].mxu0 %v272
  %v1392 = vpop.f32.mrb[0].mxu0
  %v1393 = vadd.f32 0.0, %v1392
  %v1394 = vpop.f32.mrb[0].mxu0
  %v1395 = vpop.f32.mrb[0].mxu0
  %v1396 = vadd.f32 0.0, %v1395
  %v1397 = vpop.f32.mrb[0].mxu0
  %1398 = vmatprep.mubr.bf16.mxu0 0
  %1399 = vmatmul.mubr.bf16.gmra.mrb[0].mxu0 %v275
  %v1400 = vpop.f32.mrb[0].mxu0
  %v1401 = vadd.f32 0.0, %v1400
  %v1402 = vpop.f32.mrb[0].mxu0
  %v1403 = vpop.f32.mrb[0].mxu0
  %v1404 = vadd.f32 0.0, %v1403
  %v1405 = vpop.f32.mrb[0].mxu0
  %1406 = vmatprep.mubr.bf16.mxu0 0
  %1407 = vmatmul.mubr.bf16.gmra.mrb[0].mxu0 %v278
  %v1408 = vpop.f32.mrb[0].mxu0
  %v1409 = vadd.f32 0.0, %v1408
  %v1410 = vpop.f32.mrb[0].mxu0
  %v1411 = vpop.f32.mrb[0].mxu0
  %v1412 = vadd.f32 0.0, %v1411
  %v1413 = vpop.f32.mrb[0].mxu0
  %1414 = vmatprep.mubr.bf16.mxu0 0
  %1415 = vmatmul.mubr.bf16.gmra.mrb[0].mxu0 %v281
  %v1416 = vpop.f32.mrb[0].mxu0
  %v1417 = vadd.f32 0.0, %v1416
  %v1418 = vpop.f32.mrb[0].mxu0
  %v1419 = vpop.f32.mrb[0].mxu0
  %v1420 = vadd.f32 0.0, %v1419
  %v1421 = vpop.f32.mrb[0].mxu0
  %1422 = vmatprep.mubr.bf16.mxu0 0
  %1423 = vmatmul.mubr.bf16.gmra.mrb[0].mxu0 %v284
  %v1424 = vpop.f32.mrb[0].mxu0
  %v1425 = vadd.f32 0.0, %v1424
  %v1426 = vpop.f32.mrb[0].mxu0
  %v1427 = vpop.f32.mrb[0].mxu0
  %v1428 = vadd.f32 0.0, %v1427
  %v1429 = vpop.f32.mrb[0].mxu0
  %1430 = vmatprep.mubr.bf16.mxu0 0
  %1431 = vmatmul.mubr.bf16.gmra.mrb[0].mxu0 %v287
  %v1432 = vpop.f32.mrb[0].mxu0
  %v1433 = vadd.f32 0.0, %v1432
  %v1434 = vpop.f32.mrb[0].mxu0
  %v1435 = vpop.f32.mrb[0].mxu0
  %v1436 = vadd.f32 0.0, %v1435
  %v1437 = vpop.f32.mrb[0].mxu0
  %1438 = vmatprep.mubr.bf16.mxu0 0
  %1439 = vmatmul.mubr.bf16.gmra.mrb[0].mxu0 %v290
  %v1440 = vpop.f32.mrb[0].mxu0
  %v1441 = vadd.f32 0.0, %v1440
  %v1442 = vpop.f32.mrb[0].mxu0
  %v1443 = vpop.f32.mrb[0].mxu0
  %v1444 = vadd.f32 0.0, %v1443
  %v1445 = vpop.f32.mrb[0].mxu0
  %1446 = vmatprep.mubr.bf16.mxu0 0
  %1447 = vmatmul.mubr.bf16.gmra.mrb[0].mxu0 %v293
  %v1448 = vpop.f32.mrb[0].mxu0
  %v1449 = vadd.f32 0.0, %v1448
  %v1450 = vpop.f32.mrb[0].mxu0
  %v1451 = vpop.f32.mrb[0].mxu0
  %v1452 = vadd.f32 0.0, %v1451
  %v1453 = vpop.f32.mrb[0].mxu0
  %1454 = vmatprep.mubr.bf16.mxu0 0
  %1455 = vmatmul.mubr.bf16.gmra.mrb[0].mxu0 %v296
  %v1456 = vpop.f32.mrb[0].mxu0
  %v1457 = vadd.f32 0.0, %v1456
  %v1458 = vpop.f32.mrb[0].mxu0
  %v1459 = vpop.f32.mrb[0].mxu0
  %v1460 = vadd.f32 0.0, %v1459
  %v1461 = vpop.f32.mrb[0].mxu0
  %1462 = vmatprep.mubr.bf16.mxu0 0
  %1463 = vmatmul.mubr.bf16.gmra.mrb[0].mxu0 %v299
  %v1464 = vpop.f32.mrb[0].mxu0
  %v1465 = vadd.f32 0.0, %v1464
  %v1466 = vpop.f32.mrb[0].mxu0
  %v1467 = vpop.f32.mrb[0].mxu0
  %v1468 = vadd.f32 0.0, %v1467
  %v1469 = vpop.f32.mrb[0].mxu0
  %1470 = vmatprep.mubr.bf16.mxu0 0
  %1471 = vmatmul.mubr.bf16.gmra.mrb[0].mxu0 %v302
  %v1472 = vpop.f32.mrb[0].mxu0
  %v1473 = vadd.f32 0.0, %v1472
  %v1474 = vpop.f32.mrb[0].mxu0
  %v1475 = vpop.f32.mrb[0].mxu0
  %v1476 = vadd.f32 0.0, %v1475
  %v1477 = vpop.f32.mrb[0].mxu0
  %1478 = vmatprep.mubr.bf16.mxu0 0
  %1479 = vmatmul.mubr.bf16.gmra.mrb[0].mxu0 %v305
  %v1480 = vpop.f32.mrb[0].mxu0
  %v1481 = vadd.f32 0.0, %v1480
  %v1482 = vpop.f32.mrb[0].mxu0
  %v1483 = vpop.f32.mrb[0].mxu0
  %v1484 = vadd.f32 0.0, %v1483
  %v1485 = vpop.f32.mrb[0].mxu0
  %1486 = vmatprep.mubr.bf16.mxu0 0
  %1487 = vmatmul.mubr.bf16.gmra.mrb[0].mxu0 %v308
  %v1488 = vpop.f32.mrb[0].mxu0
  %v1489 = vadd.f32 0.0, %v1488
  %v1490 = vpop.f32.mrb[0].mxu0
  %v1491 = vpop.f32.mrb[0].mxu0
  %v1492 = vadd.f32 0.0, %v1491
  %v1493 = vpop.f32.mrb[0].mxu0
  %1494 = vmatprep.mubr.bf16.mxu0 0
  %1495 = vmatmul.mubr.bf16.gmra.mrb[0].mxu0 %v311
  %v1496 = vpop.f32.mrb[0].mxu0
  %v1497 = vadd.f32 0.0, %v1496
  %v1498 = vpop.f32.mrb[0].mxu0
  %v1499 = vpop.f32.mrb[0].mxu0
  %v1500 = vadd.f32 0.0, %v1499
  %v1501 = vpop.f32.mrb[0].mxu0
  %1502 = vmatprep.mubr.bf16.mxu0 0
  %1503 = vmatmul.mubr.bf16.gmra.mrb[0].mxu0 %v314
  %v1504 = vpop.f32.mrb[0].mxu0
  %v1505 = vadd.f32 0.0, %v1504
  %v1506 = vpop.f32.mrb[0].mxu0
  %v1507 = vpop.f32.mrb[0].mxu0
  %v1508 = vadd.f32 0.0, %v1507
  %v1509 = vpop.f32.mrb[0].mxu0
  %1510 = vmatprep.mubr.bf16.mxu0 0
  %1511 = vmatmul.mubr.bf16.gmra.mrb[0].mxu0 %v317
  %v1512 = vpop.f32.mrb[0].mxu0
  %v1513 = vadd.f32 0.0, %v1512
  %v1514 = vpop.f32.mrb[0].mxu0
  %v1515 = vpop.f32.mrb[0].mxu0
  %v1516 = vadd.f32 0.0, %v1515
  %v1517 = vpop.f32.mrb[0].mxu0
  %1518 = vmatprep.mubr.bf16.mxu0 0
  %1519 = vmatmul.mubr.bf16.gmra.mrb[0].mxu0 %v320
  %v1520 = vpop.f32.mrb[0].mxu0
  %v1521 = vadd.f32 0.0, %v1520
  %v1522 = vpop.f32.mrb[0].mxu0
  %v1523 = vpop.f32.mrb[0].mxu0
  %v1524 = vadd.f32 0.0, %v1523
  %v1525 = vpop.f32.mrb[0].mxu0
  %1526 = vmatprep.mubr.bf16.mxu0 0
  %1527 = vmatmul.mubr.bf16.gmra.mrb[0].mxu0 %v323
  %v1528 = vpop.f32.mrb[0].mxu0
  %v1529 = vadd.f32 0.0, %v1528
  %v1530 = vpop.f32.mrb[0].mxu0
  %v1531 = vpop.f32.mrb[0].mxu0
  %v1532 = vadd.f32 0.0, %v1531
  %v1533 = vpop.f32.mrb[0].mxu0
  %1534 = vmatprep.mubr.bf16.mxu0 0
  %1535 = vmatmul.mubr.bf16.gmra.mrb[0].mxu0 %v326
  %v1536 = vpop.f32.mrb[0].mxu0
  %v1537 = vadd.f32 0.0, %v1536
  %v1538 = vpop.f32.mrb[0].mxu0
  %v1539 = vpop.f32.mrb[0].mxu0
  %v1540 = vadd.f32 0.0, %v1539
  %v1541 = vpop.f32.mrb[0].mxu0
  %1542 = vmatprep.mubr.bf16.mxu0 0
  %1543 = vmatmul.mubr.bf16.gmra.mrb[0].mxu0 %v329
  %v1544 = vpop.f32.mrb[0].mxu0
  %v1545 = vadd.f32 0.0, %v1544
  %v1546 = vpop.f32.mrb[0].mxu0
  %v1547 = vpop.f32.mrb[0].mxu0
  %v1548 = vadd.f32 0.0, %v1547
  %v1549 = vpop.f32.mrb[0].mxu0
  %1550 = vmatprep.mubr.bf16.mxu0 0
  %1551 = vmatmul.mubr.bf16.gmra.mrb[0].mxu0 %v332
  %v1552 = vpop.f32.mrb[0].mxu0
  %v1553 = vadd.f32 0.0, %v1552
  %v1554 = vpop.f32.mrb[0].mxu0
  %v1555 = vpop.f32.mrb[0].mxu0
  %v1556 = vadd.f32 0.0, %v1555
  %v1557 = vpop.f32.mrb[0].mxu0
  %1558 = vmatprep.mubr.bf16.mxu0 0
  %1559 = vmatmul.mubr.bf16.gmra.mrb[0].mxu0 %v335
  %v1560 = vpop.f32.mrb[0].mxu0
  %v1561 = vadd.f32 0.0, %v1560
  %v1562 = vpop.f32.mrb[0].mxu0
  %v1563 = vpop.f32.mrb[0].mxu0
  %v1564 = vadd.f32 0.0, %v1563
  %v1565 = vpop.f32.mrb[0].mxu0
  %1566 = vmatprep.mubr.bf16.mxu0 0
  %1567 = vmatmul.mubr.bf16.gmra.mrb[0].mxu0 %v338
  %v1568 = vpop.f32.mrb[0].mxu0
  %v1569 = vadd.f32 0.0, %v1568
  %v1570 = vpop.f32.mrb[0].mxu0
  %v1571 = vpop.f32.mrb[0].mxu0
  %v1572 = vadd.f32 0.0, %v1571
  %v1573 = vpop.f32.mrb[0].mxu0
  %1574 = vmatprep.mubr.bf16.mxu0 0
  %1575 = vmatmul.mubr.bf16.gmra.mrb[0].mxu0 %v341
  %v1576 = vpop.f32.mrb[0].mxu0
  %v1577 = vadd.f32 0.0, %v1576
  %v1578 = vpop.f32.mrb[0].mxu0
  %v1579 = vpop.f32.mrb[0].mxu0
  %v1580 = vadd.f32 0.0, %v1579
  %v1581 = vpop.f32.mrb[0].mxu0
  %1582 = vdwg.mxu0
  %v1583 = vpack.c.bf16 %v1332, %v1329
  %v1584 = vpack.c.bf16 %v1340, %v1337
  %v1585 = vpack.c.bf16 %v1348, %v1345
  %v1586 = vpack.c.bf16 %v1356, %v1353
  %v1587 = vpack.c.bf16 %v1364, %v1361
  %v1588 = vpack.c.bf16 %v1372, %v1369
  %v1589 = vpack.c.bf16 %v1380, %v1377
  %v1590 = vpack.c.bf16 %v1388, %v1385
  %v1591 = vpack.c.bf16 %v1396, %v1393
  %v1592 = vpack.c.bf16 %v1404, %v1401
  %v1593 = vpack.c.bf16 %v1412, %v1409
  %v1594 = vpack.c.bf16 %v1420, %v1417
  %v1595 = vpack.c.bf16 %v1428, %v1425
  %v1596 = vpack.c.bf16 %v1436, %v1433
  %v1597 = vpack.c.bf16 %v1444, %v1441
  %v1598 = vpack.c.bf16 %v1452, %v1449
  %v1599 = vpack.c.bf16 %v1460, %v1457
  %v1600 = vpack.c.bf16 %v1468, %v1465
  %v1601 = vpack.c.bf16 %v1476, %v1473
  %v1602 = vpack.c.bf16 %v1484, %v1481
  %v1603 = vpack.c.bf16 %v1492, %v1489
  %v1604 = vpack.c.bf16 %v1500, %v1497
  %v1605 = vpack.c.bf16 %v1508, %v1505
  %v1606 = vpack.c.bf16 %v1516, %v1513
  %v1607 = vpack.c.bf16 %v1524, %v1521
  %v1608 = vpack.c.bf16 %v1532, %v1529
  %v1609 = vpack.c.bf16 %v1540, %v1537
  %v1610 = vpack.c.bf16 %v1548, %v1545
  %v1611 = vpack.c.bf16 %v1556, %v1553
  %v1612 = vpack.c.bf16 %v1564, %v1561
  %v1613 = vpack.c.bf16 %v1572, %v1569
  %v1614 = vpack.c.bf16 %v1580, %v1577
  %v1647 = vunpack.c.l.b16 %v1583
  %v1648 = vunpack.c.h.b16 %v1583
  %v1649 = vunpack.c.l.b16 %v1584
  %v1650 = vunpack.c.h.b16 %v1584
  %v1651 = vunpack.c.l.b16 %v1585
  %v1652 = vunpack.c.h.b16 %v1585
  %v1653 = vunpack.c.l.b16 %v1586
  %v1654 = vunpack.c.h.b16 %v1586
  %v1655 = vunpack.c.l.b16 %v1587
  %v1656 = vunpack.c.h.b16 %v1587
  %v1657 = vunpack.c.l.b16 %v1588
  %v1658 = vunpack.c.h.b16 %v1588
  %v1659 = vunpack.c.l.b16 %v1589
  %v1660 = vunpack.c.h.b16 %v1589
  %v1661 = vunpack.c.l.b16 %v1590
  %v1662 = vunpack.c.h.b16 %v1590
  %v1663 = vunpack.c.l.b16 %v1591
  %v1664 = vunpack.c.h.b16 %v1591
  %v1665 = vunpack.c.l.b16 %v1592
  %v1666 = vunpack.c.h.b16 %v1592
  %v1667 = vunpack.c.l.b16 %v1593
  %v1668 = vunpack.c.h.b16 %v1593
  %v1669 = vunpack.c.l.b16 %v1594
  %v1670 = vunpack.c.h.b16 %v1594
  %v1671 = vunpack.c.l.b16 %v1595
  %v1672 = vunpack.c.h.b16 %v1595
  %v1673 = vunpack.c.l.b16 %v1596
  %v1674 = vunpack.c.h.b16 %v1596
  %v1675 = vunpack.c.l.b16 %v1597
  %v1676 = vunpack.c.h.b16 %v1597
  %v1677 = vunpack.c.l.b16 %v1598
  %v1678 = vunpack.c.h.b16 %v1598
  %v1679 = vunpack.c.l.b16 %v1599
  %v1680 = vunpack.c.h.b16 %v1599
  %v1681 = vunpack.c.l.b16 %v1600
  %v1682 = vunpack.c.h.b16 %v1600
  %v1683 = vunpack.c.l.b16 %v1601
  %v1684 = vunpack.c.h.b16 %v1601
  %v1685 = vunpack.c.l.b16 %v1602
  %v1686 = vunpack.c.h.b16 %v1602
  %v1687 = vunpack.c.l.b16 %v1603
  %v1688 = vunpack.c.h.b16 %v1603
  %v1689 = vunpack.c.l.b16 %v1604
  %v1690 = vunpack.c.h.b16 %v1604
  %v1691 = vunpack.c.l.b16 %v1605
  %v1692 = vunpack.c.h.b16 %v1605
  %v1693 = vunpack.c.l.b16 %v1606
  %v1694 = vunpack.c.h.b16 %v1606
  %v1695 = vunpack.c.l.b16 %v1607
  %v1696 = vunpack.c.h.b16 %v1607
  %v1697 = vunpack.c.l.b16 %v1608
  %v1698 = vunpack.c.h.b16 %v1608
  %v1699 = vunpack.c.l.b16 %v1609
  %v1700 = vunpack.c.h.b16 %v1609
  %v1701 = vunpack.c.l.b16 %v1610
  %v1702 = vunpack.c.h.b16 %v1610
  %v1703 = vunpack.c.l.b16 %v1611
  %v1704 = vunpack.c.h.b16 %v1611
  %v1705 = vunpack.c.l.b16 %v1612
  %v1706 = vunpack.c.h.b16 %v1612
  %v1707 = vunpack.c.l.b16 %v1613
  %v1708 = vunpack.c.h.b16 %v1613
  %v1709 = vunpack.c.l.b16 %v1614
  %v1710 = vunpack.c.h.b16 %v1614
  %v1711 = vpack.c.b16 %v1647, %v1647
  %v1712 = vpack.c.b16 %v1648, %v1648
  %v1713 = vpack.c.b16 %v1649, %v1649
  %v1714 = vpack.c.b16 %v1650, %v1650
  %v1715 = vpack.c.b16 %v1651, %v1651
  %v1716 = vpack.c.b16 %v1652, %v1652
  %v1717 = vpack.c.b16 %v1653, %v1653
  %v1718 = vpack.c.b16 %v1654, %v1654
  %v1719 = vpack.c.b16 %v1655, %v1655
  %v1720 = vpack.c.b16 %v1656, %v1656
  %v1721 = vpack.c.b16 %v1657, %v1657
  %v1722 = vpack.c.b16 %v1658, %v1658
  %v1723 = vpack.c.b16 %v1659, %v1659
  %v1724 = vpack.c.b16 %v1660, %v1660
  %v1725 = vpack.c.b16 %v1661, %v1661
  %v1726 = vpack.c.b16 %v1662, %v1662
  %v1727 = vpack.c.b16 %v1663, %v1663
  %v1728 = vpack.c.b16 %v1664, %v1664
  %v1729 = vpack.c.b16 %v1665, %v1665
  %v1730 = vpack.c.b16 %v1666, %v1666
  %v1731 = vpack.c.b16 %v1667, %v1667
  %v1732 = vpack.c.b16 %v1668, %v1668
  %v1733 = vpack.c.b16 %v1669, %v1669
  %v1734 = vpack.c.b16 %v1670, %v1670
  %v1735 = vpack.c.b16 %v1671, %v1671
  %v1736 = vpack.c.b16 %v1672, %v1672
  %v1737 = vpack.c.b16 %v1673, %v1673
  %v1738 = vpack.c.b16 %v1674, %v1674
  %v1739 = vpack.c.b16 %v1675, %v1675
  %v1740 = vpack.c.b16 %v1676, %v1676
  %v1741 = vpack.c.b16 %v1677, %v1677
  %v1742 = vpack.c.b16 %v1678, %v1678
  %v1743 = vpack.c.b16 %v1679, %v1679
  %v1744 = vpack.c.b16 %v1680, %v1680
  %v1745 = vpack.c.b16 %v1681, %v1681
  %v1746 = vpack.c.b16 %v1682, %v1682
  %v1747 = vpack.c.b16 %v1683, %v1683
  %v1748 = vpack.c.b16 %v1684, %v1684
  %v1749 = vpack.c.b16 %v1685, %v1685
  %v1750 = vpack.c.b16 %v1686, %v1686
  %v1751 = vpack.c.b16 %v1687, %v1687
  %v1752 = vpack.c.b16 %v1688, %v1688
  %v1753 = vpack.c.b16 %v1689, %v1689
  %v1754 = vpack.c.b16 %v1690, %v1690
  %v1755 = vpack.c.b16 %v1691, %v1691
  %v1756 = vpack.c.b16 %v1692, %v1692
  %v1757 = vpack.c.b16 %v1693, %v1693
  %v1758 = vpack.c.b16 %v1694, %v1694
  %v1759 = vpack.c.b16 %v1695, %v1695
  %v1760 = vpack.c.b16 %v1696, %v1696
  %v1761 = vpack.c.b16 %v1697, %v1697
  %v1762 = vpack.c.b16 %v1698, %v1698
  %v1763 = vpack.c.b16 %v1699, %v1699
  %v1764 = vpack.c.b16 %v1700, %v1700
  %v1765 = vpack.c.b16 %v1701, %v1701
  %v1766 = vpack.c.b16 %v1702, %v1702
  %v1767 = vpack.c.b16 %v1703, %v1703
  %v1768 = vpack.c.b16 %v1704, %v1704
  %v1769 = vpack.c.b16 %v1705, %v1705
  %v1770 = vpack.c.b16 %v1706, %v1706
  %v1771 = vpack.c.b16 %v1707, %v1707
  %v1772 = vpack.c.b16 %v1708, %v1708
  %v1773 = vpack.c.b16 %v1709, %v1709
  %v1774 = vpack.c.b16 %v1710, %v1710
  %vm1839 = vcmask 125952
  %1840 = vst.msk [vmem:[%s4] sm:$0xf] %vm1839, %v1711
  %1841 = vst.msk [vmem:[%s4 + $0x4] sm:$0xf] %vm1839, %v1712
  %1842 = vst.msk [vmem:[%s4 + $0x8] sm:$0xf] %vm1839, %v1713
  %1843 = vst.msk [vmem:[%s4 + $0xc] sm:$0xf] %vm1839, %v1714
  %1844 = vst.msk [vmem:[%s4 + $0x10] sm:$0xf] %vm1839, %v1715
  %1845 = vst.msk [vmem:[%s4 + $0x14] sm:$0xf] %vm1839, %v1716
  %1846 = vst.msk [vmem:[%s4 + $0x18] sm:$0xf] %vm1839, %v1717
  %1847 = vst.msk [vmem:[%s4 + $0x1c] sm:$0xf] %vm1839, %v1718
  %1848 = vst.msk [vmem:[%s4 + $0x20] sm:$0xf] %vm1839, %v1719
  %1849 = vst.msk [vmem:[%s4 + $0x24] sm:$0xf] %vm1839, %v1720
  %1850 = vst.msk [vmem:[%s4 + $0x28] sm:$0xf] %vm1839, %v1721
  %1851 = vst.msk [vmem:[%s4 + $0x2c] sm:$0xf] %vm1839, %v1722
  %1852 = vst.msk [vmem:[%s4 + $0x30] sm:$0xf] %vm1839, %v1723
  %1853 = vst.msk [vmem:[%s4 + $0x34] sm:$0xf] %vm1839, %v1724
  %1854 = vst.msk [vmem:[%s4 + $0x38] sm:$0xf] %vm1839, %v1725
  %1855 = vst.msk [vmem:[%s4 + $0x3c] sm:$0xf] %vm1839, %v1726
  %1856 = vst.msk [vmem:[%s4 + $0x40] sm:$0xf] %vm1839, %v1727
  %1857 = vst.msk [vmem:[%s4 + $0x44] sm:$0xf] %vm1839, %v1728
  %1858 = vst.msk [vmem:[%s4 + $0x48] sm:$0xf] %vm1839, %v1729
  %1859 = vst.msk [vmem:[%s4 + $0x4c] sm:$0xf] %vm1839, %v1730
  %1860 = vst.msk [vmem:[%s4 + $0x50] sm:$0xf] %vm1839, %v1731
  %1861 = vst.msk [vmem:[%s4 + $0x54] sm:$0xf] %vm1839, %v1732
  %1862 = vst.msk [vmem:[%s4 + $0x58] sm:$0xf] %vm1839, %v1733
  %1863 = vst.msk [vmem:[%s4 + $0x5c] sm:$0xf] %vm1839, %v1734
  %1864 = vst.msk [vmem:[%s4 + $0x60] sm:$0xf] %vm1839, %v1735
  %1865 = vst.msk [vmem:[%s4 + $0x64] sm:$0xf] %vm1839, %v1736
  %1866 = vst.msk [vmem:[%s4 + $0x68] sm:$0xf] %vm1839, %v1737
  %1867 = vst.msk [vmem:[%s4 + $0x6c] sm:$0xf] %vm1839, %v1738
  %1868 = vst.msk [vmem:[%s4 + $0x70] sm:$0xf] %vm1839, %v1739
  %1869 = vst.msk [vmem:[%s4 + $0x74] sm:$0xf] %vm1839, %v1740
  %1870 = vst.msk [vmem:[%s4 + $0x78] sm:$0xf] %vm1839, %v1741
  %1871 = vst.msk [vmem:[%s4 + $0x7c] sm:$0xf] %vm1839, %v1742
  %1872 = vst.msk [vmem:[%s4 + $0x80] sm:$0xf] %vm1839, %v1743
  %1873 = vst.msk [vmem:[%s4 + $0x84] sm:$0xf] %vm1839, %v1744
  %1874 = vst.msk [vmem:[%s4 + $0x88] sm:$0xf] %vm1839, %v1745
  %1875 = vst.msk [vmem:[%s4 + $0x8c] sm:$0xf] %vm1839, %v1746
  %1876 = vst.msk [vmem:[%s4 + $0x90] sm:$0xf] %vm1839, %v1747
  %1877 = vst.msk [vmem:[%s4 + $0x94] sm:$0xf] %vm1839, %v1748
  %1878 = vst.msk [vmem:[%s4 + $0x98] sm:$0xf] %vm1839, %v1749
  %1879 = vst.msk [vmem:[%s4 + $0x9c] sm:$0xf] %vm1839, %v1750
  %1880 = vst.msk [vmem:[%s4 + $0xa0] sm:$0xf] %vm1839, %v1751
  %1881 = vst.msk [vmem:[%s4 + $0xa4] sm:$0xf] %vm1839, %v1752
  %1882 = vst.msk [vmem:[%s4 + $0xa8] sm:$0xf] %vm1839, %v1753
  %1883 = vst.msk [vmem:[%s4 + $0xac] sm:$0xf] %vm1839, %v1754
  %1884 = vst.msk [vmem:[%s4 + $0xb0] sm:$0xf] %vm1839, %v1755
  %1885 = vst.msk [vmem:[%s4 + $0xb4] sm:$0xf] %vm1839, %v1756
  %1886 = vst.msk [vmem:[%s4 + $0xb8] sm:$0xf] %vm1839, %v1757
  %1887 = vst.msk [vmem:[%s4 + $0xbc] sm:$0xf] %vm1839, %v1758
  %1888 = vst.msk [vmem:[%s4 + $0xc0] sm:$0xf] %vm1839, %v1759
  %1889 = vst.msk [vmem:[%s4 + $0xc4] sm:$0xf] %vm1839, %v1760
  %1890 = vst.msk [vmem:[%s4 + $0xc8] sm:$0xf] %vm1839, %v1761
  %1891 = vst.msk [vmem:[%s4 + $0xcc] sm:$0xf] %vm1839, %v1762
  %1892 = vst.msk [vmem:[%s4 + $0xd0] sm:$0xf] %vm1839, %v1763
  %1893 = vst.msk [vmem:[%s4 + $0xd4] sm:$0xf] %vm1839, %v1764
  %1894 = vst.msk [vmem:[%s4 + $0xd8] sm:$0xf] %vm1839, %v1765
  %1895 = vst.msk [vmem:[%s4 + $0xdc] sm:$0xf] %vm1839, %v1766
  %1896 = vst.msk [vmem:[%s4 + $0xe0] sm:$0xf] %vm1839, %v1767
  %1897 = vst.msk [vmem:[%s4 + $0xe4] sm:$0xf] %vm1839, %v1768
  %1898 = vst.msk [vmem:[%s4 + $0xe8] sm:$0xf] %vm1839, %v1769
  %1899 = vst.msk [vmem:[%s4 + $0xec] sm:$0xf] %vm1839, %v1770
  %1900 = vst.msk [vmem:[%s4 + $0xf0] sm:$0xf] %vm1839, %v1771
  %1901 = vst.msk [vmem:[%s4 + $0xf4] sm:$0xf] %vm1839, %v1772
  %1902 = vst.msk [vmem:[%s4 + $0xf8] sm:$0xf] %vm1839, %v1773
  %1903 = vst.msk [vmem:[%s4 + $0xfc] sm:$0xf] %vm1839, %v1774
  %vm1904 = vcmask 130048
  %v1905 = vsel %vm1904, %v1329, 0.0
  %v1906 = vsel %vm1904, %v1332, 0.0
  %v1907 = vadd.f32 %v1905, %v1906
  %v1908 = vsel %vm1904, %v1337, 0.0
  %v1909 = vadd.f32 %v1907, %v1908
  %v1910 = vsel %vm1904, %v1340, 0.0
  %v1911 = vadd.f32 %v1909, %v1910
  %v1912 = vsel %vm1904, %v1345, 0.0
  %v1913 = vadd.f32 %v1911, %v1912
  %v1914 = vsel %vm1904, %v1348, 0.0
  %v1915 = vadd.f32 %v1913, %v1914
  %v1916 = vsel %vm1904, %v1353, 0.0
  %v1917 = vadd.f32 %v1915, %v1916
  %v1918 = vsel %vm1904, %v1356, 0.0
  %v1919 = vadd.f32 %v1917, %v1918
  %v1920 = vsel %vm1904, %v1361, 0.0
  %v1921 = vadd.f32 %v1919, %v1920
  %v1922 = vsel %vm1904, %v1364, 0.0
  %v1923 = vadd.f32 %v1921, %v1922
  %v1924 = vsel %vm1904, %v1369, 0.0
  %v1925 = vadd.f32 %v1923, %v1924
  %v1926 = vsel %vm1904, %v1372, 0.0
  %v1927 = vadd.f32 %v1925, %v1926
  %v1928 = vsel %vm1904, %v1377, 0.0
  %v1929 = vadd.f32 %v1927, %v1928
  %v1930 = vsel %vm1904, %v1380, 0.0
  %v1931 = vadd.f32 %v1929, %v1930
  %v1932 = vsel %vm1904, %v1385, 0.0
  %v1933 = vadd.f32 %v1931, %v1932
  %v1934 = vsel %vm1904, %v1388, 0.0
  %v1935 = vadd.f32 %v1933, %v1934
  %v1936 = vsel %vm1904, %v1393, 0.0
  %v1937 = vadd.f32 %v1935, %v1936
  %v1938 = vsel %vm1904, %v1396, 0.0
  %v1939 = vadd.f32 %v1937, %v1938
  %v1940 = vsel %vm1904, %v1401, 0.0
  %v1941 = vadd.f32 %v1939, %v1940
  %v1942 = vsel %vm1904, %v1404, 0.0
  %v1943 = vadd.f32 %v1941, %v1942
  %v1944 = vsel %vm1904, %v1409, 0.0
  %v1945 = vadd.f32 %v1943, %v1944
  %v1946 = vsel %vm1904, %v1412, 0.0
  %v1947 = vadd.f32 %v1945, %v1946
  %v1948 = vsel %vm1904, %v1417, 0.0
  %v1949 = vadd.f32 %v1947, %v1948
  %v1950 = vsel %vm1904, %v1420, 0.0
  %v1951 = vadd.f32 %v1949, %v1950
  %v1952 = vsel %vm1904, %v1425, 0.0
  %v1953 = vadd.f32 %v1951, %v1952
  %v1954 = vsel %vm1904, %v1428, 0.0
  %v1955 = vadd.f32 %v1953, %v1954
  %v1956 = vsel %vm1904, %v1433, 0.0
  %v1957 = vadd.f32 %v1955, %v1956
  %v1958 = vsel %vm1904, %v1436, 0.0
  %v1959 = vadd.f32 %v1957, %v1958
  %v1960 = vsel %vm1904, %v1441, 0.0
  %v1961 = vadd.f32 %v1959, %v1960
  %v1962 = vsel %vm1904, %v1444, 0.0
  %v1963 = vadd.f32 %v1961, %v1962
  %v1964 = vsel %vm1904, %v1449, 0.0
  %v1965 = vadd.f32 %v1963, %v1964
  %v1966 = vsel %vm1904, %v1452, 0.0
  %v1967 = vadd.f32 %v1965, %v1966
  %v1968 = vsel %vm1904, %v1457, 0.0
  %v1969 = vadd.f32 %v1967, %v1968
  %v1970 = vsel %vm1904, %v1460, 0.0
  %v1971 = vadd.f32 %v1969, %v1970
  %v1972 = vsel %vm1904, %v1465, 0.0
  %v1973 = vadd.f32 %v1971, %v1972
  %v1974 = vsel %vm1904, %v1468, 0.0
  %v1975 = vadd.f32 %v1973, %v1974
  %v1976 = vsel %vm1904, %v1473, 0.0
  %v1977 = vadd.f32 %v1975, %v1976
  %v1978 = vsel %vm1904, %v1476, 0.0
  %v1979 = vadd.f32 %v1977, %v1978
  %v1980 = vsel %vm1904, %v1481, 0.0
  %v1981 = vadd.f32 %v1979, %v1980
  %v1982 = vsel %vm1904, %v1484, 0.0
  %v1983 = vadd.f32 %v1981, %v1982
  %v1984 = vsel %vm1904, %v1489, 0.0
  %v1985 = vadd.f32 %v1983, %v1984
  %v1986 = vsel %vm1904, %v1492, 0.0
  %v1987 = vadd.f32 %v1985, %v1986
  %v1988 = vsel %vm1904, %v1497, 0.0
  %v1989 = vadd.f32 %v1987, %v1988
  %v1990 = vsel %vm1904, %v1500, 0.0
  %v1991 = vadd.f32 %v1989, %v1990
  %v1992 = vsel %vm1904, %v1505, 0.0
  %v1993 = vadd.f32 %v1991, %v1992
  %v1994 = vsel %vm1904, %v1508, 0.0
  %v1995 = vadd.f32 %v1993, %v1994
  %v1996 = vsel %vm1904, %v1513, 0.0
  %v1997 = vadd.f32 %v1995, %v1996
  %v1998 = vsel %vm1904, %v1516, 0.0
  %v1999 = vadd.f32 %v1997, %v1998
  %v2000 = vsel %vm1904, %v1521, 0.0
  %v2001 = vadd.f32 %v1999, %v2000
  %v2002 = vsel %vm1904, %v1524, 0.0
  %v2003 = vadd.f32 %v2001, %v2002
  %v2004 = vsel %vm1904, %v1529, 0.0
  %v2005 = vadd.f32 %v2003, %v2004
  %v2006 = vsel %vm1904, %v1532, 0.0
  %v2007 = vadd.f32 %v2005, %v2006
  %v2008 = vsel %vm1904, %v1537, 0.0
  %v2009 = vadd.f32 %v2007, %v2008
  %v2010 = vsel %vm1904, %v1540, 0.0
  %v2011 = vadd.f32 %v2009, %v2010
  %v2012 = vsel %vm1904, %v1545, 0.0
  %v2013 = vadd.f32 %v2011, %v2012
  %v2014 = vsel %vm1904, %v1548, 0.0
  %v2015 = vadd.f32 %v2013, %v2014
  %v2016 = vsel %vm1904, %v1553, 0.0
  %v2017 = vadd.f32 %v2015, %v2016
  %v2018 = vsel %vm1904, %v1556, 0.0
  %v2019 = vadd.f32 %v2017, %v2018
  %v2020 = vsel %vm1904, %v1561, 0.0
  %v2021 = vadd.f32 %v2019, %v2020
  %v2022 = vsel %vm1904, %v1564, 0.0
  %v2023 = vadd.f32 %v2021, %v2022
  %v2024 = vsel %vm1904, %v1569, 0.0
  %v2025 = vadd.f32 %v2023, %v2024
  %v2026 = vsel %vm1904, %v1572, 0.0
  %v2027 = vadd.f32 %v2025, %v2026
  %v2028 = vsel %vm1904, %v1577, 0.0
  %v2029 = vadd.f32 %v2027, %v2028
  %v2030 = vsel %vm1904, %v1580, 0.0
  %v2031 = vadd.f32 %v2029, %v2030
  %v2032 = vrot.slane %v2031, 4
  %v2033 = vadd.f32 %v2031, %v2032
  %v2034 = vrot.slane %v2033, 2
  %v2035 = vadd.f32 %v2033, %v2034
  %v2036 = vrot.slane %v2035, 1
  %v2037 = vadd.f32 %v2035, %v2036
  %vm2038 = vcmask 122880
  %2039 = vst.msk [vmem:[%s7] sm:$0x1] %vm2038, %v2037
  %v2040 = vmul.f32 %v1329, %v1329
  %v2041 = vmul.f32 %v1332, %v1332
  %v2042 = vmul.f32 %v1337, %v1337
  %v2043 = vmul.f32 %v1340, %v1340
  %v2044 = vmul.f32 %v1345, %v1345
  %v2045 = vmul.f32 %v1348, %v1348
  %v2046 = vmul.f32 %v1353, %v1353
  %v2047 = vmul.f32 %v1356, %v1356
  %v2048 = vmul.f32 %v1361, %v1361
  %v2049 = vmul.f32 %v1364, %v1364
  %v2050 = vmul.f32 %v1369, %v1369
  %v2051 = vmul.f32 %v1372, %v1372
  %v2052 = vmul.f32 %v1377, %v1377
  %v2053 = vmul.f32 %v1380, %v1380
  %v2054 = vmul.f32 %v1385, %v1385
  %v2055 = vmul.f32 %v1388, %v1388
  %v2056 = vmul.f32 %v1393, %v1393
  %v2057 = vmul.f32 %v1396, %v1396
  %v2058 = vmul.f32 %v1401, %v1401
  %v2059 = vmul.f32 %v1404, %v1404
  %v2060 = vmul.f32 %v1409, %v1409
  %v2061 = vmul.f32 %v1412, %v1412
  %v2062 = vmul.f32 %v1417, %v1417
  %v2063 = vmul.f32 %v1420, %v1420
  %v2064 = vmul.f32 %v1425, %v1425
  %v2065 = vmul.f32 %v1428, %v1428
  %v2066 = vmul.f32 %v1433, %v1433
  %v2067 = vmul.f32 %v1436, %v1436
  %v2068 = vmul.f32 %v1441, %v1441
  %v2069 = vmul.f32 %v1444, %v1444
  %v2070 = vmul.f32 %v1449, %v1449
  %v2071 = vmul.f32 %v1452, %v1452
  %v2072 = vmul.f32 %v1457, %v1457
  %v2073 = vmul.f32 %v1460, %v1460
  %v2074 = vmul.f32 %v1465, %v1465
  %v2075 = vmul.f32 %v1468, %v1468
  %v2076 = vmul.f32 %v1473, %v1473
  %v2077 = vmul.f32 %v1476, %v1476
  %v2078 = vmul.f32 %v1481, %v1481
  %v2079 = vmul.f32 %v1484, %v1484
  %v2080 = vmul.f32 %v1489, %v1489
  %v2081 = vmul.f32 %v1492, %v1492
  %v2082 = vmul.f32 %v1497, %v1497
  %v2083 = vmul.f32 %v1500, %v1500
  %v2084 = vmul.f32 %v1505, %v1505
  %v2085 = vmul.f32 %v1508, %v1508
  %v2086 = vmul.f32 %v1513, %v1513
  %v2087 = vmul.f32 %v1516, %v1516
  %v2088 = vmul.f32 %v1521, %v1521
  %v2089 = vmul.f32 %v1524, %v1524
  %v2090 = vmul.f32 %v1529, %v1529
  %v2091 = vmul.f32 %v1532, %v1532
  %v2092 = vmul.f32 %v1537, %v1537
  %v2093 = vmul.f32 %v1540, %v1540
  %v2094 = vmul.f32 %v1545, %v1545
  %v2095 = vmul.f32 %v1548, %v1548
  %v2096 = vmul.f32 %v1553, %v1553
  %v2097 = vmul.f32 %v1556, %v1556
  %v2098 = vmul.f32 %v1561, %v1561
  %v2099 = vmul.f32 %v1564, %v1564
  %v2100 = vmul.f32 %v1569, %v1569
  %v2101 = vmul.f32 %v1572, %v1572
  %v2102 = vmul.f32 %v1577, %v1577
  %v2103 = vmul.f32 %v1580, %v1580
  %v2104 = vsel %vm1904, %v2040, 0.0
  %v2105 = vsel %vm1904, %v2041, 0.0
  %v2106 = vadd.f32 %v2104, %v2105
  %v2107 = vsel %vm1904, %v2042, 0.0
  %v2108 = vadd.f32 %v2106, %v2107
  %v2109 = vsel %vm1904, %v2043, 0.0
  %v2110 = vadd.f32 %v2108, %v2109
  %v2111 = vsel %vm1904, %v2044, 0.0
  %v2112 = vadd.f32 %v2110, %v2111
  %v2113 = vsel %vm1904, %v2045, 0.0
  %v2114 = vadd.f32 %v2112, %v2113
  %v2115 = vsel %vm1904, %v2046, 0.0
  %v2116 = vadd.f32 %v2114, %v2115
  %v2117 = vsel %vm1904, %v2047, 0.0
  %v2118 = vadd.f32 %v2116, %v2117
  %v2119 = vsel %vm1904, %v2048, 0.0
  %v2120 = vadd.f32 %v2118, %v2119
  %v2121 = vsel %vm1904, %v2049, 0.0
  %v2122 = vadd.f32 %v2120, %v2121
  %v2123 = vsel %vm1904, %v2050, 0.0
  %v2124 = vadd.f32 %v2122, %v2123
  %v2125 = vsel %vm1904, %v2051, 0.0
  %v2126 = vadd.f32 %v2124, %v2125
  %v2127 = vsel %vm1904, %v2052, 0.0
  %v2128 = vadd.f32 %v2126, %v2127
  %v2129 = vsel %vm1904, %v2053, 0.0
  %v2130 = vadd.f32 %v2128, %v2129
  %v2131 = vsel %vm1904, %v2054, 0.0
  %v2132 = vadd.f32 %v2130, %v2131
  %v2133 = vsel %vm1904, %v2055, 0.0
  %v2134 = vadd.f32 %v2132, %v2133
  %v2135 = vsel %vm1904, %v2056, 0.0
  %v2136 = vadd.f32 %v2134, %v2135
  %v2137 = vsel %vm1904, %v2057, 0.0
  %v2138 = vadd.f32 %v2136, %v2137
  %v2139 = vsel %vm1904, %v2058, 0.0
  %v2140 = vadd.f32 %v2138, %v2139
  %v2141 = vsel %vm1904, %v2059, 0.0
  %v2142 = vadd.f32 %v2140, %v2141
  %v2143 = vsel %vm1904, %v2060, 0.0
  %v2144 = vadd.f32 %v2142, %v2143
  %v2145 = vsel %vm1904, %v2061, 0.0
  %v2146 = vadd.f32 %v2144, %v2145
  %v2147 = vsel %vm1904, %v2062, 0.0
  %v2148 = vadd.f32 %v2146, %v2147
  %v2149 = vsel %vm1904, %v2063, 0.0
  %v2150 = vadd.f32 %v2148, %v2149
  %v2151 = vsel %vm1904, %v2064, 0.0
  %v2152 = vadd.f32 %v2150, %v2151
  %v2153 = vsel %vm1904, %v2065, 0.0
  %v2154 = vadd.f32 %v2152, %v2153
  %v2155 = vsel %vm1904, %v2066, 0.0
  %v2156 = vadd.f32 %v2154, %v2155
  %v2157 = vsel %vm1904, %v2067, 0.0
  %v2158 = vadd.f32 %v2156, %v2157
  %v2159 = vsel %vm1904, %v2068, 0.0
  %v2160 = vadd.f32 %v2158, %v2159
  %v2161 = vsel %vm1904, %v2069, 0.0
  %v2162 = vadd.f32 %v2160, %v2161
  %v2163 = vsel %vm1904, %v2070, 0.0
  %v2164 = vadd.f32 %v2162, %v2163
  %v2165 = vsel %vm1904, %v2071, 0.0
  %v2166 = vadd.f32 %v2164, %v2165
  %v2167 = vsel %vm1904, %v2072, 0.0
  %v2168 = vadd.f32 %v2166, %v2167
  %v2169 = vsel %vm1904, %v2073, 0.0
  %v2170 = vadd.f32 %v2168, %v2169
  %v2171 = vsel %vm1904, %v2074, 0.0
  %v2172 = vadd.f32 %v2170, %v2171
  %v2173 = vsel %vm1904, %v2075, 0.0
  %v2174 = vadd.f32 %v2172, %v2173
  %v2175 = vsel %vm1904, %v2076, 0.0
  %v2176 = vadd.f32 %v2174, %v2175
  %v2177 = vsel %vm1904, %v2077, 0.0
  %v2178 = vadd.f32 %v2176, %v2177
  %v2179 = vsel %vm1904, %v2078, 0.0
  %v2180 = vadd.f32 %v2178, %v2179
  %v2181 = vsel %vm1904, %v2079, 0.0
  %v2182 = vadd.f32 %v2180, %v2181
  %v2183 = vsel %vm1904, %v2080, 0.0
  %v2184 = vadd.f32 %v2182, %v2183
  %v2185 = vsel %vm1904, %v2081, 0.0
  %v2186 = vadd.f32 %v2184, %v2185
  %v2187 = vsel %vm1904, %v2082, 0.0
  %v2188 = vadd.f32 %v2186, %v2187
  %v2189 = vsel %vm1904, %v2083, 0.0
  %v2190 = vadd.f32 %v2188, %v2189
  %v2191 = vsel %vm1904, %v2084, 0.0
  %v2192 = vadd.f32 %v2190, %v2191
  %v2193 = vsel %vm1904, %v2085, 0.0
  %v2194 = vadd.f32 %v2192, %v2193
  %v2195 = vsel %vm1904, %v2086, 0.0
  %v2196 = vadd.f32 %v2194, %v2195
  %v2197 = vsel %vm1904, %v2087, 0.0
  %v2198 = vadd.f32 %v2196, %v2197
  %v2199 = vsel %vm1904, %v2088, 0.0
  %v2200 = vadd.f32 %v2198, %v2199
  %v2201 = vsel %vm1904, %v2089, 0.0
  %v2202 = vadd.f32 %v2200, %v2201
  %v2203 = vsel %vm1904, %v2090, 0.0
  %v2204 = vadd.f32 %v2202, %v2203
  %v2205 = vsel %vm1904, %v2091, 0.0
  %v2206 = vadd.f32 %v2204, %v2205
  %v2207 = vsel %vm1904, %v2092, 0.0
  %v2208 = vadd.f32 %v2206, %v2207
  %v2209 = vsel %vm1904, %v2093, 0.0
  %v2210 = vadd.f32 %v2208, %v2209
  %v2211 = vsel %vm1904, %v2094, 0.0
  %v2212 = vadd.f32 %v2210, %v2211
  %v2213 = vsel %vm1904, %v2095, 0.0
  %v2214 = vadd.f32 %v2212, %v2213
  %v2215 = vsel %vm1904, %v2096, 0.0
  %v2216 = vadd.f32 %v2214, %v2215
  %v2217 = vsel %vm1904, %v2097, 0.0
  %v2218 = vadd.f32 %v2216, %v2217
  %v2219 = vsel %vm1904, %v2098, 0.0
  %v2220 = vadd.f32 %v2218, %v2219
  %v2221 = vsel %vm1904, %v2099, 0.0
  %v2222 = vadd.f32 %v2220, %v2221
  %v2223 = vsel %vm1904, %v2100, 0.0
  %v2224 = vadd.f32 %v2222, %v2223
  %v2225 = vsel %vm1904, %v2101, 0.0
  %v2226 = vadd.f32 %v2224, %v2225
  %v2227 = vsel %vm1904, %v2102, 0.0
  %v2228 = vadd.f32 %v2226, %v2227
  %v2229 = vsel %vm1904, %v2103, 0.0
  %v2230 = vadd.f32 %v2228, %v2229
  %v2231 = vrot.slane %v2230, 4
  %v2232 = vadd.f32 %v2230, %v2231
  %v2233 = vrot.slane %v2232, 2
  %v2234 = vadd.f32 %v2232, %v2233
  %v2235 = vrot.slane %v2234, 1
  %v2236 = vadd.f32 %v2234, %v2235
  %2237 = vst.msk [vmem:[%s8] sm:$0x1] %vm2038, %v2236
  // Predicated region
  $region14: #{bottleneck_forward.4} parent=0 // pred_check
    _
  $region15: #{bottleneck_forward.4} parent=0 // pred_check_branch
    %2239 = sbr.rel (0) target = $region17
  $region16: #{bottleneck_forward.4} parent=0 // pred_region
    _
  $region17: #{bottleneck_forward.4} parent=0 // pred_fallthru
    _
  // Predicated region
  $region18: #{bottleneck_forward.4} parent=0 // pred_check
    _
  $region19: #{bottleneck_forward.4} parent=0 // pred_check_branch
    %2241 = sbr.rel (0) target = $region21
  $region20: #{bottleneck_forward.4} parent=0 // pred_region
    _
  $region21: #{bottleneck_forward.4} parent=0 // pred_fallthru
    _
  // Predicated region
  $region22: #{bottleneck_forward.4} parent=0 // pred_check
    _
  $region23: #{bottleneck_forward.4} parent=0 // pred_check_branch
    %2243 = sbr.rel (0) target = $region25
  $region24: #{bottleneck_forward.4} parent=0 // pred_region
    _
  $region25: #{bottleneck_forward.4} parent=0 // pred_fallthru
    _
  // Predicated region
  $region26: #{bottleneck_forward.4} parent=0 // pred_check
    _
  $region27: #{bottleneck_forward.4} parent=0 // pred_check_branch
    %2245 = sbr.rel (0) target = $region29
  $region28: #{bottleneck_forward.4} parent=0 // pred_region
    _
  $region29: #{bottleneck_forward.4} parent=0 // pred_fallthru
    _
  // Predicated region
  $region30: #{bottleneck_forward.4} parent=0 // pred_check
    _
  $region31: #{bottleneck_forward.4} parent=0 // pred_check_branch
    %2247 = sbr.rel (0) target = $region33
  $region32: #{bottleneck_forward.4} parent=0 // pred_region
    _
  $region33: #{bottleneck_forward.4} parent=0 // pred_fallthru
    _
  // Predicated region
  $region34: #{bottleneck_forward.4} parent=0 // pred_check
    _
  $region35: #{bottleneck_forward.4} parent=0 // pred_check_branch
    %2249 = sbr.rel (0) target = $region37
  $region36: #{bottleneck_forward.4} parent=0 // pred_region
    _
  $region37: #{bottleneck_forward.4} parent=0 // pred_fallthru
    _
  // Predicated region
  $region38: #{bottleneck_forward.4} parent=0 // pred_check
    _
  $region39: #{bottleneck_forward.4} parent=0 // pred_check_branch
    %2251 = sbr.rel (0) target = $region41
  $region40: #{bottleneck_forward.4} parent=0 // pred_region
    _
  $region41: #{bottleneck_forward.4} parent=0 // pred_fallthru
    _
  // Predicated region
  $region42: #{bottleneck_forward.4} parent=0 // pred_check
    _
  $region43: #{bottleneck_forward.4} parent=0 // pred_check_branch
    %2253 = sbr.rel (0) target = $region45
  $region44: #{bottleneck_forward.4} parent=0 // pred_region
    _
  $region45: #{bottleneck_forward.4} parent=0 // pred_fallthru
    _
  // Predicated region
  $region46: #{bottleneck_forward.4} parent=0 // pred_check
    _
  $region47: #{bottleneck_forward.4} parent=0 // pred_check_branch
    %2255 = sbr.rel (0) target = $region49
  $region48: #{bottleneck_forward.4} parent=0 // pred_region
    _
  $region49: #{bottleneck_forward.4} parent=0 // pred_fallthru
    _
  // Predicated region
  $region50: #{bottleneck_forward.4} parent=0 // pred_check
    _
  $region51: #{bottleneck_forward.4} parent=0 // pred_check_branch
    %2257 = sbr.rel (0) target = $region53
  $region52: #{bottleneck_forward.4} parent=0 // pred_region
    _
  $region53: #{bottleneck_forward.4} parent=0 // pred_fallthru
    _
  // Predicated region
  $region54: #{bottleneck_forward.4} parent=0 // pred_check
    _
  $region55: #{bottleneck_forward.4} parent=0 // pred_check_branch
    %2259 = sbr.rel (0) target = $region57
  $region56: #{bottleneck_forward.4} parent=0 // pred_region
    _
  $region57: #{bottleneck_forward.4} parent=0 // pred_fallthru
    _
  // Predicated region
  $region58: #{bottleneck_forward.4} parent=0 // pred_check
    _
  $region59: #{bottleneck_forward.4} parent=0 // pred_check_branch
    %2261 = sbr.rel (0) target = $region61
  $region60: #{bottleneck_forward.4} parent=0 // pred_region
    _
  $region61: #{bottleneck_forward.4} parent=0 // pred_fallthru
    _

// kernel: bottleneck_forward.5
$region0: #{bottleneck_forward.5}
  #allocation0 [shape = 'u32[]', space=smem, size = 0x4, offset = 0x4, fixed_abs, tag = 'smem constant byte address 0x4 - core index']
  #allocation1 [shape = 'u32[144,128]{1,0:T(1,128)}', space=vmem, size = 0x12000, scoped, tag = 'internal scratch']
  #allocation2 [shape = 'bf16[10,18,4]{2,1,0:T(8,128)(2,1)}', space=vmem, size = 0xf000, scoped, tag = 'scratch operand']
  %s0 = inlined_call_operand.vmem [shape: bf16[2,16,16,4], index: 0, kind: input, shape index: {}]
  %s1 = inlined_call_operand.vmem [shape: f32[1,4], index: 1, kind: input, shape index: {}]
  %s2 = inlined_call_operand.vmem [shape: f32[1,4], index: 2, kind: input, shape index: {}]
  %s3 = inlined_call_operand.vmem [shape: bf16[36,4], index: 3, kind: input, shape index: {}]
  %s4 = inlined_call_operand.vmem [shape: bf16[2,16,16,4], index: 4, kind: output, shape index: {0}]
  %s5 = inlined_call_operand.vmem [shape: f32[2,2,1,4], index: 5, kind: output, shape index: {1}]
  %s6 = inlined_call_operand.vmem [shape: f32[2,2,1,4], index: 6, kind: output, shape index: {2}]
  %7 = xla_tuple %s4, %s5, %s6
  %s8 = sld [smem:[#allocation0]]
  $region81: #{bottleneck_forward.5} parent=0
    _
  %s10 = ssub.s32 1, %s8
  %s11 = scalar_select 0, %s10, %s8
  loop: start=0, step=1, limit=6
  $region2: #{bottleneck_forward.5} parent=0 // loop_pre_header
    _
  $region3: #{bottleneck_forward.5} parent=0 // loop_header
    %s13 = sphi 0, %s17
    %p14 = scmp.ge.s32.totalorder %s13, 6
    %s20 = sphi 0, %s32
    %s21 = sphi 0, %s28
    %s22 = sphi 0, %s20
    %s23 = sphi 0, %s21
    %s24 = sphi 0, %s22
    %s25 = sphi 0, %s23
    %s35 = sphi 0, %s37
    %s38 = sphi 0, %s35
    %s39 = sphi 0, %s38
    %s55 = sphi 0, %s39
    %s59 = sphi 0, %s59
    %s61 = sphi 0, %s59
    %s62 = sphi 0, %s61
    %s76 = sphi 0, %s62
    %s80 = sphi 0, %s80
    %s82 = sphi 0, %s80
    %s83 = sphi 0, %s82
    %s97 = sphi 0, %s83
    %s101 = sphi 0, %s101
    %s103 = sphi 0, %s101
    %s104 = sphi 0, %s103
    %s118 = sphi 0, %s104
    %s126 = sphi 0, %s128
    %s129 = sphi 0, %s126
    %s130 = sphi 0, %s129
    %s146 = sphi 0, %s130
    %s154 = sphi 0, %s156
    %s157 = sphi 0, %s154
    %s158 = sphi 0, %s157
    %s174 = sphi 0, %s158
    %s182 = sphi 0, %s184
    %s185 = sphi 0, %s182
    %s186 = sphi 0, %s185
    %s202 = sphi 0, %s186
  $region4: #{bottleneck_forward.5} parent=0 // loop_header_branch
    %16 = sbr.rel (%p14) target = $region8
  $region5: #{bottleneck_forward.5} parent=0 // loop_body
    %s18 = ssub.s32 %s13, 1
    %s19 = ssub.s32 %s13, 2
    %s26 = sadd.s32 1, %s21
    %p27 = scmp.ge.s32.totalorder %s26, 2
    %s28 = scalar_select %p27, 0, %s26
    %s29 = sadd.s32 1, %s20
    %s30 = scalar_select %p27, %s29, %s20
    %p31 = scmp.ge.s32.totalorder %s30, 2
    %s32 = scalar_select %p31, 0, %s30
    %s33 = ssub.s32 %s20, %s32
    %p34 = scmp.eq.s32.totalorder %s33, 0
    %s36 = sadd.s32 %s35, 1
    %s37 = scalar_select %p34, %s35, %s36
    %p40 = pneg %p34
    %p41 = scmp.eq.s32.totalorder %s13, 3
    %p42 = por %p40, %p41
    %p43 = scmp.ne.s32.totalorder %s35, %s38
    %p44 = scmp.eq.s32.totalorder %s13, 0
    %p45 = por %p43, %p44
    %p46 = scmp.ne.s32.totalorder %s35, %s38
    %p47 = scmp.eq.s32.totalorder %s18, 3
    %p48 = por %p46, %p47
    %p49 = scmp.ne.s32.totalorder %s38, %s39
    %p50 = scmp.eq.s32.totalorder %s18, 0
    %p51 = por %p49, %p50
    %p52 = scmp.ne.s32.totalorder %s38, %s39
    %p53 = scmp.eq.s32.totalorder %s19, 3
    %p54 = por %p52, %p53
    %p56 = scmp.ne.s32.totalorder %s39, %s55
    %p57 = scmp.eq.s32.totalorder %s19, 0
    %p58 = por %p56, %p57
    %s60 = sadd.s32 %s59, 1
    %p63 = scmp.eq.s32.totalorder %s13, 3
    %p64 = scmp.ne.s32.totalorder %s59, %s61
    %p65 = scmp.eq.s32.totalorder %s13, 0
    %p66 = por %p64, %p65
    %p67 = scmp.ne.s32.totalorder %s59, %s61
    %p68 = scmp.eq.s32.totalorder %s18, 3
    %p69 = por %p67, %p68
    %p70 = scmp.ne.s32.totalorder %s61, %s62
    %p71 = scmp.eq.s32.totalorder %s18, 0
    %p72 = por %p70, %p71
    %p73 = scmp.ne.s32.totalorder %s61, %s62
    %p74 = scmp.eq.s32.totalorder %s19, 3
    %p75 = por %p73, %p74
    %p77 = scmp.ne.s32.totalorder %s62, %s76
    %p78 = scmp.eq.s32.totalorder %s19, 0
    %p79 = por %p77, %p78
    %s81 = sadd.s32 %s80, 1
    %p84 = scmp.eq.s32.totalorder %s13, 3
    %p85 = scmp.ne.s32.totalorder %s80, %s82
    %p86 = scmp.eq.s32.totalorder %s13, 0
    %p87 = por %p85, %p86
    %p88 = scmp.ne.s32.totalorder %s80, %s82
    %p89 = scmp.eq.s32.totalorder %s18, 3
    %p90 = por %p88, %p89
    %p91 = scmp.ne.s32.totalorder %s82, %s83
    %p92 = scmp.eq.s32.totalorder %s18, 0
    %p93 = por %p91, %p92
    %p94 = scmp.ne.s32.totalorder %s82, %s83
    %p95 = scmp.eq.s32.totalorder %s19, 3
    %p96 = por %p94, %p95
    %p98 = scmp.ne.s32.totalorder %s83, %s97
    %p99 = scmp.eq.s32.totalorder %s19, 0
    %p100 = por %p98, %p99
    %s102 = sadd.s32 %s101, 1
    %p105 = scmp.eq.s32.totalorder %s13, 3
    %p106 = scmp.ne.s32.totalorder %s101, %s103
    %p107 = scmp.eq.s32.totalorder %s13, 0
    %p108 = por %p106, %p107
    %p109 = scmp.ne.s32.totalorder %s101, %s103
    %p110 = scmp.eq.s32.totalorder %s18, 3
    %p111 = por %p109, %p110
    %p112 = scmp.ne.s32.totalorder %s103, %s104
    %p113 = scmp.eq.s32.totalorder %s18, 0
    %p114 = por %p112, %p113
    %p115 = scmp.ne.s32.totalorder %s103, %s104
    %p116 = scmp.eq.s32.totalorder %s19, 3
    %p117 = por %p115, %p116
    %p119 = scmp.ne.s32.totalorder %s104, %s118
    %p120 = scmp.eq.s32.totalorder %s19, 0
    %p121 = por %p119, %p120
    %s122 = ssub.s32 %s20, %s32
    %s123 = ssub.s32 %s21, %s28
    %s124 = sor.u32 %s122, %s123
    %p125 = scmp.eq.s32.totalorder %s124, 0
    %s127 = sadd.s32 %s126, 1
    %s128 = scalar_select %p125, %s126, %s127
    %p131 = pneg %p125
    %p132 = scmp.eq.s32.totalorder %s13, 3
    %p133 = por %p131, %p132
    %p134 = scmp.ne.s32.totalorder %s126, %s129
    %p135 = scmp.eq.s32.totalorder %s13, 0
    %p136 = por %p134, %p135
    %p137 = scmp.ne.s32.totalorder %s126, %s129
    %p138 = scmp.eq.s32.totalorder %s18, 3
    %p139 = por %p137, %p138
    %p140 = scmp.ne.s32.totalorder %s129, %s130
    %p141 = scmp.eq.s32.totalorder %s18, 0
    %p142 = por %p140, %p141
    %p143 = scmp.ne.s32.totalorder %s129, %s130
    %p144 = scmp.eq.s32.totalorder %s19, 3
    %p145 = por %p143, %p144
    %p147 = scmp.ne.s32.totalorder %s130, %s146
    %p148 = scmp.eq.s32.totalorder %s19, 0
    %p149 = por %p147, %p148
    %s150 = ssub.s32 %s20, %s32
    %s151 = ssub.s32 %s21, %s28
    %s152 = sor.u32 %s150, %s151
    %p153 = scmp.eq.s32.totalorder %s152, 0
    %s155 = sadd.s32 %s154, 1
    %s156 = scalar_select %p153, %s154, %s155
    %p159 = pneg %p153
    %p160 = scmp.eq.s32.totalorder %s13, 3
    %p161 = por %p159, %p160
    %p162 = scmp.ne.s32.totalorder %s154, %s157
    %p163 = scmp.eq.s32.totalorder %s13, 0
    %p164 = por %p162, %p163
    %p165 = scmp.ne.s32.totalorder %s154, %s157
    %p166 = scmp.eq.s32.totalorder %s18, 3
    %p167 = por %p165, %p166
    %p168 = scmp.ne.s32.totalorder %s157, %s158
    %p169 = scmp.eq.s32.totalorder %s18, 0
    %p170 = por %p168, %p169
    %p171 = scmp.ne.s32.totalorder %s157, %s158
    %p172 = scmp.eq.s32.totalorder %s19, 3
    %p173 = por %p171, %p172
    %p175 = scmp.ne.s32.totalorder %s158, %s174
    %p176 = scmp.eq.s32.totalorder %s19, 0
    %p177 = por %p175, %p176
    %s178 = ssub.s32 %s20, %s32
    %s179 = ssub.s32 %s21, %s28
    %s180 = sor.u32 %s178, %s179
    %p181 = scmp.eq.s32.totalorder %s180, 0
    %s183 = sadd.s32 %s182, 1
    %s184 = scalar_select %p181, %s182, %s183
    %p187 = pneg %p181
    %p188 = scmp.eq.s32.totalorder %s13, 3
    %p189 = por %p187, %p188
    %p190 = scmp.ne.s32.totalorder %s182, %s185
    %p191 = scmp.eq.s32.totalorder %s13, 0
    %p192 = por %p190, %p191
    %p193 = scmp.ne.s32.totalorder %s182, %s185
    %p194 = scmp.eq.s32.totalorder %s18, 3
    %p195 = por %p193, %p194
    %p196 = scmp.ne.s32.totalorder %s185, %s186
    %p197 = scmp.eq.s32.totalorder %s18, 0
    %p198 = por %p196, %p197
    %p199 = scmp.ne.s32.totalorder %s185, %s186
    %p200 = scmp.eq.s32.totalorder %s19, 3
    %p201 = por %p199, %p200
    %p203 = scmp.ne.s32.totalorder %s186, %s202
    %p204 = scmp.eq.s32.totalorder %s19, 0
    %p205 = por %p203, %p204
    %p206 = scmp.le.s32.totalorder 1, %s13
    %p207 = scmp.lt.s32.totalorder %s13, 5
    %p208 = pnand %p206, %p207
    %p209 = pneg %p208
    // Predicated region
    $region9: #{bottleneck_forward.5} parent=5 // pred_check
      _
    $region10: #{bottleneck_forward.5} parent=5 // pred_check_branch
      %211 = sbr.rel (%p208) target = $region12
    $region11: #{bottleneck_forward.5} parent=5 // pred_region
      %s212 = ssub.s32 %s13, 1
      // Predicated region
      $region13: #{bottleneck_forward.5} parent=11 // pred_check
        %p213 = pneg %p72
      $region14: #{bottleneck_forward.5} parent=11 // pred_check_branch
        %215 = sbr.rel (%p213) target = $region16
      $region15: #{bottleneck_forward.5} parent=11 // pred_region
        _
      $region16: #{bottleneck_forward.5} parent=11 // pred_fallthru
        _
      // Predicated region
      $region17: #{bottleneck_forward.5} parent=11 // pred_check
        %p216 = pneg %p93
      $region18: #{bottleneck_forward.5} parent=11 // pred_check_branch
        %218 = sbr.rel (%p216) target = $region20
      $region19: #{bottleneck_forward.5} parent=11 // pred_region
        _
      $region20: #{bottleneck_forward.5} parent=11 // pred_fallthru
        _
      // Predicated region
      $region21: #{bottleneck_forward.5} parent=11 // pred_check
        %p219 = pneg %p114
      $region22: #{bottleneck_forward.5} parent=11 // pred_check_branch
        %221 = sbr.rel (%p219) target = $region24
      $region23: #{bottleneck_forward.5} parent=11 // pred_region
        _
      $region24: #{bottleneck_forward.5} parent=11 // pred_fallthru
        _
    $region12: #{bottleneck_forward.5} parent=5 // pred_fallthru
      _
    %p222 = scmp.lt.s32.totalorder %s13, 4
    // Predicated region
    $region25: #{bottleneck_forward.5} parent=5 // pred_check
      %p223 = pneg %p222
    $region26: #{bottleneck_forward.5} parent=5 // pred_check_branch
      %225 = sbr.rel (%p223) target = $region28
    $region27: #{bottleneck_forward.5} parent=5 // pred_region
      // Predicated region
      $region29: #{bottleneck_forward.5} parent=27 // pred_check
        %p226 = pneg %p45
      $region30: #{bottleneck_forward.5} parent=27 // pred_check_branch
        %228 = sbr.rel (%p226) target = $region32
      $region31: #{bottleneck_forward.5} parent=27 // pred_region
        %p229 = scmp.lt.s32.totalorder %s20, 1
        %s230 = scalar_select %p229, %s20, 1
        %s231 = smul.addr %s230, 32
        %s232 = smul.addr %s231, 4
        %s233 = scalar_lea.vmem %s0, %s232
      $region32: #{bottleneck_forward.5} parent=27 // pred_fallthru
        _
    $region28: #{bottleneck_forward.5} parent=5 // pred_fallthru
      _
    %p234 = scmp.le.s32.totalorder 1, %s13
    %p235 = scmp.lt.s32.totalorder %s13, 5
    %p236 = pnand %p234, %p235
    %p237 = pneg %p236
    // Predicated region
    $region33: #{bottleneck_forward.5} parent=5 // pred_check
      _
    $region34: #{bottleneck_forward.5} parent=5 // pred_check_branch
      %239 = sbr.rel (%p236) target = $region36
    $region35: #{bottleneck_forward.5} parent=5 // pred_region
      %s240 = ssub.s32 %s13, 1
      %p241 = scmp.lt.s32.totalorder %s22, 1
      %s242 = scalar_select %p241, %s22, 1
      %s243 = smul.addr %s242, 32
      %s244 = smul.addr %s243, 4
      %s245 = scalar_lea.vmem %s0, %s244
      %p246 = pneg %p51
      %p247 = pneg %p48
      %p248 = pneg %p72
      %p249 = pneg %p69
      %p250 = pneg %p93
      %p251 = pneg %p90
      %p252 = pneg %p114
      %p253 = pneg %p111
      %p254 = pneg %p142
      %p255 = pneg %p139
      %s256 = smul.u32 8, %s23
      %p257 = scmp.lt.s32.totalorder %s22, 1
      %s258 = scalar_select %p257, %s22, 1
      %p259 = scmp.lt.s32.totalorder %s256, 15
      %s260 = scalar_select %p259, %s256, 15
      %s261 = smul.addr %s260, 2
      %s262 = smul.addr %s258, 32
      %s263 = sadd.s32 %s261, %s262
      %s264 = smul.addr %s263, 4
      %s265 = scalar_lea.vmem %s4, %s264
      %p266 = pneg %p170
      %p267 = pneg %p167
      %p268 = scmp.lt.s32.totalorder %s22, 1
      %s269 = scalar_select %p268, %s22, 1
      %p270 = scmp.lt.s32.totalorder %s23, 1
      %s271 = scalar_select %p270, %s23, 1
      %s272 = smul.addr %s269, 2
      %s273 = sadd.s32 %s271, %s272
      %s274 = scalar_lea.vmem %s5, %s273
      %p275 = pneg %p198
      %p276 = pneg %p195
      %p277 = scmp.lt.s32.totalorder %s22, 1
      %s278 = scalar_select %p277, %s22, 1
      %p279 = scmp.lt.s32.totalorder %s23, 1
      %s280 = scalar_select %p279, %s23, 1
      %s281 = smul.addr %s278, 2
      %s282 = sadd.s32 %s280, %s281
      %s283 = scalar_lea.vmem %s6, %s282
      %p284 = scmp.lt.s32.totalorder %s22, 1
      %s285 = scalar_select %p284, %s22, 1
      %s286 = smul.addr %s285, 32
      %s287 = smul.addr %s286, 4
      %s288 = scalar_lea.vmem %s0, %s287
      %s289 = smul.u32 8, %s23
      %p290 = scmp.lt.s32.totalorder %s22, 1
      %s291 = scalar_select %p290, %s22, 1
      %p292 = scmp.lt.s32.totalorder %s289, 15
      %s293 = scalar_select %p292, %s289, 15
      %s294 = smul.addr %s293, 2
      %s295 = smul.addr %s291, 32
      %s296 = sadd.s32 %s294, %s295
      %s297 = smul.addr %s296, 4
      %s298 = scalar_lea.vmem %s4, %s297
      %s299 = smul.u32 8, %s23
      %p300 = scmp.lt.s32.totalorder %s22, 1
      %s301 = scalar_select %p300, %s22, 1
      %p302 = scmp.lt.s32.totalorder %s23, 1
      %s303 = scalar_select %p302, %s23, 1
      %s304 = smul.addr %s301, 2
      %s305 = sadd.s32 %s303, %s304
      %s306 = scalar_lea.vmem %s5, %s305
      %p307 = scmp.lt.s32.totalorder %s22, 1
      %s308 = scalar_select %p307, %s22, 1
      %p309 = scmp.lt.s32.totalorder %s23, 1
      %s310 = scalar_select %p309, %s23, 1
      %s311 = smul.addr %s308, 2
      %s312 = sadd.s32 %s310, %s311
      %s313 = scalar_lea.vmem %s6, %s312
      %v315 = vld [vmem:[%s1] sm:$0x1]
      %v316 = vld [vmem:[%s2] sm:$0x1]
      %vm317 = vcmask 24576
      %vm318 = vsmask.f32 256
      %vm319 = vmand %vm317, %vm318
      %v320 = vld [vmem:[#allocation2] sm:$0x1]
      %v321 = vsel %vm319, 0, %v320
      %322 = vst [vmem:[#allocation2] sm:$0x1] %v321
      %v323 = vld [vmem:[#allocation2 + $0xc] sm:$0x1]
      %v324 = vsel %vm319, 0, %v323
      %325 = vst [vmem:[#allocation2 + $0xc] sm:$0x1] %v324
      %v326 = vld [vmem:[#allocation2 + $0x18] sm:$0x1]
      %v327 = vsel %vm319, 0, %v326
      %328 = vst [vmem:[#allocation2 + $0x18] sm:$0x1] %v327
      %v329 = vld [vmem:[#allocation2 + $0x24] sm:$0x1]
      %v330 = vsel %vm319, 0, %v329
      %331 = vst [vmem:[#allocation2 + $0x24] sm:$0x1] %v330
      %v332 = vld [vmem:[#allocation2 + $0x30] sm:$0x1]
      %v333 = vsel %vm319, 0, %v332
      %334 = vst [vmem:[#allocation2 + $0x30] sm:$0x1] %v333
      %v335 = vld [vmem:[#allocation2 + $0x3c] sm:$0x1]
      %v336 = vsel %vm319, 0, %v335
      %337 = vst [vmem:[#allocation2 + $0x3c] sm:$0x1] %v336
      %v338 = vld [vmem:[#allocation2 + $0x48] sm:$0x1]
      %v339 = vsel %vm319, 0, %v338
      %340 = vst [vmem:[#allocation2 + $0x48] sm:$0x1] %v339
      %v341 = vld [vmem:[#allocation2 + $0x54] sm:$0x1]
      %v342 = vsel %vm319, 0, %v341
      %343 = vst [vmem:[#allocation2 + $0x54] sm:$0x1] %v342
      %v344 = vld [vmem:[#allocation2 + $0x60] sm:$0x1]
      %v345 = vsel %vm319, 0, %v344
      %346 = vst [vmem:[#allocation2 + $0x60] sm:$0x1] %v345
      %v347 = vld [vmem:[#allocation2 + $0x6c] sm:$0x1]
      %v348 = vsel %vm319, 0, %v347
      %349 = vst [vmem:[#allocation2 + $0x6c] sm:$0x1] %v348
      %vm350 = vsmask.f32 7938
      %vm351 = vmand %vm317, %vm350
      %v352 = vld [vmem:[#allocation2 + $0x8] sm:$0x1]
      %v353 = vsel %vm351, 0, %v352
      %354 = vst [vmem:[#allocation2 + $0x8] sm:$0x1] %v353
      %v355 = vld [vmem:[#allocation2 + $0x14] sm:$0x1]
      %v356 = vsel %vm351, 0, %v355
      %357 = vst [vmem:[#allocation2 + $0x14] sm:$0x1] %v356
      %v358 = vld [vmem:[#allocation2 + $0x20] sm:$0x1]
      %v359 = vsel %vm351, 0, %v358
      %360 = vst [vmem:[#allocation2 + $0x20] sm:$0x1] %v359
      %v361 = vld [vmem:[#allocation2 + $0x2c] sm:$0x1]
      %v362 = vsel %vm351, 0, %v361
      %363 = vst [vmem:[#allocation2 + $0x2c] sm:$0x1] %v362
      %v364 = vld [vmem:[#allocation2 + $0x38] sm:$0x1]
      %v365 = vsel %vm351, 0, %v364
      %366 = vst [vmem:[#allocation2 + $0x38] sm:$0x1] %v365
      %v367 = vld [vmem:[#allocation2 + $0x44] sm:$0x1]
      %v368 = vsel %vm351, 0, %v367
      %369 = vst [vmem:[#allocation2 + $0x44] sm:$0x1] %v368
      %v370 = vld [vmem:[#allocation2 + $0x50] sm:$0x1]
      %v371 = vsel %vm351, 0, %v370
      %372 = vst [vmem:[#allocation2 + $0x50] sm:$0x1] %v371
      %v373 = vld [vmem:[#allocation2 + $0x5c] sm:$0x1]
      %v374 = vsel %vm351, 0, %v373
      %375 = vst [vmem:[#allocation2 + $0x5c] sm:$0x1] %v374
      %v376 = vld [vmem:[#allocation2 + $0x68] sm:$0x1]
      %v377 = vsel %vm351, 0, %v376
      %378 = vst [vmem:[#allocation2 + $0x68] sm:$0x1] %v377
      %v379 = vld [vmem:[#allocation2 + $0x74] sm:$0x1]
      %v380 = vsel %vm351, 0, %v379
      %381 = vst [vmem:[#allocation2 + $0x74] sm:$0x1] %v380
      %s382 = smul.u32 %s23, 8
      %s383 = ssub.s32 %s382, 1
      %s384 = smul.u32 %s382, 2
      %s385 = smul.addr %s384, 4
      %s386 = scalar_lea.vmem %s288, %s385
      %v387 = vld [vmem:[%s386] sm:$0xf]
      %v388 = vld [vmem:[%s386 + $0x4] sm:$0xf]
      %v389 = vld [vmem:[%s386 + $0x8] sm:$0xf]
      %v390 = vld [vmem:[%s386 + $0xc] sm:$0xf]
      %v391 = vld [vmem:[%s386 + $0x10] sm:$0xf]
      %v392 = vld [vmem:[%s386 + $0x14] sm:$0xf]
      %v393 = vld [vmem:[%s386 + $0x18] sm:$0xf]
      %v394 = vld [vmem:[%s386 + $0x1c] sm:$0xf]
      %v395 = vld [vmem:[%s386 + $0x20] sm:$0xf]
      %v396 = vld [vmem:[%s386 + $0x24] sm:$0xf]
      %v397 = vld [vmem:[%s386 + $0x28] sm:$0xf]
      %v398 = vld [vmem:[%s386 + $0x2c] sm:$0xf]
      %v399 = vld [vmem:[%s386 + $0x30] sm:$0xf]
      %v400 = vld [vmem:[%s386 + $0x34] sm:$0xf]
      %v401 = vld [vmem:[%s386 + $0x38] sm:$0xf]
      %v402 = vld [vmem:[%s386 + $0x3c] sm:$0xf]
      %v403 = vunpack.c.l.bf16 %v387
      %v404 = vunpack.c.l.bf16 %v388
      %v405 = vunpack.c.l.bf16 %v389
      %v406 = vunpack.c.l.bf16 %v390
      %v407 = vunpack.c.l.bf16 %v391
      %v408 = vunpack.c.l.bf16 %v392
      %v409 = vunpack.c.l.bf16 %v393
      %v410 = vunpack.c.l.bf16 %v394
      %v411 = vunpack.c.l.bf16 %v395
      %v412 = vunpack.c.l.bf16 %v396
      %v413 = vunpack.c.l.bf16 %v397
      %v414 = vunpack.c.l.bf16 %v398
      %v415 = vunpack.c.l.bf16 %v399
      %v416 = vunpack.c.l.bf16 %v400
      %v417 = vunpack.c.l.bf16 %v401
      %v418 = vunpack.c.l.bf16 %v402
      %v420 = vlaneseq
      %v421 = vshrl.u32 %v420, 7
      %v422 = vsub.s32 0, %v421
      %v423 = vrot.slane %v315, %v422
      %v425 = vmul.f32 %v403, %v423
      %v426 = vmul.f32 %v404, %v423
      %v427 = vmul.f32 %v405, %v423
      %v428 = vmul.f32 %v406, %v423
      %v429 = vmul.f32 %v407, %v423
      %v430 = vmul.f32 %v408, %v423
      %v431 = vmul.f32 %v409, %v423
      %v432 = vmul.f32 %v410, %v423
      %v433 = vmul.f32 %v411, %v423
      %v434 = vmul.f32 %v412, %v423
      %v435 = vmul.f32 %v413, %v423
      %v436 = vmul.f32 %v414, %v423
      %v437 = vmul.f32 %v415, %v423
      %v438 = vmul.f32 %v416, %v423
      %v439 = vmul.f32 %v417, %v423
      %v440 = vmul.f32 %v418, %v423
      %v442 = vlaneseq
      %v443 = vshrl.u32 %v442, 7
      %v444 = vsub.s32 0, %v443
      %v445 = vrot.slane %v316, %v444
      %v447 = vadd.f32 %v425, %v445
      %v448 = vadd.f32 %v426, %v445
      %v449 = vadd.f32 %v427, %v445
      %v450 = vadd.f32 %v428, %v445
      %v451 = vadd.f32 %v429, %v445
      %v452 = vadd.f32 %v430, %v445
      %v453 = vadd.f32 %v431, %v445
      %v454 = vadd.f32 %v432, %v445
      %v455 = vadd.f32 %v433, %v445
      %v456 = vadd.f32 %v434, %v445
      %v457 = vadd.f32 %v435, %v445
      %v458 = vadd.f32 %v436, %v445
      %v459 = vadd.f32 %v437, %v445
      %v460 = vadd.f32 %v438, %v445
      %v461 = vadd.f32 %v439, %v445
      %v462 = vadd.f32 %v440, %v445
      %v463 = vmax.f32 %v447, 0.0
      %v464 = vmax.f32 %v448, 0.0
      %v465 = vmax.f32 %v449, 0.0
      %v466 = vmax.f32 %v450, 0.0
      %v467 = vmax.f32 %v451, 0.0
      %v468 = vmax.f32 %v452, 0.0
      %v469 = vmax.f32 %v453, 0.0
      %v470 = vmax.f32 %v454, 0.0
      %v471 = vmax.f32 %v455, 0.0
      %v472 = vmax.f32 %v456, 0.0
      %v473 = vmax.f32 %v457, 0.0
      %v474 = vmax.f32 %v458, 0.0
      %v475 = vmax.f32 %v459, 0.0
      %v476 = vmax.f32 %v460, 0.0
      %v477 = vmax.f32 %v461, 0.0
      %v478 = vmax.f32 %v462, 0.0
      %v479 = vpack.c.bf16 %v464, %v463
      %v480 = vpack.c.bf16 %v466, %v465
      %v481 = vpack.c.bf16 %v468, %v467
      %v482 = vpack.c.bf16 %v470, %v469
      %v483 = vpack.c.bf16 %v472, %v471
      %v484 = vpack.c.bf16 %v474, %v473
      %v485 = vpack.c.bf16 %v476, %v475
      %v486 = vpack.c.bf16 %v478, %v477
      %v495 = vunpack.c.l.b16 %v479
      %v496 = vunpack.c.h.b16 %v479
      %v497 = vunpack.c.l.b16 %v480
      %v498 = vunpack.c.h.b16 %v480
      %v499 = vunpack.c.l.b16 %v481
      %v500 = vunpack.c.h.b16 %v481
      %v501 = vunpack.c.l.b16 %v482
      %v502 = vunpack.c.h.b16 %v482
      %v503 = vunpack.c.l.b16 %v483
      %v504 = vunpack.c.h.b16 %v483
      %v505 = vunpack.c.l.b16 %v484
      %v506 = vunpack.c.h.b16 %v484
      %v507 = vunpack.c.l.b16 %v485
      %v508 = vunpack.c.h.b16 %v485
      %v509 = vunpack.c.l.b16 %v486
      %v510 = vunpack.c.h.b16 %v486
      %v511 = vpack.c.b16 %v495, %v495
      %v512 = vpack.c.b16 %v496, %v496
      %v513 = vpack.c.b16 %v497, %v497
      %v514 = vpack.c.b16 %v498, %v498
      %v515 = vpack.c.b16 %v499, %v499
      %v516 = vpack.c.b16 %v500, %v500
      %v517 = vpack.c.b16 %v501, %v501
      %v518 = vpack.c.b16 %v502, %v502
      %v519 = vpack.c.b16 %v503, %v503
      %v520 = vpack.c.b16 %v504, %v504
      %v521 = vpack.c.b16 %v505, %v505
      %v522 = vpack.c.b16 %v506, %v506
      %v523 = vpack.c.b16 %v507, %v507
      %v524 = vpack.c.b16 %v508, %v508
      %v525 = vpack.c.b16 %v509, %v509
      %v526 = vpack.c.b16 %v510, %v510
      %vm527 = vsmask.f32 4368
      %vm528 = vmor %vm318, %vm527
      %v530 = vshrl.u32 %v511, 16
      %v532 = vrot.slane %v530, 7
      %v533 = vshll.u32 %v511, 16
      %v535 = vor.u32 %v532, %v533
      %v536 = vrot.slane %v532, 4
      %v538 = vshrl.u32 %v512, 16
      %v540 = vrot.slane %v538, 7
      %v541 = vshll.u32 %v512, 16
      %v543 = vor.u32 %v540, %v541
      %v544 = vsel %vm528, %v536, %v543
      %v545 = vrot.slane %v540, 4
      %v547 = vshrl.u32 %v513, 16
      %v549 = vrot.slane %v547, 7
      %v550 = vshll.u32 %v513, 16
      %v552 = vor.u32 %v549, %v550
      %v553 = vrot.slane %v549, 4
      %v555 = vshrl.u32 %v514, 16
      %v557 = vrot.slane %v555, 7
      %v558 = vshll.u32 %v514, 16
      %v560 = vor.u32 %v557, %v558
      %v561 = vsel %vm528, %v553, %v560
      %v562 = vrot.slane %v557, 4
      %v564 = vshrl.u32 %v515, 16
      %v566 = vrot.slane %v564, 7
      %v567 = vshll.u32 %v515, 16
      %v569 = vor.u32 %v566, %v567
      %v570 = vrot.slane %v566, 4
      %v572 = vshrl.u32 %v516, 16
      %v574 = vrot.slane %v572, 7
      %v575 = vshll.u32 %v516, 16
      %v577 = vor.u32 %v574, %v575
      %v578 = vsel %vm528, %v570, %v577
      %v579 = vrot.slane %v574, 4
      %v581 = vshrl.u32 %v517, 16
      %v583 = vrot.slane %v581, 7
      %v584 = vshll.u32 %v517, 16
      %v586 = vor.u32 %v583, %v584
      %v587 = vrot.slane %v583, 4
      %v589 = vshrl.u32 %v518, 16
      %v591 = vrot.slane %v589, 7
      %v592 = vshll.u32 %v518, 16
      %v594 = vor.u32 %v591, %v592
      %v595 = vsel %vm528, %v587, %v594
      %v596 = vrot.slane %v591, 4
      %v598 = vshrl.u32 %v519, 16
      %v600 = vrot.slane %v598, 7
      %v601 = vshll.u32 %v519, 16
      %v603 = vor.u32 %v600, %v601
      %v604 = vrot.slane %v600, 4
      %v606 = vshrl.u32 %v520, 16
      %v608 = vrot.slane %v606, 7
      %v609 = vshll.u32 %v520, 16
      %v611 = vor.u32 %v608, %v609
      %v612 = vsel %vm528, %v604, %v611
      %v613 = vrot.slane %v608, 4
      %v615 = vshrl.u32 %v521, 16
      %v617 = vrot.slane %v615, 7
      %v618 = vshll.u32 %v521, 16
      %v620 = vor.u32 %v617, %v618
      %v621 = vrot.slane %v617, 4
      %v623 = vshrl.u32 %v522, 16
      %v625 = vrot.slane %v623, 7
      %v626 = vshll.u32 %v522, 16
      %v628 = vor.u32 %v625, %v626
      %v629 = vsel %vm528, %v621, %v628
      %v630 = vrot.slane %v625, 4
      %v632 = vshrl.u32 %v523, 16
      %v634 = vrot.slane %v632, 7
      %v635 = vshll.u32 %v523, 16
      %v637 = vor.u32 %v634, %v635
      %v638 = vrot.slane %v634, 4
      %v640 = vshrl.u32 %v524, 16
      %v642 = vrot.slane %v640, 7
      %v643 = vshll.u32 %v524, 16
      %v645 = vor.u32 %v642, %v643
      %v646 = vsel %vm528, %v638, %v645
      %v647 = vrot.slane %v642, 4
      %v649 = vshrl.u32 %v525, 16
      %v651 = vrot.slane %v649, 7
      %v652 = vshll.u32 %v525, 16
      %v654 = vor.u32 %v651, %v652
      %v655 = vrot.slane %v651, 4
      %v657 = vshrl.u32 %v526, 16
      %v659 = vrot.slane %v657, 7
      %v660 = vshll.u32 %v526, 16
      %v662 = vor.u32 %v659, %v660
      %v663 = vsel %vm528, %v655, %v662
      %v664 = vrot.slane %v659, 4
      %s689 = scalar_lea.vmem [#allocation2], 12
      %vm690 = vcmask 27648
      %vm691 = vmand %vm690, %vm350
      %v692 = vld [vmem:[%s689] sm:$0xf]
      %v693 = vsel %vm691, %v535, %v692
      %694 = vst [vmem:[%s689] sm:$0xf] %v693
      %vm695 = vcmask 27648
      %696 = vst.msk [vmem:[%s689 + $0x4] sm:$0xf] %vm695, %v544
      %v697 = vld [vmem:[%s689 + $0x8] sm:$0x1]
      %v698 = vsel %vm319, %v545, %v697
      %699 = vst [vmem:[%s689 + $0x8] sm:$0x1] %v698
      %v700 = vld [vmem:[%s689 + $0xc] sm:$0xf]
      %v701 = vsel %vm691, %v552, %v700
      %702 = vst [vmem:[%s689 + $0xc] sm:$0xf] %v701
      %703 = vst.msk [vmem:[%s689 + $0x10] sm:$0xf] %vm695, %v561
      %v704 = vld [vmem:[%s689 + $0x14] sm:$0x1]
      %v705 = vsel %vm319, %v562, %v704
      %706 = vst [vmem:[%s689 + $0x14] sm:$0x1] %v705
      %v707 = vld [vmem:[%s689 + $0x18] sm:$0xf]
      %v708 = vsel %vm691, %v569, %v707
      %709 = vst [vmem:[%s689 + $0x18] sm:$0xf] %v708
      %710 = vst.msk [vmem:[%s689 + $0x1c] sm:$0xf] %vm695, %v578
      %v711 = vld [vmem:[%s689 + $0x20] sm:$0x1]
      %v712 = vsel %vm319, %v579, %v711
      %713 = vst [vmem:[%s689 + $0x20] sm:$0x1] %v712
      %v714 = vld [vmem:[%s689 + $0x24] sm:$0xf]
      %v715 = vsel %vm691, %v586, %v714
      %716 = vst [vmem:[%s689 + $0x24] sm:$0xf] %v715
      %717 = vst.msk [vmem:[%s689 + $0x28] sm:$0xf] %vm695, %v595
      %v718 = vld [vmem:[%s689 + $0x2c] sm:$0x1]
      %v719 = vsel %vm319, %v596, %v718
      %720 = vst [vmem:[%s689 + $0x2c] sm:$0x1] %v719
      %v721 = vld [vmem:[%s689 + $0x30] sm:$0xf]
      %v722 = vsel %vm691, %v603, %v721
      %723 = vst [vmem:[%s689 + $0x30] sm:$0xf] %v722
      %724 = vst.msk [vmem:[%s689 + $0x34] sm:$0xf] %vm695, %v612
      %v725 = vld [vmem:[%s689 + $0x38] sm:$0x1]
      %v726 = vsel %vm319, %v613, %v725
      %727 = vst [vmem:[%s689 + $0x38] sm:$0x1] %v726
      %v728 = vld [vmem:[%s689 + $0x3c] sm:$0xf]
      %v729 = vsel %vm691, %v620, %v728
      %730 = vst [vmem:[%s689 + $0x3c] sm:$0xf] %v729
      %731 = vst.msk [vmem:[%s689 + $0x40] sm:$0xf] %vm695, %v629
      %v732 = vld [vmem:[%s689 + $0x44] sm:$0x1]
      %v733 = vsel %vm319, %v630, %v732
      %734 = vst [vmem:[%s689 + $0x44] sm:$0x1] %v733
      %v735 = vld [vmem:[%s689 + $0x48] sm:$0xf]
      %v736 = vsel %vm691, %v637, %v735
      %737 = vst [vmem:[%s689 + $0x48] sm:$0xf] %v736
      %738 = vst.msk [vmem:[%s689 + $0x4c] sm:$0xf] %vm695, %v646
      %v739 = vld [vmem:[%s689 + $0x50] sm:$0x1]
      %v740 = vsel %vm319, %v647, %v739
      %741 = vst [vmem:[%s689 + $0x50] sm:$0x1] %v740
      %v742 = vld [vmem:[%s689 + $0x54] sm:$0xf]
      %v743 = vsel %vm691, %v654, %v742
      %744 = vst [vmem:[%s689 + $0x54] sm:$0xf] %v743
      %745 = vst.msk [vmem:[%s689 + $0x58] sm:$0xf] %vm695, %v663
      %v746 = vld [vmem:[%s689 + $0x5c] sm:$0x1]
      %v747 = vsel %vm319, %v664, %v746
      %748 = vst [vmem:[%s689 + $0x5c] sm:$0x1] %v747
      %p749 = scmp.eq.s32.totalorder %s23, 0
      // Predicated region
      $region37: #{bottleneck_forward.5} parent=35 // pred_check
        %p750 = pneg %p749
      $region38: #{bottleneck_forward.5} parent=35 // pred_check_branch
        %752 = sbr.rel (%p750) target = $region40
      $region39: #{bottleneck_forward.5} parent=35 // pred_region
        %753 = vst.msk [vmem:[#allocation2] sm:$0xf] %vm695, 0
        %754 = vst.msk [vmem:[#allocation2 + $0x4] sm:$0xf] %vm695, 0
        %vm755 = vcmask 24576
        %756 = vst.msk [vmem:[#allocation2 + $0x8] sm:$0x1] %vm755, 0
      $region40: #{bottleneck_forward.5} parent=35 // pred_fallthru
        _
      %p757 = scmp.gt.s32.totalorder %s23, 0
      // Predicated region
      $region41: #{bottleneck_forward.5} parent=35 // pred_check
        %p758 = pneg %p757
      $region42: #{bottleneck_forward.5} parent=35 // pred_check_branch
        %760 = sbr.rel (%p758) target = $region44
      $region43: #{bottleneck_forward.5} parent=35 // pred_region
        %s761 = smul.u32 %s383, 2
        %s762 = smul.addr %s761, 4
        %s763 = scalar_lea.vmem %s288, %s762
        %v764 = vld [vmem:[%s763] sm:$0xf]
        %v765 = vld [vmem:[%s763 + $0x4] sm:$0xf]
        %v766 = vunpack.c.l.bf16 %v764
        %v767 = vunpack.c.l.bf16 %v765
        %v768 = vmul.f32 %v766, %v423
        %v769 = vmul.f32 %v767, %v423
        %v770 = vadd.f32 %v768, %v445
        %v771 = vadd.f32 %v769, %v445
        %v772 = vmax.f32 %v770, 0.0
        %v773 = vmax.f32 %v771, 0.0
        %v774 = vpack.c.bf16 %v773, %v772
        %v776 = vunpack.c.l.b16 %v774
        %v777 = vunpack.c.h.b16 %v774
        %v778 = vpack.c.b16 %v776, %v776
        %v779 = vpack.c.b16 %v777, %v777
        %v781 = vshrl.u32 %v778, 16
        %v783 = vrot.slane %v781, 7
        %v784 = vshll.u32 %v778, 16
        %v786 = vor.u32 %v783, %v784
        %v787 = vrot.slane %v783, 4
        %v789 = vshrl.u32 %v779, 16
        %v791 = vrot.slane %v789, 7
        %v792 = vshll.u32 %v779, 16
        %v794 = vor.u32 %v791, %v792
        %v795 = vsel %vm528, %v787, %v794
        %v796 = vrot.slane %v791, 4
        %v800 = vld [vmem:[#allocation2] sm:$0xf]
        %v801 = vsel %vm691, %v786, %v800
        %802 = vst [vmem:[#allocation2] sm:$0xf] %v801
        %803 = vst.msk [vmem:[#allocation2 + $0x4] sm:$0xf] %vm695, %v795
        %v804 = vld [vmem:[#allocation2 + $0x8] sm:$0x1]
        %v805 = vsel %vm319, %v796, %v804
        %806 = vst [vmem:[#allocation2 + $0x8] sm:$0x1] %v805
      $region44: #{bottleneck_forward.5} parent=35 // pred_fallthru
        _
      %s807 = sadd.s32 %s382, 8
      %p808 = scmp.lt.s32.totalorder %s807, 16
      // Predicated region
      $region45: #{bottleneck_forward.5} parent=35 // pred_check
        %p809 = pneg %p808
      $region46: #{bottleneck_forward.5} parent=35 // pred_check_branch
        %811 = sbr.rel (%p809) target = $region48
      $region47: #{bottleneck_forward.5} parent=35 // pred_region
        %s812 = smul.u32 %s807, 2
        %s813 = smul.addr %s812, 4
        %s814 = scalar_lea.vmem %s288, %s813
        %v815 = vld [vmem:[%s814] sm:$0xf]
        %v816 = vld [vmem:[%s814 + $0x4] sm:$0xf]
        %v817 = vunpack.c.l.bf16 %v815
        %v818 = vunpack.c.l.bf16 %v816
        %v819 = vmul.f32 %v817, %v423
        %v820 = vmul.f32 %v818, %v423
        %v821 = vadd.f32 %v819, %v445
        %v822 = vadd.f32 %v820, %v445
        %v823 = vmax.f32 %v821, 0.0
        %v824 = vmax.f32 %v822, 0.0
        %v825 = vpack.c.bf16 %v824, %v823
        %v827 = vunpack.c.l.b16 %v825
        %v828 = vunpack.c.h.b16 %v825
        %v829 = vpack.c.b16 %v827, %v827
        %v830 = vpack.c.b16 %v828, %v828
        %v832 = vshrl.u32 %v829, 16
        %v834 = vrot.slane %v832, 7
        %v835 = vshll.u32 %v829, 16
        %v837 = vor.u32 %v834, %v835
        %v838 = vrot.slane %v834, 4
        %v840 = vshrl.u32 %v830, 16
        %v842 = vrot.slane %v840, 7
        %v843 = vshll.u32 %v830, 16
        %v845 = vor.u32 %v842, %v843
        %v846 = vsel %vm528, %v838, %v845
        %v847 = vrot.slane %v842, 4
        %s851 = scalar_lea.vmem [#allocation2], 108
        %v852 = vld [vmem:[%s851] sm:$0xf]
        %v853 = vsel %vm691, %v837, %v852
        %854 = vst [vmem:[%s851] sm:$0xf] %v853
        %855 = vst.msk [vmem:[%s851 + $0x4] sm:$0xf] %vm695, %v846
        %v856 = vld [vmem:[%s851 + $0x8] sm:$0x1]
        %v857 = vsel %vm319, %v847, %v856
        %858 = vst [vmem:[%s851 + $0x8] sm:$0x1] %v857
      $region48: #{bottleneck_forward.5} parent=35 // pred_fallthru
        _
      %p859 = scmp.ge.s32.totalorder %s807, 16
      // Predicated region
      $region49: #{bottleneck_forward.5} parent=35 // pred_check
        %p860 = pneg %p859
      $region50: #{bottleneck_forward.5} parent=35 // pred_check_branch
        %862 = sbr.rel (%p860) target = $region52
      $region51: #{bottleneck_forward.5} parent=35 // pred_region
        %s863 = scalar_lea.vmem [#allocation2], 108
        %864 = vst.msk [vmem:[%s863] sm:$0xf] %vm695, 0
        %865 = vst.msk [vmem:[%s863 + $0x4] sm:$0xf] %vm695, 0
        %vm866 = vcmask 24576
        %867 = vst.msk [vmem:[%s863 + $0x8] sm:$0x1] %vm866, 0
      $region52: #{bottleneck_forward.5} parent=35 // pred_fallthru
        _
      %v868 = vld [vmem:[#allocation2] sm:$0xf]
      %v869 = vld [vmem:[#allocation2 + $0x4] sm:$0xf]
      %v870 = vld [vmem:[#allocation2 + $0xc] sm:$0xf]
      %v871 = vld [vmem:[#allocation2 + $0x10] sm:$0xf]
      %v872 = vld [vmem:[#allocation2 + $0x18] sm:$0xf]
      %v873 = vld [vmem:[#allocation2 + $0x1c] sm:$0xf]
      %v874 = vld [vmem:[#allocation2 + $0x24] sm:$0xf]
      %v875 = vld [vmem:[#allocation2 + $0x28] sm:$0xf]
      %v876 = vld [vmem:[#allocation2 + $0x30] sm:$0xf]
      %v877 = vld [vmem:[#allocation2 + $0x34] sm:$0xf]
      %v878 = vld [vmem:[#allocation2 + $0x3c] sm:$0xf]
      %v879 = vld [vmem:[#allocation2 + $0x40] sm:$0xf]
      %v880 = vld [vmem:[#allocation2 + $0x48] sm:$0xf]
      %v881 = vld [vmem:[#allocation2 + $0x4c] sm:$0xf]
      %v882 = vld [vmem:[#allocation2 + $0x54] sm:$0xf]
      %v883 = vld [vmem:[#allocation2 + $0x58] sm:$0xf]
      %v884 = vld [vmem:[#allocation2 + $0x8] sm:$0x1]
      %v885 = vld [vmem:[#allocation2 + $0x14] sm:$0x1]
      %v886 = vld [vmem:[#allocation2 + $0x20] sm:$0x1]
      %v887 = vld [vmem:[#allocation2 + $0x2c] sm:$0x1]
      %v888 = vld [vmem:[#allocation2 + $0x38] sm:$0x1]
      %v889 = vld [vmem:[#allocation2 + $0x44] sm:$0x1]
      %v890 = vld [vmem:[#allocation2 + $0x50] sm:$0x1]
      %v891 = vld [vmem:[#allocation2 + $0x5c] sm:$0x1]
      %v892 = vld [vmem:[#allocation2] sm:$0xe]
      %v893 = vld [vmem:[#allocation2 + $0xc] sm:$0xe]
      %v894 = vld [vmem:[#allocation2 + $0x18] sm:$0xe]
      %v895 = vld [vmem:[#allocation2 + $0x24] sm:$0xe]
      %v896 = vld [vmem:[#allocation2 + $0x30] sm:$0xe]
      %v897 = vld [vmem:[#allocation2 + $0x3c] sm:$0xe]
      %v898 = vld [vmem:[#allocation2 + $0x48] sm:$0xe]
      %v899 = vld [vmem:[#allocation2 + $0x54] sm:$0xe]
      %v900 = vld [vmem:[%s689] sm:$0xf]
      %v901 = vld [vmem:[%s689 + $0x4] sm:$0xf]
      %v902 = vld [vmem:[%s689 + $0xc] sm:$0xf]
      %v903 = vld [vmem:[%s689 + $0x10] sm:$0xf]
      %v904 = vld [vmem:[%s689 + $0x18] sm:$0xf]
      %v905 = vld [vmem:[%s689 + $0x1c] sm:$0xf]
      %v906 = vld [vmem:[%s689 + $0x24] sm:$0xf]
      %v907 = vld [vmem:[%s689 + $0x28] sm:$0xf]
      %v908 = vld [vmem:[%s689 + $0x30] sm:$0xf]
      %v909 = vld [vmem:[%s689 + $0x34] sm:$0xf]
      %v910 = vld [vmem:[%s689 + $0x3c] sm:$0xf]
      %v911 = vld [vmem:[%s689 + $0x40] sm:$0xf]
      %v912 = vld [vmem:[%s689 + $0x48] sm:$0xf]
      %v913 = vld [vmem:[%s689 + $0x4c] sm:$0xf]
      %v914 = vld [vmem:[%s689 + $0x54] sm:$0xf]
      %v915 = vld [vmem:[%s689 + $0x58] sm:$0xf]
      %v916 = vld [vmem:[%s689 + $0x8] sm:$0x1]
      %v917 = vld [vmem:[%s689 + $0x14] sm:$0x1]
      %v918 = vld [vmem:[%s689 + $0x20] sm:$0x1]
      %v919 = vld [vmem:[%s689 + $0x2c] sm:$0x1]
      %v920 = vld [vmem:[%s689 + $0x38] sm:$0x1]
      %v921 = vld [vmem:[%s689 + $0x44] sm:$0x1]
      %v922 = vld [vmem:[%s689 + $0x50] sm:$0x1]
      %v923 = vld [vmem:[%s689 + $0x5c] sm:$0x1]
      %v924 = vld [vmem:[%s689] sm:$0xe]
      %v925 = vld [vmem:[%s689 + $0xc] sm:$0xe]
      %v926 = vld [vmem:[%s689 + $0x18] sm:$0xe]
      %v927 = vld [vmem:[%s689 + $0x24] sm:$0xe]
      %v928 = vld [vmem:[%s689 + $0x30] sm:$0xe]
      %v929 = vld [vmem:[%s689 + $0x3c] sm:$0xe]
      %v930 = vld [vmem:[%s689 + $0x48] sm:$0xe]
      %v931 = vld [vmem:[%s689 + $0x54] sm:$0xe]
      %s932 = scalar_lea.vmem [#allocation2], 24
      %v933 = vld [vmem:[%s932] sm:$0xf]
      %v934 = vld [vmem:[%s932 + $0x4] sm:$0xf]
      %v935 = vld [vmem:[%s932 + $0xc] sm:$0xf]
      %v936 = vld [vmem:[%s932 + $0x10] sm:$0xf]
      %v937 = vld [vmem:[%s932 + $0x18] sm:$0xf]
      %v938 = vld [vmem:[%s932 + $0x1c] sm:$0xf]
      %v939 = vld [vmem:[%s932 + $0x24] sm:$0xf]
      %v940 = vld [vmem:[%s932 + $0x28] sm:$0xf]
      %v941 = vld [vmem:[%s932 + $0x30] sm:$0xf]
      %v942 = vld [vmem:[%s932 + $0x34] sm:$0xf]
      %v943 = vld [vmem:[%s932 + $0x3c] sm:$0xf]
      %v944 = vld [vmem:[%s932 + $0x40] sm:$0xf]
      %v945 = vld [vmem:[%s932 + $0x48] sm:$0xf]
      %v946 = vld [vmem:[%s932 + $0x4c] sm:$0xf]
      %v947 = vld [vmem:[%s932 + $0x54] sm:$0xf]
      %v948 = vld [vmem:[%s932 + $0x58] sm:$0xf]
      %v949 = vld [vmem:[%s932 + $0x8] sm:$0x1]
      %v950 = vld [vmem:[%s932 + $0x14] sm:$0x1]
      %v951 = vld [vmem:[%s932 + $0x20] sm:$0x1]
      %v952 = vld [vmem:[%s932 + $0x2c] sm:$0x1]
      %v953 = vld [vmem:[%s932 + $0x38] sm:$0x1]
      %v954 = vld [vmem:[%s932 + $0x44] sm:$0x1]
      %v955 = vld [vmem:[%s932 + $0x50] sm:$0x1]
      %v956 = vld [vmem:[%s932 + $0x5c] sm:$0x1]
      %v957 = vld [vmem:[%s932] sm:$0xe]
      %v958 = vld [vmem:[%s932 + $0xc] sm:$0xe]
      %v959 = vld [vmem:[%s932 + $0x18] sm:$0xe]
      %v960 = vld [vmem:[%s932 + $0x24] sm:$0xe]
      %v961 = vld [vmem:[%s932 + $0x30] sm:$0xe]
      %v962 = vld [vmem:[%s932 + $0x3c] sm:$0xe]
      %v963 = vld [vmem:[%s932 + $0x48] sm:$0xe]
      %v964 = vld [vmem:[%s932 + $0x54] sm:$0xe]
      %v981 = vunpack.c.l.b16 %v868
      %v982 = vunpack.c.l.b16 %v869
      %v983 = vunpack.c.l.b16 %v870
      %v984 = vunpack.c.l.b16 %v871
      %v985 = vunpack.c.l.b16 %v872
      %v986 = vunpack.c.l.b16 %v873
      %v987 = vunpack.c.l.b16 %v874
      %v988 = vunpack.c.l.b16 %v875
      %v989 = vunpack.c.l.b16 %v876
      %v990 = vunpack.c.l.b16 %v877
      %v991 = vunpack.c.l.b16 %v878
      %v992 = vunpack.c.l.b16 %v879
      %v993 = vunpack.c.l.b16 %v880
      %v994 = vunpack.c.l.b16 %v881
      %v995 = vunpack.c.l.b16 %v882
      %v996 = vunpack.c.l.b16 %v883
      %v997 = vpack.c.b16 %v982, %v981
      %v998 = vpack.c.b16 %v984, %v983
      %v999 = vpack.c.b16 %v986, %v985
      %v1000 = vpack.c.b16 %v988, %v987
      %v1001 = vpack.c.b16 %v990, %v989
      %v1002 = vpack.c.b16 %v992, %v991
      %v1003 = vpack.c.b16 %v994, %v993
      %v1004 = vpack.c.b16 %v996, %v995
      %v1013 = vunpack.c.l.b16 %v884
      %v1014 = vunpack.c.l.b16 %v885
      %v1015 = vunpack.c.l.b16 %v886
      %v1016 = vunpack.c.l.b16 %v887
      %v1017 = vunpack.c.l.b16 %v888
      %v1018 = vunpack.c.l.b16 %v889
      %v1019 = vunpack.c.l.b16 %v890
      %v1020 = vunpack.c.l.b16 %v891
      %v1021 = vpack.c.b16 %v1013, %v1013
      %v1022 = vpack.c.b16 %v1014, %v1014
      %v1023 = vpack.c.b16 %v1015, %v1015
      %v1024 = vpack.c.b16 %v1016, %v1016
      %v1025 = vpack.c.b16 %v1017, %v1017
      %v1026 = vpack.c.b16 %v1018, %v1018
      %v1027 = vpack.c.b16 %v1019, %v1019
      %v1028 = vpack.c.b16 %v1020, %v1020
      %vm1029 = vsmask.f32 7424
      %v1031 = vshrl.u32 %v997, 16
      %v1033 = vshll.u32 %v997, 16
      %v1035 = vrot.slane %v1033, 1
      %v1036 = vor.u32 %v1031, %v1035
      %v1038 = vshll.u32 %v1021, 16
      %v1040 = vrot.slane %v1038, 1
      %v1041 = vsel %vm1029, %v1036, %v1040
      %v1043 = vshrl.u32 %v998, 16
      %v1045 = vshll.u32 %v998, 16
      %v1047 = vrot.slane %v1045, 1
      %v1048 = vor.u32 %v1043, %v1047
      %v1050 = vshll.u32 %v1022, 16
      %v1052 = vrot.slane %v1050, 1
      %v1053 = vsel %vm1029, %v1048, %v1052
      %v1055 = vshrl.u32 %v999, 16
      %v1057 = vshll.u32 %v999, 16
      %v1059 = vrot.slane %v1057, 1
      %v1060 = vor.u32 %v1055, %v1059
      %v1062 = vshll.u32 %v1023, 16
      %v1064 = vrot.slane %v1062, 1
      %v1065 = vsel %vm1029, %v1060, %v1064
      %v1067 = vshrl.u32 %v1000, 16
      %v1069 = vshll.u32 %v1000, 16
      %v1071 = vrot.slane %v1069, 1
      %v1072 = vor.u32 %v1067, %v1071
      %v1074 = vshll.u32 %v1024, 16
      %v1076 = vrot.slane %v1074, 1
      %v1077 = vsel %vm1029, %v1072, %v1076
      %v1079 = vshrl.u32 %v1001, 16
      %v1081 = vshll.u32 %v1001, 16
      %v1083 = vrot.slane %v1081, 1
      %v1084 = vor.u32 %v1079, %v1083
      %v1086 = vshll.u32 %v1025, 16
      %v1088 = vrot.slane %v1086, 1
      %v1089 = vsel %vm1029, %v1084, %v1088
      %v1091 = vshrl.u32 %v1002, 16
      %v1093 = vshll.u32 %v1002, 16
      %v1095 = vrot.slane %v1093, 1
      %v1096 = vor.u32 %v1091, %v1095
      %v1098 = vshll.u32 %v1026, 16
      %v1100 = vrot.slane %v1098, 1
      %v1101 = vsel %vm1029, %v1096, %v1100
      %v1103 = vshrl.u32 %v1003, 16
      %v1105 = vshll.u32 %v1003, 16
      %v1107 = vrot.slane %v1105, 1
      %v1108 = vor.u32 %v1103, %v1107
      %v1110 = vshll.u32 %v1027, 16
      %v1112 = vrot.slane %v1110, 1
      %v1113 = vsel %vm1029, %v1108, %v1112
      %v1115 = vshrl.u32 %v1004, 16
      %v1117 = vshll.u32 %v1004, 16
      %v1119 = vrot.slane %v1117, 1
      %v1120 = vor.u32 %v1115, %v1119
      %v1122 = vshll.u32 %v1028, 16
      %v1124 = vrot.slane %v1122, 1
      %v1125 = vsel %vm1029, %v1120, %v1124
      %1126 = vrot.lane.b32.xlu0 %v1041, 4
      %v1127 = vpop.permute.xlu0 %1126
      %1128 = vrot.lane.b32.xlu0 %v1053, 4
      %v1129 = vpop.permute.xlu0 %1128
      %1130 = vrot.lane.b32.xlu0 %v1065, 4
      %v1131 = vpop.permute.xlu0 %1130
      %1132 = vrot.lane.b32.xlu0 %v1077, 4
      %v1133 = vpop.permute.xlu0 %1132
      %1134 = vrot.lane.b32.xlu0 %v1089, 4
      %v1135 = vpop.permute.xlu0 %1134
      %1136 = vrot.lane.b32.xlu0 %v1101, 4
      %v1137 = vpop.permute.xlu0 %1136
      %1138 = vrot.lane.b32.xlu0 %v1113, 4
      %v1139 = vpop.permute.xlu0 %1138
      %1140 = vrot.lane.b32.xlu0 %v1125, 4
      %v1141 = vpop.permute.xlu0 %1140
      %v1150 = vunpack.c.l.b16 %v892
      %v1151 = vunpack.c.l.b16 %v893
      %v1152 = vunpack.c.l.b16 %v894
      %v1153 = vunpack.c.l.b16 %v895
      %v1154 = vunpack.c.l.b16 %v896
      %v1155 = vunpack.c.l.b16 %v897
      %v1156 = vunpack.c.l.b16 %v898
      %v1157 = vunpack.c.l.b16 %v899
      %v1158 = vpack.c.b16 %v982, %v1150
      %v1159 = vpack.c.b16 %v984, %v1151
      %v1160 = vpack.c.b16 %v986, %v1152
      %v1161 = vpack.c.b16 %v988, %v1153
      %v1162 = vpack.c.b16 %v990, %v1154
      %v1163 = vpack.c.b16 %v992, %v1155
      %v1164 = vpack.c.b16 %v994, %v1156
      %v1165 = vpack.c.b16 %v996, %v1157
      %vm1166 = vcmask 1046528
      %v1167 = vrot.slane %v1158, 1
      %v1168 = vrot.slane %v1021, 1
      %v1169 = vsel %vm1166, %v1167, %v1168
      %v1170 = vrot.slane %v1159, 1
      %v1171 = vrot.slane %v1022, 1
      %v1172 = vsel %vm1166, %v1170, %v1171
      %v1173 = vrot.slane %v1160, 1
      %v1174 = vrot.slane %v1023, 1
      %v1175 = vsel %vm1166, %v1173, %v1174
      %v1176 = vrot.slane %v1161, 1
      %v1177 = vrot.slane %v1024, 1
      %v1178 = vsel %vm1166, %v1176, %v1177
      %v1179 = vrot.slane %v1162, 1
      %v1180 = vrot.slane %v1025, 1
      %v1181 = vsel %vm1166, %v1179, %v1180
      %v1182 = vrot.slane %v1163, 1
      %v1183 = vrot.slane %v1026, 1
      %v1184 = vsel %vm1166, %v1182, %v1183
      %v1185 = vrot.slane %v1164, 1
      %v1186 = vrot.slane %v1027, 1
      %v1187 = vsel %vm1166, %v1185, %v1186
      %v1188 = vrot.slane %v1165, 1
      %v1189 = vrot.slane %v1028, 1
      %v1190 = vsel %vm1166, %v1188, %v1189
      %1191 = vrot.lane.b32.xlu0 %v1169, 8
      %v1192 = vpop.permute.xlu0 %1191
      %1193 = vrot.lane.b32.xlu0 %v1172, 8
      %v1194 = vpop.permute.xlu0 %1193
      %1195 = vrot.lane.b32.xlu0 %v1175, 8
      %v1196 = vpop.permute.xlu0 %1195
      %1197 = vrot.lane.b32.xlu0 %v1178, 8
      %v1198 = vpop.permute.xlu0 %1197
      %1199 = vrot.lane.b32.xlu0 %v1181, 8
      %v1200 = vpop.permute.xlu0 %1199
      %1201 = vrot.lane.b32.xlu0 %v1184, 8
      %v1202 = vpop.permute.xlu0 %1201
      %1203 = vrot.lane.b32.xlu0 %v1187, 8
      %v1204 = vpop.permute.xlu0 %1203
      %1205 = vrot.lane.b32.xlu0 %v1190, 8
      %v1206 = vpop.permute.xlu0 %1205
      %v1223 = vunpack.c.l.b16 %v900
      %v1224 = vunpack.c.l.b16 %v901
      %v1225 = vunpack.c.l.b16 %v902
      %v1226 = vunpack.c.l.b16 %v903
      %v1227 = vunpack.c.l.b16 %v904
      %v1228 = vunpack.c.l.b16 %v905
      %v1229 = vunpack.c.l.b16 %v906
      %v1230 = vunpack.c.l.b16 %v907
      %v1231 = vunpack.c.l.b16 %v908
      %v1232 = vunpack.c.l.b16 %v909
      %v1233 = vunpack.c.l.b16 %v910
      %v1234 = vunpack.c.l.b16 %v911
      %v1235 = vunpack.c.l.b16 %v912
      %v1236 = vunpack.c.l.b16 %v913
      %v1237 = vunpack.c.l.b16 %v914
      %v1238 = vunpack.c.l.b16 %v915
      %v1239 = vpack.c.b16 %v1224, %v1223
      %v1240 = vpack.c.b16 %v1226, %v1225
      %v1241 = vpack.c.b16 %v1228, %v1227
      %v1242 = vpack.c.b16 %v1230, %v1229
      %v1243 = vpack.c.b16 %v1232, %v1231
      %v1244 = vpack.c.b16 %v1234, %v1233
      %v1245 = vpack.c.b16 %v1236, %v1235
      %v1246 = vpack.c.b16 %v1238, %v1237
      %1247 = vrot.lane.b32.xlu0 %v1239, 12
      %v1248 = vpop.permute.xlu0 %1247
      %1249 = vrot.lane.b32.xlu0 %v1240, 12
      %v1250 = vpop.permute.xlu0 %1249
      %1251 = vrot.lane.b32.xlu0 %v1241, 12
      %v1252 = vpop.permute.xlu0 %1251
      %1253 = vrot.lane.b32.xlu0 %v1242, 12
      %v1254 = vpop.permute.xlu0 %1253
      %1255 = vrot.lane.b32.xlu0 %v1243, 12
      %v1256 = vpop.permute.xlu0 %1255
      %1257 = vrot.lane.b32.xlu0 %v1244, 12
      %v1258 = vpop.permute.xlu0 %1257
      %1259 = vrot.lane.b32.xlu0 %v1245, 12
      %v1260 = vpop.permute.xlu0 %1259
      %1261 = vrot.lane.b32.xlu0 %v1246, 12
      %v1262 = vpop.permute.xlu0 %1261
      %v1271 = vunpack.c.l.b16 %v916
      %v1272 = vunpack.c.l.b16 %v917
      %v1273 = vunpack.c.l.b16 %v918
      %v1274 = vunpack.c.l.b16 %v919
      %v1275 = vunpack.c.l.b16 %v920
      %v1276 = vunpack.c.l.b16 %v921
      %v1277 = vunpack.c.l.b16 %v922
      %v1278 = vunpack.c.l.b16 %v923
      %v1279 = vpack.c.b16 %v1271, %v1271
      %v1280 = vpack.c.b16 %v1272, %v1272
      %v1281 = vpack.c.b16 %v1273, %v1273
      %v1282 = vpack.c.b16 %v1274, %v1274
      %v1283 = vpack.c.b16 %v1275, %v1275
      %v1284 = vpack.c.b16 %v1276, %v1276
      %v1285 = vpack.c.b16 %v1277, %v1277
      %v1286 = vpack.c.b16 %v1278, %v1278
      %v1288 = vshrl.u32 %v1239, 16
      %v1290 = vshll.u32 %v1239, 16
      %v1292 = vrot.slane %v1290, 1
      %v1293 = vor.u32 %v1288, %v1292
      %v1295 = vshll.u32 %v1279, 16
      %v1297 = vrot.slane %v1295, 1
      %v1298 = vsel %vm1029, %v1293, %v1297
      %v1300 = vshrl.u32 %v1240, 16
      %v1302 = vshll.u32 %v1240, 16
      %v1304 = vrot.slane %v1302, 1
      %v1305 = vor.u32 %v1300, %v1304
      %v1307 = vshll.u32 %v1280, 16
      %v1309 = vrot.slane %v1307, 1
      %v1310 = vsel %vm1029, %v1305, %v1309
      %v1312 = vshrl.u32 %v1241, 16
      %v1314 = vshll.u32 %v1241, 16
      %v1316 = vrot.slane %v1314, 1
      %v1317 = vor.u32 %v1312, %v1316
      %v1319 = vshll.u32 %v1281, 16
      %v1321 = vrot.slane %v1319, 1
      %v1322 = vsel %vm1029, %v1317, %v1321
      %v1324 = vshrl.u32 %v1242, 16
      %v1326 = vshll.u32 %v1242, 16
      %v1328 = vrot.slane %v1326, 1
      %v1329 = vor.u32 %v1324, %v1328
      %v1331 = vshll.u32 %v1282, 16
      %v1333 = vrot.slane %v1331, 1
      %v1334 = vsel %vm1029, %v1329, %v1333
      %v1336 = vshrl.u32 %v1243, 16
      %v1338 = vshll.u32 %v1243, 16
      %v1340 = vrot.slane %v1338, 1
      %v1341 = vor.u32 %v1336, %v1340
      %v1343 = vshll.u32 %v1283, 16
      %v1345 = vrot.slane %v1343, 1
      %v1346 = vsel %vm1029, %v1341, %v1345
      %v1348 = vshrl.u32 %v1244, 16
      %v1350 = vshll.u32 %v1244, 16
      %v1352 = vrot.slane %v1350, 1
      %v1353 = vor.u32 %v1348, %v1352
      %v1355 = vshll.u32 %v1284, 16
      %v1357 = vrot.slane %v1355, 1
      %v1358 = vsel %vm1029, %v1353, %v1357
      %v1360 = vshrl.u32 %v1245, 16
      %v1362 = vshll.u32 %v1245, 16
      %v1364 = vrot.slane %v1362, 1
      %v1365 = vor.u32 %v1360, %v1364
      %v1367 = vshll.u32 %v1285, 16
      %v1369 = vrot.slane %v1367, 1
      %v1370 = vsel %vm1029, %v1365, %v1369
      %v1372 = vshrl.u32 %v1246, 16
      %v1374 = vshll.u32 %v1246, 16
      %v1376 = vrot.slane %v1374, 1
      %v1377 = vor.u32 %v1372, %v1376
      %v1379 = vshll.u32 %v1286, 16
      %v1381 = vrot.slane %v1379, 1
      %v1382 = vsel %vm1029, %v1377, %v1381
      %1383 = vrot.lane.b32.xlu0 %v1298, 16
      %v1384 = vpop.permute.xlu0 %1383
      %1385 = vrot.lane.b32.xlu0 %v1310, 16
      %v1386 = vpop.permute.xlu0 %1385
      %1387 = vrot.lane.b32.xlu0 %v1322, 16
      %v1388 = vpop.permute.xlu0 %1387
      %1389 = vrot.lane.b32.xlu0 %v1334, 16
      %v1390 = vpop.permute.xlu0 %1389
      %1391 = vrot.lane.b32.xlu0 %v1346, 16
      %v1392 = vpop.permute.xlu0 %1391
      %1393 = vrot.lane.b32.xlu0 %v1358, 16
      %v1394 = vpop.permute.xlu0 %1393
      %1395 = vrot.lane.b32.xlu0 %v1370, 16
      %v1396 = vpop.permute.xlu0 %1395
      %1397 = vrot.lane.b32.xlu0 %v1382, 16
      %v1398 = vpop.permute.xlu0 %1397
      %v1407 = vunpack.c.l.b16 %v924
      %v1408 = vunpack.c.l.b16 %v925
      %v1409 = vunpack.c.l.b16 %v926
      %v1410 = vunpack.c.l.b16 %v927
      %v1411 = vunpack.c.l.b16 %v928
      %v1412 = vunpack.c.l.b16 %v929
      %v1413 = vunpack.c.l.b16 %v930
      %v1414 = vunpack.c.l.b16 %v931
      %v1415 = vpack.c.b16 %v1224, %v1407
      %v1416 = vpack.c.b16 %v1226, %v1408
      %v1417 = vpack.c.b16 %v1228, %v1409
      %v1418 = vpack.c.b16 %v1230, %v1410
      %v1419 = vpack.c.b16 %v1232, %v1411
      %v1420 = vpack.c.b16 %v1234, %v1412
      %v1421 = vpack.c.b16 %v1236, %v1413
      %v1422 = vpack.c.b16 %v1238, %v1414
      %v1423 = vrot.slane %v1415, 1
      %v1424 = vrot.slane %v1279, 1
      %v1425 = vsel %vm1166, %v1423, %v1424
      %v1426 = vrot.slane %v1416, 1
      %v1427 = vrot.slane %v1280, 1
      %v1428 = vsel %vm1166, %v1426, %v1427
      %v1429 = vrot.slane %v1417, 1
      %v1430 = vrot.slane %v1281, 1
      %v1431 = vsel %vm1166, %v1429, %v1430
      %v1432 = vrot.slane %v1418, 1
      %v1433 = vrot.slane %v1282, 1
      %v1434 = vsel %vm1166, %v1432, %v1433
      %v1435 = vrot.slane %v1419, 1
      %v1436 = vrot.slane %v1283, 1
      %v1437 = vsel %vm1166, %v1435, %v1436
      %v1438 = vrot.slane %v1420, 1
      %v1439 = vrot.slane %v1284, 1
      %v1440 = vsel %vm1166, %v1438, %v1439
      %v1441 = vrot.slane %v1421, 1
      %v1442 = vrot.slane %v1285, 1
      %v1443 = vsel %vm1166, %v1441, %v1442
      %v1444 = vrot.slane %v1422, 1
      %v1445 = vrot.slane %v1286, 1
      %v1446 = vsel %vm1166, %v1444, %v1445
      %1447 = vrot.lane.b32.xlu0 %v1425, 20
      %v1448 = vpop.permute.xlu0 %1447
      %1449 = vrot.lane.b32.xlu0 %v1428, 20
      %v1450 = vpop.permute.xlu0 %1449
      %1451 = vrot.lane.b32.xlu0 %v1431, 20
      %v1452 = vpop.permute.xlu0 %1451
      %1453 = vrot.lane.b32.xlu0 %v1434, 20
      %v1454 = vpop.permute.xlu0 %1453
      %1455 = vrot.lane.b32.xlu0 %v1437, 20
      %v1456 = vpop.permute.xlu0 %1455
      %1457 = vrot.lane.b32.xlu0 %v1440, 20
      %v1458 = vpop.permute.xlu0 %1457
      %1459 = vrot.lane.b32.xlu0 %v1443, 20
      %v1460 = vpop.permute.xlu0 %1459
      %1461 = vrot.lane.b32.xlu0 %v1446, 20
      %v1462 = vpop.permute.xlu0 %1461
      %v1479 = vunpack.c.l.b16 %v933
      %v1480 = vunpack.c.l.b16 %v934
      %v1481 = vunpack.c.l.b16 %v935
      %v1482 = vunpack.c.l.b16 %v936
      %v1483 = vunpack.c.l.b16 %v937
      %v1484 = vunpack.c.l.b16 %v938
      %v1485 = vunpack.c.l.b16 %v939
      %v1486 = vunpack.c.l.b16 %v940
      %v1487 = vunpack.c.l.b16 %v941
      %v1488 = vunpack.c.l.b16 %v942
      %v1489 = vunpack.c.l.b16 %v943
      %v1490 = vunpack.c.l.b16 %v944
      %v1491 = vunpack.c.l.b16 %v945
      %v1492 = vunpack.c.l.b16 %v946
      %v1493 = vunpack.c.l.b16 %v947
      %v1494 = vunpack.c.l.b16 %v948
      %v1495 = vpack.c.b16 %v1480, %v1479
      %v1496 = vpack.c.b16 %v1482, %v1481
      %v1497 = vpack.c.b16 %v1484, %v1483
      %v1498 = vpack.c.b16 %v1486, %v1485
      %v1499 = vpack.c.b16 %v1488, %v1487
      %v1500 = vpack.c.b16 %v1490, %v1489
      %v1501 = vpack.c.b16 %v1492, %v1491
      %v1502 = vpack.c.b16 %v1494, %v1493
      %1503 = vrot.lane.b32.xlu0 %v1495, 24
      %v1504 = vpop.permute.xlu0 %1503
      %1505 = vrot.lane.b32.xlu0 %v1496, 24
      %v1506 = vpop.permute.xlu0 %1505
      %1507 = vrot.lane.b32.xlu0 %v1497, 24
      %v1508 = vpop.permute.xlu0 %1507
      %1509 = vrot.lane.b32.xlu0 %v1498, 24
      %v1510 = vpop.permute.xlu0 %1509
      %1511 = vrot.lane.b32.xlu0 %v1499, 24
      %v1512 = vpop.permute.xlu0 %1511
      %1513 = vrot.lane.b32.xlu0 %v1500, 24
      %v1514 = vpop.permute.xlu0 %1513
      %1515 = vrot.lane.b32.xlu0 %v1501, 24
      %v1516 = vpop.permute.xlu0 %1515
      %1517 = vrot.lane.b32.xlu0 %v1502, 24
      %v1518 = vpop.permute.xlu0 %1517
      %v1527 = vunpack.c.l.b16 %v949
      %v1528 = vunpack.c.l.b16 %v950
      %v1529 = vunpack.c.l.b16 %v951
      %v1530 = vunpack.c.l.b16 %v952
      %v1531 = vunpack.c.l.b16 %v953
      %v1532 = vunpack.c.l.b16 %v954
      %v1533 = vunpack.c.l.b16 %v955
      %v1534 = vunpack.c.l.b16 %v956
      %v1535 = vpack.c.b16 %v1527, %v1527
      %v1536 = vpack.c.b16 %v1528, %v1528
      %v1537 = vpack.c.b16 %v1529, %v1529
      %v1538 = vpack.c.b16 %v1530, %v1530
      %v1539 = vpack.c.b16 %v1531, %v1531
      %v1540 = vpack.c.b16 %v1532, %v1532
      %v1541 = vpack.c.b16 %v1533, %v1533
      %v1542 = vpack.c.b16 %v1534, %v1534
      %v1544 = vshrl.u32 %v1495, 16
      %v1546 = vshll.u32 %v1495, 16
      %v1548 = vrot.slane %v1546, 1
      %v1549 = vor.u32 %v1544, %v1548
      %v1551 = vshll.u32 %v1535, 16
      %v1553 = vrot.slane %v1551, 1
      %v1554 = vsel %vm1029, %v1549, %v1553
      %v1556 = vshrl.u32 %v1496, 16
      %v1558 = vshll.u32 %v1496, 16
      %v1560 = vrot.slane %v1558, 1
      %v1561 = vor.u32 %v1556, %v1560
      %v1563 = vshll.u32 %v1536, 16
      %v1565 = vrot.slane %v1563, 1
      %v1566 = vsel %vm1029, %v1561, %v1565
      %v1568 = vshrl.u32 %v1497, 16
      %v1570 = vshll.u32 %v1497, 16
      %v1572 = vrot.slane %v1570, 1
      %v1573 = vor.u32 %v1568, %v1572
      %v1575 = vshll.u32 %v1537, 16
      %v1577 = vrot.slane %v1575, 1
      %v1578 = vsel %vm1029, %v1573, %v1577
      %v1580 = vshrl.u32 %v1498, 16
      %v1582 = vshll.u32 %v1498, 16
      %v1584 = vrot.slane %v1582, 1
      %v1585 = vor.u32 %v1580, %v1584
      %v1587 = vshll.u32 %v1538, 16
      %v1589 = vrot.slane %v1587, 1
      %v1590 = vsel %vm1029, %v1585, %v1589
      %v1592 = vshrl.u32 %v1499, 16
      %v1594 = vshll.u32 %v1499, 16
      %v1596 = vrot.slane %v1594, 1
      %v1597 = vor.u32 %v1592, %v1596
      %v1599 = vshll.u32 %v1539, 16
      %v1601 = vrot.slane %v1599, 1
      %v1602 = vsel %vm1029, %v1597, %v1601
      %v1604 = vshrl.u32 %v1500, 16
      %v1606 = vshll.u32 %v1500, 16
      %v1608 = vrot.slane %v1606, 1
      %v1609 = vor.u32 %v1604, %v1608
      %v1611 = vshll.u32 %v1540, 16
      %v1613 = vrot.slane %v1611, 1
      %v1614 = vsel %vm1029, %v1609, %v1613
      %v1616 = vshrl.u32 %v1501, 16
      %v1618 = vshll.u32 %v1501, 16
      %v1620 = vrot.slane %v1618, 1
      %v1621 = vor.u32 %v1616, %v1620
      %v1623 = vshll.u32 %v1541, 16
      %v1625 = vrot.slane %v1623, 1
      %v1626 = vsel %vm1029, %v1621, %v1625
      %v1628 = vshrl.u32 %v1502, 16
      %v1630 = vshll.u32 %v1502, 16
      %v1632 = vrot.slane %v1630, 1
      %v1633 = vor.u32 %v1628, %v1632
      %v1635 = vshll.u32 %v1542, 16
      %v1637 = vrot.slane %v1635, 1
      %v1638 = vsel %vm1029, %v1633, %v1637
      %1639 = vrot.lane.b32.xlu0 %v1554, 28
      %v1640 = vpop.permute.xlu0 %1639
      %1641 = vrot.lane.b32.xlu0 %v1566, 28
      %v1642 = vpop.permute.xlu0 %1641
      %1643 = vrot.lane.b32.xlu0 %v1578, 28
      %v1644 = vpop.permute.xlu0 %1643
      %1645 = vrot.lane.b32.xlu0 %v1590, 28
      %v1646 = vpop.permute.xlu0 %1645
      %1647 = vrot.lane.b32.xlu0 %v1602, 28
      %v1648 = vpop.permute.xlu0 %1647
      %1649 = vrot.lane.b32.xlu0 %v1614, 28
      %v1650 = vpop.permute.xlu0 %1649
      %1651 = vrot.lane.b32.xlu0 %v1626, 28
      %v1652 = vpop.permute.xlu0 %1651
      %1653 = vrot.lane.b32.xlu0 %v1638, 28
      %v1654 = vpop.permute.xlu0 %1653
      %v1663 = vunpack.c.l.b16 %v957
      %v1664 = vunpack.c.l.b16 %v958
      %v1665 = vunpack.c.l.b16 %v959
      %v1666 = vunpack.c.l.b16 %v960
      %v1667 = vunpack.c.l.b16 %v961
      %v1668 = vunpack.c.l.b16 %v962
      %v1669 = vunpack.c.l.b16 %v963
      %v1670 = vunpack.c.l.b16 %v964
      %v1671 = vpack.c.b16 %v1480, %v1663
      %v1672 = vpack.c.b16 %v1482, %v1664
      %v1673 = vpack.c.b16 %v1484, %v1665
      %v1674 = vpack.c.b16 %v1486, %v1666
      %v1675 = vpack.c.b16 %v1488, %v1667
      %v1676 = vpack.c.b16 %v1490, %v1668
      %v1677 = vpack.c.b16 %v1492, %v1669
      %v1678 = vpack.c.b16 %v1494, %v1670
      %v1679 = vrot.slane %v1671, 1
      %v1680 = vrot.slane %v1535, 1
      %v1681 = vsel %vm1166, %v1679, %v1680
      %v1682 = vrot.slane %v1672, 1
      %v1683 = vrot.slane %v1536, 1
      %v1684 = vsel %vm1166, %v1682, %v1683
      %v1685 = vrot.slane %v1673, 1
      %v1686 = vrot.slane %v1537, 1
      %v1687 = vsel %vm1166, %v1685, %v1686
      %v1688 = vrot.slane %v1674, 1
      %v1689 = vrot.slane %v1538, 1
      %v1690 = vsel %vm1166, %v1688, %v1689
      %v1691 = vrot.slane %v1675, 1
      %v1692 = vrot.slane %v1539, 1
      %v1693 = vsel %vm1166, %v1691, %v1692
      %v1694 = vrot.slane %v1676, 1
      %v1695 = vrot.slane %v1540, 1
      %v1696 = vsel %vm1166, %v1694, %v1695
      %v1697 = vrot.slane %v1677, 1
      %v1698 = vrot.slane %v1541, 1
      %v1699 = vsel %vm1166, %v1697, %v1698
      %v1700 = vrot.slane %v1678, 1
      %v1701 = vrot.slane %v1542, 1
      %v1702 = vsel %vm1166, %v1700, %v1701
      %1703 = vrot.lane.b32.xlu0 %v1681, 32
      %v1704 = vpop.permute.xlu0 %1703
      %1705 = vrot.lane.b32.xlu0 %v1684, 32
      %v1706 = vpop.permute.xlu0 %1705
      %1707 = vrot.lane.b32.xlu0 %v1687, 32
      %v1708 = vpop.permute.xlu0 %1707
      %1709 = vrot.lane.b32.xlu0 %v1690, 32
      %v1710 = vpop.permute.xlu0 %1709
      %1711 = vrot.lane.b32.xlu0 %v1693, 32
      %v1712 = vpop.permute.xlu0 %1711
      %1713 = vrot.lane.b32.xlu0 %v1696, 32
      %v1714 = vpop.permute.xlu0 %1713
      %1715 = vrot.lane.b32.xlu0 %v1699, 32
      %v1716 = vpop.permute.xlu0 %1715
      %1717 = vrot.lane.b32.xlu0 %v1702, 32
      %v1718 = vpop.permute.xlu0 %1717
      %vm1719 = vcmask 31744
      %v1721 = vsel %vm1719, %v997, %v1127
      %v1723 = vsel %vm1719, %v998, %v1129
      %v1725 = vsel %vm1719, %v999, %v1131
      %v1727 = vsel %vm1719, %v1000, %v1133
      %v1729 = vsel %vm1719, %v1001, %v1135
      %v1731 = vsel %vm1719, %v1002, %v1137
      %v1733 = vsel %vm1719, %v1003, %v1139
      %v1735 = vsel %vm1719, %v1004, %v1141
      %vm1736 = vcmask 64512
      %v1738 = vsel %vm1736, %v1721, %v1192
      %v1740 = vsel %vm1736, %v1723, %v1194
      %v1742 = vsel %vm1736, %v1725, %v1196
      %v1744 = vsel %vm1736, %v1727, %v1198
      %v1746 = vsel %vm1736, %v1729, %v1200
      %v1748 = vsel %vm1736, %v1731, %v1202
      %v1750 = vsel %vm1736, %v1733, %v1204
      %v1752 = vsel %vm1736, %v1735, %v1206
      %vm1753 = vcmask 97280
      %v1755 = vsel %vm1753, %v1738, %v1248
      %v1757 = vsel %vm1753, %v1740, %v1250
      %v1759 = vsel %vm1753, %v1742, %v1252
      %v1761 = vsel %vm1753, %v1744, %v1254
      %v1763 = vsel %vm1753, %v1746, %v1256
      %v1765 = vsel %vm1753, %v1748, %v1258
      %v1767 = vsel %vm1753, %v1750, %v1260
      %v1769 = vsel %vm1753, %v1752, %v1262
      %vm1770 = vcmask 130048
      %v1772 = vsel %vm1770, %v1755, %v1384
      %v1774 = vsel %vm1770, %v1757, %v1386
      %v1776 = vsel %vm1770, %v1759, %v1388
      %v1778 = vsel %vm1770, %v1761, %v1390
      %v1780 = vsel %vm1770, %v1763, %v1392
      %v1782 = vsel %vm1770, %v1765, %v1394
      %v1784 = vsel %vm1770, %v1767, %v1396
      %v1786 = vsel %vm1770, %v1769, %v1398
      %vm1787 = vcmask 162816
      %v1789 = vsel %vm1787, %v1772, %v1448
      %v1791 = vsel %vm1787, %v1774, %v1450
      %v1793 = vsel %vm1787, %v1776, %v1452
      %v1795 = vsel %vm1787, %v1778, %v1454
      %v1797 = vsel %vm1787, %v1780, %v1456
      %v1799 = vsel %vm1787, %v1782, %v1458
      %v1801 = vsel %vm1787, %v1784, %v1460
      %v1803 = vsel %vm1787, %v1786, %v1462
      %vm1804 = vcmask 195584
      %v1806 = vsel %vm1804, %v1789, %v1504
      %v1808 = vsel %vm1804, %v1791, %v1506
      %v1810 = vsel %vm1804, %v1793, %v1508
      %v1812 = vsel %vm1804, %v1795, %v1510
      %v1814 = vsel %vm1804, %v1797, %v1512
      %v1816 = vsel %vm1804, %v1799, %v1514
      %v1818 = vsel %vm1804, %v1801, %v1516
      %v1820 = vsel %vm1804, %v1803, %v1518
      %vm1821 = vcmask 228352
      %v1823 = vsel %vm1821, %v1806, %v1640
      %v1825 = vsel %vm1821, %v1808, %v1642
      %v1827 = vsel %vm1821, %v1810, %v1644
      %v1829 = vsel %vm1821, %v1812, %v1646
      %v1831 = vsel %vm1821, %v1814, %v1648
      %v1833 = vsel %vm1821, %v1816, %v1650
      %v1835 = vsel %vm1821, %v1818, %v1652
      %v1837 = vsel %vm1821, %v1820, %v1654
      %vm1838 = vcmask 261120
      %v1840 = vsel %vm1838, %v1823, %v1704
      %v1842 = vsel %vm1838, %v1825, %v1706
      %v1844 = vsel %vm1838, %v1827, %v1708
      %v1846 = vsel %vm1838, %v1829, %v1710
      %v1848 = vsel %vm1838, %v1831, %v1712
      %v1850 = vsel %vm1838, %v1833, %v1714
      %v1852 = vsel %vm1838, %v1835, %v1716
      %v1854 = vsel %vm1838, %v1837, %v1718
      %v1855 = vld [vmem:[%s3] sm:$0xf]
      %v1856 = vld [vmem:[%s3 + $0x4] sm:$0xf]
      %v1857 = vld [vmem:[%s3 + $0x8] sm:$0xf]
      %v1858 = vld [vmem:[%s3 + $0xc] sm:$0xf]
      %v1859 = vld [vmem:[%s3 + $0x10] sm:$0x3]
      %v1865 = vunpack.c.l.b16 %v1855
      %v1866 = vunpack.c.l.b16 %v1856
      %v1867 = vunpack.c.l.b16 %v1857
      %v1868 = vunpack.c.l.b16 %v1858
      %v1869 = vunpack.c.l.b16 %v1859
      %v1870 = vpack.c.b16 %v1866, %v1865
      %v1871 = vpack.c.b16 %v1868, %v1867
      %v1872 = vpack.c.b16 %v1869, %v1869
      %vm1875 = vcmask 293888
      %v1876 = vsel %vm1875, %v1840, 0
      %v1878 = vsel %vm1875, %v1842, 0
      %v1880 = vsel %vm1875, %v1844, 0
      %v1882 = vsel %vm1875, %v1846, 0
      %v1884 = vsel %vm1875, %v1848, 0
      %v1886 = vsel %vm1875, %v1850, 0
      %v1888 = vsel %vm1875, %v1852, 0
      %v1890 = vsel %vm1875, %v1854, 0
      %vm1892 = vcmask 1041408
      %v1894 = vsel %vm1892, %v1872, 0
      %1896 = vmatprep.subr.bf16.mxu0 0
      %1897 = vmatpush1.bf16.msra.mxu0 %v1870
      %1898 = vmatprep.subr.bf16.mxu0 0
      %1899 = vmatpush1.bf16.msra.mxu0 %v1871
      %1900 = vmatprep.subr.bf16.mxu0 0
      %1901 = vmatpush1.bf16.msra.mxu0 %v1894
      %1902 = vmatprep.subr.bf16.mxu0 0
      %1903 = vmatpush1.bf16.msra.mxu0 0
      %1904 = vmatprep.subr.bf16.mxu0 0
      %1905 = vmatpush1.bf16.msra.mxu0 0
      %1906 = vmatprep.subr.bf16.mxu0 0
      %1907 = vmatpush1.bf16.msra.mxu0 0
      %1908 = vmatprep.subr.bf16.mxu0 0
      %1909 = vmatpush1.bf16.msra.mxu0 0
      %1910 = vmatprep.subr.bf16.mxu0 0
      %1911 = vmatpush1.bf16.msra.mxu0 0
      %1912 = vmatprep.subr.bf16.mxu0 0
      %1913 = vmatpush1.bf16.msra.mxu0 0
      %1914 = vmatprep.subr.bf16.mxu0 0
      %1915 = vmatpush1.bf16.msra.mxu0 0
      %1916 = vmatprep.subr.bf16.mxu0 0
      %1917 = vmatpush1.bf16.msra.mxu0 0
      %1918 = vmatprep.subr.bf16.mxu0 0
      %1919 = vmatpush1.bf16.msra.mxu0 0
      %1920 = vmatprep.subr.bf16.mxu0 0
      %1921 = vmatpush1.bf16.msra.mxu0 0
      %1922 = vmatprep.subr.bf16.mxu0 0
      %1923 = vmatpush1.bf16.msra.mxu0 0
      %1924 = vmatprep.subr.bf16.mxu0 0
      %1925 = vmatpush1.bf16.msra.mxu0 0
      %1926 = vmatprep.subr.bf16.mxu0 0
      %1927 = vmatpush1.bf16.msra.mxu0 0
      %1928 = vmatprep.mubr.bf16.mxu0 0
      %1929 = vmatmul.mubr.bf16.gmra.mrb[0].mxu0 %v1876
      %v1930 = vpop.f32.mrb[0].mxu0
      %v1931 = vadd.f32 0.0, %v1930
      %v1932 = vpop.f32.mrb[0].mxu0
      %v1933 = vpop.f32.mrb[0].mxu0
      %v1934 = vadd.f32 0.0, %v1933
      %v1935 = vpop.f32.mrb[0].mxu0
      %1936 = vmatprep.mubr.bf16.mxu0 0
      %1937 = vmatmul.mubr.bf16.gmra.mrb[0].mxu0 %v1878
      %v1938 = vpop.f32.mrb[0].mxu0
      %v1939 = vadd.f32 0.0, %v1938
      %v1940 = vpop.f32.mrb[0].mxu0
      %v1941 = vpop.f32.mrb[0].mxu0
      %v1942 = vadd.f32 0.0, %v1941
      %v1943 = vpop.f32.mrb[0].mxu0
      %1944 = vmatprep.mubr.bf16.mxu0 0
      %1945 = vmatmul.mubr.bf16.gmra.mrb[0].mxu0 %v1880
      %v1946 = vpop.f32.mrb[0].mxu0
      %v1947 = vadd.f32 0.0, %v1946
      %v1948 = vpop.f32.mrb[0].mxu0
      %v1949 = vpop.f32.mrb[0].mxu0
      %v1950 = vadd.f32 0.0, %v1949
      %v1951 = vpop.f32.mrb[0].mxu0
      %1952 = vmatprep.mubr.bf16.mxu0 0
      %1953 = vmatmul.mubr.bf16.gmra.mrb[0].mxu0 %v1882
      %v1954 = vpop.f32.mrb[0].mxu0
      %v1955 = vadd.f32 0.0, %v1954
      %v1956 = vpop.f32.mrb[0].mxu0
      %v1957 = vpop.f32.mrb[0].mxu0
      %v1958 = vadd.f32 0.0, %v1957
      %v1959 = vpop.f32.mrb[0].mxu0
      %1960 = vmatprep.mubr.bf16.mxu0 0
      %1961 = vmatmul.mubr.bf16.gmra.mrb[0].mxu0 %v1884
      %v1962 = vpop.f32.mrb[0].mxu0
      %v1963 = vadd.f32 0.0, %v1962
      %v1964 = vpop.f32.mrb[0].mxu0
      %v1965 = vpop.f32.mrb[0].mxu0
      %v1966 = vadd.f32 0.0, %v1965
      %v1967 = vpop.f32.mrb[0].mxu0
      %1968 = vmatprep.mubr.bf16.mxu0 0
      %1969 = vmatmul.mubr.bf16.gmra.mrb[0].mxu0 %v1886
      %v1970 = vpop.f32.mrb[0].mxu0
      %v1971 = vadd.f32 0.0, %v1970
      %v1972 = vpop.f32.mrb[0].mxu0
      %v1973 = vpop.f32.mrb[0].mxu0
      %v1974 = vadd.f32 0.0, %v1973
      %v1975 = vpop.f32.mrb[0].mxu0
      %1976 = vmatprep.mubr.bf16.mxu0 0
      %1977 = vmatmul.mubr.bf16.gmra.mrb[0].mxu0 %v1888
      %v1978 = vpop.f32.mrb[0].mxu0
      %v1979 = vadd.f32 0.0, %v1978
      %v1980 = vpop.f32.mrb[0].mxu0
      %v1981 = vpop.f32.mrb[0].mxu0
      %v1982 = vadd.f32 0.0, %v1981
      %v1983 = vpop.f32.mrb[0].mxu0
      %1984 = vmatprep.mubr.bf16.mxu0 0
      %1985 = vmatmul.mubr.bf16.gmra.mrb[0].mxu0 %v1890
      %v1986 = vpop.f32.mrb[0].mxu0
      %v1987 = vadd.f32 0.0, %v1986
      %v1988 = vpop.f32.mrb[0].mxu0
      %v1989 = vpop.f32.mrb[0].mxu0
      %v1990 = vadd.f32 0.0, %v1989
      %v1991 = vpop.f32.mrb[0].mxu0
      %1992 = vdwg.mxu0
      %v1993 = vpack.c.bf16 %v1934, %v1931
      %v1994 = vpack.c.bf16 %v1942, %v1939
      %v1995 = vpack.c.bf16 %v1950, %v1947
      %v1996 = vpack.c.bf16 %v1958, %v1955
      %v1997 = vpack.c.bf16 %v1966, %v1963
      %v1998 = vpack.c.bf16 %v1974, %v1971
      %v1999 = vpack.c.bf16 %v1982, %v1979
      %v2000 = vpack.c.bf16 %v1990, %v1987
      %v2009 = vunpack.c.l.b16 %v1993
      %v2010 = vunpack.c.h.b16 %v1993
      %v2011 = vunpack.c.l.b16 %v1994
      %v2012 = vunpack.c.h.b16 %v1994
      %v2013 = vunpack.c.l.b16 %v1995
      %v2014 = vunpack.c.h.b16 %v1995
      %v2015 = vunpack.c.l.b16 %v1996
      %v2016 = vunpack.c.h.b16 %v1996
      %v2017 = vunpack.c.l.b16 %v1997
      %v2018 = vunpack.c.h.b16 %v1997
      %v2019 = vunpack.c.l.b16 %v1998
      %v2020 = vunpack.c.h.b16 %v1998
      %v2021 = vunpack.c.l.b16 %v1999
      %v2022 = vunpack.c.h.b16 %v1999
      %v2023 = vunpack.c.l.b16 %v2000
      %v2024 = vunpack.c.h.b16 %v2000
      %v2025 = vpack.c.b16 %v2009, %v2009
      %v2026 = vpack.c.b16 %v2010, %v2010
      %v2027 = vpack.c.b16 %v2011, %v2011
      %v2028 = vpack.c.b16 %v2012, %v2012
      %v2029 = vpack.c.b16 %v2013, %v2013
      %v2030 = vpack.c.b16 %v2014, %v2014
      %v2031 = vpack.c.b16 %v2015, %v2015
      %v2032 = vpack.c.b16 %v2016, %v2016
      %v2033 = vpack.c.b16 %v2017, %v2017
      %v2034 = vpack.c.b16 %v2018, %v2018
      %v2035 = vpack.c.b16 %v2019, %v2019
      %v2036 = vpack.c.b16 %v2020, %v2020
      %v2037 = vpack.c.b16 %v2021, %v2021
      %v2038 = vpack.c.b16 %v2022, %v2022
      %v2039 = vpack.c.b16 %v2023, %v2023
      %v2040 = vpack.c.b16 %v2024, %v2024
      %2057 = vst.msk [vmem:[%s298] sm:$0xf] %vm695, %v2025
      %2058 = vst.msk [vmem:[%s298 + $0x4] sm:$0xf] %vm695, %v2026
      %2059 = vst.msk [vmem:[%s298 + $0x8] sm:$0xf] %vm695, %v2027
      %2060 = vst.msk [vmem:[%s298 + $0xc] sm:$0xf] %vm695, %v2028
      %2061 = vst.msk [vmem:[%s298 + $0x10] sm:$0xf] %vm695, %v2029
      %2062 = vst.msk [vmem:[%s298 + $0x14] sm:$0xf] %vm695, %v2030
      %2063 = vst.msk [vmem:[%s298 + $0x18] sm:$0xf] %vm695, %v2031
      %2064 = vst.msk [vmem:[%s298 + $0x1c] sm:$0xf] %vm695, %v2032
      %2065 = vst.msk [vmem:[%s298 + $0x20] sm:$0xf] %vm695, %v2033
      %2066 = vst.msk [vmem:[%s298 + $0x24] sm:$0xf] %vm695, %v2034
      %2067 = vst.msk [vmem:[%s298 + $0x28] sm:$0xf] %vm695, %v2035
      %2068 = vst.msk [vmem:[%s298 + $0x2c] sm:$0xf] %vm695, %v2036
      %2069 = vst.msk [vmem:[%s298 + $0x30] sm:$0xf] %vm695, %v2037
      %2070 = vst.msk [vmem:[%s298 + $0x34] sm:$0xf] %vm695, %v2038
      %2071 = vst.msk [vmem:[%s298 + $0x38] sm:$0xf] %vm695, %v2039
      %2072 = vst.msk [vmem:[%s298 + $0x3c] sm:$0xf] %vm695, %v2040
      %v2073 = vsel %vm1719, %v1931, 0.0
      %v2074 = vsel %vm1719, %v1934, 0.0
      %v2075 = vadd.f32 %v2073, %v2074
      %v2076 = vsel %vm1719, %v1939, 0.0
      %v2077 = vadd.f32 %v2075, %v2076
      %v2078 = vsel %vm1719, %v1942, 0.0
      %v2079 = vadd.f32 %v2077, %v2078
      %v2080 = vsel %vm1719, %v1947, 0.0
      %v2081 = vadd.f32 %v2079, %v2080
      %v2082 = vsel %vm1719, %v1950, 0.0
      %v2083 = vadd.f32 %v2081, %v2082
      %v2084 = vsel %vm1719, %v1955, 0.0
      %v2085 = vadd.f32 %v2083, %v2084
      %v2086 = vsel %vm1719, %v1958, 0.0
      %v2087 = vadd.f32 %v2085, %v2086
      %v2088 = vsel %vm1719, %v1963, 0.0
      %v2089 = vadd.f32 %v2087, %v2088
      %v2090 = vsel %vm1719, %v1966, 0.0
      %v2091 = vadd.f32 %v2089, %v2090
      %v2092 = vsel %vm1719, %v1971, 0.0
      %v2093 = vadd.f32 %v2091, %v2092
      %v2094 = vsel %vm1719, %v1974, 0.0
      %v2095 = vadd.f32 %v2093, %v2094
      %v2096 = vsel %vm1719, %v1979, 0.0
      %v2097 = vadd.f32 %v2095, %v2096
      %v2098 = vsel %vm1719, %v1982, 0.0
      %v2099 = vadd.f32 %v2097, %v2098
      %v2100 = vsel %vm1719, %v1987, 0.0
      %v2101 = vadd.f32 %v2099, %v2100
      %v2102 = vsel %vm1719, %v1990, 0.0
      %v2103 = vadd.f32 %v2101, %v2102
      %v2104 = vrot.slane %v2103, 4
      %v2105 = vadd.f32 %v2103, %v2104
      %v2106 = vrot.slane %v2105, 2
      %v2107 = vadd.f32 %v2105, %v2106
      %v2108 = vrot.slane %v2107, 1
      %v2109 = vadd.f32 %v2107, %v2108
      %vm2110 = vcmask 24576
      %2111 = vst.msk [vmem:[%s306] sm:$0x1] %vm2110, %v2109
      %v2112 = vmul.f32 %v1931, %v1931
      %v2113 = vmul.f32 %v1934, %v1934
      %v2114 = vmul.f32 %v1939, %v1939
      %v2115 = vmul.f32 %v1942, %v1942
      %v2116 = vmul.f32 %v1947, %v1947
      %v2117 = vmul.f32 %v1950, %v1950
      %v2118 = vmul.f32 %v1955, %v1955
      %v2119 = vmul.f32 %v1958, %v1958
      %v2120 = vmul.f32 %v1963, %v1963
      %v2121 = vmul.f32 %v1966, %v1966
      %v2122 = vmul.f32 %v1971, %v1971
      %v2123 = vmul.f32 %v1974, %v1974
      %v2124 = vmul.f32 %v1979, %v1979
      %v2125 = vmul.f32 %v1982, %v1982
      %v2126 = vmul.f32 %v1987, %v1987
      %v2127 = vmul.f32 %v1990, %v1990
      %v2128 = vsel %vm1719, %v2112, 0.0
      %v2129 = vsel %vm1719, %v2113, 0.0
      %v2130 = vadd.f32 %v2128, %v2129
      %v2131 = vsel %vm1719, %v2114, 0.0
      %v2132 = vadd.f32 %v2130, %v2131
      %v2133 = vsel %vm1719, %v2115, 0.0
      %v2134 = vadd.f32 %v2132, %v2133
      %v2135 = vsel %vm1719, %v2116, 0.0
      %v2136 = vadd.f32 %v2134, %v2135
      %v2137 = vsel %vm1719, %v2117, 0.0
      %v2138 = vadd.f32 %v2136, %v2137
      %v2139 = vsel %vm1719, %v2118, 0.0
      %v2140 = vadd.f32 %v2138, %v2139
      %v2141 = vsel %vm1719, %v2119, 0.0
      %v2142 = vadd.f32 %v2140, %v2141
      %v2143 = vsel %vm1719, %v2120, 0.0
      %v2144 = vadd.f32 %v2142, %v2143
      %v2145 = vsel %vm1719, %v2121, 0.0
      %v2146 = vadd.f32 %v2144, %v2145
      %v2147 = vsel %vm1719, %v2122, 0.0
      %v2148 = vadd.f32 %v2146, %v2147
      %v2149 = vsel %vm1719, %v2123, 0.0
      %v2150 = vadd.f32 %v2148, %v2149
      %v2151 = vsel %vm1719, %v2124, 0.0
      %v2152 = vadd.f32 %v2150, %v2151
      %v2153 = vsel %vm1719, %v2125, 0.0
      %v2154 = vadd.f32 %v2152, %v2153
      %v2155 = vsel %vm1719, %v2126, 0.0
      %v2156 = vadd.f32 %v2154, %v2155
      %v2157 = vsel %vm1719, %v2127, 0.0
      %v2158 = vadd.f32 %v2156, %v2157
      %v2159 = vrot.slane %v2158, 4
      %v2160 = vadd.f32 %v2158, %v2159
      %v2161 = vrot.slane %v2160, 2
      %v2162 = vadd.f32 %v2160, %v2161
      %v2163 = vrot.slane %v2162, 1
      %v2164 = vadd.f32 %v2162, %v2163
      %2165 = vst.msk [vmem:[%s313] sm:$0x1] %vm2110, %v2164
      %s2166 = smul.u32 8, %s23
      %p2167 = scmp.lt.s32.totalorder %s22, 1
      %s2168 = scalar_select %p2167, %s22, 1
      %p2169 = scmp.lt.s32.totalorder %s2166, 15
      %s2170 = scalar_select %p2169, %s2166, 15
      %s2171 = smul.addr %s2170, 2
      %s2172 = smul.addr %s2168, 32
      %s2173 = sadd.s32 %s2171, %s2172
      %s2174 = smul.addr %s2173, 4
      %s2175 = scalar_lea.vmem %s4, %s2174
      %p2176 = scmp.lt.s32.totalorder %s22, 1
      %s2177 = scalar_select %p2176, %s22, 1
      %p2178 = scmp.lt.s32.totalorder %s23, 1
      %s2179 = scalar_select %p2178, %s23, 1
      %s2180 = smul.addr %s2177, 2
      %s2181 = sadd.s32 %s2179, %s2180
      %s2182 = scalar_lea.vmem %s5, %s2181
      %p2183 = scmp.lt.s32.totalorder %s22, 1
      %s2184 = scalar_select %p2183, %s22, 1
      %p2185 = scmp.lt.s32.totalorder %s23, 1
      %s2186 = scalar_select %p2185, %s23, 1
      %s2187 = smul.addr %s2184, 2
      %s2188 = sadd.s32 %s2186, %s2187
      %s2189 = scalar_lea.vmem %s6, %s2188
      // Predicated region
      $region53: #{bottleneck_forward.5} parent=35 // pred_check
        %p2190 = pneg %p139
      $region54: #{bottleneck_forward.5} parent=35 // pred_check_branch
        %2192 = sbr.rel (%p2190) target = $region56
      $region55: #{bottleneck_forward.5} parent=35 // pred_region
        %s2193 = smul.u32 8, %s23
      $region56: #{bottleneck_forward.5} parent=35 // pred_fallthru
        _
      // Predicated region
      $region57: #{bottleneck_forward.5} parent=35 // pred_check
        %p2194 = pneg %p167
      $region58: #{bottleneck_forward.5} parent=35 // pred_check_branch
        %2196 = sbr.rel (%p2194) target = $region60
      $region59: #{bottleneck_forward.5} parent=35 // pred_region
        _
      $region60: #{bottleneck_forward.5} parent=35 // pred_fallthru
        _
      // Predicated region
      $region61: #{bottleneck_forward.5} parent=35 // pred_check
        %p2197 = pneg %p195
      $region62: #{bottleneck_forward.5} parent=35 // pred_check_branch
        %2199 = sbr.rel (%p2197) target = $region64
      $region63: #{bottleneck_forward.5} parent=35 // pred_region
        _
      $region64: #{bottleneck_forward.5} parent=35 // pred_fallthru
        _
    $region36: #{bottleneck_forward.5} parent=5 // pred_fallthru
      _
    %p2200 = scmp.le.s32.totalorder 2, %s13
    // Predicated region
    $region65: #{bottleneck_forward.5} parent=5 // pred_check
      %p2201 = pneg %p2200
    $region66: #{bottleneck_forward.5} parent=5 // pred_check_branch
      %2203 = sbr.rel (%p2201) target = $region68
    $region67: #{bottleneck_forward.5} parent=5 // pred_region
      %s2204 = ssub.s32 %s13, 2
      // Predicated region
      $region69: #{bottleneck_forward.5} parent=67 // pred_check
        %p2205 = pneg %p145
      $region70: #{bottleneck_forward.5} parent=67 // pred_check_branch
        %2207 = sbr.rel (%p2205) target = $region72
      $region71: #{bottleneck_forward.5} parent=67 // pred_region
        %s2208 = smul.u32 8, %s25
        %p2209 = scmp.lt.s32.totalorder %s24, 1
        %s2210 = scalar_select %p2209, %s24, 1
        %p2211 = scmp.lt.s32.totalorder %s2208, 15
        %s2212 = scalar_select %p2211, %s2208, 15
        %s2213 = smul.addr %s2212, 2
        %s2214 = smul.addr %s2210, 32
        %s2215 = sadd.s32 %s2213, %s2214
        %s2216 = smul.addr %s2215, 4
        %s2217 = scalar_lea.vmem %s4, %s2216
      $region72: #{bottleneck_forward.5} parent=67 // pred_fallthru
        _
      // Predicated region
      $region73: #{bottleneck_forward.5} parent=67 // pred_check
        %p2218 = pneg %p173
      $region74: #{bottleneck_forward.5} parent=67 // pred_check_branch
        %2220 = sbr.rel (%p2218) target = $region76
      $region75: #{bottleneck_forward.5} parent=67 // pred_region
        %p2221 = scmp.lt.s32.totalorder %s24, 1
        %s2222 = scalar_select %p2221, %s24, 1
        %p2223 = scmp.lt.s32.totalorder %s25, 1
        %s2224 = scalar_select %p2223, %s25, 1
        %s2225 = smul.addr %s2222, 2
        %s2226 = sadd.s32 %s2224, %s2225
        %s2227 = scalar_lea.vmem %s5, %s2226
      $region76: #{bottleneck_forward.5} parent=67 // pred_fallthru
        _
      // Predicated region
      $region77: #{bottleneck_forward.5} parent=67 // pred_check
        %p2228 = pneg %p201
      $region78: #{bottleneck_forward.5} parent=67 // pred_check_branch
        %2230 = sbr.rel (%p2228) target = $region80
      $region79: #{bottleneck_forward.5} parent=67 // pred_region
        %p2231 = scmp.lt.s32.totalorder %s24, 1
        %s2232 = scalar_select %p2231, %s24, 1
        %p2233 = scmp.lt.s32.totalorder %s25, 1
        %s2234 = scalar_select %p2233, %s25, 1
        %s2235 = smul.addr %s2232, 2
        %s2236 = sadd.s32 %s2234, %s2235
        %s2237 = scalar_lea.vmem %s6, %s2236
      $region80: #{bottleneck_forward.5} parent=67 // pred_fallthru
        _
    $region68: #{bottleneck_forward.5} parent=5 // pred_fallthru
      _
  $region6: #{bottleneck_forward.5} parent=0 // loop_footer
    %s17 = sadd.s32 1, %s13
  $region7: #{bottleneck_forward.5} parent=0 // loop_footer_branch
    %12 = sbr.rel target = $region3
  $region8: #{bottleneck_forward.5} parent=0 // loop_exit
    _

</llo_original>
